<compile_context>
chip_gen: v7x
topology: tpu7x:2x2x1
jax: 0.10.0
libtpu: 0.0.40
codegen_flags: <defaults>
</compile_context>

<pallas_src>
import jax
import jax.numpy as jnp
from jax import lax
from jax.experimental import pallas as pl
from jax.experimental.pallas import tpu as pltpu

EXPANSION = 6        # NVAE decoder-cell channel expansion factor
SE_REDUCTION = 16    # squeeze-excite reduction ratio
BN_EPS = 1e-5


# --------------------------------------------------------------------------- #
# Small helpers
# --------------------------------------------------------------------------- #
def _round_up(x, m):
    return ((x + m - 1) // m) * m


def _divisors(n):
    return [d for d in range(1, n + 1) if n % d == 0]


def _pick_mm_rows(H, W):
    # smallest spatial-row count (dividing H) whose strip gives >= 128 MXU rows
    for d in _divisors(H):
        if d * W >= 128:
            return d
    return H


def _pick_dw_rows(H, W):
    # largest spatial-row count (dividing H) with <= 64 rows per depthwise strip
    best = 1
    for d in _divisors(H):
        if d * W <= 64:
            best = d
    return best


def _select_mac_dtype():
    """bf16 depthwise MACs / slab on chips with a bf16 VPU (v6e/v7x); f32 slab +
    MACs on older chips (v5e has no bf16 VALU, so per-band converts would sit on
    the critical VALU chain)."""
    try:
        kind = jax.devices()[0].device_kind.lower()
    except Exception:
        return jnp.bfloat16
    for old in ("v2", "v3", "v4", "v5"):
        if old in kind:
            return jnp.float32
    return jnp.bfloat16


# --------------------------------------------------------------------------- #
# Fused DecoderBlock kernel
# --------------------------------------------------------------------------- #
def _build_block_kernel(H, W, c_in, cells_cfg, mm_rows, dw_rows, left, w_pad,
                        mac_dtype):
    """cells_cfg: list of (cin, cout, has_projection_skip) -- static metadata."""
    HW = H * W
    EC = c_in * EXPANSION
    n_mm = H // mm_rows
    n_dw = H // dw_rows
    MM = mm_rows * W          # rows per MXU strip (>= 128 when the shape allows)
    DW = dw_rows * W          # rows per depthwise strip (bounded vreg working set)
    nparams = [11 if proj else 10 for (_, _, proj) in cells_cfg]
    total_p = sum(nparams)
    n_cells = len(cells_cfg)

    def kernel(*refs):
        x_ref = refs[0]
        o_ref = refs[1 + total_p]
        act_ref, dw_ref, pad_ref = refs[2 + total_p:]

        # Zero only the halo bands of the padded slab, once per grid step (NOT
        # under pl.when(pid == 0): with the batch axis "parallel" each core has
        # its own scratch).  Bands are sublane-tile aligned -> unmasked stores.
        pad_ref[0:2, :, :] = jnp.zeros((2, w_pad, EC), mac_dtype)
        pad_ref[H + 2:H + 4, :, :] = jnp.zeros((2, w_pad, EC), mac_dtype)
        pad_ref[:, 0:left, :] = jnp.zeros((H + 4, left, EC), mac_dtype)
        pad_ref[:, left + W:w_pad, :] = jnp.zeros(
            (H + 4, w_pad - left - W, EC), mac_dtype)

        off = 1
        for ci, (_cin_c, cout_c, proj) in enumerate(cells_cfg):
            prefs = refs[off:off + nparams[ci]]
            off += nparams[ci]
            (w1_r, b1_r, wd_r, b2_r, w2_r, b3_r,
             sw1_r, sb1_r, sw2_r, sb2_r) = prefs[:10]
            skw_r = prefs[10] if proj else None
            last = ci == n_cells - 1
            src = x_ref if ci == 0 else act_ref        # activation stays in VMEM
            dst = o_ref if last else act_ref

            # ---- pass 1: folded BN0 + 1x1 expand (bf16 MXU) + folded BN1 +
            #      SiLU -> slab interior (interior starts at sublane offset
            #      `left` == sublane tile -> aligned, unmasked stores).
            w1 = w1_r[...]                             # hoisted, loop-invariant
            b1 = b1_r[...]

            def expand_body(s, carry):
                r0 = pl.multiple_of(s * MM, MM)
                xs = src[pl.ds(r0, MM), :].astype(jnp.bfloat16)
                hs = jnp.dot(xs, w1, preferred_element_type=jnp.float32) + b1
                hs = hs * jax.nn.sigmoid(hs)
                pad_ref[pl.ds(2 + s * mm_rows, mm_rows), left:left + W, :] = (
                    hs.astype(mac_dtype).reshape(mm_rows, W, EC))
                return carry

            lax.fori_loop(0, n_mm, expand_body, 0)

            # ---- pass 2: 5x5 depthwise (BN2 folded into taps).  25 shifted
            #      windows loaded straight from the slab; MACs in mac_dtype
            #      (bf16 on v6e/v7x), per-ky partials promoted to f32.  + SiLU
            #      -> bf16 dw buffer; SE pooling sum is the fori carry.
            b2 = b2_r[...]

            def dw_body(s, dwsum):
                acc = None
                for ky in range(5):
                    accy = None
                    for kx in range(5):
                        win = pad_ref[pl.ds(s * dw_rows + ky, dw_rows),
                                      left - 2 + kx:left - 2 + kx + W, :]
                        tap = wd_r[ky * 5 + kx:ky * 5 + kx + 1, :].reshape(1, 1, EC)
                        term = win * tap
                        accy = term if accy is None else accy + term
                    a32 = accy.astype(jnp.float32)
                    acc = a32 if acc is None else acc + a32
                h2 = acc.reshape(DW, EC) + b2
                h2 = h2 * jax.nn.sigmoid(h2)
                r0 = pl.multiple_of(s * DW, DW)
                dw_ref[pl.ds(r0, DW), :] = h2.astype(dw_ref.dtype)
                return dwsum + jnp.sum(h2, axis=0, keepdims=True)

            dwsum = lax.fori_loop(0, n_dw, dw_body,
                                  jnp.zeros((1, EC), jnp.float32))

            # ---- squeeze-excite gate.  mean_s(dw @ W2f + b3) ==
            #      (mean_s dw) @ W2f + b3, so no extra pass over h is needed.
            w2 = w2_r[...]
            b3 = b3_r[...]
            pooled = dwsum * (1.0 / HW)
            hpool = jnp.dot(pooled.astype(jnp.bfloat16), w2,
                            preferred_element_type=jnp.float32) + b3
            g = jnp.maximum(
                jnp.dot(hpool, sw1_r[...],
                        preferred_element_type=jnp.float32) + sb1_r[...], 0.0)
            g = jax.nn.sigmoid(
                jnp.dot(g, sw2_r[...],
                        preferred_element_type=jnp.float32) + sb2_r[...])
            g = g * 0.1          # fold the residual-branch 0.1 into the gate

            skw = skw_r[...] if proj else None

            # ---- pass 3: 1x1 reduce (bf16 MXU, >=128-row strips, BN3 folded)
            #      + skip (identity or bf16 MXU projection) + gated branch.
            def out_body(s, carry):
                r0 = pl.multiple_of(s * MM, MM)
                hr = jnp.dot(dw_ref[pl.ds(r0, MM), :], w2,
                             preferred_element_type=jnp.float32) + b3
                if proj:
                    sk = jnp.dot(src[pl.ds(r0, MM), :].astype(jnp.bfloat16), skw,
                                 preferred_element_type=jnp.float32)
                else:
                    sk = src[pl.ds(r0, MM), :]
                # read-before-write: src (== act_ref for non-last cells) is read
                # above before dst is written for the same rows; strips disjoint.
                dst[pl.ds(r0, MM), :] = sk + g * hr
                return carry

            lax.fori_loop(0, n_mm, out_body, 0)

    return kernel


def fold_cell_params(p, mac_dtype):
    """Fold eval-mode BN scale/shift into the adjacent 1x1 / depthwise convs,
    pre-cast MXU weights to bf16 and depthwise taps to the MAC dtype."""
    cin = p["w1"].shape[0]
    cout = p["w2"].shape[1]
    w1f = (p["w1"] * p["s0"].reshape(-1, 1) * p["s1"]).astype(jnp.bfloat16)
    b1f = (p["b0"] @ p["w1"]) * p["s1"] + p["b1"]
    wdf = (p["wd"] * p["s2"]).astype(mac_dtype)       # fold BN2 scale into taps
    b2f = p["b2"]
    w2f = (p["w2"] * p["s3"]).astype(jnp.bfloat16)
    b3f = p["b3"]
    flat = [w1f, b1f, wdf, b2f, w2f, b3f,
            p["sew1"], p["seb1"], p["sew2"], p["seb2"]]
    proj = cin != cout
    if proj:
        flat.append(p["skipw"].astype(jnp.bfloat16))
    return flat, (cin, cout, proj)


def decoder_block_forward(x_nchw, cell_params, mac_dtype=None):
    """x_nchw: (N, C, H, W) float; cell_params: list of per-cell dicts."""
    x_nchw = x_nchw.astype(jnp.float32)
    N, C, H, W = x_nchw.shape
    HW = H * W
    # TODO(synk): when chaining blocks, keep activations in (N, HW, C) between
    # blocks and drop these NCHW<->NHWC transposes (full-activation HBM trips).
    x = jnp.transpose(x_nchw, (0, 2, 3, 1)).reshape(N, HW, C)

    if mac_dtype is None:
        mac_dtype = _select_mac_dtype()
    sub = 8 if mac_dtype == jnp.float32 else 16       # sublane tile of slab dtype
    left = sub                                        # aligned interior start (>=2 halo)
    w_pad = left + _round_up(W + 2, sub)

    flat_params = []
    in_specs = [pl.BlockSpec((None, HW, C), lambda n: (n, 0, 0))]
    cells_cfg = []
    for i, p in enumerate(cell_params):
        folded, cfg = fold_cell_params(p, mac_dtype)
        cin, cout, _ = cfg
        assert cin == C, "all decoder cells take in_channels"
        if i < len(cell_params) - 1:
            assert cout == C, "only the last cell may change channel count"
        cells_cfg.append(cfg)
        for a in folded:
            flat_params.append(a)
            in_specs.append(pl.BlockSpec(a.shape, lambda n: (0, 0)))

    c_out = cells_cfg[-1][1]
    EC = C * EXPANSION
    mm_rows = _pick_mm_rows(H, W)
    dw_rows = _pick_dw_rows(H, W)
    kernel = _build_block_kernel(H, W, C, cells_cfg, mm_rows, dw_rows, left,
                                 w_pad, mac_dtype)

    # Explicit VMEM budget: scratch + double-buffered I/O blocks + params + headroom.
    # TODO(synk): for H*W / C big enough to blow past ~60 MiB (v7x physical is
    # 64 MiB), switch to a row-block grid axis (2-row halo) instead of the
    # whole-image-resident slab.
    lane = 128
    macb = 2 if mac_dtype == jnp.bfloat16 else 4
    scratch_bytes = (
        _round_up(HW, 8) * _round_up(C, lane) * 4             # act_ref (f32)
        + _round_up(HW, 16) * _round_up(EC, lane) * 2         # dw_ref (bf16)
        + (H + 4) * w_pad * _round_up(EC, lane) * macb)       # padded slab
    io_bytes = 2 * _round_up(HW, 8) * (_round_up(C, lane) + _round_up(c_out, lane)) * 4
    par_bytes = 2 * sum(int(a.size) * jnp.dtype(a.dtype).itemsize for a in flat_params)
    need = scratch_bytes + io_bytes + par_bytes + (8 << 20)
    vmem_limit = max(int(need), 32 << 20)
    try:
        cap = int(pltpu.get_tpu_info().vmem_capacity_bytes)
        vmem_limit = min(vmem_limit, cap - (2 << 20))
    except Exception:
        vmem_limit = min(vmem_limit, 60 << 20)

    out = pl.pallas_call(
        kernel,
        out_shape=jax.ShapeDtypeStruct((N, HW, c_out), jnp.float32),
        grid=(N,),
        in_specs=in_specs,
        out_specs=pl.BlockSpec((None, HW, c_out), lambda n: (n, 0, 0)),
        scratch_shapes=[
            pltpu.VMEM((HW, C), jnp.float32),            # inter-cell activation (f32: skip-path accuracy)
            pltpu.VMEM((HW, EC), jnp.bfloat16),          # depthwise+SiLU output for the reduce matmul
            pltpu.VMEM((H + 4, w_pad, EC), mac_dtype),   # zero-padded expanded slab
        ],
        compiler_params=pltpu.CompilerParams(
            dimension_semantics=("parallel",),
            vmem_limit_bytes=int(vmem_limit)),
        # TODO(synk): on v7x with per-chip batch < 2, add a second "parallel"
        # grid axis (split H, halo exchange) so both TensorCores stay busy.
    )(x, *flat_params)

    return jnp.transpose(out.reshape(N, H, W, c_out), (0, 3, 1, 2))


# --------------------------------------------------------------------------- #
# Parameter construction (deterministic, synthetic, "PyTorch-like" unfolded)
# --------------------------------------------------------------------------- #
def _fold_bn(key, c):
    kg, kb = jax.random.split(key)
    gamma = 1.0 + 0.1 * jax.random.normal(kg, (1, c), jnp.float32)
    beta = 0.1 * jax.random.normal(kb, (1, c), jnp.float32)
    running_mean = jnp.zeros((1, c), jnp.float32)
    running_var = jnp.ones((1, c), jnp.float32)
    scale = gamma / jnp.sqrt(running_var + BN_EPS)
    shift = beta - running_mean * scale
    return scale, shift


def init_cell_params(key, c_in, c_out):
    EC = c_in * EXPANSION
    Cr = max(c_out // SE_REDUCTION, 4)
    ks = jax.random.split(key, 10)
    s0, b0 = _fold_bn(ks[0], c_in)
    w1 = 0.05 * jax.random.normal(ks[1], (c_in, EC), jnp.float32)
    s1, b1 = _fold_bn(ks[2], EC)
    wd = 0.05 * jax.random.normal(ks[3], (25, EC), jnp.float32)   # 5x5 depthwise taps
    s2, b2 = _fold_bn(ks[4], EC)
    w2 = 0.05 * jax.random.normal(ks[5], (EC, c_out), jnp.float32)
    s3, b3 = _fold_bn(ks[6], c_out)
    sew1 = 0.1 * jax.random.normal(ks[7], (c_out, Cr), jnp.float32)
    seb1 = jnp.zeros((1, Cr), jnp.float32)
    sew2 = 0.1 * jax.random.normal(ks[8], (Cr, c_out), jnp.float32)
    seb2 = jnp.zeros((1, c_out), jnp.float32)
    if c_in == c_out:
        skipw = jnp.eye(c_in, dtype=jnp.float32)      # reference only; kernel skips it
    else:
        skipw = 0.05 * jax.random.normal(ks[9], (c_in, c_out), jnp.float32)
    return dict(s0=s0, b0=b0, w1=w1, s1=s1, b1=b1, wd=wd, s2=s2, b2=b2,
                w2=w2, s3=s3, b3=b3, sew1=sew1, seb1=seb1, sew2=sew2,
                seb2=seb2, skipw=skipw)


def init_decoder_block_params(key, in_channels, out_channels, number_of_cells,
                              upscale=False):
    assert not upscale, "upscale=True path not implemented"
    keys = jax.random.split(key, number_of_cells)
    params = []
    for i in range(number_of_cells):
        i_ch = in_channels
        o_ch = out_channels if i == number_of_cells - 1 else i_ch
        params.append(init_cell_params(keys[i], i_ch, o_ch))
    return params


# --------------------------------------------------------------------------- #
# Pure-JAX reference (same math, unfolded params, f32) for self-check
# --------------------------------------------------------------------------- #
def residual_cell_ref(x, p):
    N, H, W, C = x.shape
    EC = p["w1"].shape[1]
    x2 = x.reshape(N, H * W, C)
    h = x2 * p["s0"] + p["b0"]
    h = jnp.einsum("nsc,ce->nse", h, p["w1"])
    h = h * p["s1"] + p["b1"]
    h = h * jax.nn.sigmoid(h)
    h = h.reshape(N, H, W, EC)
    hp = jnp.pad(h, ((0, 0), (2, 2), (2, 2), (0, 0)))
    acc = jnp.zeros_like(h)
    for ky in range(5):
        for kx in range(5):
            acc = acc + hp[:, ky:ky + H, kx:kx + W, :] * p["wd"][ky * 5 + kx]
    h = acc.reshape(N, H * W, EC)
    h = h * p["s2"] + p["b2"]
    h = h * jax.nn.sigmoid(h)
    h = jnp.einsum("nse,eo->nso", h, p["w2"])
    h = h * p["s3"] + p["b3"]
    pooled = jnp.mean(h, axis=1, keepdims=True)
    g = jnp.maximum(jnp.einsum("nso,or->nsr", pooled, p["sew1"]) + p["seb1"], 0.0)
    g = jax.nn.sigmoid(jnp.einsum("nsr,ro->nso", g, p["sew2"]) + p["seb2"])
    h = h * g
    skip = jnp.einsum("nsc,co->nso", x2, p["skipw"])
    out = skip + 0.1 * h
    return out.reshape(N, H, W, -1)


if __name__ == "__main__":
    key = jax.random.PRNGKey(0)
    k_x, k_p = jax.random.split(key)

    # small shapes: batch=2, in_channels=32 -> out_channels=64, spatial=16, 2 cells
    # (cell 0 exercises the identity-skip path, cell 1 the projection-skip path)
    N, C_IN, C_OUT, H, W = 2, 32, 64, 16, 16
    x_nchw = jax.random.normal(k_x, (N, C_IN, H, W), jnp.float32)
    params = init_decoder_block_params(k_p, C_IN, C_OUT, number_of_cells=2,
                                       upscale=False)

    out = decoder_block_forward(x_nchw, params)
    out = jax.block_until_ready(out)

    # self-check against the pure-JAX f32 reference (kernel uses bf16 MXU/slab)
    xr = jnp.transpose(x_nchw, (0, 2, 3, 1))
    for p in params:
        xr = residual_cell_ref(xr, p)
    ref = jnp.transpose(xr, (0, 3, 1, 2))
    assert out.shape == (N, C_OUT, H, W), out.shape
    max_err = float(jnp.max(jnp.abs(out - ref)))
    assert max_err < 2e-2, f"max_err={max_err}"

    print("KERNEL_OK")
</pallas_src>

<mosaic_0001>
module attributes {stable_mosaic.version = 11 : i64} {
  func.func @kernel(%arg0: i32, %arg1: memref<1x256x32xf32, #tpu.memory_space<vmem>>, %arg2: memref<32x192xbf16, #tpu.memory_space<vmem>>, %arg3: memref<1x192xf32, #tpu.memory_space<vmem>>, %arg4: memref<25x192xbf16, #tpu.memory_space<vmem>>, %arg5: memref<1x192xf32, #tpu.memory_space<vmem>>, %arg6: memref<192x32xbf16, #tpu.memory_space<vmem>>, %arg7: memref<1x32xf32, #tpu.memory_space<vmem>>, %arg8: memref<32x4xf32, #tpu.memory_space<vmem>>, %arg9: memref<1x4xf32, #tpu.memory_space<vmem>>, %arg10: memref<4x32xf32, #tpu.memory_space<vmem>>, %arg11: memref<1x32xf32, #tpu.memory_space<vmem>>, %arg12: memref<32x192xbf16, #tpu.memory_space<vmem>>, %arg13: memref<1x192xf32, #tpu.memory_space<vmem>>, %arg14: memref<25x192xbf16, #tpu.memory_space<vmem>>, %arg15: memref<1x192xf32, #tpu.memory_space<vmem>>, %arg16: memref<192x64xbf16, #tpu.memory_space<vmem>>, %arg17: memref<1x64xf32, #tpu.memory_space<vmem>>, %arg18: memref<64x4xf32, #tpu.memory_space<vmem>>, %arg19: memref<1x4xf32, #tpu.memory_space<vmem>>, %arg20: memref<4x64xf32, #tpu.memory_space<vmem>>, %arg21: memref<1x64xf32, #tpu.memory_space<vmem>>, %arg22: memref<32x64xbf16, #tpu.memory_space<vmem>>, %arg23: memref<1x256x64xf32, #tpu.memory_space<vmem>>, %arg24: memref<256x32xf32, #tpu.memory_space<vmem>>, %arg25: memref<256x192xbf16, #tpu.memory_space<vmem>>, %arg26: memref<20x48x192xbf16, #tpu.memory_space<vmem>>) attributes {dimension_semantics = [#tpu.dimension_semantics<parallel>], iteration_bounds = array<i64: 2>, scalar_prefetch = 0 : i64, scratch_operands = 3 : i64, tpu.core_type = #tpu.core_type<tc>, window_params = [{transform_indices = @transform_0, window_bounds = array<i64: 1, 256, 32>}, {pipeline_mode = #tpu.pipeline_mode<synchronous>, transform_indices = @transform_1, window_bounds = array<i64: 32, 192>}, {pipeline_mode = #tpu.pipeline_mode<synchronous>, transform_indices = @transform_2, window_bounds = array<i64: 1, 192>}, {pipeline_mode = #tpu.pipeline_mode<synchronous>, transform_indices = @transform_3, window_bounds = array<i64: 25, 192>}, {pipeline_mode = #tpu.pipeline_mode<synchronous>, transform_indices = @transform_4, window_bounds = array<i64: 1, 192>}, {pipeline_mode = #tpu.pipeline_mode<synchronous>, transform_indices = @transform_5, window_bounds = array<i64: 192, 32>}, {pipeline_mode = #tpu.pipeline_mode<synchronous>, transform_indices = @transform_6, window_bounds = array<i64: 1, 32>}, {pipeline_mode = #tpu.pipeline_mode<synchronous>, transform_indices = @transform_7, window_bounds = array<i64: 32, 4>}, {pipeline_mode = #tpu.pipeline_mode<synchronous>, transform_indices = @transform_8, window_bounds = array<i64: 1, 4>}, {pipeline_mode = #tpu.pipeline_mode<synchronous>, transform_indices = @transform_9, window_bounds = array<i64: 4, 32>}, {pipeline_mode = #tpu.pipeline_mode<synchronous>, transform_indices = @transform_10, window_bounds = array<i64: 1, 32>}, {pipeline_mode = #tpu.pipeline_mode<synchronous>, transform_indices = @transform_11, window_bounds = array<i64: 32, 192>}, {pipeline_mode = #tpu.pipeline_mode<synchronous>, transform_indices = @transform_12, window_bounds = array<i64: 1, 192>}, {pipeline_mode = #tpu.pipeline_mode<synchronous>, transform_indices = @transform_13, window_bounds = array<i64: 25, 192>}, {pipeline_mode = #tpu.pipeline_mode<synchronous>, transform_indices = @transform_14, window_bounds = array<i64: 1, 192>}, {pipeline_mode = #tpu.pipeline_mode<synchronous>, transform_indices = @transform_15, window_bounds = array<i64: 192, 64>}, {pipeline_mode = #tpu.pipeline_mode<synchronous>, transform_indices = @transform_16, window_bounds = array<i64: 1, 64>}, {pipeline_mode = #tpu.pipeline_mode<synchronous>, transform_indices = @transform_17, window_bounds = array<i64: 64, 4>}, {pipeline_mode = #tpu.pipeline_mode<synchronous>, transform_indices = @transform_18, window_bounds = array<i64: 1, 4>}, {pipeline_mode = #tpu.pipeline_mode<synchronous>, transform_indices = @transform_19, window_bounds = array<i64: 4, 64>}, {pipeline_mode = #tpu.pipeline_mode<synchronous>, transform_indices = @transform_20, window_bounds = array<i64: 1, 64>}, {pipeline_mode = #tpu.pipeline_mode<synchronous>, transform_indices = @transform_21, window_bounds = array<i64: 32, 64>}, {transform_indices = @transform_22, window_bounds = array<i64: 1, 256, 64>}]} {
    %cst = arith.constant 0.000000e+00 : bf16
    %0 = vector.broadcast %cst : bf16 to vector<2x48x192xbf16>
    %c0 = arith.constant 0 : index
    %c0_0 = arith.constant 0 : index
    %c0_1 = arith.constant 0 : index
    %1 = vector.load %arg26[%c0, %c0_0, %c0_1] : memref<20x48x192xbf16, #tpu.memory_space<vmem>>, vector<2x48x192xbf16>
    tpu.vector_store %arg26[%c0, %c0_0, %c0_1], %0 {strides = array<i32>} : memref<20x48x192xbf16, #tpu.memory_space<vmem>>, vector<2x48x192xbf16>,
    %cst_2 = arith.constant 0.000000e+00 : bf16
    %2 = vector.broadcast %cst_2 : bf16 to vector<2x48x192xbf16>
    %c18 = arith.constant 18 : index
    %c0_3 = arith.constant 0 : index
    %c0_4 = arith.constant 0 : index
    %3 = vector.load %arg26[%c18, %c0_3, %c0_4] : memref<20x48x192xbf16, #tpu.memory_space<vmem>>, vector<2x48x192xbf16>
    tpu.vector_store %arg26[%c18, %c0_3, %c0_4], %2 {strides = array<i32>} : memref<20x48x192xbf16, #tpu.memory_space<vmem>>, vector<2x48x192xbf16>,
    %cst_5 = arith.constant 0.000000e+00 : bf16
    %4 = vector.broadcast %cst_5 : bf16 to vector<20x16x192xbf16>
    %c0_6 = arith.constant 0 : index
    %c0_7 = arith.constant 0 : index
    %c0_8 = arith.constant 0 : index
    %5 = vector.load %arg26[%c0_6, %c0_7, %c0_8] : memref<20x48x192xbf16, #tpu.memory_space<vmem>>, vector<20x16x192xbf16>
    tpu.vector_store %arg26[%c0_6, %c0_7, %c0_8], %4 {strides = array<i32>} : memref<20x48x192xbf16, #tpu.memory_space<vmem>>, vector<20x16x192xbf16>,
    %cst_9 = arith.constant 0.000000e+00 : bf16
    %6 = vector.broadcast %cst_9 : bf16 to vector<20x16x192xbf16>
    %c0_10 = arith.constant 0 : index
    %c32 = arith.constant 32 : index
    %c0_11 = arith.constant 0 : index
    %7 = vector.load %arg26[%c0_10, %c32, %c0_11] : memref<20x48x192xbf16, #tpu.memory_space<vmem>>, vector<20x16x192xbf16>
    tpu.vector_store %arg26[%c0_10, %c32, %c0_11], %6 {strides = array<i32>} : memref<20x48x192xbf16, #tpu.memory_space<vmem>>, vector<20x16x192xbf16>,
    %c0_12 = arith.constant 0 : index
    %c0_13 = arith.constant 0 : index
    %8 = vector.load %arg2[%c0_12, %c0_13] : memref<32x192xbf16, #tpu.memory_space<vmem>>, vector<32x192xbf16>
    %c0_14 = arith.constant 0 : index
    %c0_15 = arith.constant 0 : index
    %9 = vector.load %arg3[%c0_14, %c0_15] : memref<1x192xf32, #tpu.memory_space<vmem>>, vector<1x192xf32>
    %c0_i32 = arith.constant 0 : i32
    %c2_i32 = arith.constant 2 : i32
    %10 = arith.addi %c0_i32, %c2_i32 : i32
    %c1_i32 = arith.constant 1 : i32
    scf.for %arg27 = %c0_i32 to %10 step %c1_i32  : i32 {
      %c128_i32 = arith.constant 128 : i32
      %73 = arith.muli %arg27, %c128_i32 : i32
      %74 = tpu.assume_multiple %73, 128 : i32
      %c0_86 = arith.constant 0 : index
      %75 = arith.index_cast %74 : i32 to index
      %c0_87 = arith.constant 0 : index
      %76 = vector.load %arg1[%c0_86, %75, %c0_87] : memref<1x256x32xf32, #tpu.memory_space<vmem>>, vector<1x128x32xf32>
      %77 = vector.shape_cast %76 : vector<1x128x32xf32> to vector<128x32xf32>
      %78 = arith.truncf %77 : vector<128x32xf32> to vector<128x32xbf16>
      %cst_88 = arith.constant dense<0.000000e+00> : vector<128x192xf32>
      %79 = tpu.matmul %78, %8, %cst_88 {dimension_numbers = #tpu.dot_dimension_numbers<[1], [0], [0], [1], [0, 0, 1, 1], [], []>} : vector<128x32xbf16>, vector<32x192xbf16>, vector<128x192xf32> -> vector<128x192xf32>
      %80 = vector.broadcast %9 : vector<1x192xf32> to vector<128x192xf32>
      %81 = arith.addf %79, %80 : vector<128x192xf32>
      %82 = arith.negf %81 : vector<128x192xf32>
      %83 = math.exp %82 : vector<128x192xf32>
      %cst_89 = arith.constant 1.000000e+00 : f32
      %84 = vector.broadcast %cst_89 : f32 to vector<128x192xf32>
      %85 = arith.addf %84, %83 : vector<128x192xf32>
      %86 = arith.divf %84, %85 : vector<128x192xf32>
      %87 = arith.mulf %81, %86 : vector<128x192xf32>
      %88 = arith.truncf %87 : vector<128x192xf32> to vector<128x192xbf16>
      %89 = vector.shape_cast %88 : vector<128x192xbf16> to vector<8x16x192xbf16>
      %c8_i32 = arith.constant 8 : i32
      %90 = arith.muli %arg27, %c8_i32 : i32
      %c2_i32_90 = arith.constant 2 : i32
      %91 = arith.addi %c2_i32_90, %90 : i32
      %92 = arith.index_cast %91 : i32 to index
      %c16 = arith.constant 16 : index
      %c0_91 = arith.constant 0 : index
      %93 = vector.load %arg26[%92, %c16, %c0_91] : memref<20x48x192xbf16, #tpu.memory_space<vmem>>, vector<8x16x192xbf16>
      tpu.vector_store %arg26[%92, %c16, %c0_91], %89 {strides = array<i32>} : memref<20x48x192xbf16, #tpu.memory_space<vmem>>, vector<8x16x192xbf16>,
    }
    %c2_i32_16 = arith.constant 2 : i32
    %c0_17 = arith.constant 0 : index
    %c0_18 = arith.constant 0 : index
    %11 = vector.load %arg5[%c0_17, %c0_18] : memref<1x192xf32, #tpu.memory_space<vmem>>, vector<1x192xf32>
    %cst_19 = arith.constant 0.000000e+00 : f32
    %12 = vector.broadcast %cst_19 : f32 to vector<1x192xf32>
    %c0_i32_20 = arith.constant 0 : i32
    %c4_i32 = arith.constant 4 : i32
    %13 = arith.addi %c0_i32_20, %c4_i32 : i32
    %c1_i32_21 = arith.constant 1 : i32
    %14 = scf.for %arg27 = %c0_i32_20 to %13 step %c1_i32_21 iter_args(%arg28 = %12) -> (vector<1x192xf32>)  : i32 {
      %c4_i32_86 = arith.constant 4 : i32
      %73 = arith.muli %arg27, %c4_i32_86 : i32
      %c0_i32_87 = arith.constant 0 : i32
      %74 = arith.addi %73, %c0_i32_87 : i32
      %75 = arith.index_cast %74 : i32 to index
      %c14 = arith.constant 14 : index
      %c0_88 = arith.constant 0 : index
      %76 = vector.load %arg26[%75, %c14, %c0_88] : memref<20x48x192xbf16, #tpu.memory_space<vmem>>, vector<4x16x192xbf16>
      %c0_89 = arith.constant 0 : index
      %c0_90 = arith.constant 0 : index
      %77 = vector.load %arg4[%c0_89, %c0_90] : memref<25x192xbf16, #tpu.memory_space<vmem>>, vector<1x192xbf16>
      %78 = vector.shape_cast %77 : vector<1x192xbf16> to vector<1x1x192xbf16>
      %79 = vector.broadcast %78 : vector<1x1x192xbf16> to vector<4x16x192xbf16>
      %80 = arith.mulf %76, %79 : vector<4x16x192xbf16>
      %c4_i32_91 = arith.constant 4 : i32
      %81 = arith.muli %arg27, %c4_i32_91 : i32
      %c0_i32_92 = arith.constant 0 : i32
      %82 = arith.addi %81, %c0_i32_92 : i32
      %83 = arith.index_cast %82 : i32 to index
      %c15 = arith.constant 15 : index
      %c0_93 = arith.constant 0 : index
      %84 = vector.load %arg26[%83, %c15, %c0_93] : memref<20x48x192xbf16, #tpu.memory_space<vmem>>, vector<4x16x192xbf16>
      %c1 = arith.constant 1 : index
      %c0_94 = arith.constant 0 : index
      %85 = vector.load %arg4[%c1, %c0_94] : memref<25x192xbf16, #tpu.memory_space<vmem>>, vector<1x192xbf16>
      %86 = vector.shape_cast %85 : vector<1x192xbf16> to vector<1x1x192xbf16>
      %87 = vector.broadcast %86 : vector<1x1x192xbf16> to vector<4x16x192xbf16>
      %88 = arith.mulf %84, %87 : vector<4x16x192xbf16>
      %89 = arith.addf %80, %88 : vector<4x16x192xbf16>
      %c4_i32_95 = arith.constant 4 : i32
      %90 = arith.muli %arg27, %c4_i32_95 : i32
      %c0_i32_96 = arith.constant 0 : i32
      %91 = arith.addi %90, %c0_i32_96 : i32
      %92 = arith.index_cast %91 : i32 to index
      %c16 = arith.constant 16 : index
      %c0_97 = arith.constant 0 : index
      %93 = vector.load %arg26[%92, %c16, %c0_97] : memref<20x48x192xbf16, #tpu.memory_space<vmem>>, vector<4x16x192xbf16>
      %c2 = arith.constant 2 : index
      %c0_98 = arith.constant 0 : index
      %94 = vector.load %arg4[%c2, %c0_98] : memref<25x192xbf16, #tpu.memory_space<vmem>>, vector<1x192xbf16>
      %95 = vector.shape_cast %94 : vector<1x192xbf16> to vector<1x1x192xbf16>
      %96 = vector.broadcast %95 : vector<1x1x192xbf16> to vector<4x16x192xbf16>
      %97 = arith.mulf %93, %96 : vector<4x16x192xbf16>
      %98 = arith.addf %89, %97 : vector<4x16x192xbf16>
      %c4_i32_99 = arith.constant 4 : i32
      %99 = arith.muli %arg27, %c4_i32_99 : i32
      %c0_i32_100 = arith.constant 0 : i32
      %100 = arith.addi %99, %c0_i32_100 : i32
      %101 = arith.index_cast %100 : i32 to index
      %c17 = arith.constant 17 : index
      %c0_101 = arith.constant 0 : index
      %102 = vector.load %arg26[%101, %c17, %c0_101] : memref<20x48x192xbf16, #tpu.memory_space<vmem>>, vector<4x16x192xbf16>
      %c3 = arith.constant 3 : index
      %c0_102 = arith.constant 0 : index
      %103 = vector.load %arg4[%c3, %c0_102] : memref<25x192xbf16, #tpu.memory_space<vmem>>, vector<1x192xbf16>
      %104 = vector.shape_cast %103 : vector<1x192xbf16> to vector<1x1x192xbf16>
      %105 = vector.broadcast %104 : vector<1x1x192xbf16> to vector<4x16x192xbf16>
      %106 = arith.mulf %102, %105 : vector<4x16x192xbf16>
      %107 = arith.addf %98, %106 : vector<4x16x192xbf16>
      %c4_i32_103 = arith.constant 4 : i32
      %108 = arith.muli %arg27, %c4_i32_103 : i32
      %c0_i32_104 = arith.constant 0 : i32
      %109 = arith.addi %108, %c0_i32_104 : i32
      %110 = arith.index_cast %109 : i32 to index
      %c18_105 = arith.constant 18 : index
      %c0_106 = arith.constant 0 : index
      %111 = vector.load %arg26[%110, %c18_105, %c0_106] : memref<20x48x192xbf16, #tpu.memory_space<vmem>>, vector<4x16x192xbf16>
      %c4 = arith.constant 4 : index
      %c0_107 = arith.constant 0 : index
      %112 = vector.load %arg4[%c4, %c0_107] : memref<25x192xbf16, #tpu.memory_space<vmem>>, vector<1x192xbf16>
      %113 = vector.shape_cast %112 : vector<1x192xbf16> to vector<1x1x192xbf16>
      %114 = vector.broadcast %113 : vector<1x1x192xbf16> to vector<4x16x192xbf16>
      %115 = arith.mulf %111, %114 : vector<4x16x192xbf16>
      %116 = arith.addf %107, %115 : vector<4x16x192xbf16>
      %117 = arith.extf %116 : vector<4x16x192xbf16> to vector<4x16x192xf32>
      %c4_i32_108 = arith.constant 4 : i32
      %118 = arith.muli %arg27, %c4_i32_108 : i32
      %c1_i32_109 = arith.constant 1 : i32
      %119 = arith.addi %118, %c1_i32_109 : i32
      %120 = arith.index_cast %119 : i32 to index
      %c14_110 = arith.constant 14 : index
      %c0_111 = arith.constant 0 : index
      %121 = vector.load %arg26[%120, %c14_110, %c0_111] : memref<20x48x192xbf16, #tpu.memory_space<vmem>>, vector<4x16x192xbf16>
      %c5 = arith.constant 5 : index
      %c0_112 = arith.constant 0 : index
      %122 = vector.load %arg4[%c5, %c0_112] : memref<25x192xbf16, #tpu.memory_space<vmem>>, vector<1x192xbf16>
      %123 = vector.shape_cast %122 : vector<1x192xbf16> to vector<1x1x192xbf16>
      %124 = vector.broadcast %123 : vector<1x1x192xbf16> to vector<4x16x192xbf16>
      %125 = arith.mulf %121, %124 : vector<4x16x192xbf16>
      %c4_i32_113 = arith.constant 4 : i32
      %126 = arith.muli %arg27, %c4_i32_113 : i32
      %c1_i32_114 = arith.constant 1 : i32
      %127 = arith.addi %126, %c1_i32_114 : i32
      %128 = arith.index_cast %127 : i32 to index
      %c15_115 = arith.constant 15 : index
      %c0_116 = arith.constant 0 : index
      %129 = vector.load %arg26[%128, %c15_115, %c0_116] : memref<20x48x192xbf16, #tpu.memory_space<vmem>>, vector<4x16x192xbf16>
      %c6 = arith.constant 6 : index
      %c0_117 = arith.constant 0 : index
      %130 = vector.load %arg4[%c6, %c0_117] : memref<25x192xbf16, #tpu.memory_space<vmem>>, vector<1x192xbf16>
      %131 = vector.shape_cast %130 : vector<1x192xbf16> to vector<1x1x192xbf16>
      %132 = vector.broadcast %131 : vector<1x1x192xbf16> to vector<4x16x192xbf16>
      %133 = arith.mulf %129, %132 : vector<4x16x192xbf16>
      %134 = arith.addf %125, %133 : vector<4x16x192xbf16>
      %c4_i32_118 = arith.constant 4 : i32
      %135 = arith.muli %arg27, %c4_i32_118 : i32
      %c1_i32_119 = arith.constant 1 : i32
      %136 = arith.addi %135, %c1_i32_119 : i32
      %137 = arith.index_cast %136 : i32 to index
      %c16_120 = arith.constant 16 : index
      %c0_121 = arith.constant 0 : index
      %138 = vector.load %arg26[%137, %c16_120, %c0_121] : memref<20x48x192xbf16, #tpu.memory_space<vmem>>, vector<4x16x192xbf16>
      %c7 = arith.constant 7 : index
      %c0_122 = arith.constant 0 : index
      %139 = vector.load %arg4[%c7, %c0_122] : memref<25x192xbf16, #tpu.memory_space<vmem>>, vector<1x192xbf16>
      %140 = vector.shape_cast %139 : vector<1x192xbf16> to vector<1x1x192xbf16>
      %141 = vector.broadcast %140 : vector<1x1x192xbf16> to vector<4x16x192xbf16>
      %142 = arith.mulf %138, %141 : vector<4x16x192xbf16>
      %143 = arith.addf %134, %142 : vector<4x16x192xbf16>
      %c4_i32_123 = arith.constant 4 : i32
      %144 = arith.muli %arg27, %c4_i32_123 : i32
      %c1_i32_124 = arith.constant 1 : i32
      %145 = arith.addi %144, %c1_i32_124 : i32
      %146 = arith.index_cast %145 : i32 to index
      %c17_125 = arith.constant 17 : index
      %c0_126 = arith.constant 0 : index
      %147 = vector.load %arg26[%146, %c17_125, %c0_126] : memref<20x48x192xbf16, #tpu.memory_space<vmem>>, vector<4x16x192xbf16>
      %c8 = arith.constant 8 : index
      %c0_127 = arith.constant 0 : index
      %148 = vector.load %arg4[%c8, %c0_127] : memref<25x192xbf16, #tpu.memory_space<vmem>>, vector<1x192xbf16>
      %149 = vector.shape_cast %148 : vector<1x192xbf16> to vector<1x1x192xbf16>
      %150 = vector.broadcast %149 : vector<1x1x192xbf16> to vector<4x16x192xbf16>
      %151 = arith.mulf %147, %150 : vector<4x16x192xbf16>
      %152 = arith.addf %143, %151 : vector<4x16x192xbf16>
      %c4_i32_128 = arith.constant 4 : i32
      %153 = arith.muli %arg27, %c4_i32_128 : i32
      %c1_i32_129 = arith.constant 1 : i32
      %154 = arith.addi %153, %c1_i32_129 : i32
      %155 = arith.index_cast %154 : i32 to index
      %c18_130 = arith.constant 18 : index
      %c0_131 = arith.constant 0 : index
      %156 = vector.load %arg26[%155, %c18_130, %c0_131] : memref<20x48x192xbf16, #tpu.memory_space<vmem>>, vector<4x16x192xbf16>
      %c9 = arith.constant 9 : index
      %c0_132 = arith.constant 0 : index
      %157 = vector.load %arg4[%c9, %c0_132] : memref<25x192xbf16, #tpu.memory_space<vmem>>, vector<1x192xbf16>
      %158 = vector.shape_cast %157 : vector<1x192xbf16> to vector<1x1x192xbf16>
      %159 = vector.broadcast %158 : vector<1x1x192xbf16> to vector<4x16x192xbf16>
      %160 = arith.mulf %156, %159 : vector<4x16x192xbf16>
      %161 = arith.addf %152, %160 : vector<4x16x192xbf16>
      %162 = arith.extf %161 : vector<4x16x192xbf16> to vector<4x16x192xf32>
      %163 = arith.addf %117, %162 : vector<4x16x192xf32>
      %c4_i32_133 = arith.constant 4 : i32
      %164 = arith.muli %arg27, %c4_i32_133 : i32
      %c2_i32_134 = arith.constant 2 : i32
      %165 = arith.addi %164, %c2_i32_134 : i32
      %166 = arith.index_cast %165 : i32 to index
      %c14_135 = arith.constant 14 : index
      %c0_136 = arith.constant 0 : index
      %167 = vector.load %arg26[%166, %c14_135, %c0_136] : memref<20x48x192xbf16, #tpu.memory_space<vmem>>, vector<4x16x192xbf16>
      %c10 = arith.constant 10 : index
      %c0_137 = arith.constant 0 : index
      %168 = vector.load %arg4[%c10, %c0_137] : memref<25x192xbf16, #tpu.memory_space<vmem>>, vector<1x192xbf16>
      %169 = vector.shape_cast %168 : vector<1x192xbf16> to vector<1x1x192xbf16>
      %170 = vector.broadcast %169 : vector<1x1x192xbf16> to vector<4x16x192xbf16>
      %171 = arith.mulf %167, %170 : vector<4x16x192xbf16>
      %c4_i32_138 = arith.constant 4 : i32
      %172 = arith.muli %arg27, %c4_i32_138 : i32
      %c2_i32_139 = arith.constant 2 : i32
      %173 = arith.addi %172, %c2_i32_139 : i32
      %174 = arith.index_cast %173 : i32 to index
      %c15_140 = arith.constant 15 : index
      %c0_141 = arith.constant 0 : index
      %175 = vector.load %arg26[%174, %c15_140, %c0_141] : memref<20x48x192xbf16, #tpu.memory_space<vmem>>, vector<4x16x192xbf16>
      %c11 = arith.constant 11 : index
      %c0_142 = arith.constant 0 : index
      %176 = vector.load %arg4[%c11, %c0_142] : memref<25x192xbf16, #tpu.memory_space<vmem>>, vector<1x192xbf16>
      %177 = vector.shape_cast %176 : vector<1x192xbf16> to vector<1x1x192xbf16>
      %178 = vector.broadcast %177 : vector<1x1x192xbf16> to vector<4x16x192xbf16>
      %179 = arith.mulf %175, %178 : vector<4x16x192xbf16>
      %180 = arith.addf %171, %179 : vector<4x16x192xbf16>
      %c4_i32_143 = arith.constant 4 : i32
      %181 = arith.muli %arg27, %c4_i32_143 : i32
      %c2_i32_144 = arith.constant 2 : i32
      %182 = arith.addi %181, %c2_i32_144 : i32
      %183 = arith.index_cast %182 : i32 to index
      %c16_145 = arith.constant 16 : index
      %c0_146 = arith.constant 0 : index
      %184 = vector.load %arg26[%183, %c16_145, %c0_146] : memref<20x48x192xbf16, #tpu.memory_space<vmem>>, vector<4x16x192xbf16>
      %c12 = arith.constant 12 : index
      %c0_147 = arith.constant 0 : index
      %185 = vector.load %arg4[%c12, %c0_147] : memref<25x192xbf16, #tpu.memory_space<vmem>>, vector<1x192xbf16>
      %186 = vector.shape_cast %185 : vector<1x192xbf16> to vector<1x1x192xbf16>
      %187 = vector.broadcast %186 : vector<1x1x192xbf16> to vector<4x16x192xbf16>
      %188 = arith.mulf %184, %187 : vector<4x16x192xbf16>
      %189 = arith.addf %180, %188 : vector<4x16x192xbf16>
      %c4_i32_148 = arith.constant 4 : i32
      %190 = arith.muli %arg27, %c4_i32_148 : i32
      %c2_i32_149 = arith.constant 2 : i32
      %191 = arith.addi %190, %c2_i32_149 : i32
      %192 = arith.index_cast %191 : i32 to index
      %c17_150 = arith.constant 17 : index
      %c0_151 = arith.constant 0 : index
      %193 = vector.load %arg26[%192, %c17_150, %c0_151] : memref<20x48x192xbf16, #tpu.memory_space<vmem>>, vector<4x16x192xbf16>
      %c13 = arith.constant 13 : index
      %c0_152 = arith.constant 0 : index
      %194 = vector.load %arg4[%c13, %c0_152] : memref<25x192xbf16, #tpu.memory_space<vmem>>, vector<1x192xbf16>
      %195 = vector.shape_cast %194 : vector<1x192xbf16> to vector<1x1x192xbf16>
      %196 = vector.broadcast %195 : vector<1x1x192xbf16> to vector<4x16x192xbf16>
      %197 = arith.mulf %193, %196 : vector<4x16x192xbf16>
      %198 = arith.addf %189, %197 : vector<4x16x192xbf16>
      %c4_i32_153 = arith.constant 4 : i32
      %199 = arith.muli %arg27, %c4_i32_153 : i32
      %c2_i32_154 = arith.constant 2 : i32
      %200 = arith.addi %199, %c2_i32_154 : i32
      %201 = arith.index_cast %200 : i32 to index
      %c18_155 = arith.constant 18 : index
      %c0_156 = arith.constant 0 : index
      %202 = vector.load %arg26[%201, %c18_155, %c0_156] : memref<20x48x192xbf16, #tpu.memory_space<vmem>>, vector<4x16x192xbf16>
      %c14_157 = arith.constant 14 : index
      %c0_158 = arith.constant 0 : index
      %203 = vector.load %arg4[%c14_157, %c0_158] : memref<25x192xbf16, #tpu.memory_space<vmem>>, vector<1x192xbf16>
      %204 = vector.shape_cast %203 : vector<1x192xbf16> to vector<1x1x192xbf16>
      %205 = vector.broadcast %204 : vector<1x1x192xbf16> to vector<4x16x192xbf16>
      %206 = arith.mulf %202, %205 : vector<4x16x192xbf16>
      %207 = arith.addf %198, %206 : vector<4x16x192xbf16>
      %208 = arith.extf %207 : vector<4x16x192xbf16> to vector<4x16x192xf32>
      %209 = arith.addf %163, %208 : vector<4x16x192xf32>
      %c4_i32_159 = arith.constant 4 : i32
      %210 = arith.muli %arg27, %c4_i32_159 : i32
      %c3_i32 = arith.constant 3 : i32
      %211 = arith.addi %210, %c3_i32 : i32
      %212 = arith.index_cast %211 : i32 to index
      %c14_160 = arith.constant 14 : index
      %c0_161 = arith.constant 0 : index
      %213 = vector.load %arg26[%212, %c14_160, %c0_161] : memref<20x48x192xbf16, #tpu.memory_space<vmem>>, vector<4x16x192xbf16>
      %c15_162 = arith.constant 15 : index
      %c0_163 = arith.constant 0 : index
      %214 = vector.load %arg4[%c15_162, %c0_163] : memref<25x192xbf16, #tpu.memory_space<vmem>>, vector<1x192xbf16>
      %215 = vector.shape_cast %214 : vector<1x192xbf16> to vector<1x1x192xbf16>
      %216 = vector.broadcast %215 : vector<1x1x192xbf16> to vector<4x16x192xbf16>
      %217 = arith.mulf %213, %216 : vector<4x16x192xbf16>
      %c4_i32_164 = arith.constant 4 : i32
      %218 = arith.muli %arg27, %c4_i32_164 : i32
      %c3_i32_165 = arith.constant 3 : i32
      %219 = arith.addi %218, %c3_i32_165 : i32
      %220 = arith.index_cast %219 : i32 to index
      %c15_166 = arith.constant 15 : index
      %c0_167 = arith.constant 0 : index
      %221 = vector.load %arg26[%220, %c15_166, %c0_167] : memref<20x48x192xbf16, #tpu.memory_space<vmem>>, vector<4x16x192xbf16>
      %c16_168 = arith.constant 16 : index
      %c0_169 = arith.constant 0 : index
      %222 = vector.load %arg4[%c16_168, %c0_169] : memref<25x192xbf16, #tpu.memory_space<vmem>>, vector<1x192xbf16>
      %223 = vector.shape_cast %222 : vector<1x192xbf16> to vector<1x1x192xbf16>
      %224 = vector.broadcast %223 : vector<1x1x192xbf16> to vector<4x16x192xbf16>
      %225 = arith.mulf %221, %224 : vector<4x16x192xbf16>
      %226 = arith.addf %217, %225 : vector<4x16x192xbf16>
      %c4_i32_170 = arith.constant 4 : i32
      %227 = arith.muli %arg27, %c4_i32_170 : i32
      %c3_i32_171 = arith.constant 3 : i32
      %228 = arith.addi %227, %c3_i32_171 : i32
      %229 = arith.index_cast %228 : i32 to index
      %c16_172 = arith.constant 16 : index
      %c0_173 = arith.constant 0 : index
      %230 = vector.load %arg26[%229, %c16_172, %c0_173] : memref<20x48x192xbf16, #tpu.memory_space<vmem>>, vector<4x16x192xbf16>
      %c17_174 = arith.constant 17 : index
      %c0_175 = arith.constant 0 : index
      %231 = vector.load %arg4[%c17_174, %c0_175] : memref<25x192xbf16, #tpu.memory_space<vmem>>, vector<1x192xbf16>
      %232 = vector.shape_cast %231 : vector<1x192xbf16> to vector<1x1x192xbf16>
      %233 = vector.broadcast %232 : vector<1x1x192xbf16> to vector<4x16x192xbf16>
      %234 = arith.mulf %230, %233 : vector<4x16x192xbf16>
      %235 = arith.addf %226, %234 : vector<4x16x192xbf16>
      %c4_i32_176 = arith.constant 4 : i32
      %236 = arith.muli %arg27, %c4_i32_176 : i32
      %c3_i32_177 = arith.constant 3 : i32
      %237 = arith.addi %236, %c3_i32_177 : i32
      %238 = arith.index_cast %237 : i32 to index
      %c17_178 = arith.constant 17 : index
      %c0_179 = arith.constant 0 : index
      %239 = vector.load %arg26[%238, %c17_178, %c0_179] : memref<20x48x192xbf16, #tpu.memory_space<vmem>>, vector<4x16x192xbf16>
      %c18_180 = arith.constant 18 : index
      %c0_181 = arith.constant 0 : index
      %240 = vector.load %arg4[%c18_180, %c0_181] : memref<25x192xbf16, #tpu.memory_space<vmem>>, vector<1x192xbf16>
      %241 = vector.shape_cast %240 : vector<1x192xbf16> to vector<1x1x192xbf16>
      %242 = vector.broadcast %241 : vector<1x1x192xbf16> to vector<4x16x192xbf16>
      %243 = arith.mulf %239, %242 : vector<4x16x192xbf16>
      %244 = arith.addf %235, %243 : vector<4x16x192xbf16>
      %c4_i32_182 = arith.constant 4 : i32
      %245 = arith.muli %arg27, %c4_i32_182 : i32
      %c3_i32_183 = arith.constant 3 : i32
      %246 = arith.addi %245, %c3_i32_183 : i32
      %247 = arith.index_cast %246 : i32 to index
      %c18_184 = arith.constant 18 : index
      %c0_185 = arith.constant 0 : index
      %248 = vector.load %arg26[%247, %c18_184, %c0_185] : memref<20x48x192xbf16, #tpu.memory_space<vmem>>, vector<4x16x192xbf16>
      %c19 = arith.constant 19 : index
      %c0_186 = arith.constant 0 : index
      %249 = vector.load %arg4[%c19, %c0_186] : memref<25x192xbf16, #tpu.memory_space<vmem>>, vector<1x192xbf16>
      %250 = vector.shape_cast %249 : vector<1x192xbf16> to vector<1x1x192xbf16>
      %251 = vector.broadcast %250 : vector<1x1x192xbf16> to vector<4x16x192xbf16>
      %252 = arith.mulf %248, %251 : vector<4x16x192xbf16>
      %253 = arith.addf %244, %252 : vector<4x16x192xbf16>
      %254 = arith.extf %253 : vector<4x16x192xbf16> to vector<4x16x192xf32>
      %255 = arith.addf %209, %254 : vector<4x16x192xf32>
      %c4_i32_187 = arith.constant 4 : i32
      %256 = arith.muli %arg27, %c4_i32_187 : i32
      %c4_i32_188 = arith.constant 4 : i32
      %257 = arith.addi %256, %c4_i32_188 : i32
      %258 = arith.index_cast %257 : i32 to index
      %c14_189 = arith.constant 14 : index
      %c0_190 = arith.constant 0 : index
      %259 = vector.load %arg26[%258, %c14_189, %c0_190] : memref<20x48x192xbf16, #tpu.memory_space<vmem>>, vector<4x16x192xbf16>
      %c20 = arith.constant 20 : index
      %c0_191 = arith.constant 0 : index
      %260 = vector.load %arg4[%c20, %c0_191] : memref<25x192xbf16, #tpu.memory_space<vmem>>, vector<1x192xbf16>
      %261 = vector.shape_cast %260 : vector<1x192xbf16> to vector<1x1x192xbf16>
      %262 = vector.broadcast %261 : vector<1x1x192xbf16> to vector<4x16x192xbf16>
      %263 = arith.mulf %259, %262 : vector<4x16x192xbf16>
      %c4_i32_192 = arith.constant 4 : i32
      %264 = arith.muli %arg27, %c4_i32_192 : i32
      %c4_i32_193 = arith.constant 4 : i32
      %265 = arith.addi %264, %c4_i32_193 : i32
      %266 = arith.index_cast %265 : i32 to index
      %c15_194 = arith.constant 15 : index
      %c0_195 = arith.constant 0 : index
      %267 = vector.load %arg26[%266, %c15_194, %c0_195] : memref<20x48x192xbf16, #tpu.memory_space<vmem>>, vector<4x16x192xbf16>
      %c21 = arith.constant 21 : index
      %c0_196 = arith.constant 0 : index
      %268 = vector.load %arg4[%c21, %c0_196] : memref<25x192xbf16, #tpu.memory_space<vmem>>, vector<1x192xbf16>
      %269 = vector.shape_cast %268 : vector<1x192xbf16> to vector<1x1x192xbf16>
      %270 = vector.broadcast %269 : vector<1x1x192xbf16> to vector<4x16x192xbf16>
      %271 = arith.mulf %267, %270 : vector<4x16x192xbf16>
      %272 = arith.addf %263, %271 : vector<4x16x192xbf16>
      %c4_i32_197 = arith.constant 4 : i32
      %273 = arith.muli %arg27, %c4_i32_197 : i32
      %c4_i32_198 = arith.constant 4 : i32
      %274 = arith.addi %273, %c4_i32_198 : i32
      %275 = arith.index_cast %274 : i32 to index
      %c16_199 = arith.constant 16 : index
      %c0_200 = arith.constant 0 : index
      %276 = vector.load %arg26[%275, %c16_199, %c0_200] : memref<20x48x192xbf16, #tpu.memory_space<vmem>>, vector<4x16x192xbf16>
      %c22 = arith.constant 22 : index
      %c0_201 = arith.constant 0 : index
      %277 = vector.load %arg4[%c22, %c0_201] : memref<25x192xbf16, #tpu.memory_space<vmem>>, vector<1x192xbf16>
      %278 = vector.shape_cast %277 : vector<1x192xbf16> to vector<1x1x192xbf16>
      %279 = vector.broadcast %278 : vector<1x1x192xbf16> to vector<4x16x192xbf16>
      %280 = arith.mulf %276, %279 : vector<4x16x192xbf16>
      %281 = arith.addf %272, %280 : vector<4x16x192xbf16>
      %c4_i32_202 = arith.constant 4 : i32
      %282 = arith.muli %arg27, %c4_i32_202 : i32
      %c4_i32_203 = arith.constant 4 : i32
      %283 = arith.addi %282, %c4_i32_203 : i32
      %284 = arith.index_cast %283 : i32 to index
      %c17_204 = arith.constant 17 : index
      %c0_205 = arith.constant 0 : index
      %285 = vector.load %arg26[%284, %c17_204, %c0_205] : memref<20x48x192xbf16, #tpu.memory_space<vmem>>, vector<4x16x192xbf16>
      %c23 = arith.constant 23 : index
      %c0_206 = arith.constant 0 : index
      %286 = vector.load %arg4[%c23, %c0_206] : memref<25x192xbf16, #tpu.memory_space<vmem>>, vector<1x192xbf16>
      %287 = vector.shape_cast %286 : vector<1x192xbf16> to vector<1x1x192xbf16>
      %288 = vector.broadcast %287 : vector<1x1x192xbf16> to vector<4x16x192xbf16>
      %289 = arith.mulf %285, %288 : vector<4x16x192xbf16>
      %290 = arith.addf %281, %289 : vector<4x16x192xbf16>
      %c4_i32_207 = arith.constant 4 : i32
      %291 = arith.muli %arg27, %c4_i32_207 : i32
      %c4_i32_208 = arith.constant 4 : i32
      %292 = arith.addi %291, %c4_i32_208 : i32
      %293 = arith.index_cast %292 : i32 to index
      %c18_209 = arith.constant 18 : index
      %c0_210 = arith.constant 0 : index
      %294 = vector.load %arg26[%293, %c18_209, %c0_210] : memref<20x48x192xbf16, #tpu.memory_space<vmem>>, vector<4x16x192xbf16>
      %c24 = arith.constant 24 : index
      %c0_211 = arith.constant 0 : index
      %295 = vector.load %arg4[%c24, %c0_211] : memref<25x192xbf16, #tpu.memory_space<vmem>>, vector<1x192xbf16>
      %296 = vector.shape_cast %295 : vector<1x192xbf16> to vector<1x1x192xbf16>
      %297 = vector.broadcast %296 : vector<1x1x192xbf16> to vector<4x16x192xbf16>
      %298 = arith.mulf %294, %297 : vector<4x16x192xbf16>
      %299 = arith.addf %290, %298 : vector<4x16x192xbf16>
      %300 = arith.extf %299 : vector<4x16x192xbf16> to vector<4x16x192xf32>
      %301 = arith.addf %255, %300 : vector<4x16x192xf32>
      %302 = vector.shape_cast %301 : vector<4x16x192xf32> to vector<64x192xf32>
      %303 = vector.broadcast %11 : vector<1x192xf32> to vector<64x192xf32>
      %304 = arith.addf %302, %303 : vector<64x192xf32>
      %305 = arith.negf %304 : vector<64x192xf32>
      %306 = math.exp %305 : vector<64x192xf32>
      %cst_212 = arith.constant 1.000000e+00 : f32
      %307 = vector.broadcast %cst_212 : f32 to vector<64x192xf32>
      %308 = arith.addf %307, %306 : vector<64x192xf32>
      %309 = arith.divf %307, %308 : vector<64x192xf32>
      %310 = arith.mulf %304, %309 : vector<64x192xf32>
      %c64_i32 = arith.constant 64 : i32
      %311 = arith.muli %arg27, %c64_i32 : i32
      %312 = tpu.assume_multiple %311, 64 : i32
      %313 = arith.truncf %310 : vector<64x192xf32> to vector<64x192xbf16>
      %314 = arith.index_cast %312 : i32 to index
      %c0_213 = arith.constant 0 : index
      %315 = vector.load %arg25[%314, %c0_213] : memref<256x192xbf16, #tpu.memory_space<vmem>>, vector<64x192xbf16>
      tpu.vector_store %arg25[%314, %c0_213], %313 {strides = array<i32>} : memref<256x192xbf16, #tpu.memory_space<vmem>>, vector<64x192xbf16>,
      %cst_214 = arith.constant dense<0.000000e+00> : vector<192xf32>
      %316 = vector.multi_reduction <add>, %310, %cst_214 [0] : vector<64x192xf32> to vector<192xf32>
      %317 = vector.shape_cast %316 : vector<192xf32> to vector<1x192xf32>
      %318 = arith.addf %arg28, %317 : vector<1x192xf32>
      scf.yield %318 : vector<1x192xf32>
    }
    %c4_i32_22 = arith.constant 4 : i32
    %c0_23 = arith.constant 0 : index
    %c0_24 = arith.constant 0 : index
    %15 = vector.load %arg6[%c0_23, %c0_24] : memref<192x32xbf16, #tpu.memory_space<vmem>>, vector<192x32xbf16>
    %c0_25 = arith.constant 0 : index
    %c0_26 = arith.constant 0 : index
    %16 = vector.load %arg7[%c0_25, %c0_26] : memref<1x32xf32, #tpu.memory_space<vmem>>, vector<1x32xf32>
    %cst_27 = arith.constant 3.906250e-03 : f32
    %17 = vector.broadcast %cst_27 : f32 to vector<1x192xf32>
    %18 = arith.mulf %14, %17 : vector<1x192xf32>
    %19 = arith.truncf %18 : vector<1x192xf32> to vector<1x192xbf16>
    %cst_28 = arith.constant dense<0.000000e+00> : vector<1x32xf32>
    %20 = tpu.matmul %19, %15, %cst_28 {dimension_numbers = #tpu.dot_dimension_numbers<[1], [0], [0], [1], [0, 0, 1, 1], [], []>} : vector<1x192xbf16>, vector<192x32xbf16>, vector<1x32xf32> -> vector<1x32xf32>
    %21 = arith.addf %20, %16 : vector<1x32xf32>
    %c0_29 = arith.constant 0 : index
    %c0_30 = arith.constant 0 : index
    %22 = vector.load %arg8[%c0_29, %c0_30] : memref<32x4xf32, #tpu.memory_space<vmem>>, vector<32x4xf32>
    %cst_31 = arith.constant dense<0.000000e+00> : vector<1x4xf32>
    %23 = tpu.matmul %21, %22, %cst_31 {dimension_numbers = #tpu.dot_dimension_numbers<[1], [0], [0], [1], [0, 0, 1, 1], [], []>} : vector<1x32xf32>, vector<32x4xf32>, vector<1x4xf32> -> vector<1x4xf32>
    %c0_32 = arith.constant 0 : index
    %c0_33 = arith.constant 0 : index
    %24 = vector.load %arg9[%c0_32, %c0_33] : memref<1x4xf32, #tpu.memory_space<vmem>>, vector<1x4xf32>
    %25 = arith.addf %23, %24 : vector<1x4xf32>
    %cst_34 = arith.constant 0.000000e+00 : f32
    %26 = vector.broadcast %cst_34 : f32 to vector<1x4xf32>
    %27 = arith.maximumf %25, %26 : vector<1x4xf32>
    %c0_35 = arith.constant 0 : index
    %c0_36 = arith.constant 0 : index
    %28 = vector.load %arg10[%c0_35, %c0_36] : memref<4x32xf32, #tpu.memory_space<vmem>>, vector<4x32xf32>
    %cst_37 = arith.constant dense<0.000000e+00> : vector<1x32xf32>
    %29 = tpu.matmul %27, %28, %cst_37 {dimension_numbers = #tpu.dot_dimension_numbers<[1], [0], [0], [1], [0, 0, 1, 1], [], []>} : vector<1x4xf32>, vector<4x32xf32>, vector<1x32xf32> -> vector<1x32xf32>
    %c0_38 = arith.constant 0 : index
    %c0_39 = arith.constant 0 : index
    %30 = vector.load %arg11[%c0_38, %c0_39] : memref<1x32xf32, #tpu.memory_space<vmem>>, vector<1x32xf32>
    %31 = arith.addf %29, %30 : vector<1x32xf32>
    %32 = arith.negf %31 : vector<1x32xf32>
    %33 = math.exp %32 : vector<1x32xf32>
    %cst_40 = arith.constant 1.000000e+00 : f32
    %34 = vector.broadcast %cst_40 : f32 to vector<1x32xf32>
    %35 = arith.addf %34, %33 : vector<1x32xf32>
    %36 = arith.divf %34, %35 : vector<1x32xf32>
    %cst_41 = arith.constant 1.000000e-01 : f32
    %37 = vector.broadcast %cst_41 : f32 to vector<1x32xf32>
    %38 = arith.mulf %36, %37 : vector<1x32xf32>
    %c0_i32_42 = arith.constant 0 : i32
    %c2_i32_43 = arith.constant 2 : i32
    %39 = arith.addi %c0_i32_42, %c2_i32_43 : i32
    %c1_i32_44 = arith.constant 1 : i32
    scf.for %arg27 = %c0_i32_42 to %39 step %c1_i32_44  : i32 {
      %c128_i32 = arith.constant 128 : i32
      %73 = arith.muli %arg27, %c128_i32 : i32
      %74 = tpu.assume_multiple %73, 128 : i32
      %75 = arith.index_cast %74 : i32 to index
      %c0_86 = arith.constant 0 : index
      %76 = vector.load %arg25[%75, %c0_86] : memref<256x192xbf16, #tpu.memory_space<vmem>>, vector<128x192xbf16>
      %cst_87 = arith.constant dense<0.000000e+00> : vector<128x32xf32>
      %77 = tpu.matmul %76, %15, %cst_87 {dimension_numbers = #tpu.dot_dimension_numbers<[1], [0], [0], [1], [0, 0, 1, 1], [], []>} : vector<128x192xbf16>, vector<192x32xbf16>, vector<128x32xf32> -> vector<128x32xf32>
      %78 = vector.broadcast %16 : vector<1x32xf32> to vector<128x32xf32>
      %79 = arith.addf %77, %78 : vector<128x32xf32>
      %c0_88 = arith.constant 0 : index
      %80 = arith.index_cast %74 : i32 to index
      %c0_89 = arith.constant 0 : index
      %81 = vector.load %arg1[%c0_88, %80, %c0_89] : memref<1x256x32xf32, #tpu.memory_space<vmem>>, vector<1x128x32xf32>
      %82 = vector.shape_cast %81 : vector<1x128x32xf32> to vector<128x32xf32>
      %83 = vector.broadcast %38 : vector<1x32xf32> to vector<128x32xf32>
      %84 = arith.mulf %83, %79 : vector<128x32xf32>
      %85 = arith.addf %82, %84 : vector<128x32xf32>
      %86 = arith.index_cast %74 : i32 to index
      %c0_90 = arith.constant 0 : index
      %87 = vector.load %arg24[%86, %c0_90] : memref<256x32xf32, #tpu.memory_space<vmem>>, vector<128x32xf32>
      tpu.vector_store %arg24[%86, %c0_90], %85 {strides = array<i32>} : memref<256x32xf32, #tpu.memory_space<vmem>>, vector<128x32xf32>,
    }
    %c2_i32_45 = arith.constant 2 : i32
    %c0_46 = arith.constant 0 : index
    %c0_47 = arith.constant 0 : index
    %40 = vector.load %arg12[%c0_46, %c0_47] : memref<32x192xbf16, #tpu.memory_space<vmem>>, vector<32x192xbf16>
    %c0_48 = arith.constant 0 : index
    %c0_49 = arith.constant 0 : index
    %41 = vector.load %arg13[%c0_48, %c0_49] : memref<1x192xf32, #tpu.memory_space<vmem>>, vector<1x192xf32>
    %c0_i32_50 = arith.constant 0 : i32
    %c2_i32_51 = arith.constant 2 : i32
    %42 = arith.addi %c0_i32_50, %c2_i32_51 : i32
    %c1_i32_52 = arith.constant 1 : i32
    scf.for %arg27 = %c0_i32_50 to %42 step %c1_i32_52  : i32 {
      %c128_i32 = arith.constant 128 : i32
      %73 = arith.muli %arg27, %c128_i32 : i32
      %74 = tpu.assume_multiple %73, 128 : i32
      %75 = arith.index_cast %74 : i32 to index
      %c0_86 = arith.constant 0 : index
      %76 = vector.load %arg24[%75, %c0_86] : memref<256x32xf32, #tpu.memory_space<vmem>>, vector<128x32xf32>
      %77 = arith.truncf %76 : vector<128x32xf32> to vector<128x32xbf16>
      %cst_87 = arith.constant dense<0.000000e+00> : vector<128x192xf32>
      %78 = tpu.matmul %77, %40, %cst_87 {dimension_numbers = #tpu.dot_dimension_numbers<[1], [0], [0], [1], [0, 0, 1, 1], [], []>} : vector<128x32xbf16>, vector<32x192xbf16>, vector<128x192xf32> -> vector<128x192xf32>
      %79 = vector.broadcast %41 : vector<1x192xf32> to vector<128x192xf32>
      %80 = arith.addf %78, %79 : vector<128x192xf32>
      %81 = arith.negf %80 : vector<128x192xf32>
      %82 = math.exp %81 : vector<128x192xf32>
      %cst_88 = arith.constant 1.000000e+00 : f32
      %83 = vector.broadcast %cst_88 : f32 to vector<128x192xf32>
      %84 = arith.addf %83, %82 : vector<128x192xf32>
      %85 = arith.divf %83, %84 : vector<128x192xf32>
      %86 = arith.mulf %80, %85 : vector<128x192xf32>
      %87 = arith.truncf %86 : vector<128x192xf32> to vector<128x192xbf16>
      %88 = vector.shape_cast %87 : vector<128x192xbf16> to vector<8x16x192xbf16>
      %c8_i32 = arith.constant 8 : i32
      %89 = arith.muli %arg27, %c8_i32 : i32
      %c2_i32_89 = arith.constant 2 : i32
      %90 = arith.addi %c2_i32_89, %89 : i32
      %91 = arith.index_cast %90 : i32 to index
      %c16 = arith.constant 16 : index
      %c0_90 = arith.constant 0 : index
      %92 = vector.load %arg26[%91, %c16, %c0_90] : memref<20x48x192xbf16, #tpu.memory_space<vmem>>, vector<8x16x192xbf16>
      tpu.vector_store %arg26[%91, %c16, %c0_90], %88 {strides = array<i32>} : memref<20x48x192xbf16, #tpu.memory_space<vmem>>, vector<8x16x192xbf16>,
    }
    %c2_i32_53 = arith.constant 2 : i32
    %c0_54 = arith.constant 0 : index
    %c0_55 = arith.constant 0 : index
    %43 = vector.load %arg15[%c0_54, %c0_55] : memref<1x192xf32, #tpu.memory_space<vmem>>, vector<1x192xf32>
    %cst_56 = arith.constant 0.000000e+00 : f32
    %44 = vector.broadcast %cst_56 : f32 to vector<1x192xf32>
    %c0_i32_57 = arith.constant 0 : i32
    %c4_i32_58 = arith.constant 4 : i32
    %45 = arith.addi %c0_i32_57, %c4_i32_58 : i32
    %c1_i32_59 = arith.constant 1 : i32
    %46 = scf.for %arg27 = %c0_i32_57 to %45 step %c1_i32_59 iter_args(%arg28 = %44) -> (vector<1x192xf32>)  : i32 {
      %c4_i32_86 = arith.constant 4 : i32
      %73 = arith.muli %arg27, %c4_i32_86 : i32
      %c0_i32_87 = arith.constant 0 : i32
      %74 = arith.addi %73, %c0_i32_87 : i32
      %75 = arith.index_cast %74 : i32 to index
      %c14 = arith.constant 14 : index
      %c0_88 = arith.constant 0 : index
      %76 = vector.load %arg26[%75, %c14, %c0_88] : memref<20x48x192xbf16, #tpu.memory_space<vmem>>, vector<4x16x192xbf16>
      %c0_89 = arith.constant 0 : index
      %c0_90 = arith.constant 0 : index
      %77 = vector.load %arg14[%c0_89, %c0_90] : memref<25x192xbf16, #tpu.memory_space<vmem>>, vector<1x192xbf16>
      %78 = vector.shape_cast %77 : vector<1x192xbf16> to vector<1x1x192xbf16>
      %79 = vector.broadcast %78 : vector<1x1x192xbf16> to vector<4x16x192xbf16>
      %80 = arith.mulf %76, %79 : vector<4x16x192xbf16>
      %c4_i32_91 = arith.constant 4 : i32
      %81 = arith.muli %arg27, %c4_i32_91 : i32
      %c0_i32_92 = arith.constant 0 : i32
      %82 = arith.addi %81, %c0_i32_92 : i32
      %83 = arith.index_cast %82 : i32 to index
      %c15 = arith.constant 15 : index
      %c0_93 = arith.constant 0 : index
      %84 = vector.load %arg26[%83, %c15, %c0_93] : memref<20x48x192xbf16, #tpu.memory_space<vmem>>, vector<4x16x192xbf16>
      %c1 = arith.constant 1 : index
      %c0_94 = arith.constant 0 : index
      %85 = vector.load %arg14[%c1, %c0_94] : memref<25x192xbf16, #tpu.memory_space<vmem>>, vector<1x192xbf16>
      %86 = vector.shape_cast %85 : vector<1x192xbf16> to vector<1x1x192xbf16>
      %87 = vector.broadcast %86 : vector<1x1x192xbf16> to vector<4x16x192xbf16>
      %88 = arith.mulf %84, %87 : vector<4x16x192xbf16>
      %89 = arith.addf %80, %88 : vector<4x16x192xbf16>
      %c4_i32_95 = arith.constant 4 : i32
      %90 = arith.muli %arg27, %c4_i32_95 : i32
      %c0_i32_96 = arith.constant 0 : i32
      %91 = arith.addi %90, %c0_i32_96 : i32
      %92 = arith.index_cast %91 : i32 to index
      %c16 = arith.constant 16 : index
      %c0_97 = arith.constant 0 : index
      %93 = vector.load %arg26[%92, %c16, %c0_97] : memref<20x48x192xbf16, #tpu.memory_space<vmem>>, vector<4x16x192xbf16>
      %c2 = arith.constant 2 : index
      %c0_98 = arith.constant 0 : index
      %94 = vector.load %arg14[%c2, %c0_98] : memref<25x192xbf16, #tpu.memory_space<vmem>>, vector<1x192xbf16>
      %95 = vector.shape_cast %94 : vector<1x192xbf16> to vector<1x1x192xbf16>
      %96 = vector.broadcast %95 : vector<1x1x192xbf16> to vector<4x16x192xbf16>
      %97 = arith.mulf %93, %96 : vector<4x16x192xbf16>
      %98 = arith.addf %89, %97 : vector<4x16x192xbf16>
      %c4_i32_99 = arith.constant 4 : i32
      %99 = arith.muli %arg27, %c4_i32_99 : i32
      %c0_i32_100 = arith.constant 0 : i32
      %100 = arith.addi %99, %c0_i32_100 : i32
      %101 = arith.index_cast %100 : i32 to index
      %c17 = arith.constant 17 : index
      %c0_101 = arith.constant 0 : index
      %102 = vector.load %arg26[%101, %c17, %c0_101] : memref<20x48x192xbf16, #tpu.memory_space<vmem>>, vector<4x16x192xbf16>
      %c3 = arith.constant 3 : index
      %c0_102 = arith.constant 0 : index
      %103 = vector.load %arg14[%c3, %c0_102] : memref<25x192xbf16, #tpu.memory_space<vmem>>, vector<1x192xbf16>
      %104 = vector.shape_cast %103 : vector<1x192xbf16> to vector<1x1x192xbf16>
      %105 = vector.broadcast %104 : vector<1x1x192xbf16> to vector<4x16x192xbf16>
      %106 = arith.mulf %102, %105 : vector<4x16x192xbf16>
      %107 = arith.addf %98, %106 : vector<4x16x192xbf16>
      %c4_i32_103 = arith.constant 4 : i32
      %108 = arith.muli %arg27, %c4_i32_103 : i32
      %c0_i32_104 = arith.constant 0 : i32
      %109 = arith.addi %108, %c0_i32_104 : i32
      %110 = arith.index_cast %109 : i32 to index
      %c18_105 = arith.constant 18 : index
      %c0_106 = arith.constant 0 : index
      %111 = vector.load %arg26[%110, %c18_105, %c0_106] : memref<20x48x192xbf16, #tpu.memory_space<vmem>>, vector<4x16x192xbf16>
      %c4 = arith.constant 4 : index
      %c0_107 = arith.constant 0 : index
      %112 = vector.load %arg14[%c4, %c0_107] : memref<25x192xbf16, #tpu.memory_space<vmem>>, vector<1x192xbf16>
      %113 = vector.shape_cast %112 : vector<1x192xbf16> to vector<1x1x192xbf16>
      %114 = vector.broadcast %113 : vector<1x1x192xbf16> to vector<4x16x192xbf16>
      %115 = arith.mulf %111, %114 : vector<4x16x192xbf16>
      %116 = arith.addf %107, %115 : vector<4x16x192xbf16>
      %117 = arith.extf %116 : vector<4x16x192xbf16> to vector<4x16x192xf32>
      %c4_i32_108 = arith.constant 4 : i32
      %118 = arith.muli %arg27, %c4_i32_108 : i32
      %c1_i32_109 = arith.constant 1 : i32
      %119 = arith.addi %118, %c1_i32_109 : i32
      %120 = arith.index_cast %119 : i32 to index
      %c14_110 = arith.constant 14 : index
      %c0_111 = arith.constant 0 : index
      %121 = vector.load %arg26[%120, %c14_110, %c0_111] : memref<20x48x192xbf16, #tpu.memory_space<vmem>>, vector<4x16x192xbf16>
      %c5 = arith.constant 5 : index
      %c0_112 = arith.constant 0 : index
      %122 = vector.load %arg14[%c5, %c0_112] : memref<25x192xbf16, #tpu.memory_space<vmem>>, vector<1x192xbf16>
      %123 = vector.shape_cast %122 : vector<1x192xbf16> to vector<1x1x192xbf16>
      %124 = vector.broadcast %123 : vector<1x1x192xbf16> to vector<4x16x192xbf16>
      %125 = arith.mulf %121, %124 : vector<4x16x192xbf16>
      %c4_i32_113 = arith.constant 4 : i32
      %126 = arith.muli %arg27, %c4_i32_113 : i32
      %c1_i32_114 = arith.constant 1 : i32
      %127 = arith.addi %126, %c1_i32_114 : i32
      %128 = arith.index_cast %127 : i32 to index
      %c15_115 = arith.constant 15 : index
      %c0_116 = arith.constant 0 : index
      %129 = vector.load %arg26[%128, %c15_115, %c0_116] : memref<20x48x192xbf16, #tpu.memory_space<vmem>>, vector<4x16x192xbf16>
      %c6 = arith.constant 6 : index
      %c0_117 = arith.constant 0 : index
      %130 = vector.load %arg14[%c6, %c0_117] : memref<25x192xbf16, #tpu.memory_space<vmem>>, vector<1x192xbf16>
      %131 = vector.shape_cast %130 : vector<1x192xbf16> to vector<1x1x192xbf16>
      %132 = vector.broadcast %131 : vector<1x1x192xbf16> to vector<4x16x192xbf16>
      %133 = arith.mulf %129, %132 : vector<4x16x192xbf16>
      %134 = arith.addf %125, %133 : vector<4x16x192xbf16>
      %c4_i32_118 = arith.constant 4 : i32
      %135 = arith.muli %arg27, %c4_i32_118 : i32
      %c1_i32_119 = arith.constant 1 : i32
      %136 = arith.addi %135, %c1_i32_119 : i32
      %137 = arith.index_cast %136 : i32 to index
      %c16_120 = arith.constant 16 : index
      %c0_121 = arith.constant 0 : index
      %138 = vector.load %arg26[%137, %c16_120, %c0_121] : memref<20x48x192xbf16, #tpu.memory_space<vmem>>, vector<4x16x192xbf16>
      %c7 = arith.constant 7 : index
      %c0_122 = arith.constant 0 : index
      %139 = vector.load %arg14[%c7, %c0_122] : memref<25x192xbf16, #tpu.memory_space<vmem>>, vector<1x192xbf16>
      %140 = vector.shape_cast %139 : vector<1x192xbf16> to vector<1x1x192xbf16>
      %141 = vector.broadcast %140 : vector<1x1x192xbf16> to vector<4x16x192xbf16>
      %142 = arith.mulf %138, %141 : vector<4x16x192xbf16>
      %143 = arith.addf %134, %142 : vector<4x16x192xbf16>
      %c4_i32_123 = arith.constant 4 : i32
      %144 = arith.muli %arg27, %c4_i32_123 : i32
      %c1_i32_124 = arith.constant 1 : i32
      %145 = arith.addi %144, %c1_i32_124 : i32
      %146 = arith.index_cast %145 : i32 to index
      %c17_125 = arith.constant 17 : index
      %c0_126 = arith.constant 0 : index
      %147 = vector.load %arg26[%146, %c17_125, %c0_126] : memref<20x48x192xbf16, #tpu.memory_space<vmem>>, vector<4x16x192xbf16>
      %c8 = arith.constant 8 : index
      %c0_127 = arith.constant 0 : index
      %148 = vector.load %arg14[%c8, %c0_127] : memref<25x192xbf16, #tpu.memory_space<vmem>>, vector<1x192xbf16>
      %149 = vector.shape_cast %148 : vector<1x192xbf16> to vector<1x1x192xbf16>
      %150 = vector.broadcast %149 : vector<1x1x192xbf16> to vector<4x16x192xbf16>
      %151 = arith.mulf %147, %150 : vector<4x16x192xbf16>
      %152 = arith.addf %143, %151 : vector<4x16x192xbf16>
      %c4_i32_128 = arith.constant 4 : i32
      %153 = arith.muli %arg27, %c4_i32_128 : i32
      %c1_i32_129 = arith.constant 1 : i32
      %154 = arith.addi %153, %c1_i32_129 : i32
      %155 = arith.index_cast %154 : i32 to index
      %c18_130 = arith.constant 18 : index
      %c0_131 = arith.constant 0 : index
      %156 = vector.load %arg26[%155, %c18_130, %c0_131] : memref<20x48x192xbf16, #tpu.memory_space<vmem>>, vector<4x16x192xbf16>
      %c9 = arith.constant 9 : index
      %c0_132 = arith.constant 0 : index
      %157 = vector.load %arg14[%c9, %c0_132] : memref<25x192xbf16, #tpu.memory_space<vmem>>, vector<1x192xbf16>
      %158 = vector.shape_cast %157 : vector<1x192xbf16> to vector<1x1x192xbf16>
      %159 = vector.broadcast %158 : vector<1x1x192xbf16> to vector<4x16x192xbf16>
      %160 = arith.mulf %156, %159 : vector<4x16x192xbf16>
      %161 = arith.addf %152, %160 : vector<4x16x192xbf16>
      %162 = arith.extf %161 : vector<4x16x192xbf16> to vector<4x16x192xf32>
      %163 = arith.addf %117, %162 : vector<4x16x192xf32>
      %c4_i32_133 = arith.constant 4 : i32
      %164 = arith.muli %arg27, %c4_i32_133 : i32
      %c2_i32_134 = arith.constant 2 : i32
      %165 = arith.addi %164, %c2_i32_134 : i32
      %166 = arith.index_cast %165 : i32 to index
      %c14_135 = arith.constant 14 : index
      %c0_136 = arith.constant 0 : index
      %167 = vector.load %arg26[%166, %c14_135, %c0_136] : memref<20x48x192xbf16, #tpu.memory_space<vmem>>, vector<4x16x192xbf16>
      %c10 = arith.constant 10 : index
      %c0_137 = arith.constant 0 : index
      %168 = vector.load %arg14[%c10, %c0_137] : memref<25x192xbf16, #tpu.memory_space<vmem>>, vector<1x192xbf16>
      %169 = vector.shape_cast %168 : vector<1x192xbf16> to vector<1x1x192xbf16>
      %170 = vector.broadcast %169 : vector<1x1x192xbf16> to vector<4x16x192xbf16>
      %171 = arith.mulf %167, %170 : vector<4x16x192xbf16>
      %c4_i32_138 = arith.constant 4 : i32
      %172 = arith.muli %arg27, %c4_i32_138 : i32
      %c2_i32_139 = arith.constant 2 : i32
      %173 = arith.addi %172, %c2_i32_139 : i32
      %174 = arith.index_cast %173 : i32 to index
      %c15_140 = arith.constant 15 : index
      %c0_141 = arith.constant 0 : index
      %175 = vector.load %arg26[%174, %c15_140, %c0_141] : memref<20x48x192xbf16, #tpu.memory_space<vmem>>, vector<4x16x192xbf16>
      %c11 = arith.constant 11 : index
      %c0_142 = arith.constant 0 : index
      %176 = vector.load %arg14[%c11, %c0_142] : memref<25x192xbf16, #tpu.memory_space<vmem>>, vector<1x192xbf16>
      %177 = vector.shape_cast %176 : vector<1x192xbf16> to vector<1x1x192xbf16>
      %178 = vector.broadcast %177 : vector<1x1x192xbf16> to vector<4x16x192xbf16>
      %179 = arith.mulf %175, %178 : vector<4x16x192xbf16>
      %180 = arith.addf %171, %179 : vector<4x16x192xbf16>
      %c4_i32_143 = arith.constant 4 : i32
      %181 = arith.muli %arg27, %c4_i32_143 : i32
      %c2_i32_144 = arith.constant 2 : i32
      %182 = arith.addi %181, %c2_i32_144 : i32
      %183 = arith.index_cast %182 : i32 to index
      %c16_145 = arith.constant 16 : index
      %c0_146 = arith.constant 0 : index
      %184 = vector.load %arg26[%183, %c16_145, %c0_146] : memref<20x48x192xbf16, #tpu.memory_space<vmem>>, vector<4x16x192xbf16>
      %c12 = arith.constant 12 : index
      %c0_147 = arith.constant 0 : index
      %185 = vector.load %arg14[%c12, %c0_147] : memref<25x192xbf16, #tpu.memory_space<vmem>>, vector<1x192xbf16>
      %186 = vector.shape_cast %185 : vector<1x192xbf16> to vector<1x1x192xbf16>
      %187 = vector.broadcast %186 : vector<1x1x192xbf16> to vector<4x16x192xbf16>
      %188 = arith.mulf %184, %187 : vector<4x16x192xbf16>
      %189 = arith.addf %180, %188 : vector<4x16x192xbf16>
      %c4_i32_148 = arith.constant 4 : i32
      %190 = arith.muli %arg27, %c4_i32_148 : i32
      %c2_i32_149 = arith.constant 2 : i32
      %191 = arith.addi %190, %c2_i32_149 : i32
      %192 = arith.index_cast %191 : i32 to index
      %c17_150 = arith.constant 17 : index
      %c0_151 = arith.constant 0 : index
      %193 = vector.load %arg26[%192, %c17_150, %c0_151] : memref<20x48x192xbf16, #tpu.memory_space<vmem>>, vector<4x16x192xbf16>
      %c13 = arith.constant 13 : index
      %c0_152 = arith.constant 0 : index
      %194 = vector.load %arg14[%c13, %c0_152] : memref<25x192xbf16, #tpu.memory_space<vmem>>, vector<1x192xbf16>
      %195 = vector.shape_cast %194 : vector<1x192xbf16> to vector<1x1x192xbf16>
      %196 = vector.broadcast %195 : vector<1x1x192xbf16> to vector<4x16x192xbf16>
      %197 = arith.mulf %193, %196 : vector<4x16x192xbf16>
      %198 = arith.addf %189, %197 : vector<4x16x192xbf16>
      %c4_i32_153 = arith.constant 4 : i32
      %199 = arith.muli %arg27, %c4_i32_153 : i32
      %c2_i32_154 = arith.constant 2 : i32
      %200 = arith.addi %199, %c2_i32_154 : i32
      %201 = arith.index_cast %200 : i32 to index
      %c18_155 = arith.constant 18 : index
      %c0_156 = arith.constant 0 : index
      %202 = vector.load %arg26[%201, %c18_155, %c0_156] : memref<20x48x192xbf16, #tpu.memory_space<vmem>>, vector<4x16x192xbf16>
      %c14_157 = arith.constant 14 : index
      %c0_158 = arith.constant 0 : index
      %203 = vector.load %arg14[%c14_157, %c0_158] : memref<25x192xbf16, #tpu.memory_space<vmem>>, vector<1x192xbf16>
      %204 = vector.shape_cast %203 : vector<1x192xbf16> to vector<1x1x192xbf16>
      %205 = vector.broadcast %204 : vector<1x1x192xbf16> to vector<4x16x192xbf16>
      %206 = arith.mulf %202, %205 : vector<4x16x192xbf16>
      %207 = arith.addf %198, %206 : vector<4x16x192xbf16>
      %208 = arith.extf %207 : vector<4x16x192xbf16> to vector<4x16x192xf32>
      %209 = arith.addf %163, %208 : vector<4x16x192xf32>
      %c4_i32_159 = arith.constant 4 : i32
      %210 = arith.muli %arg27, %c4_i32_159 : i32
      %c3_i32 = arith.constant 3 : i32
      %211 = arith.addi %210, %c3_i32 : i32
      %212 = arith.index_cast %211 : i32 to index
      %c14_160 = arith.constant 14 : index
      %c0_161 = arith.constant 0 : index
      %213 = vector.load %arg26[%212, %c14_160, %c0_161] : memref<20x48x192xbf16, #tpu.memory_space<vmem>>, vector<4x16x192xbf16>
      %c15_162 = arith.constant 15 : index
      %c0_163 = arith.constant 0 : index
      %214 = vector.load %arg14[%c15_162, %c0_163] : memref<25x192xbf16, #tpu.memory_space<vmem>>, vector<1x192xbf16>
      %215 = vector.shape_cast %214 : vector<1x192xbf16> to vector<1x1x192xbf16>
      %216 = vector.broadcast %215 : vector<1x1x192xbf16> to vector<4x16x192xbf16>
      %217 = arith.mulf %213, %216 : vector<4x16x192xbf16>
      %c4_i32_164 = arith.constant 4 : i32
      %218 = arith.muli %arg27, %c4_i32_164 : i32
      %c3_i32_165 = arith.constant 3 : i32
      %219 = arith.addi %218, %c3_i32_165 : i32
      %220 = arith.index_cast %219 : i32 to index
      %c15_166 = arith.constant 15 : index
      %c0_167 = arith.constant 0 : index
      %221 = vector.load %arg26[%220, %c15_166, %c0_167] : memref<20x48x192xbf16, #tpu.memory_space<vmem>>, vector<4x16x192xbf16>
      %c16_168 = arith.constant 16 : index
      %c0_169 = arith.constant 0 : index
      %222 = vector.load %arg14[%c16_168, %c0_169] : memref<25x192xbf16, #tpu.memory_space<vmem>>, vector<1x192xbf16>
      %223 = vector.shape_cast %222 : vector<1x192xbf16> to vector<1x1x192xbf16>
      %224 = vector.broadcast %223 : vector<1x1x192xbf16> to vector<4x16x192xbf16>
      %225 = arith.mulf %221, %224 : vector<4x16x192xbf16>
      %226 = arith.addf %217, %225 : vector<4x16x192xbf16>
      %c4_i32_170 = arith.constant 4 : i32
      %227 = arith.muli %arg27, %c4_i32_170 : i32
      %c3_i32_171 = arith.constant 3 : i32
      %228 = arith.addi %227, %c3_i32_171 : i32
      %229 = arith.index_cast %228 : i32 to index
      %c16_172 = arith.constant 16 : index
      %c0_173 = arith.constant 0 : index
      %230 = vector.load %arg26[%229, %c16_172, %c0_173] : memref<20x48x192xbf16, #tpu.memory_space<vmem>>, vector<4x16x192xbf16>
      %c17_174 = arith.constant 17 : index
      %c0_175 = arith.constant 0 : index
      %231 = vector.load %arg14[%c17_174, %c0_175] : memref<25x192xbf16, #tpu.memory_space<vmem>>, vector<1x192xbf16>
      %232 = vector.shape_cast %231 : vector<1x192xbf16> to vector<1x1x192xbf16>
      %233 = vector.broadcast %232 : vector<1x1x192xbf16> to vector<4x16x192xbf16>
      %234 = arith.mulf %230, %233 : vector<4x16x192xbf16>
      %235 = arith.addf %226, %234 : vector<4x16x192xbf16>
      %c4_i32_176 = arith.constant 4 : i32
      %236 = arith.muli %arg27, %c4_i32_176 : i32
      %c3_i32_177 = arith.constant 3 : i32
      %237 = arith.addi %236, %c3_i32_177 : i32
      %238 = arith.index_cast %237 : i32 to index
      %c17_178 = arith.constant 17 : index
      %c0_179 = arith.constant 0 : index
      %239 = vector.load %arg26[%238, %c17_178, %c0_179] : memref<20x48x192xbf16, #tpu.memory_space<vmem>>, vector<4x16x192xbf16>
      %c18_180 = arith.constant 18 : index
      %c0_181 = arith.constant 0 : index
      %240 = vector.load %arg14[%c18_180, %c0_181] : memref<25x192xbf16, #tpu.memory_space<vmem>>, vector<1x192xbf16>
      %241 = vector.shape_cast %240 : vector<1x192xbf16> to vector<1x1x192xbf16>
      %242 = vector.broadcast %241 : vector<1x1x192xbf16> to vector<4x16x192xbf16>
      %243 = arith.mulf %239, %242 : vector<4x16x192xbf16>
      %244 = arith.addf %235, %243 : vector<4x16x192xbf16>
      %c4_i32_182 = arith.constant 4 : i32
      %245 = arith.muli %arg27, %c4_i32_182 : i32
      %c3_i32_183 = arith.constant 3 : i32
      %246 = arith.addi %245, %c3_i32_183 : i32
      %247 = arith.index_cast %246 : i32 to index
      %c18_184 = arith.constant 18 : index
      %c0_185 = arith.constant 0 : index
      %248 = vector.load %arg26[%247, %c18_184, %c0_185] : memref<20x48x192xbf16, #tpu.memory_space<vmem>>, vector<4x16x192xbf16>
      %c19 = arith.constant 19 : index
      %c0_186 = arith.constant 0 : index
      %249 = vector.load %arg14[%c19, %c0_186] : memref<25x192xbf16, #tpu.memory_space<vmem>>, vector<1x192xbf16>
      %250 = vector.shape_cast %249 : vector<1x192xbf16> to vector<1x1x192xbf16>
      %251 = vector.broadcast %250 : vector<1x1x192xbf16> to vector<4x16x192xbf16>
      %252 = arith.mulf %248, %251 : vector<4x16x192xbf16>
      %253 = arith.addf %244, %252 : vector<4x16x192xbf16>
      %254 = arith.extf %253 : vector<4x16x192xbf16> to vector<4x16x192xf32>
      %255 = arith.addf %209, %254 : vector<4x16x192xf32>
      %c4_i32_187 = arith.constant 4 : i32
      %256 = arith.muli %arg27, %c4_i32_187 : i32
      %c4_i32_188 = arith.constant 4 : i32
      %257 = arith.addi %256, %c4_i32_188 : i32
      %258 = arith.index_cast %257 : i32 to index
      %c14_189 = arith.constant 14 : index
      %c0_190 = arith.constant 0 : index
      %259 = vector.load %arg26[%258, %c14_189, %c0_190] : memref<20x48x192xbf16, #tpu.memory_space<vmem>>, vector<4x16x192xbf16>
      %c20 = arith.constant 20 : index
      %c0_191 = arith.constant 0 : index
      %260 = vector.load %arg14[%c20, %c0_191] : memref<25x192xbf16, #tpu.memory_space<vmem>>, vector<1x192xbf16>
      %261 = vector.shape_cast %260 : vector<1x192xbf16> to vector<1x1x192xbf16>
      %262 = vector.broadcast %261 : vector<1x1x192xbf16> to vector<4x16x192xbf16>
      %263 = arith.mulf %259, %262 : vector<4x16x192xbf16>
      %c4_i32_192 = arith.constant 4 : i32
      %264 = arith.muli %arg27, %c4_i32_192 : i32
      %c4_i32_193 = arith.constant 4 : i32
      %265 = arith.addi %264, %c4_i32_193 : i32
      %266 = arith.index_cast %265 : i32 to index
      %c15_194 = arith.constant 15 : index
      %c0_195 = arith.constant 0 : index
      %267 = vector.load %arg26[%266, %c15_194, %c0_195] : memref<20x48x192xbf16, #tpu.memory_space<vmem>>, vector<4x16x192xbf16>
      %c21 = arith.constant 21 : index
      %c0_196 = arith.constant 0 : index
      %268 = vector.load %arg14[%c21, %c0_196] : memref<25x192xbf16, #tpu.memory_space<vmem>>, vector<1x192xbf16>
      %269 = vector.shape_cast %268 : vector<1x192xbf16> to vector<1x1x192xbf16>
      %270 = vector.broadcast %269 : vector<1x1x192xbf16> to vector<4x16x192xbf16>
      %271 = arith.mulf %267, %270 : vector<4x16x192xbf16>
      %272 = arith.addf %263, %271 : vector<4x16x192xbf16>
      %c4_i32_197 = arith.constant 4 : i32
      %273 = arith.muli %arg27, %c4_i32_197 : i32
      %c4_i32_198 = arith.constant 4 : i32
      %274 = arith.addi %273, %c4_i32_198 : i32
      %275 = arith.index_cast %274 : i32 to index
      %c16_199 = arith.constant 16 : index
      %c0_200 = arith.constant 0 : index
      %276 = vector.load %arg26[%275, %c16_199, %c0_200] : memref<20x48x192xbf16, #tpu.memory_space<vmem>>, vector<4x16x192xbf16>
      %c22 = arith.constant 22 : index
      %c0_201 = arith.constant 0 : index
      %277 = vector.load %arg14[%c22, %c0_201] : memref<25x192xbf16, #tpu.memory_space<vmem>>, vector<1x192xbf16>
      %278 = vector.shape_cast %277 : vector<1x192xbf16> to vector<1x1x192xbf16>
      %279 = vector.broadcast %278 : vector<1x1x192xbf16> to vector<4x16x192xbf16>
      %280 = arith.mulf %276, %279 : vector<4x16x192xbf16>
      %281 = arith.addf %272, %280 : vector<4x16x192xbf16>
      %c4_i32_202 = arith.constant 4 : i32
      %282 = arith.muli %arg27, %c4_i32_202 : i32
      %c4_i32_203 = arith.constant 4 : i32
      %283 = arith.addi %282, %c4_i32_203 : i32
      %284 = arith.index_cast %283 : i32 to index
      %c17_204 = arith.constant 17 : index
      %c0_205 = arith.constant 0 : index
      %285 = vector.load %arg26[%284, %c17_204, %c0_205] : memref<20x48x192xbf16, #tpu.memory_space<vmem>>, vector<4x16x192xbf16>
      %c23 = arith.constant 23 : index
      %c0_206 = arith.constant 0 : index
      %286 = vector.load %arg14[%c23, %c0_206] : memref<25x192xbf16, #tpu.memory_space<vmem>>, vector<1x192xbf16>
      %287 = vector.shape_cast %286 : vector<1x192xbf16> to vector<1x1x192xbf16>
      %288 = vector.broadcast %287 : vector<1x1x192xbf16> to vector<4x16x192xbf16>
      %289 = arith.mulf %285, %288 : vector<4x16x192xbf16>
      %290 = arith.addf %281, %289 : vector<4x16x192xbf16>
      %c4_i32_207 = arith.constant 4 : i32
      %291 = arith.muli %arg27, %c4_i32_207 : i32
      %c4_i32_208 = arith.constant 4 : i32
      %292 = arith.addi %291, %c4_i32_208 : i32
      %293 = arith.index_cast %292 : i32 to index
      %c18_209 = arith.constant 18 : index
      %c0_210 = arith.constant 0 : index
      %294 = vector.load %arg26[%293, %c18_209, %c0_210] : memref<20x48x192xbf16, #tpu.memory_space<vmem>>, vector<4x16x192xbf16>
      %c24 = arith.constant 24 : index
      %c0_211 = arith.constant 0 : index
      %295 = vector.load %arg14[%c24, %c0_211] : memref<25x192xbf16, #tpu.memory_space<vmem>>, vector<1x192xbf16>
      %296 = vector.shape_cast %295 : vector<1x192xbf16> to vector<1x1x192xbf16>
      %297 = vector.broadcast %296 : vector<1x1x192xbf16> to vector<4x16x192xbf16>
      %298 = arith.mulf %294, %297 : vector<4x16x192xbf16>
      %299 = arith.addf %290, %298 : vector<4x16x192xbf16>
      %300 = arith.extf %299 : vector<4x16x192xbf16> to vector<4x16x192xf32>
      %301 = arith.addf %255, %300 : vector<4x16x192xf32>
      %302 = vector.shape_cast %301 : vector<4x16x192xf32> to vector<64x192xf32>
      %303 = vector.broadcast %43 : vector<1x192xf32> to vector<64x192xf32>
      %304 = arith.addf %302, %303 : vector<64x192xf32>
      %305 = arith.negf %304 : vector<64x192xf32>
      %306 = math.exp %305 : vector<64x192xf32>
      %cst_212 = arith.constant 1.000000e+00 : f32
      %307 = vector.broadcast %cst_212 : f32 to vector<64x192xf32>
      %308 = arith.addf %307, %306 : vector<64x192xf32>
      %309 = arith.divf %307, %308 : vector<64x192xf32>
      %310 = arith.mulf %304, %309 : vector<64x192xf32>
      %c64_i32 = arith.constant 64 : i32
      %311 = arith.muli %arg27, %c64_i32 : i32
      %312 = tpu.assume_multiple %311, 64 : i32
      %313 = arith.truncf %310 : vector<64x192xf32> to vector<64x192xbf16>
      %314 = arith.index_cast %312 : i32 to index
      %c0_213 = arith.constant 0 : index
      %315 = vector.load %arg25[%314, %c0_213] : memref<256x192xbf16, #tpu.memory_space<vmem>>, vector<64x192xbf16>
      tpu.vector_store %arg25[%314, %c0_213], %313 {strides = array<i32>} : memref<256x192xbf16, #tpu.memory_space<vmem>>, vector<64x192xbf16>,
      %cst_214 = arith.constant dense<0.000000e+00> : vector<192xf32>
      %316 = vector.multi_reduction <add>, %310, %cst_214 [0] : vector<64x192xf32> to vector<192xf32>
      %317 = vector.shape_cast %316 : vector<192xf32> to vector<1x192xf32>
      %318 = arith.addf %arg28, %317 : vector<1x192xf32>
      scf.yield %318 : vector<1x192xf32>
    }
    %c4_i32_60 = arith.constant 4 : i32
    %c0_61 = arith.constant 0 : index
    %c0_62 = arith.constant 0 : index
    %47 = vector.load %arg16[%c0_61, %c0_62] : memref<192x64xbf16, #tpu.memory_space<vmem>>, vector<192x64xbf16>
    %c0_63 = arith.constant 0 : index
    %c0_64 = arith.constant 0 : index
    %48 = vector.load %arg17[%c0_63, %c0_64] : memref<1x64xf32, #tpu.memory_space<vmem>>, vector<1x64xf32>
    %cst_65 = arith.constant 3.906250e-03 : f32
    %49 = vector.broadcast %cst_65 : f32 to vector<1x192xf32>
    %50 = arith.mulf %46, %49 : vector<1x192xf32>
    %51 = arith.truncf %50 : vector<1x192xf32> to vector<1x192xbf16>
    %cst_66 = arith.constant dense<0.000000e+00> : vector<1x64xf32>
    %52 = tpu.matmul %51, %47, %cst_66 {dimension_numbers = #tpu.dot_dimension_numbers<[1], [0], [0], [1], [0, 0, 1, 1], [], []>} : vector<1x192xbf16>, vector<192x64xbf16>, vector<1x64xf32> -> vector<1x64xf32>
    %53 = arith.addf %52, %48 : vector<1x64xf32>
    %c0_67 = arith.constant 0 : index
    %c0_68 = arith.constant 0 : index
    %54 = vector.load %arg18[%c0_67, %c0_68] : memref<64x4xf32, #tpu.memory_space<vmem>>, vector<64x4xf32>
    %cst_69 = arith.constant dense<0.000000e+00> : vector<1x4xf32>
    %55 = tpu.matmul %53, %54, %cst_69 {dimension_numbers = #tpu.dot_dimension_numbers<[1], [0], [0], [1], [0, 0, 1, 1], [], []>} : vector<1x64xf32>, vector<64x4xf32>, vector<1x4xf32> -> vector<1x4xf32>
    %c0_70 = arith.constant 0 : index
    %c0_71 = arith.constant 0 : index
    %56 = vector.load %arg19[%c0_70, %c0_71] : memref<1x4xf32, #tpu.memory_space<vmem>>, vector<1x4xf32>
    %57 = arith.addf %55, %56 : vector<1x4xf32>
    %cst_72 = arith.constant 0.000000e+00 : f32
    %58 = vector.broadcast %cst_72 : f32 to vector<1x4xf32>
    %59 = arith.maximumf %57, %58 : vector<1x4xf32>
    %c0_73 = arith.constant 0 : index
    %c0_74 = arith.constant 0 : index
    %60 = vector.load %arg20[%c0_73, %c0_74] : memref<4x64xf32, #tpu.memory_space<vmem>>, vector<4x64xf32>
    %cst_75 = arith.constant dense<0.000000e+00> : vector<1x64xf32>
    %61 = tpu.matmul %59, %60, %cst_75 {dimension_numbers = #tpu.dot_dimension_numbers<[1], [0], [0], [1], [0, 0, 1, 1], [], []>} : vector<1x4xf32>, vector<4x64xf32>, vector<1x64xf32> -> vector<1x64xf32>
    %c0_76 = arith.constant 0 : index
    %c0_77 = arith.constant 0 : index
    %62 = vector.load %arg21[%c0_76, %c0_77] : memref<1x64xf32, #tpu.memory_space<vmem>>, vector<1x64xf32>
    %63 = arith.addf %61, %62 : vector<1x64xf32>
    %64 = arith.negf %63 : vector<1x64xf32>
    %65 = math.exp %64 : vector<1x64xf32>
    %cst_78 = arith.constant 1.000000e+00 : f32
    %66 = vector.broadcast %cst_78 : f32 to vector<1x64xf32>
    %67 = arith.addf %66, %65 : vector<1x64xf32>
    %68 = arith.divf %66, %67 : vector<1x64xf32>
    %cst_79 = arith.constant 1.000000e-01 : f32
    %69 = vector.broadcast %cst_79 : f32 to vector<1x64xf32>
    %70 = arith.mulf %68, %69 : vector<1x64xf32>
    %c0_80 = arith.constant 0 : index
    %c0_81 = arith.constant 0 : index
    %71 = vector.load %arg22[%c0_80, %c0_81] : memref<32x64xbf16, #tpu.memory_space<vmem>>, vector<32x64xbf16>
    %c0_i32_82 = arith.constant 0 : i32
    %c2_i32_83 = arith.constant 2 : i32
    %72 = arith.addi %c0_i32_82, %c2_i32_83 : i32
    %c1_i32_84 = arith.constant 1 : i32
    scf.for %arg27 = %c0_i32_82 to %72 step %c1_i32_84  : i32 {
      %c128_i32 = arith.constant 128 : i32
      %73 = arith.muli %arg27, %c128_i32 : i32
      %74 = tpu.assume_multiple %73, 128 : i32
      %75 = arith.index_cast %74 : i32 to index
      %c0_86 = arith.constant 0 : index
      %76 = vector.load %arg25[%75, %c0_86] : memref<256x192xbf16, #tpu.memory_space<vmem>>, vector<128x192xbf16>
      %cst_87 = arith.constant dense<0.000000e+00> : vector<128x64xf32>
      %77 = tpu.matmul %76, %47, %cst_87 {dimension_numbers = #tpu.dot_dimension_numbers<[1], [0], [0], [1], [0, 0, 1, 1], [], []>} : vector<128x192xbf16>, vector<192x64xbf16>, vector<128x64xf32> -> vector<128x64xf32>
      %78 = vector.broadcast %48 : vector<1x64xf32> to vector<128x64xf32>
      %79 = arith.addf %77, %78 : vector<128x64xf32>
      %80 = arith.index_cast %74 : i32 to index
      %c0_88 = arith.constant 0 : index
      %81 = vector.load %arg24[%80, %c0_88] : memref<256x32xf32, #tpu.memory_space<vmem>>, vector<128x32xf32>
      %82 = arith.truncf %81 : vector<128x32xf32> to vector<128x32xbf16>
      %cst_89 = arith.constant dense<0.000000e+00> : vector<128x64xf32>
      %83 = tpu.matmul %82, %71, %cst_89 {dimension_numbers = #tpu.dot_dimension_numbers<[1], [0], [0], [1], [0, 0, 1, 1], [], []>} : vector<128x32xbf16>, vector<32x64xbf16>, vector<128x64xf32> -> vector<128x64xf32>
      %84 = vector.broadcast %70 : vector<1x64xf32> to vector<128x64xf32>
      %85 = arith.mulf %84, %79 : vector<128x64xf32>
      %86 = arith.addf %83, %85 : vector<128x64xf32>
      %c0_90 = arith.constant 0 : index
      %87 = arith.index_cast %74 : i32 to index
      %c0_91 = arith.constant 0 : index
      %88 = vector.load %arg23[%c0_90, %87, %c0_91] : memref<1x256x64xf32, #tpu.memory_space<vmem>>, vector<1x128x64xf32>
      %89 = vector.shape_cast %88 : vector<1x128x64xf32> to vector<128x64xf32>
      %90 = vector.shape_cast %86 : vector<128x64xf32> to vector<1x128x64xf32>
      tpu.vector_store %arg23[%c0_90, %87, %c0_91], %90 {strides = array<i32>} : memref<1x256x64xf32, #tpu.memory_space<vmem>>, vector<1x128x64xf32>,
    }
    %c2_i32_85 = arith.constant 2 : i32
    return
  }
  func.func @transform_0(%arg0: i32) -> (i32, i32, i32) {
    %c0_i32 = arith.constant 0 : i32
    %c0_i32_0 = arith.constant 0 : i32
    %c0_i32_1 = arith.constant 0 : i32
    return %arg0, %c0_i32, %c0_i32_0 : i32, i32, i32
  }
  func.func @transform_1(%arg0: i32) -> (i32, i32) {
    %c0_i32 = arith.constant 0 : i32
    %c0_i32_0 = arith.constant 0 : i32
    %c0_i32_1 = arith.constant 0 : i32
    return %c0_i32, %c0_i32_0 : i32, i32
  }
  func.func @transform_2(%arg0: i32) -> (i32, i32) {
    %c0_i32 = arith.constant 0 : i32
    %c0_i32_0 = arith.constant 0 : i32
    %c0_i32_1 = arith.constant 0 : i32
    return %c0_i32, %c0_i32_0 : i32, i32
  }
  func.func @transform_3(%arg0: i32) -> (i32, i32) {
    %c0_i32 = arith.constant 0 : i32
    %c0_i32_0 = arith.constant 0 : i32
    %c0_i32_1 = arith.constant 0 : i32
    return %c0_i32, %c0_i32_0 : i32, i32
  }
  func.func @transform_4(%arg0: i32) -> (i32, i32) {
    %c0_i32 = arith.constant 0 : i32
    %c0_i32_0 = arith.constant 0 : i32
    %c0_i32_1 = arith.constant 0 : i32
    return %c0_i32, %c0_i32_0 : i32, i32
  }
  func.func @transform_5(%arg0: i32) -> (i32, i32) {
    %c0_i32 = arith.constant 0 : i32
    %c0_i32_0 = arith.constant 0 : i32
    %c0_i32_1 = arith.constant 0 : i32
    return %c0_i32, %c0_i32_0 : i32, i32
  }
  func.func @transform_6(%arg0: i32) -> (i32, i32) {
    %c0_i32 = arith.constant 0 : i32
    %c0_i32_0 = arith.constant 0 : i32
    %c0_i32_1 = arith.constant 0 : i32
    return %c0_i32, %c0_i32_0 : i32, i32
  }
  func.func @transform_7(%arg0: i32) -> (i32, i32) {
    %c0_i32 = arith.constant 0 : i32
    %c0_i32_0 = arith.constant 0 : i32
    %c0_i32_1 = arith.constant 0 : i32
    return %c0_i32, %c0_i32_0 : i32, i32
  }
  func.func @transform_8(%arg0: i32) -> (i32, i32) {
    %c0_i32 = arith.constant 0 : i32
    %c0_i32_0 = arith.constant 0 : i32
    %c0_i32_1 = arith.constant 0 : i32
    return %c0_i32, %c0_i32_0 : i32, i32
  }
  func.func @transform_9(%arg0: i32) -> (i32, i32) {
    %c0_i32 = arith.constant 0 : i32
    %c0_i32_0 = arith.constant 0 : i32
    %c0_i32_1 = arith.constant 0 : i32
    return %c0_i32, %c0_i32_0 : i32, i32
  }
  func.func @transform_10(%arg0: i32) -> (i32, i32) {
    %c0_i32 = arith.constant 0 : i32
    %c0_i32_0 = arith.constant 0 : i32
    %c0_i32_1 = arith.constant 0 : i32
    return %c0_i32, %c0_i32_0 : i32, i32
  }
  func.func @transform_11(%arg0: i32) -> (i32, i32) {
    %c0_i32 = arith.constant 0 : i32
    %c0_i32_0 = arith.constant 0 : i32
    %c0_i32_1 = arith.constant 0 : i32
    return %c0_i32, %c0_i32_0 : i32, i32
  }
  func.func @transform_12(%arg0: i32) -> (i32, i32) {
    %c0_i32 = arith.constant 0 : i32
    %c0_i32_0 = arith.constant 0 : i32
    %c0_i32_1 = arith.constant 0 : i32
    return %c0_i32, %c0_i32_0 : i32, i32
  }
  func.func @transform_13(%arg0: i32) -> (i32, i32) {
    %c0_i32 = arith.constant 0 : i32
    %c0_i32_0 = arith.constant 0 : i32
    %c0_i32_1 = arith.constant 0 : i32
    return %c0_i32, %c0_i32_0 : i32, i32
  }
  func.func @transform_14(%arg0: i32) -> (i32, i32) {
    %c0_i32 = arith.constant 0 : i32
    %c0_i32_0 = arith.constant 0 : i32
    %c0_i32_1 = arith.constant 0 : i32
    return %c0_i32, %c0_i32_0 : i32, i32
  }
  func.func @transform_15(%arg0: i32) -> (i32, i32) {
    %c0_i32 = arith.constant 0 : i32
    %c0_i32_0 = arith.constant 0 : i32
    %c0_i32_1 = arith.constant 0 : i32
    return %c0_i32, %c0_i32_0 : i32, i32
  }
  func.func @transform_16(%arg0: i32) -> (i32, i32) {
    %c0_i32 = arith.constant 0 : i32
    %c0_i32_0 = arith.constant 0 : i32
    %c0_i32_1 = arith.constant 0 : i32
    return %c0_i32, %c0_i32_0 : i32, i32
  }
  func.func @transform_17(%arg0: i32) -> (i32, i32) {
    %c0_i32 = arith.constant 0 : i32
    %c0_i32_0 = arith.constant 0 : i32
    %c0_i32_1 = arith.constant 0 : i32
    return %c0_i32, %c0_i32_0 : i32, i32
  }
  func.func @transform_18(%arg0: i32) -> (i32, i32) {
    %c0_i32 = arith.constant 0 : i32
    %c0_i32_0 = arith.constant 0 : i32
    %c0_i32_1 = arith.constant 0 : i32
    return %c0_i32, %c0_i32_0 : i32, i32
  }
  func.func @transform_19(%arg0: i32) -> (i32, i32) {
    %c0_i32 = arith.constant 0 : i32
    %c0_i32_0 = arith.constant 0 : i32
    %c0_i32_1 = arith.constant 0 : i32
    return %c0_i32, %c0_i32_0 : i32, i32
  }
  func.func @transform_20(%arg0: i32) -> (i32, i32) {
    %c0_i32 = arith.constant 0 : i32
    %c0_i32_0 = arith.constant 0 : i32
    %c0_i32_1 = arith.constant 0 : i32
    return %c0_i32, %c0_i32_0 : i32, i32
  }
  func.func @transform_21(%arg0: i32) -> (i32, i32) {
    %c0_i32 = arith.constant 0 : i32
    %c0_i32_0 = arith.constant 0 : i32
    %c0_i32_1 = arith.constant 0 : i32
    return %c0_i32, %c0_i32_0 : i32, i32
  }
  func.func @transform_22(%arg0: i32) -> (i32, i32, i32) {
    %c0_i32 = arith.constant 0 : i32
    %c0_i32_0 = arith.constant 0 : i32
    %c0_i32_1 = arith.constant 0 : i32
    return %arg0, %c0_i32, %c0_i32_0 : i32, i32, i32
  }
}

</mosaic_0001>

<llo_original>
// kernel: tpu_custom_call.1
$region0: #{tpu_custom_call.1}
  #allocation0 [shape = 'u32[]', space=smem, size = 0x4, offset = 0x4, fixed_abs, tag = 'smem constant byte address 0x4 - core index']
  #allocation1 [shape = 'u32[144,128]{1,0:T(1,128)}', space=vmem, size = 0x12000, scoped, tag = 'internal scratch']
  #allocation2 [shape = 'f32[256,32]{1,0:T(8,128)}', space=vmem, size = 0x20000, scoped, tag = 'scratch operand']
  #allocation3 [shape = 'bf16[256,192]{1,0:T(16,128)(2,1)}', space=vmem, size = 0x20000, scoped, tag = 'scratch operand']
  #allocation4 [shape = 'bf16[20,48,192]{2,1,0:T(16,128)(2,1)}', space=vmem, size = 0x78000, scoped, tag = 'scratch operand']
  %s0 = inlined_call_operand.vmem [shape: f32[2,256,32], index: 0, kind: input, shape index: {}]
  %s1 = inlined_call_operand.vmem [shape: bf16[32,192], index: 1, kind: input, shape index: {}]
  %s2 = inlined_call_operand.vmem [shape: f32[1,192], index: 2, kind: input, shape index: {}]
  %s3 = inlined_call_operand.vmem [shape: bf16[25,192], index: 3, kind: input, shape index: {}]
  %s4 = inlined_call_operand.vmem [shape: f32[1,192], index: 4, kind: input, shape index: {}]
  %s5 = inlined_call_operand.vmem [shape: bf16[192,32], index: 5, kind: input, shape index: {}]
  %s6 = inlined_call_operand.vmem [shape: f32[1,32], index: 6, kind: input, shape index: {}]
  %s7 = inlined_call_operand.vmem [shape: f32[32,4], index: 7, kind: input, shape index: {}]
  %s8 = inlined_call_operand.vmem [shape: f32[1,4], index: 8, kind: input, shape index: {}]
  %s9 = inlined_call_operand.vmem [shape: f32[4,32], index: 9, kind: input, shape index: {}]
  %s10 = inlined_call_operand.vmem [shape: f32[1,32], index: 10, kind: input, shape index: {}]
  %s11 = inlined_call_operand.vmem [shape: bf16[32,192], index: 11, kind: input, shape index: {}]
  %s12 = inlined_call_operand.vmem [shape: f32[1,192], index: 12, kind: input, shape index: {}]
  %s13 = inlined_call_operand.vmem [shape: bf16[25,192], index: 13, kind: input, shape index: {}]
  %s14 = inlined_call_operand.vmem [shape: f32[1,192], index: 14, kind: input, shape index: {}]
  %s15 = inlined_call_operand.vmem [shape: bf16[192,64], index: 15, kind: input, shape index: {}]
  %s16 = inlined_call_operand.vmem [shape: f32[1,64], index: 16, kind: input, shape index: {}]
  %s17 = inlined_call_operand.vmem [shape: f32[64,4], index: 17, kind: input, shape index: {}]
  %s18 = inlined_call_operand.vmem [shape: f32[1,4], index: 18, kind: input, shape index: {}]
  %s19 = inlined_call_operand.vmem [shape: f32[4,64], index: 19, kind: input, shape index: {}]
  %s20 = inlined_call_operand.vmem [shape: f32[1,64], index: 20, kind: input, shape index: {}]
  %s21 = inlined_call_operand.vmem [shape: bf16[32,64], index: 21, kind: input, shape index: {}]
  %s22 = inlined_call_operand.vmem [shape: f32[2,256,64], index: 22, kind: output, shape index: {}]
  %s23 = sld [smem:[#allocation0]]
  $region163: #{tpu_custom_call.1} parent=0
    _
  %s25 = ssub.s32 1, %s23
  %s26 = scalar_select 0, %s25, %s23
  loop: start=0, step=1, limit=4
  $region2: #{tpu_custom_call.1} parent=0 // loop_pre_header
    _
  $region3: #{tpu_custom_call.1} parent=0 // loop_header
    %s28 = sphi 0, %s32
    %p29 = scmp.ge.s32.totalorder %s28, 4
    %s38 = sphi 0, %s40
    %s41 = sphi 0, %s38
    %s42 = sphi 0, %s41
    %s58 = sphi 0, %s42
    %s62 = sphi 0, %s62
    %s64 = sphi 0, %s62
    %s65 = sphi 0, %s64
    %s79 = sphi 0, %s65
    %s83 = sphi 0, %s83
    %s85 = sphi 0, %s83
    %s86 = sphi 0, %s85
    %s100 = sphi 0, %s86
    %s104 = sphi 0, %s104
    %s106 = sphi 0, %s104
    %s107 = sphi 0, %s106
    %s121 = sphi 0, %s107
    %s125 = sphi 0, %s125
    %s127 = sphi 0, %s125
    %s128 = sphi 0, %s127
    %s142 = sphi 0, %s128
    %s146 = sphi 0, %s146
    %s148 = sphi 0, %s146
    %s149 = sphi 0, %s148
    %s163 = sphi 0, %s149
    %s167 = sphi 0, %s167
    %s169 = sphi 0, %s167
    %s170 = sphi 0, %s169
    %s184 = sphi 0, %s170
    %s188 = sphi 0, %s188
    %s190 = sphi 0, %s188
    %s191 = sphi 0, %s190
    %s205 = sphi 0, %s191
    %s209 = sphi 0, %s209
    %s211 = sphi 0, %s209
    %s212 = sphi 0, %s211
    %s226 = sphi 0, %s212
    %s230 = sphi 0, %s230
    %s232 = sphi 0, %s230
    %s233 = sphi 0, %s232
    %s247 = sphi 0, %s233
    %s251 = sphi 0, %s251
    %s253 = sphi 0, %s251
    %s254 = sphi 0, %s253
    %s268 = sphi 0, %s254
    %s272 = sphi 0, %s272
    %s274 = sphi 0, %s272
    %s275 = sphi 0, %s274
    %s289 = sphi 0, %s275
    %s293 = sphi 0, %s293
    %s295 = sphi 0, %s293
    %s296 = sphi 0, %s295
    %s310 = sphi 0, %s296
    %s314 = sphi 0, %s314
    %s316 = sphi 0, %s314
    %s317 = sphi 0, %s316
    %s331 = sphi 0, %s317
    %s335 = sphi 0, %s335
    %s337 = sphi 0, %s335
    %s338 = sphi 0, %s337
    %s352 = sphi 0, %s338
    %s356 = sphi 0, %s356
    %s358 = sphi 0, %s356
    %s359 = sphi 0, %s358
    %s373 = sphi 0, %s359
    %s377 = sphi 0, %s377
    %s379 = sphi 0, %s377
    %s380 = sphi 0, %s379
    %s394 = sphi 0, %s380
    %s398 = sphi 0, %s398
    %s400 = sphi 0, %s398
    %s401 = sphi 0, %s400
    %s415 = sphi 0, %s401
    %s419 = sphi 0, %s419
    %s421 = sphi 0, %s419
    %s422 = sphi 0, %s421
    %s436 = sphi 0, %s422
    %s440 = sphi 0, %s440
    %s442 = sphi 0, %s440
    %s443 = sphi 0, %s442
    %s457 = sphi 0, %s443
    %s461 = sphi 0, %s461
    %s463 = sphi 0, %s461
    %s464 = sphi 0, %s463
    %s478 = sphi 0, %s464
    %s482 = sphi 0, %s482
    %s484 = sphi 0, %s482
    %s485 = sphi 0, %s484
    %s499 = sphi 0, %s485
    %s505 = sphi 0, %s507
    %s508 = sphi 0, %s505
    %s509 = sphi 0, %s508
    %s525 = sphi 0, %s509
  $region4: #{tpu_custom_call.1} parent=0 // loop_header_branch
    %31 = sbr.rel (%p29) target = $region8
  $region5: #{tpu_custom_call.1} parent=0 // loop_body
    %s33 = ssub.s32 %s28, 1
    %s34 = ssub.s32 %s28, 2
    %s35 = sadd.s32 %s28, 1
    %s36 = ssub.s32 %s28, %s35
    %p37 = scmp.eq.s32.totalorder %s36, 0
    %s39 = sadd.s32 %s38, 1
    %s40 = scalar_select %p37, %s38, %s39
    %p43 = pneg %p37
    %p44 = scmp.eq.s32.totalorder %s28, 1
    %p45 = por %p43, %p44
    %p46 = scmp.ne.s32.totalorder %s38, %s41
    %p47 = scmp.eq.s32.totalorder %s28, 0
    %p48 = por %p46, %p47
    %p49 = scmp.ne.s32.totalorder %s38, %s41
    %p50 = scmp.eq.s32.totalorder %s33, 1
    %p51 = por %p49, %p50
    %p52 = scmp.ne.s32.totalorder %s41, %s42
    %p53 = scmp.eq.s32.totalorder %s33, 0
    %p54 = por %p52, %p53
    %p55 = scmp.ne.s32.totalorder %s41, %s42
    %p56 = scmp.eq.s32.totalorder %s34, 1
    %p57 = por %p55, %p56
    %p59 = scmp.ne.s32.totalorder %s42, %s58
    %p60 = scmp.eq.s32.totalorder %s34, 0
    %p61 = por %p59, %p60
    %s63 = sadd.s32 %s62, 1
    %p66 = scmp.eq.s32.totalorder %s28, 1
    %p67 = scmp.ne.s32.totalorder %s62, %s64
    %p68 = scmp.eq.s32.totalorder %s28, 0
    %p69 = por %p67, %p68
    %p70 = scmp.ne.s32.totalorder %s62, %s64
    %p71 = scmp.eq.s32.totalorder %s33, 1
    %p72 = por %p70, %p71
    %p73 = scmp.ne.s32.totalorder %s64, %s65
    %p74 = scmp.eq.s32.totalorder %s33, 0
    %p75 = por %p73, %p74
    %p76 = scmp.ne.s32.totalorder %s64, %s65
    %p77 = scmp.eq.s32.totalorder %s34, 1
    %p78 = por %p76, %p77
    %p80 = scmp.ne.s32.totalorder %s65, %s79
    %p81 = scmp.eq.s32.totalorder %s34, 0
    %p82 = por %p80, %p81
    %s84 = sadd.s32 %s83, 1
    %p87 = scmp.eq.s32.totalorder %s28, 1
    %p88 = scmp.ne.s32.totalorder %s83, %s85
    %p89 = scmp.eq.s32.totalorder %s28, 0
    %p90 = por %p88, %p89
    %p91 = scmp.ne.s32.totalorder %s83, %s85
    %p92 = scmp.eq.s32.totalorder %s33, 1
    %p93 = por %p91, %p92
    %p94 = scmp.ne.s32.totalorder %s85, %s86
    %p95 = scmp.eq.s32.totalorder %s33, 0
    %p96 = por %p94, %p95
    %p97 = scmp.ne.s32.totalorder %s85, %s86
    %p98 = scmp.eq.s32.totalorder %s34, 1
    %p99 = por %p97, %p98
    %p101 = scmp.ne.s32.totalorder %s86, %s100
    %p102 = scmp.eq.s32.totalorder %s34, 0
    %p103 = por %p101, %p102
    %s105 = sadd.s32 %s104, 1
    %p108 = scmp.eq.s32.totalorder %s28, 1
    %p109 = scmp.ne.s32.totalorder %s104, %s106
    %p110 = scmp.eq.s32.totalorder %s28, 0
    %p111 = por %p109, %p110
    %p112 = scmp.ne.s32.totalorder %s104, %s106
    %p113 = scmp.eq.s32.totalorder %s33, 1
    %p114 = por %p112, %p113
    %p115 = scmp.ne.s32.totalorder %s106, %s107
    %p116 = scmp.eq.s32.totalorder %s33, 0
    %p117 = por %p115, %p116
    %p118 = scmp.ne.s32.totalorder %s106, %s107
    %p119 = scmp.eq.s32.totalorder %s34, 1
    %p120 = por %p118, %p119
    %p122 = scmp.ne.s32.totalorder %s107, %s121
    %p123 = scmp.eq.s32.totalorder %s34, 0
    %p124 = por %p122, %p123
    %s126 = sadd.s32 %s125, 1
    %p129 = scmp.eq.s32.totalorder %s28, 1
    %p130 = scmp.ne.s32.totalorder %s125, %s127
    %p131 = scmp.eq.s32.totalorder %s28, 0
    %p132 = por %p130, %p131
    %p133 = scmp.ne.s32.totalorder %s125, %s127
    %p134 = scmp.eq.s32.totalorder %s33, 1
    %p135 = por %p133, %p134
    %p136 = scmp.ne.s32.totalorder %s127, %s128
    %p137 = scmp.eq.s32.totalorder %s33, 0
    %p138 = por %p136, %p137
    %p139 = scmp.ne.s32.totalorder %s127, %s128
    %p140 = scmp.eq.s32.totalorder %s34, 1
    %p141 = por %p139, %p140
    %p143 = scmp.ne.s32.totalorder %s128, %s142
    %p144 = scmp.eq.s32.totalorder %s34, 0
    %p145 = por %p143, %p144
    %s147 = sadd.s32 %s146, 1
    %p150 = scmp.eq.s32.totalorder %s28, 1
    %p151 = scmp.ne.s32.totalorder %s146, %s148
    %p152 = scmp.eq.s32.totalorder %s28, 0
    %p153 = por %p151, %p152
    %p154 = scmp.ne.s32.totalorder %s146, %s148
    %p155 = scmp.eq.s32.totalorder %s33, 1
    %p156 = por %p154, %p155
    %p157 = scmp.ne.s32.totalorder %s148, %s149
    %p158 = scmp.eq.s32.totalorder %s33, 0
    %p159 = por %p157, %p158
    %p160 = scmp.ne.s32.totalorder %s148, %s149
    %p161 = scmp.eq.s32.totalorder %s34, 1
    %p162 = por %p160, %p161
    %p164 = scmp.ne.s32.totalorder %s149, %s163
    %p165 = scmp.eq.s32.totalorder %s34, 0
    %p166 = por %p164, %p165
    %s168 = sadd.s32 %s167, 1
    %p171 = scmp.eq.s32.totalorder %s28, 1
    %p172 = scmp.ne.s32.totalorder %s167, %s169
    %p173 = scmp.eq.s32.totalorder %s28, 0
    %p174 = por %p172, %p173
    %p175 = scmp.ne.s32.totalorder %s167, %s169
    %p176 = scmp.eq.s32.totalorder %s33, 1
    %p177 = por %p175, %p176
    %p178 = scmp.ne.s32.totalorder %s169, %s170
    %p179 = scmp.eq.s32.totalorder %s33, 0
    %p180 = por %p178, %p179
    %p181 = scmp.ne.s32.totalorder %s169, %s170
    %p182 = scmp.eq.s32.totalorder %s34, 1
    %p183 = por %p181, %p182
    %p185 = scmp.ne.s32.totalorder %s170, %s184
    %p186 = scmp.eq.s32.totalorder %s34, 0
    %p187 = por %p185, %p186
    %s189 = sadd.s32 %s188, 1
    %p192 = scmp.eq.s32.totalorder %s28, 1
    %p193 = scmp.ne.s32.totalorder %s188, %s190
    %p194 = scmp.eq.s32.totalorder %s28, 0
    %p195 = por %p193, %p194
    %p196 = scmp.ne.s32.totalorder %s188, %s190
    %p197 = scmp.eq.s32.totalorder %s33, 1
    %p198 = por %p196, %p197
    %p199 = scmp.ne.s32.totalorder %s190, %s191
    %p200 = scmp.eq.s32.totalorder %s33, 0
    %p201 = por %p199, %p200
    %p202 = scmp.ne.s32.totalorder %s190, %s191
    %p203 = scmp.eq.s32.totalorder %s34, 1
    %p204 = por %p202, %p203
    %p206 = scmp.ne.s32.totalorder %s191, %s205
    %p207 = scmp.eq.s32.totalorder %s34, 0
    %p208 = por %p206, %p207
    %s210 = sadd.s32 %s209, 1
    %p213 = scmp.eq.s32.totalorder %s28, 1
    %p214 = scmp.ne.s32.totalorder %s209, %s211
    %p215 = scmp.eq.s32.totalorder %s28, 0
    %p216 = por %p214, %p215
    %p217 = scmp.ne.s32.totalorder %s209, %s211
    %p218 = scmp.eq.s32.totalorder %s33, 1
    %p219 = por %p217, %p218
    %p220 = scmp.ne.s32.totalorder %s211, %s212
    %p221 = scmp.eq.s32.totalorder %s33, 0
    %p222 = por %p220, %p221
    %p223 = scmp.ne.s32.totalorder %s211, %s212
    %p224 = scmp.eq.s32.totalorder %s34, 1
    %p225 = por %p223, %p224
    %p227 = scmp.ne.s32.totalorder %s212, %s226
    %p228 = scmp.eq.s32.totalorder %s34, 0
    %p229 = por %p227, %p228
    %s231 = sadd.s32 %s230, 1
    %p234 = scmp.eq.s32.totalorder %s28, 1
    %p235 = scmp.ne.s32.totalorder %s230, %s232
    %p236 = scmp.eq.s32.totalorder %s28, 0
    %p237 = por %p235, %p236
    %p238 = scmp.ne.s32.totalorder %s230, %s232
    %p239 = scmp.eq.s32.totalorder %s33, 1
    %p240 = por %p238, %p239
    %p241 = scmp.ne.s32.totalorder %s232, %s233
    %p242 = scmp.eq.s32.totalorder %s33, 0
    %p243 = por %p241, %p242
    %p244 = scmp.ne.s32.totalorder %s232, %s233
    %p245 = scmp.eq.s32.totalorder %s34, 1
    %p246 = por %p244, %p245
    %p248 = scmp.ne.s32.totalorder %s233, %s247
    %p249 = scmp.eq.s32.totalorder %s34, 0
    %p250 = por %p248, %p249
    %s252 = sadd.s32 %s251, 1
    %p255 = scmp.eq.s32.totalorder %s28, 1
    %p256 = scmp.ne.s32.totalorder %s251, %s253
    %p257 = scmp.eq.s32.totalorder %s28, 0
    %p258 = por %p256, %p257
    %p259 = scmp.ne.s32.totalorder %s251, %s253
    %p260 = scmp.eq.s32.totalorder %s33, 1
    %p261 = por %p259, %p260
    %p262 = scmp.ne.s32.totalorder %s253, %s254
    %p263 = scmp.eq.s32.totalorder %s33, 0
    %p264 = por %p262, %p263
    %p265 = scmp.ne.s32.totalorder %s253, %s254
    %p266 = scmp.eq.s32.totalorder %s34, 1
    %p267 = por %p265, %p266
    %p269 = scmp.ne.s32.totalorder %s254, %s268
    %p270 = scmp.eq.s32.totalorder %s34, 0
    %p271 = por %p269, %p270
    %s273 = sadd.s32 %s272, 1
    %p276 = scmp.eq.s32.totalorder %s28, 1
    %p277 = scmp.ne.s32.totalorder %s272, %s274
    %p278 = scmp.eq.s32.totalorder %s28, 0
    %p279 = por %p277, %p278
    %p280 = scmp.ne.s32.totalorder %s272, %s274
    %p281 = scmp.eq.s32.totalorder %s33, 1
    %p282 = por %p280, %p281
    %p283 = scmp.ne.s32.totalorder %s274, %s275
    %p284 = scmp.eq.s32.totalorder %s33, 0
    %p285 = por %p283, %p284
    %p286 = scmp.ne.s32.totalorder %s274, %s275
    %p287 = scmp.eq.s32.totalorder %s34, 1
    %p288 = por %p286, %p287
    %p290 = scmp.ne.s32.totalorder %s275, %s289
    %p291 = scmp.eq.s32.totalorder %s34, 0
    %p292 = por %p290, %p291
    %s294 = sadd.s32 %s293, 1
    %p297 = scmp.eq.s32.totalorder %s28, 1
    %p298 = scmp.ne.s32.totalorder %s293, %s295
    %p299 = scmp.eq.s32.totalorder %s28, 0
    %p300 = por %p298, %p299
    %p301 = scmp.ne.s32.totalorder %s293, %s295
    %p302 = scmp.eq.s32.totalorder %s33, 1
    %p303 = por %p301, %p302
    %p304 = scmp.ne.s32.totalorder %s295, %s296
    %p305 = scmp.eq.s32.totalorder %s33, 0
    %p306 = por %p304, %p305
    %p307 = scmp.ne.s32.totalorder %s295, %s296
    %p308 = scmp.eq.s32.totalorder %s34, 1
    %p309 = por %p307, %p308
    %p311 = scmp.ne.s32.totalorder %s296, %s310
    %p312 = scmp.eq.s32.totalorder %s34, 0
    %p313 = por %p311, %p312
    %s315 = sadd.s32 %s314, 1
    %p318 = scmp.eq.s32.totalorder %s28, 1
    %p319 = scmp.ne.s32.totalorder %s314, %s316
    %p320 = scmp.eq.s32.totalorder %s28, 0
    %p321 = por %p319, %p320
    %p322 = scmp.ne.s32.totalorder %s314, %s316
    %p323 = scmp.eq.s32.totalorder %s33, 1
    %p324 = por %p322, %p323
    %p325 = scmp.ne.s32.totalorder %s316, %s317
    %p326 = scmp.eq.s32.totalorder %s33, 0
    %p327 = por %p325, %p326
    %p328 = scmp.ne.s32.totalorder %s316, %s317
    %p329 = scmp.eq.s32.totalorder %s34, 1
    %p330 = por %p328, %p329
    %p332 = scmp.ne.s32.totalorder %s317, %s331
    %p333 = scmp.eq.s32.totalorder %s34, 0
    %p334 = por %p332, %p333
    %s336 = sadd.s32 %s335, 1
    %p339 = scmp.eq.s32.totalorder %s28, 1
    %p340 = scmp.ne.s32.totalorder %s335, %s337
    %p341 = scmp.eq.s32.totalorder %s28, 0
    %p342 = por %p340, %p341
    %p343 = scmp.ne.s32.totalorder %s335, %s337
    %p344 = scmp.eq.s32.totalorder %s33, 1
    %p345 = por %p343, %p344
    %p346 = scmp.ne.s32.totalorder %s337, %s338
    %p347 = scmp.eq.s32.totalorder %s33, 0
    %p348 = por %p346, %p347
    %p349 = scmp.ne.s32.totalorder %s337, %s338
    %p350 = scmp.eq.s32.totalorder %s34, 1
    %p351 = por %p349, %p350
    %p353 = scmp.ne.s32.totalorder %s338, %s352
    %p354 = scmp.eq.s32.totalorder %s34, 0
    %p355 = por %p353, %p354
    %s357 = sadd.s32 %s356, 1
    %p360 = scmp.eq.s32.totalorder %s28, 1
    %p361 = scmp.ne.s32.totalorder %s356, %s358
    %p362 = scmp.eq.s32.totalorder %s28, 0
    %p363 = por %p361, %p362
    %p364 = scmp.ne.s32.totalorder %s356, %s358
    %p365 = scmp.eq.s32.totalorder %s33, 1
    %p366 = por %p364, %p365
    %p367 = scmp.ne.s32.totalorder %s358, %s359
    %p368 = scmp.eq.s32.totalorder %s33, 0
    %p369 = por %p367, %p368
    %p370 = scmp.ne.s32.totalorder %s358, %s359
    %p371 = scmp.eq.s32.totalorder %s34, 1
    %p372 = por %p370, %p371
    %p374 = scmp.ne.s32.totalorder %s359, %s373
    %p375 = scmp.eq.s32.totalorder %s34, 0
    %p376 = por %p374, %p375
    %s378 = sadd.s32 %s377, 1
    %p381 = scmp.eq.s32.totalorder %s28, 1
    %p382 = scmp.ne.s32.totalorder %s377, %s379
    %p383 = scmp.eq.s32.totalorder %s28, 0
    %p384 = por %p382, %p383
    %p385 = scmp.ne.s32.totalorder %s377, %s379
    %p386 = scmp.eq.s32.totalorder %s33, 1
    %p387 = por %p385, %p386
    %p388 = scmp.ne.s32.totalorder %s379, %s380
    %p389 = scmp.eq.s32.totalorder %s33, 0
    %p390 = por %p388, %p389
    %p391 = scmp.ne.s32.totalorder %s379, %s380
    %p392 = scmp.eq.s32.totalorder %s34, 1
    %p393 = por %p391, %p392
    %p395 = scmp.ne.s32.totalorder %s380, %s394
    %p396 = scmp.eq.s32.totalorder %s34, 0
    %p397 = por %p395, %p396
    %s399 = sadd.s32 %s398, 1
    %p402 = scmp.eq.s32.totalorder %s28, 1
    %p403 = scmp.ne.s32.totalorder %s398, %s400
    %p404 = scmp.eq.s32.totalorder %s28, 0
    %p405 = por %p403, %p404
    %p406 = scmp.ne.s32.totalorder %s398, %s400
    %p407 = scmp.eq.s32.totalorder %s33, 1
    %p408 = por %p406, %p407
    %p409 = scmp.ne.s32.totalorder %s400, %s401
    %p410 = scmp.eq.s32.totalorder %s33, 0
    %p411 = por %p409, %p410
    %p412 = scmp.ne.s32.totalorder %s400, %s401
    %p413 = scmp.eq.s32.totalorder %s34, 1
    %p414 = por %p412, %p413
    %p416 = scmp.ne.s32.totalorder %s401, %s415
    %p417 = scmp.eq.s32.totalorder %s34, 0
    %p418 = por %p416, %p417
    %s420 = sadd.s32 %s419, 1
    %p423 = scmp.eq.s32.totalorder %s28, 1
    %p424 = scmp.ne.s32.totalorder %s419, %s421
    %p425 = scmp.eq.s32.totalorder %s28, 0
    %p426 = por %p424, %p425
    %p427 = scmp.ne.s32.totalorder %s419, %s421
    %p428 = scmp.eq.s32.totalorder %s33, 1
    %p429 = por %p427, %p428
    %p430 = scmp.ne.s32.totalorder %s421, %s422
    %p431 = scmp.eq.s32.totalorder %s33, 0
    %p432 = por %p430, %p431
    %p433 = scmp.ne.s32.totalorder %s421, %s422
    %p434 = scmp.eq.s32.totalorder %s34, 1
    %p435 = por %p433, %p434
    %p437 = scmp.ne.s32.totalorder %s422, %s436
    %p438 = scmp.eq.s32.totalorder %s34, 0
    %p439 = por %p437, %p438
    %s441 = sadd.s32 %s440, 1
    %p444 = scmp.eq.s32.totalorder %s28, 1
    %p445 = scmp.ne.s32.totalorder %s440, %s442
    %p446 = scmp.eq.s32.totalorder %s28, 0
    %p447 = por %p445, %p446
    %p448 = scmp.ne.s32.totalorder %s440, %s442
    %p449 = scmp.eq.s32.totalorder %s33, 1
    %p450 = por %p448, %p449
    %p451 = scmp.ne.s32.totalorder %s442, %s443
    %p452 = scmp.eq.s32.totalorder %s33, 0
    %p453 = por %p451, %p452
    %p454 = scmp.ne.s32.totalorder %s442, %s443
    %p455 = scmp.eq.s32.totalorder %s34, 1
    %p456 = por %p454, %p455
    %p458 = scmp.ne.s32.totalorder %s443, %s457
    %p459 = scmp.eq.s32.totalorder %s34, 0
    %p460 = por %p458, %p459
    %s462 = sadd.s32 %s461, 1
    %p465 = scmp.eq.s32.totalorder %s28, 1
    %p466 = scmp.ne.s32.totalorder %s461, %s463
    %p467 = scmp.eq.s32.totalorder %s28, 0
    %p468 = por %p466, %p467
    %p469 = scmp.ne.s32.totalorder %s461, %s463
    %p470 = scmp.eq.s32.totalorder %s33, 1
    %p471 = por %p469, %p470
    %p472 = scmp.ne.s32.totalorder %s463, %s464
    %p473 = scmp.eq.s32.totalorder %s33, 0
    %p474 = por %p472, %p473
    %p475 = scmp.ne.s32.totalorder %s463, %s464
    %p476 = scmp.eq.s32.totalorder %s34, 1
    %p477 = por %p475, %p476
    %p479 = scmp.ne.s32.totalorder %s464, %s478
    %p480 = scmp.eq.s32.totalorder %s34, 0
    %p481 = por %p479, %p480
    %s483 = sadd.s32 %s482, 1
    %p486 = scmp.eq.s32.totalorder %s28, 1
    %p487 = scmp.ne.s32.totalorder %s482, %s484
    %p488 = scmp.eq.s32.totalorder %s28, 0
    %p489 = por %p487, %p488
    %p490 = scmp.ne.s32.totalorder %s482, %s484
    %p491 = scmp.eq.s32.totalorder %s33, 1
    %p492 = por %p490, %p491
    %p493 = scmp.ne.s32.totalorder %s484, %s485
    %p494 = scmp.eq.s32.totalorder %s33, 0
    %p495 = por %p493, %p494
    %p496 = scmp.ne.s32.totalorder %s484, %s485
    %p497 = scmp.eq.s32.totalorder %s34, 1
    %p498 = por %p496, %p497
    %p500 = scmp.ne.s32.totalorder %s485, %s499
    %p501 = scmp.eq.s32.totalorder %s34, 0
    %p502 = por %p500, %p501
    %s503 = ssub.s32 %s28, %s35
    %p504 = scmp.eq.s32.totalorder %s503, 0
    %s506 = sadd.s32 %s505, 1
    %s507 = scalar_select %p504, %s505, %s506
    %p510 = pneg %p504
    %p511 = scmp.eq.s32.totalorder %s28, 1
    %p512 = por %p510, %p511
    %p513 = scmp.ne.s32.totalorder %s505, %s508
    %p514 = scmp.eq.s32.totalorder %s28, 0
    %p515 = por %p513, %p514
    %p516 = scmp.ne.s32.totalorder %s505, %s508
    %p517 = scmp.eq.s32.totalorder %s33, 1
    %p518 = por %p516, %p517
    %p519 = scmp.ne.s32.totalorder %s508, %s509
    %p520 = scmp.eq.s32.totalorder %s33, 0
    %p521 = por %p519, %p520
    %p522 = scmp.ne.s32.totalorder %s508, %s509
    %p523 = scmp.eq.s32.totalorder %s34, 1
    %p524 = por %p522, %p523
    %p526 = scmp.ne.s32.totalorder %s509, %s525
    %p527 = scmp.eq.s32.totalorder %s34, 0
    %p528 = por %p526, %p527
    %p529 = scmp.le.s32.totalorder 1, %s28
    %p530 = scmp.lt.s32.totalorder %s28, 3
    %p531 = pnand %p529, %p530
    %p532 = pneg %p531
    // Predicated region
    $region9: #{tpu_custom_call.1} parent=5 // pred_check
      _
    $region10: #{tpu_custom_call.1} parent=5 // pred_check_branch
      %534 = sbr.rel (%p531) target = $region12
    $region11: #{tpu_custom_call.1} parent=5 // pred_region
      %s535 = ssub.s32 %s28, 1
      // Predicated region
      $region13: #{tpu_custom_call.1} parent=11 // pred_check
        %p536 = pneg %p75
      $region14: #{tpu_custom_call.1} parent=11 // pred_check_branch
        %538 = sbr.rel (%p536) target = $region16
      $region15: #{tpu_custom_call.1} parent=11 // pred_region
        _
      $region16: #{tpu_custom_call.1} parent=11 // pred_fallthru
        _
      // Predicated region
      $region17: #{tpu_custom_call.1} parent=11 // pred_check
        %p539 = pneg %p96
      $region18: #{tpu_custom_call.1} parent=11 // pred_check_branch
        %541 = sbr.rel (%p539) target = $region20
      $region19: #{tpu_custom_call.1} parent=11 // pred_region
        _
      $region20: #{tpu_custom_call.1} parent=11 // pred_fallthru
        _
      // Predicated region
      $region21: #{tpu_custom_call.1} parent=11 // pred_check
        %p542 = pneg %p117
      $region22: #{tpu_custom_call.1} parent=11 // pred_check_branch
        %544 = sbr.rel (%p542) target = $region24
      $region23: #{tpu_custom_call.1} parent=11 // pred_region
        _
      $region24: #{tpu_custom_call.1} parent=11 // pred_fallthru
        _
      // Predicated region
      $region25: #{tpu_custom_call.1} parent=11 // pred_check
        %p545 = pneg %p138
      $region26: #{tpu_custom_call.1} parent=11 // pred_check_branch
        %547 = sbr.rel (%p545) target = $region28
      $region27: #{tpu_custom_call.1} parent=11 // pred_region
        _
      $region28: #{tpu_custom_call.1} parent=11 // pred_fallthru
        _
      // Predicated region
      $region29: #{tpu_custom_call.1} parent=11 // pred_check
        %p548 = pneg %p159
      $region30: #{tpu_custom_call.1} parent=11 // pred_check_branch
        %550 = sbr.rel (%p548) target = $region32
      $region31: #{tpu_custom_call.1} parent=11 // pred_region
        _
      $region32: #{tpu_custom_call.1} parent=11 // pred_fallthru
        _
      // Predicated region
      $region33: #{tpu_custom_call.1} parent=11 // pred_check
        %p551 = pneg %p180
      $region34: #{tpu_custom_call.1} parent=11 // pred_check_branch
        %553 = sbr.rel (%p551) target = $region36
      $region35: #{tpu_custom_call.1} parent=11 // pred_region
        _
      $region36: #{tpu_custom_call.1} parent=11 // pred_fallthru
        _
      // Predicated region
      $region37: #{tpu_custom_call.1} parent=11 // pred_check
        %p554 = pneg %p201
      $region38: #{tpu_custom_call.1} parent=11 // pred_check_branch
        %556 = sbr.rel (%p554) target = $region40
      $region39: #{tpu_custom_call.1} parent=11 // pred_region
        _
      $region40: #{tpu_custom_call.1} parent=11 // pred_fallthru
        _
      // Predicated region
      $region41: #{tpu_custom_call.1} parent=11 // pred_check
        %p557 = pneg %p222
      $region42: #{tpu_custom_call.1} parent=11 // pred_check_branch
        %559 = sbr.rel (%p557) target = $region44
      $region43: #{tpu_custom_call.1} parent=11 // pred_region
        _
      $region44: #{tpu_custom_call.1} parent=11 // pred_fallthru
        _
      // Predicated region
      $region45: #{tpu_custom_call.1} parent=11 // pred_check
        %p560 = pneg %p243
      $region46: #{tpu_custom_call.1} parent=11 // pred_check_branch
        %562 = sbr.rel (%p560) target = $region48
      $region47: #{tpu_custom_call.1} parent=11 // pred_region
        _
      $region48: #{tpu_custom_call.1} parent=11 // pred_fallthru
        _
      // Predicated region
      $region49: #{tpu_custom_call.1} parent=11 // pred_check
        %p563 = pneg %p264
      $region50: #{tpu_custom_call.1} parent=11 // pred_check_branch
        %565 = sbr.rel (%p563) target = $region52
      $region51: #{tpu_custom_call.1} parent=11 // pred_region
        _
      $region52: #{tpu_custom_call.1} parent=11 // pred_fallthru
        _
      // Predicated region
      $region53: #{tpu_custom_call.1} parent=11 // pred_check
        %p566 = pneg %p285
      $region54: #{tpu_custom_call.1} parent=11 // pred_check_branch
        %568 = sbr.rel (%p566) target = $region56
      $region55: #{tpu_custom_call.1} parent=11 // pred_region
        _
      $region56: #{tpu_custom_call.1} parent=11 // pred_fallthru
        _
      // Predicated region
      $region57: #{tpu_custom_call.1} parent=11 // pred_check
        %p569 = pneg %p306
      $region58: #{tpu_custom_call.1} parent=11 // pred_check_branch
        %571 = sbr.rel (%p569) target = $region60
      $region59: #{tpu_custom_call.1} parent=11 // pred_region
        _
      $region60: #{tpu_custom_call.1} parent=11 // pred_fallthru
        _
      // Predicated region
      $region61: #{tpu_custom_call.1} parent=11 // pred_check
        %p572 = pneg %p327
      $region62: #{tpu_custom_call.1} parent=11 // pred_check_branch
        %574 = sbr.rel (%p572) target = $region64
      $region63: #{tpu_custom_call.1} parent=11 // pred_region
        _
      $region64: #{tpu_custom_call.1} parent=11 // pred_fallthru
        _
      // Predicated region
      $region65: #{tpu_custom_call.1} parent=11 // pred_check
        %p575 = pneg %p348
      $region66: #{tpu_custom_call.1} parent=11 // pred_check_branch
        %577 = sbr.rel (%p575) target = $region68
      $region67: #{tpu_custom_call.1} parent=11 // pred_region
        _
      $region68: #{tpu_custom_call.1} parent=11 // pred_fallthru
        _
      // Predicated region
      $region69: #{tpu_custom_call.1} parent=11 // pred_check
        %p578 = pneg %p369
      $region70: #{tpu_custom_call.1} parent=11 // pred_check_branch
        %580 = sbr.rel (%p578) target = $region72
      $region71: #{tpu_custom_call.1} parent=11 // pred_region
        _
      $region72: #{tpu_custom_call.1} parent=11 // pred_fallthru
        _
      // Predicated region
      $region73: #{tpu_custom_call.1} parent=11 // pred_check
        %p581 = pneg %p390
      $region74: #{tpu_custom_call.1} parent=11 // pred_check_branch
        %583 = sbr.rel (%p581) target = $region76
      $region75: #{tpu_custom_call.1} parent=11 // pred_region
        _
      $region76: #{tpu_custom_call.1} parent=11 // pred_fallthru
        _
      // Predicated region
      $region77: #{tpu_custom_call.1} parent=11 // pred_check
        %p584 = pneg %p411
      $region78: #{tpu_custom_call.1} parent=11 // pred_check_branch
        %586 = sbr.rel (%p584) target = $region80
      $region79: #{tpu_custom_call.1} parent=11 // pred_region
        _
      $region80: #{tpu_custom_call.1} parent=11 // pred_fallthru
        _
      // Predicated region
      $region81: #{tpu_custom_call.1} parent=11 // pred_check
        %p587 = pneg %p432
      $region82: #{tpu_custom_call.1} parent=11 // pred_check_branch
        %589 = sbr.rel (%p587) target = $region84
      $region83: #{tpu_custom_call.1} parent=11 // pred_region
        _
      $region84: #{tpu_custom_call.1} parent=11 // pred_fallthru
        _
      // Predicated region
      $region85: #{tpu_custom_call.1} parent=11 // pred_check
        %p590 = pneg %p453
      $region86: #{tpu_custom_call.1} parent=11 // pred_check_branch
        %592 = sbr.rel (%p590) target = $region88
      $region87: #{tpu_custom_call.1} parent=11 // pred_region
        _
      $region88: #{tpu_custom_call.1} parent=11 // pred_fallthru
        _
      // Predicated region
      $region89: #{tpu_custom_call.1} parent=11 // pred_check
        %p593 = pneg %p474
      $region90: #{tpu_custom_call.1} parent=11 // pred_check_branch
        %595 = sbr.rel (%p593) target = $region92
      $region91: #{tpu_custom_call.1} parent=11 // pred_region
        _
      $region92: #{tpu_custom_call.1} parent=11 // pred_fallthru
        _
      // Predicated region
      $region93: #{tpu_custom_call.1} parent=11 // pred_check
        %p596 = pneg %p495
      $region94: #{tpu_custom_call.1} parent=11 // pred_check_branch
        %598 = sbr.rel (%p596) target = $region96
      $region95: #{tpu_custom_call.1} parent=11 // pred_region
        _
      $region96: #{tpu_custom_call.1} parent=11 // pred_fallthru
        _
    $region12: #{tpu_custom_call.1} parent=5 // pred_fallthru
      _
    %p599 = scmp.lt.s32.totalorder %s28, 2
    // Predicated region
    $region97: #{tpu_custom_call.1} parent=5 // pred_check
      %p600 = pneg %p599
    $region98: #{tpu_custom_call.1} parent=5 // pred_check_branch
      %602 = sbr.rel (%p600) target = $region100
    $region99: #{tpu_custom_call.1} parent=5 // pred_region
      // Predicated region
      $region101: #{tpu_custom_call.1} parent=99 // pred_check
        %p603 = pneg %p48
      $region102: #{tpu_custom_call.1} parent=99 // pred_check_branch
        %605 = sbr.rel (%p603) target = $region104
      $region103: #{tpu_custom_call.1} parent=99 // pred_region
        %p606 = scmp.lt.s32.totalorder %s28, 1
        %s607 = scalar_select %p606, %s28, 1
        %s608 = smul.addr %s607, 32
        %s609 = smul.addr %s608, 8
        %s610 = scalar_lea.vmem %s0, %s609
      $region104: #{tpu_custom_call.1} parent=99 // pred_fallthru
        _
    $region100: #{tpu_custom_call.1} parent=5 // pred_fallthru
      _
    %p611 = scmp.le.s32.totalorder 1, %s28
    %p612 = scmp.lt.s32.totalorder %s28, 3
    %p613 = pnand %p611, %p612
    %p614 = pneg %p613
    // Predicated region
    $region105: #{tpu_custom_call.1} parent=5 // pred_check
      _
    $region106: #{tpu_custom_call.1} parent=5 // pred_check_branch
      %616 = sbr.rel (%p613) target = $region108
    $region107: #{tpu_custom_call.1} parent=5 // pred_region
      %s617 = ssub.s32 %s28, 1
      %p618 = scmp.lt.s32.totalorder %s33, 1
      %s619 = scalar_select %p618, %s33, 1
      %s620 = smul.addr %s619, 32
      %s621 = smul.addr %s620, 8
      %s622 = scalar_lea.vmem %s0, %s621
      %p623 = pneg %p54
      %p624 = pneg %p51
      %p625 = pneg %p75
      %p626 = pneg %p72
      %p627 = pneg %p96
      %p628 = pneg %p93
      %p629 = pneg %p117
      %p630 = pneg %p114
      %p631 = pneg %p138
      %p632 = pneg %p135
      %p633 = pneg %p159
      %p634 = pneg %p156
      %p635 = pneg %p180
      %p636 = pneg %p177
      %p637 = pneg %p201
      %p638 = pneg %p198
      %p639 = pneg %p222
      %p640 = pneg %p219
      %p641 = pneg %p243
      %p642 = pneg %p240
      %p643 = pneg %p264
      %p644 = pneg %p261
      %p645 = pneg %p285
      %p646 = pneg %p282
      %p647 = pneg %p306
      %p648 = pneg %p303
      %p649 = pneg %p327
      %p650 = pneg %p324
      %p651 = pneg %p348
      %p652 = pneg %p345
      %p653 = pneg %p369
      %p654 = pneg %p366
      %p655 = pneg %p390
      %p656 = pneg %p387
      %p657 = pneg %p411
      %p658 = pneg %p408
      %p659 = pneg %p432
      %p660 = pneg %p429
      %p661 = pneg %p453
      %p662 = pneg %p450
      %p663 = pneg %p474
      %p664 = pneg %p471
      %p665 = pneg %p495
      %p666 = pneg %p492
      %p667 = pneg %p521
      %p668 = pneg %p518
      %p669 = scmp.lt.s32.totalorder %s33, 1
      %s670 = scalar_select %p669, %s33, 1
      %s671 = smul.addr %s670, 32
      %s672 = smul.addr %s671, 8
      %s673 = scalar_lea.vmem %s22, %s672
      %p674 = scmp.lt.s32.totalorder %s33, 1
      %s675 = scalar_select %p674, %s33, 1
      %s676 = smul.addr %s675, 32
      %s677 = smul.addr %s676, 8
      %s678 = scalar_lea.vmem %s0, %s677
      %p679 = scmp.lt.s32.totalorder %s33, 1
      %s680 = scalar_select %p679, %s33, 1
      %s681 = smul.addr %s680, 32
      %s682 = smul.addr %s681, 8
      %s683 = scalar_lea.vmem %s22, %s682
      %685 = vst [vmem:[#allocation4] sm:$0xff] 0
      %vm686 = vcmask 523264
      %687 = vst.msk [vmem:[#allocation4 + $0x8] sm:$0xff] %vm686, 0
      %688 = vst [vmem:[#allocation4 + $0x10] sm:$0xff] 0
      %689 = vst.msk [vmem:[#allocation4 + $0x18] sm:$0xff] %vm686, 0
      %690 = vst [vmem:[#allocation4 + $0x20] sm:$0xff] 0
      %691 = vst.msk [vmem:[#allocation4 + $0x28] sm:$0xff] %vm686, 0
      %692 = vst [vmem:[#allocation4 + $0x30] sm:$0xff] 0
      %693 = vst.msk [vmem:[#allocation4 + $0x38] sm:$0xff] %vm686, 0
      %694 = vst [vmem:[#allocation4 + $0x40] sm:$0xff] 0
      %695 = vst.msk [vmem:[#allocation4 + $0x48] sm:$0xff] %vm686, 0
      %696 = vst [vmem:[#allocation4 + $0x50] sm:$0xff] 0
      %697 = vst.msk [vmem:[#allocation4 + $0x58] sm:$0xff] %vm686, 0
      %s698 = scalar_lea.vmem [#allocation4], 864
      %699 = vst [vmem:[%s698] sm:$0xff] 0
      %700 = vst.msk [vmem:[%s698 + $0x8] sm:$0xff] %vm686, 0
      %701 = vst [vmem:[%s698 + $0x10] sm:$0xff] 0
      %702 = vst.msk [vmem:[%s698 + $0x18] sm:$0xff] %vm686, 0
      %703 = vst [vmem:[%s698 + $0x20] sm:$0xff] 0
      %704 = vst.msk [vmem:[%s698 + $0x28] sm:$0xff] %vm686, 0
      %705 = vst [vmem:[%s698 + $0x30] sm:$0xff] 0
      %706 = vst.msk [vmem:[%s698 + $0x38] sm:$0xff] %vm686, 0
      %707 = vst [vmem:[%s698 + $0x40] sm:$0xff] 0
      %708 = vst.msk [vmem:[%s698 + $0x48] sm:$0xff] %vm686, 0
      %709 = vst [vmem:[%s698 + $0x50] sm:$0xff] 0
      %710 = vst.msk [vmem:[%s698 + $0x58] sm:$0xff] %vm686, 0
      %711 = vst [vmem:[#allocation4] sm:$0xff] 0
      %712 = vst.msk [vmem:[#allocation4 + $0x8] sm:$0xff] %vm686, 0
      %713 = vst [vmem:[#allocation4 + $0x30] sm:$0xff] 0
      %714 = vst.msk [vmem:[#allocation4 + $0x38] sm:$0xff] %vm686, 0
      %715 = vst [vmem:[#allocation4 + $0x60] sm:$0xff] 0
      %716 = vst.msk [vmem:[#allocation4 + $0x68] sm:$0xff] %vm686, 0
      %717 = vst [vmem:[#allocation4 + $0x90] sm:$0xff] 0
      %718 = vst.msk [vmem:[#allocation4 + $0x98] sm:$0xff] %vm686, 0
      %719 = vst [vmem:[#allocation4 + $0xc0] sm:$0xff] 0
      %720 = vst.msk [vmem:[#allocation4 + $0xc8] sm:$0xff] %vm686, 0
      %721 = vst [vmem:[#allocation4 + $0xf0] sm:$0xff] 0
      %722 = vst.msk [vmem:[#allocation4 + $0xf8] sm:$0xff] %vm686, 0
      %723 = vst [vmem:[#allocation4 + $0x120] sm:$0xff] 0
      %724 = vst.msk [vmem:[#allocation4 + $0x128] sm:$0xff] %vm686, 0
      %725 = vst [vmem:[#allocation4 + $0x150] sm:$0xff] 0
      %726 = vst.msk [vmem:[#allocation4 + $0x158] sm:$0xff] %vm686, 0
      %727 = vst [vmem:[#allocation4 + $0x180] sm:$0xff] 0
      %728 = vst.msk [vmem:[#allocation4 + $0x188] sm:$0xff] %vm686, 0
      %729 = vst [vmem:[#allocation4 + $0x1b0] sm:$0xff] 0
      %730 = vst.msk [vmem:[#allocation4 + $0x1b8] sm:$0xff] %vm686, 0
      %731 = vst [vmem:[#allocation4 + $0x1e0] sm:$0xff] 0
      %732 = vst.msk [vmem:[#allocation4 + $0x1e8] sm:$0xff] %vm686, 0
      %733 = vst [vmem:[#allocation4 + $0x210] sm:$0xff] 0
      %734 = vst.msk [vmem:[#allocation4 + $0x218] sm:$0xff] %vm686, 0
      %735 = vst [vmem:[#allocation4 + $0x240] sm:$0xff] 0
      %736 = vst.msk [vmem:[#allocation4 + $0x248] sm:$0xff] %vm686, 0
      %737 = vst [vmem:[#allocation4 + $0x270] sm:$0xff] 0
      %738 = vst.msk [vmem:[#allocation4 + $0x278] sm:$0xff] %vm686, 0
      %739 = vst [vmem:[#allocation4 + $0x2a0] sm:$0xff] 0
      %740 = vst.msk [vmem:[#allocation4 + $0x2a8] sm:$0xff] %vm686, 0
      %741 = vst [vmem:[#allocation4 + $0x2d0] sm:$0xff] 0
      %742 = vst.msk [vmem:[#allocation4 + $0x2d8] sm:$0xff] %vm686, 0
      %743 = vst [vmem:[#allocation4 + $0x300] sm:$0xff] 0
      %744 = vst.msk [vmem:[#allocation4 + $0x308] sm:$0xff] %vm686, 0
      %745 = vst [vmem:[#allocation4 + $0x330] sm:$0xff] 0
      %746 = vst.msk [vmem:[#allocation4 + $0x338] sm:$0xff] %vm686, 0
      %747 = vst [vmem:[#allocation4 + $0x360] sm:$0xff] 0
      %748 = vst.msk [vmem:[#allocation4 + $0x368] sm:$0xff] %vm686, 0
      %749 = vst [vmem:[#allocation4 + $0x390] sm:$0xff] 0
      %750 = vst.msk [vmem:[#allocation4 + $0x398] sm:$0xff] %vm686, 0
      %751 = vst [vmem:[#allocation4 + $0x20] sm:$0xff] 0
      %752 = vst.msk [vmem:[#allocation4 + $0x28] sm:$0xff] %vm686, 0
      %753 = vst [vmem:[#allocation4 + $0x50] sm:$0xff] 0
      %754 = vst.msk [vmem:[#allocation4 + $0x58] sm:$0xff] %vm686, 0
      %755 = vst [vmem:[#allocation4 + $0x80] sm:$0xff] 0
      %756 = vst.msk [vmem:[#allocation4 + $0x88] sm:$0xff] %vm686, 0
      %757 = vst [vmem:[#allocation4 + $0xb0] sm:$0xff] 0
      %758 = vst.msk [vmem:[#allocation4 + $0xb8] sm:$0xff] %vm686, 0
      %759 = vst [vmem:[#allocation4 + $0xe0] sm:$0xff] 0
      %760 = vst.msk [vmem:[#allocation4 + $0xe8] sm:$0xff] %vm686, 0
      %761 = vst [vmem:[#allocation4 + $0x110] sm:$0xff] 0
      %762 = vst.msk [vmem:[#allocation4 + $0x118] sm:$0xff] %vm686, 0
      %763 = vst [vmem:[#allocation4 + $0x140] sm:$0xff] 0
      %764 = vst.msk [vmem:[#allocation4 + $0x148] sm:$0xff] %vm686, 0
      %765 = vst [vmem:[#allocation4 + $0x170] sm:$0xff] 0
      %766 = vst.msk [vmem:[#allocation4 + $0x178] sm:$0xff] %vm686, 0
      %767 = vst [vmem:[#allocation4 + $0x1a0] sm:$0xff] 0
      %768 = vst.msk [vmem:[#allocation4 + $0x1a8] sm:$0xff] %vm686, 0
      %769 = vst [vmem:[#allocation4 + $0x1d0] sm:$0xff] 0
      %770 = vst.msk [vmem:[#allocation4 + $0x1d8] sm:$0xff] %vm686, 0
      %771 = vst [vmem:[#allocation4 + $0x200] sm:$0xff] 0
      %772 = vst.msk [vmem:[#allocation4 + $0x208] sm:$0xff] %vm686, 0
      %773 = vst [vmem:[#allocation4 + $0x230] sm:$0xff] 0
      %774 = vst.msk [vmem:[#allocation4 + $0x238] sm:$0xff] %vm686, 0
      %775 = vst [vmem:[#allocation4 + $0x260] sm:$0xff] 0
      %776 = vst.msk [vmem:[#allocation4 + $0x268] sm:$0xff] %vm686, 0
      %777 = vst [vmem:[#allocation4 + $0x290] sm:$0xff] 0
      %778 = vst.msk [vmem:[#allocation4 + $0x298] sm:$0xff] %vm686, 0
      %779 = vst [vmem:[#allocation4 + $0x2c0] sm:$0xff] 0
      %780 = vst.msk [vmem:[#allocation4 + $0x2c8] sm:$0xff] %vm686, 0
      %781 = vst [vmem:[#allocation4 + $0x2f0] sm:$0xff] 0
      %782 = vst.msk [vmem:[#allocation4 + $0x2f8] sm:$0xff] %vm686, 0
      %783 = vst [vmem:[#allocation4 + $0x320] sm:$0xff] 0
      %784 = vst.msk [vmem:[#allocation4 + $0x328] sm:$0xff] %vm686, 0
      %785 = vst [vmem:[#allocation4 + $0x350] sm:$0xff] 0
      %786 = vst.msk [vmem:[#allocation4 + $0x358] sm:$0xff] %vm686, 0
      %787 = vst [vmem:[#allocation4 + $0x380] sm:$0xff] 0
      %788 = vst.msk [vmem:[#allocation4 + $0x388] sm:$0xff] %vm686, 0
      %789 = vst [vmem:[#allocation4 + $0x3b0] sm:$0xff] 0
      %790 = vst.msk [vmem:[#allocation4 + $0x3b8] sm:$0xff] %vm686, 0
      %v791 = vld [vmem:[%s1] sm:$0xff]
      %v792 = vld [vmem:[%s1 + $0x8] sm:$0xff]
      %v793 = vld [vmem:[%s1 + $0x10] sm:$0xff]
      %v794 = vld [vmem:[%s1 + $0x18] sm:$0xff]
      %v795 = vld [vmem:[%s2] sm:$0x3]
      loop: start=0, step=1, limit=2
      $region109: #{tpu_custom_call.1} parent=107 // loop_pre_header
        _
      $region110: #{tpu_custom_call.1} parent=107 // loop_header
        %s797 = sphi 0, %s801
        %p798 = scmp.ge.s32.totalorder %s797, 2
      $region111: #{tpu_custom_call.1} parent=107 // loop_header_branch
        %800 = sbr.rel (%p798) target = $region115
      $region112: #{tpu_custom_call.1} parent=107 // loop_body
        %s802 = smul.u32 %s797, 128
        %s803 = scalar_lea.vmem %s678, %s802
        %v804 = vld [vmem:[%s803] sm:$0xff]
        %v805 = vld [vmem:[%s803 + $0x8] sm:$0xff]
        %v806 = vld [vmem:[%s803 + $0x10] sm:$0xff]
        %v807 = vld [vmem:[%s803 + $0x18] sm:$0xff]
        %v808 = vld [vmem:[%s803 + $0x20] sm:$0xff]
        %v809 = vld [vmem:[%s803 + $0x28] sm:$0xff]
        %v810 = vld [vmem:[%s803 + $0x30] sm:$0xff]
        %v811 = vld [vmem:[%s803 + $0x38] sm:$0xff]
        %v812 = vld [vmem:[%s803 + $0x40] sm:$0xff]
        %v813 = vld [vmem:[%s803 + $0x48] sm:$0xff]
        %v814 = vld [vmem:[%s803 + $0x50] sm:$0xff]
        %v815 = vld [vmem:[%s803 + $0x58] sm:$0xff]
        %v816 = vld [vmem:[%s803 + $0x60] sm:$0xff]
        %v817 = vld [vmem:[%s803 + $0x68] sm:$0xff]
        %v818 = vld [vmem:[%s803 + $0x70] sm:$0xff]
        %v819 = vld [vmem:[%s803 + $0x78] sm:$0xff]
        %v820 = vpack.c.bf16 %v805, %v804
        %v821 = vpack.c.bf16 %v807, %v806
        %v822 = vpack.c.bf16 %v809, %v808
        %v823 = vpack.c.bf16 %v811, %v810
        %v824 = vpack.c.bf16 %v813, %v812
        %v825 = vpack.c.bf16 %v815, %v814
        %v826 = vpack.c.bf16 %v817, %v816
        %v827 = vpack.c.bf16 %v819, %v818
        %v829 = vlaneseq
        %v830 = vshrl.u32 %v829, 7
        %v831 = vsub.s32 0, %v830
        %v832 = vrot.slane %v795, %v831
        %v833 = vlaneseq
        %v834 = vshrl.u32 %v833, 7
        %v835 = vsub.s32 1, %v834
        %v836 = vrot.slane %v795, %v835
        %v843 = vunpack.c.l.b16 %v791
        %v844 = vunpack.c.h.b16 %v791
        %v845 = vunpack.c.l.b16 %v792
        %v846 = vunpack.c.h.b16 %v792
        %v847 = vunpack.c.l.b16 %v793
        %v848 = vunpack.c.h.b16 %v793
        %v849 = vunpack.c.l.b16 %v794
        %v850 = vunpack.c.h.b16 %v794
        %v851 = vpack.c.b16 %v845, %v843
        %v852 = vpack.c.b16 %v846, %v844
        %v853 = vpack.c.b16 %v849, %v847
        %v854 = vpack.c.b16 %v850, %v848
        %vm859 = vcmask 261120
        %v861 = vsel %vm859, %v820, 0
        %v864 = vsel %vm859, %v821, 0
        %v867 = vsel %vm859, %v822, 0
        %v870 = vsel %vm859, %v823, 0
        %v873 = vsel %vm859, %v824, 0
        %v876 = vsel %vm859, %v825, 0
        %v879 = vsel %vm859, %v826, 0
        %v882 = vsel %vm859, %v827, 0
        %884 = vmatprep.subr.bf16.mxu0 %v852
        %885 = vmatpush1.bf16.msra.mxu0 %v851
        %886 = vmatprep.subr.bf16.mxu0 %v854
        %887 = vmatpush1.bf16.msra.mxu0 %v853
        %888 = vmatprep.subr.bf16.mxu0 0
        %889 = vmatpush1.bf16.msra.mxu0 0
        %890 = vmatprep.subr.bf16.mxu0 0
        %891 = vmatpush1.bf16.msra.mxu0 0
        %892 = vmatprep.subr.bf16.mxu0 0
        %893 = vmatpush1.bf16.msra.mxu0 0
        %894 = vmatprep.subr.bf16.mxu0 0
        %895 = vmatpush1.bf16.msra.mxu0 0
        %896 = vmatprep.subr.bf16.mxu0 0
        %897 = vmatpush1.bf16.msra.mxu0 0
        %898 = vmatprep.subr.bf16.mxu0 0
        %899 = vmatpush1.bf16.msra.mxu0 0
        %900 = vmatprep.subr.bf16.mxu0 0
        %901 = vmatpush1.bf16.msra.mxu0 0
        %902 = vmatprep.subr.bf16.mxu0 0
        %903 = vmatpush1.bf16.msra.mxu0 0
        %904 = vmatprep.subr.bf16.mxu0 0
        %905 = vmatpush1.bf16.msra.mxu0 0
        %906 = vmatprep.subr.bf16.mxu0 0
        %907 = vmatpush1.bf16.msra.mxu0 0
        %908 = vmatprep.subr.bf16.mxu0 0
        %909 = vmatpush1.bf16.msra.mxu0 0
        %910 = vmatprep.subr.bf16.mxu0 0
        %911 = vmatpush1.bf16.msra.mxu0 0
        %912 = vmatprep.subr.bf16.mxu0 0
        %913 = vmatpush1.bf16.msra.mxu0 0
        %914 = vmatprep.subr.bf16.mxu0 0
        %915 = vmatpush1.bf16.msra.mxu0 0
        %916 = vmatprep.mubr.bf16.mxu0 0
        %917 = vmatmul.mubr.bf16.gmra.mrb[0].mxu0 %v861
        %v918 = vpop.f32.mrb[0].mxu0
        %v919 = vadd.f32 %v832, %v918
        %v920 = vpop.f32.mrb[0].mxu0
        %v921 = vadd.f32 %v836, %v920
        %v922 = vpop.f32.mrb[0].mxu0
        %v923 = vadd.f32 %v832, %v922
        %v924 = vpop.f32.mrb[0].mxu0
        %v925 = vadd.f32 %v836, %v924
        %926 = vmatprep.mubr.bf16.mxu0 0
        %927 = vmatmul.mubr.bf16.gmra.mrb[0].mxu0 %v864
        %v928 = vpop.f32.mrb[0].mxu0
        %v929 = vadd.f32 %v832, %v928
        %v930 = vpop.f32.mrb[0].mxu0
        %v931 = vadd.f32 %v836, %v930
        %v932 = vpop.f32.mrb[0].mxu0
        %v933 = vadd.f32 %v832, %v932
        %v934 = vpop.f32.mrb[0].mxu0
        %v935 = vadd.f32 %v836, %v934
        %936 = vmatprep.mubr.bf16.mxu0 0
        %937 = vmatmul.mubr.bf16.gmra.mrb[0].mxu0 %v867
        %v938 = vpop.f32.mrb[0].mxu0
        %v939 = vadd.f32 %v832, %v938
        %v940 = vpop.f32.mrb[0].mxu0
        %v941 = vadd.f32 %v836, %v940
        %v942 = vpop.f32.mrb[0].mxu0
        %v943 = vadd.f32 %v832, %v942
        %v944 = vpop.f32.mrb[0].mxu0
        %v945 = vadd.f32 %v836, %v944
        %946 = vmatprep.mubr.bf16.mxu0 0
        %947 = vmatmul.mubr.bf16.gmra.mrb[0].mxu0 %v870
        %v948 = vpop.f32.mrb[0].mxu0
        %v949 = vadd.f32 %v832, %v948
        %v950 = vpop.f32.mrb[0].mxu0
        %v951 = vadd.f32 %v836, %v950
        %v952 = vpop.f32.mrb[0].mxu0
        %v953 = vadd.f32 %v832, %v952
        %v954 = vpop.f32.mrb[0].mxu0
        %v955 = vadd.f32 %v836, %v954
        %956 = vmatprep.mubr.bf16.mxu0 0
        %957 = vmatmul.mubr.bf16.gmra.mrb[0].mxu0 %v873
        %v958 = vpop.f32.mrb[0].mxu0
        %v959 = vadd.f32 %v832, %v958
        %v960 = vpop.f32.mrb[0].mxu0
        %v961 = vadd.f32 %v836, %v960
        %v962 = vpop.f32.mrb[0].mxu0
        %v963 = vadd.f32 %v832, %v962
        %v964 = vpop.f32.mrb[0].mxu0
        %v965 = vadd.f32 %v836, %v964
        %966 = vmatprep.mubr.bf16.mxu0 0
        %967 = vmatmul.mubr.bf16.gmra.mrb[0].mxu0 %v876
        %v968 = vpop.f32.mrb[0].mxu0
        %v969 = vadd.f32 %v832, %v968
        %v970 = vpop.f32.mrb[0].mxu0
        %v971 = vadd.f32 %v836, %v970
        %v972 = vpop.f32.mrb[0].mxu0
        %v973 = vadd.f32 %v832, %v972
        %v974 = vpop.f32.mrb[0].mxu0
        %v975 = vadd.f32 %v836, %v974
        %976 = vmatprep.mubr.bf16.mxu0 0
        %977 = vmatmul.mubr.bf16.gmra.mrb[0].mxu0 %v879
        %v978 = vpop.f32.mrb[0].mxu0
        %v979 = vadd.f32 %v832, %v978
        %v980 = vpop.f32.mrb[0].mxu0
        %v981 = vadd.f32 %v836, %v980
        %v982 = vpop.f32.mrb[0].mxu0
        %v983 = vadd.f32 %v832, %v982
        %v984 = vpop.f32.mrb[0].mxu0
        %v985 = vadd.f32 %v836, %v984
        %986 = vmatprep.mubr.bf16.mxu0 0
        %987 = vmatmul.mubr.bf16.gmra.mrb[0].mxu0 %v882
        %v988 = vpop.f32.mrb[0].mxu0
        %v989 = vadd.f32 %v832, %v988
        %v990 = vpop.f32.mrb[0].mxu0
        %v991 = vadd.f32 %v836, %v990
        %v992 = vpop.f32.mrb[0].mxu0
        %v993 = vadd.f32 %v832, %v992
        %v994 = vpop.f32.mrb[0].mxu0
        %v995 = vadd.f32 %v836, %v994
        %996 = vdwg.mxu0
        %v997 = vxor.u32 %v919, 2147483648
        %v998 = vxor.u32 %v921, 2147483648
        %v999 = vxor.u32 %v923, 2147483648
        %v1000 = vxor.u32 %v925, 2147483648
        %v1001 = vxor.u32 %v929, 2147483648
        %v1002 = vxor.u32 %v931, 2147483648
        %v1003 = vxor.u32 %v933, 2147483648
        %v1004 = vxor.u32 %v935, 2147483648
        %v1005 = vxor.u32 %v939, 2147483648
        %v1006 = vxor.u32 %v941, 2147483648
        %v1007 = vxor.u32 %v943, 2147483648
        %v1008 = vxor.u32 %v945, 2147483648
        %v1009 = vxor.u32 %v949, 2147483648
        %v1010 = vxor.u32 %v951, 2147483648
        %v1011 = vxor.u32 %v953, 2147483648
        %v1012 = vxor.u32 %v955, 2147483648
        %v1013 = vxor.u32 %v959, 2147483648
        %v1014 = vxor.u32 %v961, 2147483648
        %v1015 = vxor.u32 %v963, 2147483648
        %v1016 = vxor.u32 %v965, 2147483648
        %v1017 = vxor.u32 %v969, 2147483648
        %v1018 = vxor.u32 %v971, 2147483648
        %v1019 = vxor.u32 %v973, 2147483648
        %v1020 = vxor.u32 %v975, 2147483648
        %v1021 = vxor.u32 %v979, 2147483648
        %v1022 = vxor.u32 %v981, 2147483648
        %v1023 = vxor.u32 %v983, 2147483648
        %v1024 = vxor.u32 %v985, 2147483648
        %v1025 = vxor.u32 %v989, 2147483648
        %v1026 = vxor.u32 %v991, 2147483648
        %v1027 = vxor.u32 %v993, 2147483648
        %v1028 = vxor.u32 %v995, 2147483648
        %v1029 = vmul.f32 %v997, 1.442695
        %v1030 = vpow.pop %v1029
        %v1031 = vmul.f32 %v998, 1.442695
        %v1032 = vpow.pop %v1031
        %v1033 = vmul.f32 %v999, 1.442695
        %v1034 = vpow.pop %v1033
        %v1035 = vmul.f32 %v1000, 1.442695
        %v1036 = vpow.pop %v1035
        %v1037 = vmul.f32 %v1001, 1.442695
        %v1038 = vpow.pop %v1037
        %v1039 = vmul.f32 %v1002, 1.442695
        %v1040 = vpow.pop %v1039
        %v1041 = vmul.f32 %v1003, 1.442695
        %v1042 = vpow.pop %v1041
        %v1043 = vmul.f32 %v1004, 1.442695
        %v1044 = vpow.pop %v1043
        %v1045 = vmul.f32 %v1005, 1.442695
        %v1046 = vpow.pop %v1045
        %v1047 = vmul.f32 %v1006, 1.442695
        %v1048 = vpow.pop %v1047
        %v1049 = vmul.f32 %v1007, 1.442695
        %v1050 = vpow.pop %v1049
        %v1051 = vmul.f32 %v1008, 1.442695
        %v1052 = vpow.pop %v1051
        %v1053 = vmul.f32 %v1009, 1.442695
        %v1054 = vpow.pop %v1053
        %v1055 = vmul.f32 %v1010, 1.442695
        %v1056 = vpow.pop %v1055
        %v1057 = vmul.f32 %v1011, 1.442695
        %v1058 = vpow.pop %v1057
        %v1059 = vmul.f32 %v1012, 1.442695
        %v1060 = vpow.pop %v1059
        %v1061 = vmul.f32 %v1013, 1.442695
        %v1062 = vpow.pop %v1061
        %v1063 = vmul.f32 %v1014, 1.442695
        %v1064 = vpow.pop %v1063
        %v1065 = vmul.f32 %v1015, 1.442695
        %v1066 = vpow.pop %v1065
        %v1067 = vmul.f32 %v1016, 1.442695
        %v1068 = vpow.pop %v1067
        %v1069 = vmul.f32 %v1017, 1.442695
        %v1070 = vpow.pop %v1069
        %v1071 = vmul.f32 %v1018, 1.442695
        %v1072 = vpow.pop %v1071
        %v1073 = vmul.f32 %v1019, 1.442695
        %v1074 = vpow.pop %v1073
        %v1075 = vmul.f32 %v1020, 1.442695
        %v1076 = vpow.pop %v1075
        %v1077 = vmul.f32 %v1021, 1.442695
        %v1078 = vpow.pop %v1077
        %v1079 = vmul.f32 %v1022, 1.442695
        %v1080 = vpow.pop %v1079
        %v1081 = vmul.f32 %v1023, 1.442695
        %v1082 = vpow.pop %v1081
        %v1083 = vmul.f32 %v1024, 1.442695
        %v1084 = vpow.pop %v1083
        %v1085 = vmul.f32 %v1025, 1.442695
        %v1086 = vpow.pop %v1085
        %v1087 = vmul.f32 %v1026, 1.442695
        %v1088 = vpow.pop %v1087
        %v1089 = vmul.f32 %v1027, 1.442695
        %v1090 = vpow.pop %v1089
        %v1091 = vmul.f32 %v1028, 1.442695
        %v1092 = vpow.pop %v1091
        %v1093 = vadd.f32 %v1030, 1.0
        %v1094 = vadd.f32 %v1032, 1.0
        %v1095 = vadd.f32 %v1034, 1.0
        %v1096 = vadd.f32 %v1036, 1.0
        %v1097 = vadd.f32 %v1038, 1.0
        %v1098 = vadd.f32 %v1040, 1.0
        %v1099 = vadd.f32 %v1042, 1.0
        %v1100 = vadd.f32 %v1044, 1.0
        %v1101 = vadd.f32 %v1046, 1.0
        %v1102 = vadd.f32 %v1048, 1.0
        %v1103 = vadd.f32 %v1050, 1.0
        %v1104 = vadd.f32 %v1052, 1.0
        %v1105 = vadd.f32 %v1054, 1.0
        %v1106 = vadd.f32 %v1056, 1.0
        %v1107 = vadd.f32 %v1058, 1.0
        %v1108 = vadd.f32 %v1060, 1.0
        %v1109 = vadd.f32 %v1062, 1.0
        %v1110 = vadd.f32 %v1064, 1.0
        %v1111 = vadd.f32 %v1066, 1.0
        %v1112 = vadd.f32 %v1068, 1.0
        %v1113 = vadd.f32 %v1070, 1.0
        %v1114 = vadd.f32 %v1072, 1.0
        %v1115 = vadd.f32 %v1074, 1.0
        %v1116 = vadd.f32 %v1076, 1.0
        %v1117 = vadd.f32 %v1078, 1.0
        %v1118 = vadd.f32 %v1080, 1.0
        %v1119 = vadd.f32 %v1082, 1.0
        %v1120 = vadd.f32 %v1084, 1.0
        %v1121 = vadd.f32 %v1086, 1.0
        %v1122 = vadd.f32 %v1088, 1.0
        %v1123 = vadd.f32 %v1090, 1.0
        %v1124 = vadd.f32 %v1092, 1.0
        %v1125 = vrcp.pop %v1093
        %v1126 = vmul.f32 1.0, %v1125
        %v1127 = vrcp.pop %v1094
        %v1128 = vmul.f32 1.0, %v1127
        %v1129 = vrcp.pop %v1095
        %v1130 = vmul.f32 1.0, %v1129
        %v1131 = vrcp.pop %v1096
        %v1132 = vmul.f32 1.0, %v1131
        %v1133 = vrcp.pop %v1097
        %v1134 = vmul.f32 1.0, %v1133
        %v1135 = vrcp.pop %v1098
        %v1136 = vmul.f32 1.0, %v1135
        %v1137 = vrcp.pop %v1099
        %v1138 = vmul.f32 1.0, %v1137
        %v1139 = vrcp.pop %v1100
        %v1140 = vmul.f32 1.0, %v1139
        %v1141 = vrcp.pop %v1101
        %v1142 = vmul.f32 1.0, %v1141
        %v1143 = vrcp.pop %v1102
        %v1144 = vmul.f32 1.0, %v1143
        %v1145 = vrcp.pop %v1103
        %v1146 = vmul.f32 1.0, %v1145
        %v1147 = vrcp.pop %v1104
        %v1148 = vmul.f32 1.0, %v1147
        %v1149 = vrcp.pop %v1105
        %v1150 = vmul.f32 1.0, %v1149
        %v1151 = vrcp.pop %v1106
        %v1152 = vmul.f32 1.0, %v1151
        %v1153 = vrcp.pop %v1107
        %v1154 = vmul.f32 1.0, %v1153
        %v1155 = vrcp.pop %v1108
        %v1156 = vmul.f32 1.0, %v1155
        %v1157 = vrcp.pop %v1109
        %v1158 = vmul.f32 1.0, %v1157
        %v1159 = vrcp.pop %v1110
        %v1160 = vmul.f32 1.0, %v1159
        %v1161 = vrcp.pop %v1111
        %v1162 = vmul.f32 1.0, %v1161
        %v1163 = vrcp.pop %v1112
        %v1164 = vmul.f32 1.0, %v1163
        %v1165 = vrcp.pop %v1113
        %v1166 = vmul.f32 1.0, %v1165
        %v1167 = vrcp.pop %v1114
        %v1168 = vmul.f32 1.0, %v1167
        %v1169 = vrcp.pop %v1115
        %v1170 = vmul.f32 1.0, %v1169
        %v1171 = vrcp.pop %v1116
        %v1172 = vmul.f32 1.0, %v1171
        %v1173 = vrcp.pop %v1117
        %v1174 = vmul.f32 1.0, %v1173
        %v1175 = vrcp.pop %v1118
        %v1176 = vmul.f32 1.0, %v1175
        %v1177 = vrcp.pop %v1119
        %v1178 = vmul.f32 1.0, %v1177
        %v1179 = vrcp.pop %v1120
        %v1180 = vmul.f32 1.0, %v1179
        %v1181 = vrcp.pop %v1121
        %v1182 = vmul.f32 1.0, %v1181
        %v1183 = vrcp.pop %v1122
        %v1184 = vmul.f32 1.0, %v1183
        %v1185 = vrcp.pop %v1123
        %v1186 = vmul.f32 1.0, %v1185
        %v1187 = vrcp.pop %v1124
        %v1188 = vmul.f32 1.0, %v1187
        %v1189 = vmul.f32 %v919, %v1126
        %v1190 = vmul.f32 %v921, %v1128
        %v1191 = vmul.f32 %v923, %v1130
        %v1192 = vmul.f32 %v925, %v1132
        %v1193 = vmul.f32 %v929, %v1134
        %v1194 = vmul.f32 %v931, %v1136
        %v1195 = vmul.f32 %v933, %v1138
        %v1196 = vmul.f32 %v935, %v1140
        %v1197 = vmul.f32 %v939, %v1142
        %v1198 = vmul.f32 %v941, %v1144
        %v1199 = vmul.f32 %v943, %v1146
        %v1200 = vmul.f32 %v945, %v1148
        %v1201 = vmul.f32 %v949, %v1150
        %v1202 = vmul.f32 %v951, %v1152
        %v1203 = vmul.f32 %v953, %v1154
        %v1204 = vmul.f32 %v955, %v1156
        %v1205 = vmul.f32 %v959, %v1158
        %v1206 = vmul.f32 %v961, %v1160
        %v1207 = vmul.f32 %v963, %v1162
        %v1208 = vmul.f32 %v965, %v1164
        %v1209 = vmul.f32 %v969, %v1166
        %v1210 = vmul.f32 %v971, %v1168
        %v1211 = vmul.f32 %v973, %v1170
        %v1212 = vmul.f32 %v975, %v1172
        %v1213 = vmul.f32 %v979, %v1174
        %v1214 = vmul.f32 %v981, %v1176
        %v1215 = vmul.f32 %v983, %v1178
        %v1216 = vmul.f32 %v985, %v1180
        %v1217 = vmul.f32 %v989, %v1182
        %v1218 = vmul.f32 %v991, %v1184
        %v1219 = vmul.f32 %v993, %v1186
        %v1220 = vmul.f32 %v995, %v1188
        %v1221 = vpack.c.bf16 %v1191, %v1189
        %v1222 = vpack.c.bf16 %v1192, %v1190
        %v1223 = vpack.c.bf16 %v1195, %v1193
        %v1224 = vpack.c.bf16 %v1196, %v1194
        %v1225 = vpack.c.bf16 %v1199, %v1197
        %v1226 = vpack.c.bf16 %v1200, %v1198
        %v1227 = vpack.c.bf16 %v1203, %v1201
        %v1228 = vpack.c.bf16 %v1204, %v1202
        %v1229 = vpack.c.bf16 %v1207, %v1205
        %v1230 = vpack.c.bf16 %v1208, %v1206
        %v1231 = vpack.c.bf16 %v1211, %v1209
        %v1232 = vpack.c.bf16 %v1212, %v1210
        %v1233 = vpack.c.bf16 %v1215, %v1213
        %v1234 = vpack.c.bf16 %v1216, %v1214
        %v1235 = vpack.c.bf16 %v1219, %v1217
        %v1236 = vpack.c.bf16 %v1220, %v1218
        %s1237 = smul.u32 %s797, 8
        %s1238 = sadd.s32 %s1237, 2
        %s1239 = smul.u32 %s1238, 6
        %s1240 = smul.addr %s1239, 8
        %s1241 = scalar_lea.vmem [#allocation4], %s1240
        %1242 = vst [vmem:[%s1241 + $0x10] sm:$0xff] %v1221
        %1243 = vst.msk [vmem:[%s1241 + $0x18] sm:$0xff] %vm686, %v1222
        %1244 = vst [vmem:[%s1241 + $0x40] sm:$0xff] %v1223
        %1245 = vst.msk [vmem:[%s1241 + $0x48] sm:$0xff] %vm686, %v1224
        %1246 = vst [vmem:[%s1241 + $0x70] sm:$0xff] %v1225
        %1247 = vst.msk [vmem:[%s1241 + $0x78] sm:$0xff] %vm686, %v1226
        %1248 = vst [vmem:[%s1241 + $0xa0] sm:$0xff] %v1227
        %1249 = vst.msk [vmem:[%s1241 + $0xa8] sm:$0xff] %vm686, %v1228
        %1250 = vst [vmem:[%s1241 + $0xd0] sm:$0xff] %v1229
        %1251 = vst.msk [vmem:[%s1241 + $0xd8] sm:$0xff] %vm686, %v1230
        %1252 = vst [vmem:[%s1241 + $0x100] sm:$0xff] %v1231
        %1253 = vst.msk [vmem:[%s1241 + $0x108] sm:$0xff] %vm686, %v1232
        %1254 = vst [vmem:[%s1241 + $0x130] sm:$0xff] %v1233
        %1255 = vst.msk [vmem:[%s1241 + $0x138] sm:$0xff] %vm686, %v1234
        %1256 = vst [vmem:[%s1241 + $0x160] sm:$0xff] %v1235
        %1257 = vst.msk [vmem:[%s1241 + $0x168] sm:$0xff] %vm686, %v1236
      $region113: #{tpu_custom_call.1} parent=107 // loop_footer
        %s801 = sadd.s32 1, %s797
      $region114: #{tpu_custom_call.1} parent=107 // loop_footer_branch
        %796 = sbr.rel target = $region110
      $region115: #{tpu_custom_call.1} parent=107 // loop_exit
        _
      %v1258 = vld [vmem:[%s4] sm:$0x3]
      loop: start=0, step=1, limit=4
      $region116: #{tpu_custom_call.1} parent=107 // loop_pre_header
        _
      $region117: #{tpu_custom_call.1} parent=107 // loop_header
        %s1260 = sphi 0, %s1264
        %p1261 = scmp.ge.s32.totalorder %s1260, 4
        %v1265 = vphi 0.0, %v4891
        %v1266 = vphi 0.0, %v4892
      $region118: #{tpu_custom_call.1} parent=107 // loop_header_branch
        %1263 = sbr.rel (%p1261) target = $region122
      $region119: #{tpu_custom_call.1} parent=107 // loop_body
        %s1267 = smul.u32 %s1260, 4
        %s1268 = smul.u32 %s1267, 6
        %s1269 = smul.addr %s1268, 8
        %s1270 = scalar_lea.vmem [#allocation4], %s1269
        %v1271 = vld [vmem:[%s1270] sm:$0x80]
        %v1272 = vld [vmem:[%s1270 + $0x8] sm:$0x80]
        %v1273 = vld [vmem:[%s1270 + $0x10] sm:$0x7f]
        %v1274 = vld [vmem:[%s1270 + $0x18] sm:$0x7f]
        %v1275 = vld [vmem:[%s1270 + $0x30] sm:$0x80]
        %v1276 = vld [vmem:[%s1270 + $0x38] sm:$0x80]
        %v1277 = vld [vmem:[%s1270 + $0x40] sm:$0x7f]
        %v1278 = vld [vmem:[%s1270 + $0x48] sm:$0x7f]
        %v1279 = vld [vmem:[%s1270 + $0x60] sm:$0x80]
        %v1280 = vld [vmem:[%s1270 + $0x68] sm:$0x80]
        %v1281 = vld [vmem:[%s1270 + $0x70] sm:$0x7f]
        %v1282 = vld [vmem:[%s1270 + $0x78] sm:$0x7f]
        %v1283 = vld [vmem:[%s1270 + $0x90] sm:$0x80]
        %v1284 = vld [vmem:[%s1270 + $0x98] sm:$0x80]
        %v1285 = vld [vmem:[%s1270 + $0xa0] sm:$0x7f]
        %v1286 = vld [vmem:[%s1270 + $0xa8] sm:$0x7f]
        %v1287 = vld [vmem:[%s3] sm:$0x11]
        %v1289 = vunpack.c.l.b16 %v1287
        %v1290 = vunpack.c.h.b16 %v1287
        %v1291 = vpack.c.b16 %v1289, %v1289
        %v1292 = vpack.c.b16 %v1290, %v1290
        %v1294 = vpack.i.b16 %v1291, %v1291
        %v1296 = vlaneseq
        %v1297 = vshrl.u32 %v1296, 7
        %v1298 = vsub.s32 0, %v1297
        %v1299 = vrot.slane %v1294, %v1298
        %v1301 = vpack.i.b16 %v1292, %v1292
        %v1303 = vlaneseq
        %v1304 = vshrl.u32 %v1303, 7
        %v1305 = vsub.s32 0, %v1304
        %v1306 = vrot.slane %v1301, %v1305
        %v1307 = vmul.bf16 %v1271, %v1299
        %v1308 = vmul.bf16 %v1272, %v1306
        %v1309 = vmul.bf16 %v1273, %v1299
        %v1310 = vmul.bf16 %v1274, %v1306
        %v1311 = vmul.bf16 %v1275, %v1299
        %v1312 = vmul.bf16 %v1276, %v1306
        %v1313 = vmul.bf16 %v1277, %v1299
        %v1314 = vmul.bf16 %v1278, %v1306
        %v1315 = vmul.bf16 %v1279, %v1299
        %v1316 = vmul.bf16 %v1280, %v1306
        %v1317 = vmul.bf16 %v1281, %v1299
        %v1318 = vmul.bf16 %v1282, %v1306
        %v1319 = vmul.bf16 %v1283, %v1299
        %v1320 = vmul.bf16 %v1284, %v1306
        %v1321 = vmul.bf16 %v1285, %v1299
        %v1322 = vmul.bf16 %v1286, %v1306
        %v1323 = vld [vmem:[%s1270 + $0x10] sm:$0xff]
        %v1324 = vld [vmem:[%s1270 + $0x18] sm:$0xff]
        %v1325 = vld [vmem:[%s1270 + $0x40] sm:$0xff]
        %v1326 = vld [vmem:[%s1270 + $0x48] sm:$0xff]
        %v1327 = vld [vmem:[%s1270 + $0x70] sm:$0xff]
        %v1328 = vld [vmem:[%s1270 + $0x78] sm:$0xff]
        %v1329 = vld [vmem:[%s1270 + $0xa0] sm:$0xff]
        %v1330 = vld [vmem:[%s1270 + $0xa8] sm:$0xff]
        %v1331 = vshrl.u32 %v1291, 16
        %v1332 = vpack.i.b16 %v1331, %v1331
        %v1334 = vlaneseq
        %v1335 = vshrl.u32 %v1334, 7
        %v1336 = vsub.s32 0, %v1335
        %v1337 = vrot.slane %v1332, %v1336
        %v1338 = vshrl.u32 %v1292, 16
        %v1339 = vpack.i.b16 %v1338, %v1338
        %v1341 = vlaneseq
        %v1342 = vshrl.u32 %v1341, 7
        %v1343 = vsub.s32 0, %v1342
        %v1344 = vrot.slane %v1339, %v1343
        %v1345 = vmul.bf16 %v1271, %v1337
        %v1346 = vmul.bf16 %v1272, %v1344
        %v1347 = vmul.bf16 %v1323, %v1337
        %v1348 = vmul.bf16 %v1324, %v1344
        %v1349 = vmul.bf16 %v1275, %v1337
        %v1350 = vmul.bf16 %v1276, %v1344
        %v1351 = vmul.bf16 %v1325, %v1337
        %v1352 = vmul.bf16 %v1326, %v1344
        %v1353 = vmul.bf16 %v1279, %v1337
        %v1354 = vmul.bf16 %v1280, %v1344
        %v1355 = vmul.bf16 %v1327, %v1337
        %v1356 = vmul.bf16 %v1328, %v1344
        %v1357 = vmul.bf16 %v1283, %v1337
        %v1358 = vmul.bf16 %v1284, %v1344
        %v1359 = vmul.bf16 %v1329, %v1337
        %v1360 = vmul.bf16 %v1330, %v1344
        %vm1361 = vsmask.f32 7424
        %v1363 = vshrl.u32 %v1345, 16
        %v1366 = vshll.u32 %v1347, 16
        %v1368 = vrot.slane %v1366, 1
        %v1369 = vsel %vm1361, %v1363, %v1368
        %v1371 = vshrl.u32 %v1346, 16
        %v1374 = vshll.u32 %v1348, 16
        %v1376 = vrot.slane %v1374, 1
        %v1377 = vsel %vm1361, %v1371, %v1376
        %v1378 = vshrl.u32 %v1347, 16
        %v1380 = vor.u32 %v1378, %v1368
        %v1381 = vshrl.u32 %v1348, 16
        %v1383 = vor.u32 %v1381, %v1376
        %v1385 = vshrl.u32 %v1349, 16
        %v1388 = vshll.u32 %v1351, 16
        %v1390 = vrot.slane %v1388, 1
        %v1391 = vsel %vm1361, %v1385, %v1390
        %v1393 = vshrl.u32 %v1350, 16
        %v1396 = vshll.u32 %v1352, 16
        %v1398 = vrot.slane %v1396, 1
        %v1399 = vsel %vm1361, %v1393, %v1398
        %v1400 = vshrl.u32 %v1351, 16
        %v1402 = vor.u32 %v1400, %v1390
        %v1403 = vshrl.u32 %v1352, 16
        %v1405 = vor.u32 %v1403, %v1398
        %v1407 = vshrl.u32 %v1353, 16
        %v1410 = vshll.u32 %v1355, 16
        %v1412 = vrot.slane %v1410, 1
        %v1413 = vsel %vm1361, %v1407, %v1412
        %v1415 = vshrl.u32 %v1354, 16
        %v1418 = vshll.u32 %v1356, 16
        %v1420 = vrot.slane %v1418, 1
        %v1421 = vsel %vm1361, %v1415, %v1420
        %v1422 = vshrl.u32 %v1355, 16
        %v1424 = vor.u32 %v1422, %v1412
        %v1425 = vshrl.u32 %v1356, 16
        %v1427 = vor.u32 %v1425, %v1420
        %v1429 = vshrl.u32 %v1357, 16
        %v1432 = vshll.u32 %v1359, 16
        %v1434 = vrot.slane %v1432, 1
        %v1435 = vsel %vm1361, %v1429, %v1434
        %v1437 = vshrl.u32 %v1358, 16
        %v1440 = vshll.u32 %v1360, 16
        %v1442 = vrot.slane %v1440, 1
        %v1443 = vsel %vm1361, %v1437, %v1442
        %v1444 = vshrl.u32 %v1359, 16
        %v1446 = vor.u32 %v1444, %v1434
        %v1447 = vshrl.u32 %v1360, 16
        %v1449 = vor.u32 %v1447, %v1442
        %v1466 = vadd.bf16 %v1307, %v1369
        %v1467 = vadd.bf16 %v1308, %v1377
        %v1468 = vadd.bf16 %v1309, %v1380
        %v1469 = vadd.bf16 %v1310, %v1383
        %v1470 = vadd.bf16 %v1311, %v1391
        %v1471 = vadd.bf16 %v1312, %v1399
        %v1472 = vadd.bf16 %v1313, %v1402
        %v1473 = vadd.bf16 %v1314, %v1405
        %v1474 = vadd.bf16 %v1315, %v1413
        %v1475 = vadd.bf16 %v1316, %v1421
        %v1476 = vadd.bf16 %v1317, %v1424
        %v1477 = vadd.bf16 %v1318, %v1427
        %v1478 = vadd.bf16 %v1319, %v1435
        %v1479 = vadd.bf16 %v1320, %v1443
        %v1480 = vadd.bf16 %v1321, %v1446
        %v1481 = vadd.bf16 %v1322, %v1449
        %v1482 = vld [vmem:[%s3] sm:$0x22]
        %v1484 = vunpack.c.l.b16 %v1482
        %v1485 = vunpack.c.h.b16 %v1482
        %v1486 = vpack.c.b16 %v1484, %v1484
        %v1487 = vpack.c.b16 %v1485, %v1485
        %v1489 = vpack.i.b16 %v1486, %v1486
        %v1491 = vlaneseq
        %v1492 = vshrl.u32 %v1491, 7
        %v1493 = vsub.s32 1, %v1492
        %v1494 = vrot.slane %v1489, %v1493
        %v1496 = vpack.i.b16 %v1487, %v1487
        %v1498 = vlaneseq
        %v1499 = vshrl.u32 %v1498, 7
        %v1500 = vsub.s32 1, %v1499
        %v1501 = vrot.slane %v1496, %v1500
        %v1502 = vmul.bf16 %v1323, %v1494
        %v1503 = vmul.bf16 %v1324, %v1501
        %v1504 = vmul.bf16 %v1325, %v1494
        %v1505 = vmul.bf16 %v1326, %v1501
        %v1506 = vmul.bf16 %v1327, %v1494
        %v1507 = vmul.bf16 %v1328, %v1501
        %v1508 = vmul.bf16 %v1329, %v1494
        %v1509 = vmul.bf16 %v1330, %v1501
        %v1518 = vrot.slane %v1502, 1
        %v1519 = vrot.slane %v1503, 1
        %v1520 = vrot.slane %v1504, 1
        %v1521 = vrot.slane %v1505, 1
        %v1522 = vrot.slane %v1506, 1
        %v1523 = vrot.slane %v1507, 1
        %v1524 = vrot.slane %v1508, 1
        %v1525 = vrot.slane %v1509, 1
        %v1534 = vadd.bf16 %v1466, %v1518
        %v1535 = vadd.bf16 %v1467, %v1519
        %v1536 = vadd.bf16 %v1468, %v1518
        %v1537 = vadd.bf16 %v1469, %v1519
        %v1538 = vadd.bf16 %v1470, %v1520
        %v1539 = vadd.bf16 %v1471, %v1521
        %v1540 = vadd.bf16 %v1472, %v1520
        %v1541 = vadd.bf16 %v1473, %v1521
        %v1542 = vadd.bf16 %v1474, %v1522
        %v1543 = vadd.bf16 %v1475, %v1523
        %v1544 = vadd.bf16 %v1476, %v1522
        %v1545 = vadd.bf16 %v1477, %v1523
        %v1546 = vadd.bf16 %v1478, %v1524
        %v1547 = vadd.bf16 %v1479, %v1525
        %v1548 = vadd.bf16 %v1480, %v1524
        %v1549 = vadd.bf16 %v1481, %v1525
        %v1550 = vld [vmem:[%s1270 + $0x20] sm:$0x1]
        %v1551 = vld [vmem:[%s1270 + $0x28] sm:$0x1]
        %v1552 = vld [vmem:[%s1270 + $0x50] sm:$0x1]
        %v1553 = vld [vmem:[%s1270 + $0x58] sm:$0x1]
        %v1554 = vld [vmem:[%s1270 + $0x80] sm:$0x1]
        %v1555 = vld [vmem:[%s1270 + $0x88] sm:$0x1]
        %v1556 = vld [vmem:[%s1270 + $0xb0] sm:$0x1]
        %v1557 = vld [vmem:[%s1270 + $0xb8] sm:$0x1]
        %v1558 = vshrl.u32 %v1486, 16
        %v1559 = vpack.i.b16 %v1558, %v1558
        %v1561 = vlaneseq
        %v1562 = vshrl.u32 %v1561, 7
        %v1563 = vsub.s32 1, %v1562
        %v1564 = vrot.slane %v1559, %v1563
        %v1565 = vshrl.u32 %v1487, 16
        %v1566 = vpack.i.b16 %v1565, %v1565
        %v1568 = vlaneseq
        %v1569 = vshrl.u32 %v1568, 7
        %v1570 = vsub.s32 1, %v1569
        %v1571 = vrot.slane %v1566, %v1570
        %v1572 = vmul.bf16 %v1323, %v1564
        %v1573 = vmul.bf16 %v1324, %v1571
        %v1574 = vmul.bf16 %v1550, %v1564
        %v1575 = vmul.bf16 %v1551, %v1571
        %v1576 = vmul.bf16 %v1325, %v1564
        %v1577 = vmul.bf16 %v1326, %v1571
        %v1578 = vmul.bf16 %v1552, %v1564
        %v1579 = vmul.bf16 %v1553, %v1571
        %v1580 = vmul.bf16 %v1327, %v1564
        %v1581 = vmul.bf16 %v1328, %v1571
        %v1582 = vmul.bf16 %v1554, %v1564
        %v1583 = vmul.bf16 %v1555, %v1571
        %v1584 = vmul.bf16 %v1329, %v1564
        %v1585 = vmul.bf16 %v1330, %v1571
        %v1586 = vmul.bf16 %v1556, %v1564
        %v1587 = vmul.bf16 %v1557, %v1571
        %vm1588 = vsmask.f32 6400
        %v1590 = vshrl.u32 %v1572, 16
        %v1592 = vrot.slane %v1590, 1
        %v1593 = vshll.u32 %v1572, 16
        %v1595 = vrot.slane %v1593, 2
        %v1596 = vor.u32 %v1592, %v1595
        %v1598 = vshrl.u32 %v1573, 16
        %v1600 = vrot.slane %v1598, 1
        %v1601 = vshll.u32 %v1573, 16
        %v1603 = vrot.slane %v1601, 2
        %v1604 = vor.u32 %v1600, %v1603
        %v1606 = vshll.u32 %v1574, 16
        %v1608 = vrot.slane %v1606, 2
        %v1609 = vsel %vm1588, %v1596, %v1608
        %v1611 = vshll.u32 %v1575, 16
        %v1613 = vrot.slane %v1611, 2
        %v1614 = vsel %vm1588, %v1604, %v1613
        %v1616 = vshrl.u32 %v1576, 16
        %v1618 = vrot.slane %v1616, 1
        %v1619 = vshll.u32 %v1576, 16
        %v1621 = vrot.slane %v1619, 2
        %v1622 = vor.u32 %v1618, %v1621
        %v1624 = vshrl.u32 %v1577, 16
        %v1626 = vrot.slane %v1624, 1
        %v1627 = vshll.u32 %v1577, 16
        %v1629 = vrot.slane %v1627, 2
        %v1630 = vor.u32 %v1626, %v1629
        %v1632 = vshll.u32 %v1578, 16
        %v1634 = vrot.slane %v1632, 2
        %v1635 = vsel %vm1588, %v1622, %v1634
        %v1637 = vshll.u32 %v1579, 16
        %v1639 = vrot.slane %v1637, 2
        %v1640 = vsel %vm1588, %v1630, %v1639
        %v1642 = vshrl.u32 %v1580, 16
        %v1644 = vrot.slane %v1642, 1
        %v1645 = vshll.u32 %v1580, 16
        %v1647 = vrot.slane %v1645, 2
        %v1648 = vor.u32 %v1644, %v1647
        %v1650 = vshrl.u32 %v1581, 16
        %v1652 = vrot.slane %v1650, 1
        %v1653 = vshll.u32 %v1581, 16
        %v1655 = vrot.slane %v1653, 2
        %v1656 = vor.u32 %v1652, %v1655
        %v1658 = vshll.u32 %v1582, 16
        %v1660 = vrot.slane %v1658, 2
        %v1661 = vsel %vm1588, %v1648, %v1660
        %v1663 = vshll.u32 %v1583, 16
        %v1665 = vrot.slane %v1663, 2
        %v1666 = vsel %vm1588, %v1656, %v1665
        %v1668 = vshrl.u32 %v1584, 16
        %v1670 = vrot.slane %v1668, 1
        %v1671 = vshll.u32 %v1584, 16
        %v1673 = vrot.slane %v1671, 2
        %v1674 = vor.u32 %v1670, %v1673
        %v1676 = vshrl.u32 %v1585, 16
        %v1678 = vrot.slane %v1676, 1
        %v1679 = vshll.u32 %v1585, 16
        %v1681 = vrot.slane %v1679, 2
        %v1682 = vor.u32 %v1678, %v1681
        %v1684 = vshll.u32 %v1586, 16
        %v1686 = vrot.slane %v1684, 2
        %v1687 = vsel %vm1588, %v1674, %v1686
        %v1689 = vshll.u32 %v1587, 16
        %v1691 = vrot.slane %v1689, 2
        %v1692 = vsel %vm1588, %v1682, %v1691
        %v1709 = vadd.bf16 %v1534, %v1596
        %v1710 = vadd.bf16 %v1535, %v1604
        %v1711 = vadd.bf16 %v1536, %v1609
        %v1712 = vadd.bf16 %v1537, %v1614
        %v1713 = vadd.bf16 %v1538, %v1622
        %v1714 = vadd.bf16 %v1539, %v1630
        %v1715 = vadd.bf16 %v1540, %v1635
        %v1716 = vadd.bf16 %v1541, %v1640
        %v1717 = vadd.bf16 %v1542, %v1648
        %v1718 = vadd.bf16 %v1543, %v1656
        %v1719 = vadd.bf16 %v1544, %v1661
        %v1720 = vadd.bf16 %v1545, %v1666
        %v1721 = vadd.bf16 %v1546, %v1674
        %v1722 = vadd.bf16 %v1547, %v1682
        %v1723 = vadd.bf16 %v1548, %v1687
        %v1724 = vadd.bf16 %v1549, %v1692
        %v1725 = vld [vmem:[%s1270 + $0x10] sm:$0xfe]
        %v1726 = vld [vmem:[%s1270 + $0x18] sm:$0xfe]
        %v1727 = vld [vmem:[%s1270 + $0x40] sm:$0xfe]
        %v1728 = vld [vmem:[%s1270 + $0x48] sm:$0xfe]
        %v1729 = vld [vmem:[%s1270 + $0x70] sm:$0xfe]
        %v1730 = vld [vmem:[%s1270 + $0x78] sm:$0xfe]
        %v1731 = vld [vmem:[%s1270 + $0xa0] sm:$0xfe]
        %v1732 = vld [vmem:[%s1270 + $0xa8] sm:$0xfe]
        %v1733 = vld [vmem:[%s3] sm:$0x44]
        %v1735 = vunpack.c.l.b16 %v1733
        %v1736 = vunpack.c.h.b16 %v1733
        %v1737 = vpack.c.b16 %v1735, %v1735
        %v1738 = vpack.c.b16 %v1736, %v1736
        %v1740 = vpack.i.b16 %v1737, %v1737
        %v1742 = vlaneseq
        %v1743 = vshrl.u32 %v1742, 7
        %v1744 = vsub.s32 2, %v1743
        %v1745 = vrot.slane %v1740, %v1744
        %v1747 = vpack.i.b16 %v1738, %v1738
        %v1749 = vlaneseq
        %v1750 = vshrl.u32 %v1749, 7
        %v1751 = vsub.s32 2, %v1750
        %v1752 = vrot.slane %v1747, %v1751
        %v1753 = vmul.bf16 %v1725, %v1745
        %v1754 = vmul.bf16 %v1726, %v1752
        %v1755 = vmul.bf16 %v1550, %v1745
        %v1756 = vmul.bf16 %v1551, %v1752
        %v1757 = vmul.bf16 %v1727, %v1745
        %v1758 = vmul.bf16 %v1728, %v1752
        %v1759 = vmul.bf16 %v1552, %v1745
        %v1760 = vmul.bf16 %v1553, %v1752
        %v1761 = vmul.bf16 %v1729, %v1745
        %v1762 = vmul.bf16 %v1730, %v1752
        %v1763 = vmul.bf16 %v1554, %v1745
        %v1764 = vmul.bf16 %v1555, %v1752
        %v1765 = vmul.bf16 %v1731, %v1745
        %v1766 = vmul.bf16 %v1732, %v1752
        %v1767 = vmul.bf16 %v1556, %v1745
        %v1768 = vmul.bf16 %v1557, %v1752
        %vm1785 = vcmask 1045504
        %v1786 = vrot.slane %v1753, 2
        %v1787 = vrot.slane %v1754, 2
        %v1788 = vrot.slane %v1755, 2
        %v1789 = vsel %vm1785, %v1786, %v1788
        %v1790 = vrot.slane %v1756, 2
        %v1791 = vsel %vm1785, %v1787, %v1790
        %v1792 = vrot.slane %v1757, 2
        %v1793 = vrot.slane %v1758, 2
        %v1794 = vrot.slane %v1759, 2
        %v1795 = vsel %vm1785, %v1792, %v1794
        %v1796 = vrot.slane %v1760, 2
        %v1797 = vsel %vm1785, %v1793, %v1796
        %v1798 = vrot.slane %v1761, 2
        %v1799 = vrot.slane %v1762, 2
        %v1800 = vrot.slane %v1763, 2
        %v1801 = vsel %vm1785, %v1798, %v1800
        %v1802 = vrot.slane %v1764, 2
        %v1803 = vsel %vm1785, %v1799, %v1802
        %v1804 = vrot.slane %v1765, 2
        %v1805 = vrot.slane %v1766, 2
        %v1806 = vrot.slane %v1767, 2
        %v1807 = vsel %vm1785, %v1804, %v1806
        %v1808 = vrot.slane %v1768, 2
        %v1809 = vsel %vm1785, %v1805, %v1808
        %v1826 = vadd.bf16 %v1709, %v1786
        %v1827 = vadd.bf16 %v1710, %v1787
        %v1828 = vadd.bf16 %v1711, %v1789
        %v1829 = vadd.bf16 %v1712, %v1791
        %v1830 = vadd.bf16 %v1713, %v1792
        %v1831 = vadd.bf16 %v1714, %v1793
        %v1832 = vadd.bf16 %v1715, %v1795
        %v1833 = vadd.bf16 %v1716, %v1797
        %v1834 = vadd.bf16 %v1717, %v1798
        %v1835 = vadd.bf16 %v1718, %v1799
        %v1836 = vadd.bf16 %v1719, %v1801
        %v1837 = vadd.bf16 %v1720, %v1803
        %v1838 = vadd.bf16 %v1721, %v1804
        %v1839 = vadd.bf16 %v1722, %v1805
        %v1840 = vadd.bf16 %v1723, %v1807
        %v1841 = vadd.bf16 %v1724, %v1809
        %vm1858 = vcmask 1043456
        %v1859 = vrot.slane %v1826, 4
        %v1860 = vrot.slane %v1828, 4
        %v1861 = vsel %vm1858, %v1859, %v1860
        %v1862 = vrot.slane %v1827, 4
        %v1863 = vrot.slane %v1829, 4
        %v1864 = vsel %vm1858, %v1862, %v1863
        %v1865 = vrot.slane %v1830, 4
        %v1866 = vrot.slane %v1832, 4
        %v1867 = vsel %vm1858, %v1865, %v1866
        %v1868 = vrot.slane %v1831, 4
        %v1869 = vrot.slane %v1833, 4
        %v1870 = vsel %vm1858, %v1868, %v1869
        %v1871 = vrot.slane %v1834, 4
        %v1872 = vrot.slane %v1836, 4
        %v1873 = vsel %vm1858, %v1871, %v1872
        %v1874 = vrot.slane %v1835, 4
        %v1875 = vrot.slane %v1837, 4
        %v1876 = vsel %vm1858, %v1874, %v1875
        %v1877 = vrot.slane %v1838, 4
        %v1878 = vrot.slane %v1840, 4
        %v1879 = vsel %vm1858, %v1877, %v1878
        %v1880 = vrot.slane %v1839, 4
        %v1881 = vrot.slane %v1841, 4
        %v1882 = vsel %vm1858, %v1880, %v1881
        %v1899 = vunpack.c.l.bf16 %v1861
        %v1900 = vunpack.c.l.bf16 %v1864
        %v1901 = vunpack.c.h.bf16 %v1861
        %v1902 = vunpack.c.h.bf16 %v1864
        %v1903 = vunpack.c.l.bf16 %v1860
        %v1904 = vunpack.c.l.bf16 %v1863
        %v1905 = vunpack.c.l.bf16 %v1867
        %v1906 = vunpack.c.l.bf16 %v1870
        %v1907 = vunpack.c.h.bf16 %v1867
        %v1908 = vunpack.c.h.bf16 %v1870
        %v1909 = vunpack.c.l.bf16 %v1866
        %v1910 = vunpack.c.l.bf16 %v1869
        %v1911 = vunpack.c.l.bf16 %v1873
        %v1912 = vunpack.c.l.bf16 %v1876
        %v1913 = vunpack.c.h.bf16 %v1873
        %v1914 = vunpack.c.h.bf16 %v1876
        %v1915 = vunpack.c.l.bf16 %v1872
        %v1916 = vunpack.c.l.bf16 %v1875
        %v1917 = vunpack.c.l.bf16 %v1879
        %v1918 = vunpack.c.l.bf16 %v1882
        %v1919 = vunpack.c.h.bf16 %v1879
        %v1920 = vunpack.c.h.bf16 %v1882
        %v1921 = vunpack.c.l.bf16 %v1878
        %v1922 = vunpack.c.l.bf16 %v1881
        %s1923 = sadd.s32 %s1267, 1
        %s1924 = smul.u32 %s1923, 6
        %s1925 = smul.addr %s1924, 8
        %s1926 = scalar_lea.vmem [#allocation4], %s1925
        %v1927 = vld [vmem:[%s1926] sm:$0x80]
        %v1928 = vld [vmem:[%s1926 + $0x8] sm:$0x80]
        %v1929 = vld [vmem:[%s1926 + $0x10] sm:$0x7f]
        %v1930 = vld [vmem:[%s1926 + $0x18] sm:$0x7f]
        %v1931 = vld [vmem:[%s1926 + $0x30] sm:$0x80]
        %v1932 = vld [vmem:[%s1926 + $0x38] sm:$0x80]
        %v1933 = vld [vmem:[%s1926 + $0x40] sm:$0x7f]
        %v1934 = vld [vmem:[%s1926 + $0x48] sm:$0x7f]
        %v1935 = vld [vmem:[%s1926 + $0x60] sm:$0x80]
        %v1936 = vld [vmem:[%s1926 + $0x68] sm:$0x80]
        %v1937 = vld [vmem:[%s1926 + $0x70] sm:$0x7f]
        %v1938 = vld [vmem:[%s1926 + $0x78] sm:$0x7f]
        %v1939 = vld [vmem:[%s1926 + $0x90] sm:$0x80]
        %v1940 = vld [vmem:[%s1926 + $0x98] sm:$0x80]
        %v1941 = vld [vmem:[%s1926 + $0xa0] sm:$0x7f]
        %v1942 = vld [vmem:[%s1926 + $0xa8] sm:$0x7f]
        %v1943 = vshrl.u32 %v1737, 16
        %v1944 = vpack.i.b16 %v1943, %v1943
        %v1946 = vlaneseq
        %v1947 = vshrl.u32 %v1946, 7
        %v1948 = vsub.s32 2, %v1947
        %v1949 = vrot.slane %v1944, %v1948
        %v1950 = vshrl.u32 %v1738, 16
        %v1951 = vpack.i.b16 %v1950, %v1950
        %v1953 = vlaneseq
        %v1954 = vshrl.u32 %v1953, 7
        %v1955 = vsub.s32 2, %v1954
        %v1956 = vrot.slane %v1951, %v1955
        %v1957 = vmul.bf16 %v1927, %v1949
        %v1958 = vmul.bf16 %v1928, %v1956
        %v1959 = vmul.bf16 %v1929, %v1949
        %v1960 = vmul.bf16 %v1930, %v1956
        %v1961 = vmul.bf16 %v1931, %v1949
        %v1962 = vmul.bf16 %v1932, %v1956
        %v1963 = vmul.bf16 %v1933, %v1949
        %v1964 = vmul.bf16 %v1934, %v1956
        %v1965 = vmul.bf16 %v1935, %v1949
        %v1966 = vmul.bf16 %v1936, %v1956
        %v1967 = vmul.bf16 %v1937, %v1949
        %v1968 = vmul.bf16 %v1938, %v1956
        %v1969 = vmul.bf16 %v1939, %v1949
        %v1970 = vmul.bf16 %v1940, %v1956
        %v1971 = vmul.bf16 %v1941, %v1949
        %v1972 = vmul.bf16 %v1942, %v1956
        %v1973 = vld [vmem:[%s1926 + $0x10] sm:$0xff]
        %v1974 = vld [vmem:[%s1926 + $0x18] sm:$0xff]
        %v1975 = vld [vmem:[%s1926 + $0x40] sm:$0xff]
        %v1976 = vld [vmem:[%s1926 + $0x48] sm:$0xff]
        %v1977 = vld [vmem:[%s1926 + $0x70] sm:$0xff]
        %v1978 = vld [vmem:[%s1926 + $0x78] sm:$0xff]
        %v1979 = vld [vmem:[%s1926 + $0xa0] sm:$0xff]
        %v1980 = vld [vmem:[%s1926 + $0xa8] sm:$0xff]
        %v1981 = vld [vmem:[%s3] sm:$0x88]
        %v1983 = vunpack.c.l.b16 %v1981
        %v1984 = vunpack.c.h.b16 %v1981
        %v1985 = vpack.c.b16 %v1983, %v1983
        %v1986 = vpack.c.b16 %v1984, %v1984
        %v1988 = vpack.i.b16 %v1985, %v1985
        %v1990 = vlaneseq
        %v1991 = vshrl.u32 %v1990, 7
        %v1992 = vsub.s32 3, %v1991
        %v1993 = vrot.slane %v1988, %v1992
        %v1995 = vpack.i.b16 %v1986, %v1986
        %v1997 = vlaneseq
        %v1998 = vshrl.u32 %v1997, 7
        %v1999 = vsub.s32 3, %v1998
        %v2000 = vrot.slane %v1995, %v1999
        %v2001 = vmul.bf16 %v1927, %v1993
        %v2002 = vmul.bf16 %v1928, %v2000
        %v2003 = vmul.bf16 %v1973, %v1993
        %v2004 = vmul.bf16 %v1974, %v2000
        %v2005 = vmul.bf16 %v1931, %v1993
        %v2006 = vmul.bf16 %v1932, %v2000
        %v2007 = vmul.bf16 %v1975, %v1993
        %v2008 = vmul.bf16 %v1976, %v2000
        %v2009 = vmul.bf16 %v1935, %v1993
        %v2010 = vmul.bf16 %v1936, %v2000
        %v2011 = vmul.bf16 %v1977, %v1993
        %v2012 = vmul.bf16 %v1978, %v2000
        %v2013 = vmul.bf16 %v1939, %v1993
        %v2014 = vmul.bf16 %v1940, %v2000
        %v2015 = vmul.bf16 %v1979, %v1993
        %v2016 = vmul.bf16 %v1980, %v2000
        %v2018 = vshrl.u32 %v2001, 16
        %v2021 = vshll.u32 %v2003, 16
        %v2023 = vrot.slane %v2021, 1
        %v2024 = vsel %vm1361, %v2018, %v2023
        %v2026 = vshrl.u32 %v2002, 16
        %v2029 = vshll.u32 %v2004, 16
        %v2031 = vrot.slane %v2029, 1
        %v2032 = vsel %vm1361, %v2026, %v2031
        %v2033 = vshrl.u32 %v2003, 16
        %v2035 = vor.u32 %v2033, %v2023
        %v2036 = vshrl.u32 %v2004, 16
        %v2038 = vor.u32 %v2036, %v2031
        %v2040 = vshrl.u32 %v2005, 16
        %v2043 = vshll.u32 %v2007, 16
        %v2045 = vrot.slane %v2043, 1
        %v2046 = vsel %vm1361, %v2040, %v2045
        %v2048 = vshrl.u32 %v2006, 16
        %v2051 = vshll.u32 %v2008, 16
        %v2053 = vrot.slane %v2051, 1
        %v2054 = vsel %vm1361, %v2048, %v2053
        %v2055 = vshrl.u32 %v2007, 16
        %v2057 = vor.u32 %v2055, %v2045
        %v2058 = vshrl.u32 %v2008, 16
        %v2060 = vor.u32 %v2058, %v2053
        %v2062 = vshrl.u32 %v2009, 16
        %v2065 = vshll.u32 %v2011, 16
        %v2067 = vrot.slane %v2065, 1
        %v2068 = vsel %vm1361, %v2062, %v2067
        %v2070 = vshrl.u32 %v2010, 16
        %v2073 = vshll.u32 %v2012, 16
        %v2075 = vrot.slane %v2073, 1
        %v2076 = vsel %vm1361, %v2070, %v2075
        %v2077 = vshrl.u32 %v2011, 16
        %v2079 = vor.u32 %v2077, %v2067
        %v2080 = vshrl.u32 %v2012, 16
        %v2082 = vor.u32 %v2080, %v2075
        %v2084 = vshrl.u32 %v2013, 16
        %v2087 = vshll.u32 %v2015, 16
        %v2089 = vrot.slane %v2087, 1
        %v2090 = vsel %vm1361, %v2084, %v2089
        %v2092 = vshrl.u32 %v2014, 16
        %v2095 = vshll.u32 %v2016, 16
        %v2097 = vrot.slane %v2095, 1
        %v2098 = vsel %vm1361, %v2092, %v2097
        %v2099 = vshrl.u32 %v2015, 16
        %v2101 = vor.u32 %v2099, %v2089
        %v2102 = vshrl.u32 %v2016, 16
        %v2104 = vor.u32 %v2102, %v2097
        %v2121 = vadd.bf16 %v1957, %v2024
        %v2122 = vadd.bf16 %v1958, %v2032
        %v2123 = vadd.bf16 %v1959, %v2035
        %v2124 = vadd.bf16 %v1960, %v2038
        %v2125 = vadd.bf16 %v1961, %v2046
        %v2126 = vadd.bf16 %v1962, %v2054
        %v2127 = vadd.bf16 %v1963, %v2057
        %v2128 = vadd.bf16 %v1964, %v2060
        %v2129 = vadd.bf16 %v1965, %v2068
        %v2130 = vadd.bf16 %v1966, %v2076
        %v2131 = vadd.bf16 %v1967, %v2079
        %v2132 = vadd.bf16 %v1968, %v2082
        %v2133 = vadd.bf16 %v1969, %v2090
        %v2134 = vadd.bf16 %v1970, %v2098
        %v2135 = vadd.bf16 %v1971, %v2101
        %v2136 = vadd.bf16 %v1972, %v2104
        %v2137 = vshrl.u32 %v1985, 16
        %v2138 = vpack.i.b16 %v2137, %v2137
        %v2140 = vlaneseq
        %v2141 = vshrl.u32 %v2140, 7
        %v2142 = vsub.s32 3, %v2141
        %v2143 = vrot.slane %v2138, %v2142
        %v2144 = vshrl.u32 %v1986, 16
        %v2145 = vpack.i.b16 %v2144, %v2144
        %v2147 = vlaneseq
        %v2148 = vshrl.u32 %v2147, 7
        %v2149 = vsub.s32 3, %v2148
        %v2150 = vrot.slane %v2145, %v2149
        %v2151 = vmul.bf16 %v1973, %v2143
        %v2152 = vmul.bf16 %v1974, %v2150
        %v2153 = vmul.bf16 %v1975, %v2143
        %v2154 = vmul.bf16 %v1976, %v2150
        %v2155 = vmul.bf16 %v1977, %v2143
        %v2156 = vmul.bf16 %v1978, %v2150
        %v2157 = vmul.bf16 %v1979, %v2143
        %v2158 = vmul.bf16 %v1980, %v2150
        %v2167 = vrot.slane %v2151, 1
        %v2168 = vrot.slane %v2152, 1
        %v2169 = vrot.slane %v2153, 1
        %v2170 = vrot.slane %v2154, 1
        %v2171 = vrot.slane %v2155, 1
        %v2172 = vrot.slane %v2156, 1
        %v2173 = vrot.slane %v2157, 1
        %v2174 = vrot.slane %v2158, 1
        %v2183 = vadd.bf16 %v2121, %v2167
        %v2184 = vadd.bf16 %v2122, %v2168
        %v2185 = vadd.bf16 %v2123, %v2167
        %v2186 = vadd.bf16 %v2124, %v2168
        %v2187 = vadd.bf16 %v2125, %v2169
        %v2188 = vadd.bf16 %v2126, %v2170
        %v2189 = vadd.bf16 %v2127, %v2169
        %v2190 = vadd.bf16 %v2128, %v2170
        %v2191 = vadd.bf16 %v2129, %v2171
        %v2192 = vadd.bf16 %v2130, %v2172
        %v2193 = vadd.bf16 %v2131, %v2171
        %v2194 = vadd.bf16 %v2132, %v2172
        %v2195 = vadd.bf16 %v2133, %v2173
        %v2196 = vadd.bf16 %v2134, %v2174
        %v2197 = vadd.bf16 %v2135, %v2173
        %v2198 = vadd.bf16 %v2136, %v2174
        %v2199 = vld [vmem:[%s1926 + $0x20] sm:$0x1]
        %v2200 = vld [vmem:[%s1926 + $0x28] sm:$0x1]
        %v2201 = vld [vmem:[%s1926 + $0x50] sm:$0x1]
        %v2202 = vld [vmem:[%s1926 + $0x58] sm:$0x1]
        %v2203 = vld [vmem:[%s1926 + $0x80] sm:$0x1]
        %v2204 = vld [vmem:[%s1926 + $0x88] sm:$0x1]
        %v2205 = vld [vmem:[%s1926 + $0xb0] sm:$0x1]
        %v2206 = vld [vmem:[%s1926 + $0xb8] sm:$0x1]
        %v2207 = vld [vmem:[%s3 + $0x8] sm:$0x11]
        %v2209 = vunpack.c.l.b16 %v2207
        %v2210 = vunpack.c.h.b16 %v2207
        %v2211 = vpack.c.b16 %v2209, %v2209
        %v2212 = vpack.c.b16 %v2210, %v2210
        %v2214 = vpack.i.b16 %v2211, %v2211
        %v2216 = vlaneseq
        %v2217 = vshrl.u32 %v2216, 7
        %v2218 = vsub.s32 0, %v2217
        %v2219 = vrot.slane %v2214, %v2218
        %v2221 = vpack.i.b16 %v2212, %v2212
        %v2223 = vlaneseq
        %v2224 = vshrl.u32 %v2223, 7
        %v2225 = vsub.s32 0, %v2224
        %v2226 = vrot.slane %v2221, %v2225
        %v2227 = vmul.bf16 %v1973, %v2219
        %v2228 = vmul.bf16 %v1974, %v2226
        %v2229 = vmul.bf16 %v2199, %v2219
        %v2230 = vmul.bf16 %v2200, %v2226
        %v2231 = vmul.bf16 %v1975, %v2219
        %v2232 = vmul.bf16 %v1976, %v2226
        %v2233 = vmul.bf16 %v2201, %v2219
        %v2234 = vmul.bf16 %v2202, %v2226
        %v2235 = vmul.bf16 %v1977, %v2219
        %v2236 = vmul.bf16 %v1978, %v2226
        %v2237 = vmul.bf16 %v2203, %v2219
        %v2238 = vmul.bf16 %v2204, %v2226
        %v2239 = vmul.bf16 %v1979, %v2219
        %v2240 = vmul.bf16 %v1980, %v2226
        %v2241 = vmul.bf16 %v2205, %v2219
        %v2242 = vmul.bf16 %v2206, %v2226
        %v2244 = vshrl.u32 %v2227, 16
        %v2246 = vrot.slane %v2244, 1
        %v2247 = vshll.u32 %v2227, 16
        %v2249 = vrot.slane %v2247, 2
        %v2250 = vor.u32 %v2246, %v2249
        %v2252 = vshrl.u32 %v2228, 16
        %v2254 = vrot.slane %v2252, 1
        %v2255 = vshll.u32 %v2228, 16
        %v2257 = vrot.slane %v2255, 2
        %v2258 = vor.u32 %v2254, %v2257
        %v2260 = vshll.u32 %v2229, 16
        %v2262 = vrot.slane %v2260, 2
        %v2263 = vsel %vm1588, %v2250, %v2262
        %v2265 = vshll.u32 %v2230, 16
        %v2267 = vrot.slane %v2265, 2
        %v2268 = vsel %vm1588, %v2258, %v2267
        %v2270 = vshrl.u32 %v2231, 16
        %v2272 = vrot.slane %v2270, 1
        %v2273 = vshll.u32 %v2231, 16
        %v2275 = vrot.slane %v2273, 2
        %v2276 = vor.u32 %v2272, %v2275
        %v2278 = vshrl.u32 %v2232, 16
        %v2280 = vrot.slane %v2278, 1
        %v2281 = vshll.u32 %v2232, 16
        %v2283 = vrot.slane %v2281, 2
        %v2284 = vor.u32 %v2280, %v2283
        %v2286 = vshll.u32 %v2233, 16
        %v2288 = vrot.slane %v2286, 2
        %v2289 = vsel %vm1588, %v2276, %v2288
        %v2291 = vshll.u32 %v2234, 16
        %v2293 = vrot.slane %v2291, 2
        %v2294 = vsel %vm1588, %v2284, %v2293
        %v2296 = vshrl.u32 %v2235, 16
        %v2298 = vrot.slane %v2296, 1
        %v2299 = vshll.u32 %v2235, 16
        %v2301 = vrot.slane %v2299, 2
        %v2302 = vor.u32 %v2298, %v2301
        %v2304 = vshrl.u32 %v2236, 16
        %v2306 = vrot.slane %v2304, 1
        %v2307 = vshll.u32 %v2236, 16
        %v2309 = vrot.slane %v2307, 2
        %v2310 = vor.u32 %v2306, %v2309
        %v2312 = vshll.u32 %v2237, 16
        %v2314 = vrot.slane %v2312, 2
        %v2315 = vsel %vm1588, %v2302, %v2314
        %v2317 = vshll.u32 %v2238, 16
        %v2319 = vrot.slane %v2317, 2
        %v2320 = vsel %vm1588, %v2310, %v2319
        %v2322 = vshrl.u32 %v2239, 16
        %v2324 = vrot.slane %v2322, 1
        %v2325 = vshll.u32 %v2239, 16
        %v2327 = vrot.slane %v2325, 2
        %v2328 = vor.u32 %v2324, %v2327
        %v2330 = vshrl.u32 %v2240, 16
        %v2332 = vrot.slane %v2330, 1
        %v2333 = vshll.u32 %v2240, 16
        %v2335 = vrot.slane %v2333, 2
        %v2336 = vor.u32 %v2332, %v2335
        %v2338 = vshll.u32 %v2241, 16
        %v2340 = vrot.slane %v2338, 2
        %v2341 = vsel %vm1588, %v2328, %v2340
        %v2343 = vshll.u32 %v2242, 16
        %v2345 = vrot.slane %v2343, 2
        %v2346 = vsel %vm1588, %v2336, %v2345
        %v2363 = vadd.bf16 %v2183, %v2250
        %v2364 = vadd.bf16 %v2184, %v2258
        %v2365 = vadd.bf16 %v2185, %v2263
        %v2366 = vadd.bf16 %v2186, %v2268
        %v2367 = vadd.bf16 %v2187, %v2276
        %v2368 = vadd.bf16 %v2188, %v2284
        %v2369 = vadd.bf16 %v2189, %v2289
        %v2370 = vadd.bf16 %v2190, %v2294
        %v2371 = vadd.bf16 %v2191, %v2302
        %v2372 = vadd.bf16 %v2192, %v2310
        %v2373 = vadd.bf16 %v2193, %v2315
        %v2374 = vadd.bf16 %v2194, %v2320
        %v2375 = vadd.bf16 %v2195, %v2328
        %v2376 = vadd.bf16 %v2196, %v2336
        %v2377 = vadd.bf16 %v2197, %v2341
        %v2378 = vadd.bf16 %v2198, %v2346
        %v2379 = vld [vmem:[%s1926 + $0x10] sm:$0xfe]
        %v2380 = vld [vmem:[%s1926 + $0x18] sm:$0xfe]
        %v2381 = vld [vmem:[%s1926 + $0x40] sm:$0xfe]
        %v2382 = vld [vmem:[%s1926 + $0x48] sm:$0xfe]
        %v2383 = vld [vmem:[%s1926 + $0x70] sm:$0xfe]
        %v2384 = vld [vmem:[%s1926 + $0x78] sm:$0xfe]
        %v2385 = vld [vmem:[%s1926 + $0xa0] sm:$0xfe]
        %v2386 = vld [vmem:[%s1926 + $0xa8] sm:$0xfe]
        %v2387 = vshrl.u32 %v2211, 16
        %v2388 = vpack.i.b16 %v2387, %v2387
        %v2390 = vlaneseq
        %v2391 = vshrl.u32 %v2390, 7
        %v2392 = vsub.s32 0, %v2391
        %v2393 = vrot.slane %v2388, %v2392
        %v2394 = vshrl.u32 %v2212, 16
        %v2395 = vpack.i.b16 %v2394, %v2394
        %v2397 = vlaneseq
        %v2398 = vshrl.u32 %v2397, 7
        %v2399 = vsub.s32 0, %v2398
        %v2400 = vrot.slane %v2395, %v2399
        %v2401 = vmul.bf16 %v2379, %v2393
        %v2402 = vmul.bf16 %v2380, %v2400
        %v2403 = vmul.bf16 %v2199, %v2393
        %v2404 = vmul.bf16 %v2200, %v2400
        %v2405 = vmul.bf16 %v2381, %v2393
        %v2406 = vmul.bf16 %v2382, %v2400
        %v2407 = vmul.bf16 %v2201, %v2393
        %v2408 = vmul.bf16 %v2202, %v2400
        %v2409 = vmul.bf16 %v2383, %v2393
        %v2410 = vmul.bf16 %v2384, %v2400
        %v2411 = vmul.bf16 %v2203, %v2393
        %v2412 = vmul.bf16 %v2204, %v2400
        %v2413 = vmul.bf16 %v2385, %v2393
        %v2414 = vmul.bf16 %v2386, %v2400
        %v2415 = vmul.bf16 %v2205, %v2393
        %v2416 = vmul.bf16 %v2206, %v2400
        %v2433 = vrot.slane %v2401, 2
        %v2434 = vrot.slane %v2402, 2
        %v2435 = vrot.slane %v2403, 2
        %v2436 = vsel %vm1785, %v2433, %v2435
        %v2437 = vrot.slane %v2404, 2
        %v2438 = vsel %vm1785, %v2434, %v2437
        %v2439 = vrot.slane %v2405, 2
        %v2440 = vrot.slane %v2406, 2
        %v2441 = vrot.slane %v2407, 2
        %v2442 = vsel %vm1785, %v2439, %v2441
        %v2443 = vrot.slane %v2408, 2
        %v2444 = vsel %vm1785, %v2440, %v2443
        %v2445 = vrot.slane %v2409, 2
        %v2446 = vrot.slane %v2410, 2
        %v2447 = vrot.slane %v2411, 2
        %v2448 = vsel %vm1785, %v2445, %v2447
        %v2449 = vrot.slane %v2412, 2
        %v2450 = vsel %vm1785, %v2446, %v2449
        %v2451 = vrot.slane %v2413, 2
        %v2452 = vrot.slane %v2414, 2
        %v2453 = vrot.slane %v2415, 2
        %v2454 = vsel %vm1785, %v2451, %v2453
        %v2455 = vrot.slane %v2416, 2
        %v2456 = vsel %vm1785, %v2452, %v2455
        %v2473 = vadd.bf16 %v2363, %v2433
        %v2474 = vadd.bf16 %v2364, %v2434
        %v2475 = vadd.bf16 %v2365, %v2436
        %v2476 = vadd.bf16 %v2366, %v2438
        %v2477 = vadd.bf16 %v2367, %v2439
        %v2478 = vadd.bf16 %v2368, %v2440
        %v2479 = vadd.bf16 %v2369, %v2442
        %v2480 = vadd.bf16 %v2370, %v2444
        %v2481 = vadd.bf16 %v2371, %v2445
        %v2482 = vadd.bf16 %v2372, %v2446
        %v2483 = vadd.bf16 %v2373, %v2448
        %v2484 = vadd.bf16 %v2374, %v2450
        %v2485 = vadd.bf16 %v2375, %v2451
        %v2486 = vadd.bf16 %v2376, %v2452
        %v2487 = vadd.bf16 %v2377, %v2454
        %v2488 = vadd.bf16 %v2378, %v2456
        %v2505 = vrot.slane %v2473, 4
        %v2506 = vrot.slane %v2475, 4
        %v2507 = vsel %vm1858, %v2505, %v2506
        %v2508 = vrot.slane %v2474, 4
        %v2509 = vrot.slane %v2476, 4
        %v2510 = vsel %vm1858, %v2508, %v2509
        %v2511 = vrot.slane %v2477, 4
        %v2512 = vrot.slane %v2479, 4
        %v2513 = vsel %vm1858, %v2511, %v2512
        %v2514 = vrot.slane %v2478, 4
        %v2515 = vrot.slane %v2480, 4
        %v2516 = vsel %vm1858, %v2514, %v2515
        %v2517 = vrot.slane %v2481, 4
        %v2518 = vrot.slane %v2483, 4
        %v2519 = vsel %vm1858, %v2517, %v2518
        %v2520 = vrot.slane %v2482, 4
        %v2521 = vrot.slane %v2484, 4
        %v2522 = vsel %vm1858, %v2520, %v2521
        %v2523 = vrot.slane %v2485, 4
        %v2524 = vrot.slane %v2487, 4
        %v2525 = vsel %vm1858, %v2523, %v2524
        %v2526 = vrot.slane %v2486, 4
        %v2527 = vrot.slane %v2488, 4
        %v2528 = vsel %vm1858, %v2526, %v2527
        %v2545 = vunpack.c.l.bf16 %v2507
        %v2546 = vunpack.c.l.bf16 %v2510
        %v2547 = vunpack.c.h.bf16 %v2507
        %v2548 = vunpack.c.h.bf16 %v2510
        %v2549 = vunpack.c.l.bf16 %v2506
        %v2550 = vunpack.c.l.bf16 %v2509
        %v2551 = vunpack.c.l.bf16 %v2513
        %v2552 = vunpack.c.l.bf16 %v2516
        %v2553 = vunpack.c.h.bf16 %v2513
        %v2554 = vunpack.c.h.bf16 %v2516
        %v2555 = vunpack.c.l.bf16 %v2512
        %v2556 = vunpack.c.l.bf16 %v2515
        %v2557 = vunpack.c.l.bf16 %v2519
        %v2558 = vunpack.c.l.bf16 %v2522
        %v2559 = vunpack.c.h.bf16 %v2519
        %v2560 = vunpack.c.h.bf16 %v2522
        %v2561 = vunpack.c.l.bf16 %v2518
        %v2562 = vunpack.c.l.bf16 %v2521
        %v2563 = vunpack.c.l.bf16 %v2525
        %v2564 = vunpack.c.l.bf16 %v2528
        %v2565 = vunpack.c.h.bf16 %v2525
        %v2566 = vunpack.c.h.bf16 %v2528
        %v2567 = vunpack.c.l.bf16 %v2524
        %v2568 = vunpack.c.l.bf16 %v2527
        %v2569 = vadd.f32 %v1899, %v2545
        %v2570 = vadd.f32 %v1900, %v2546
        %v2571 = vadd.f32 %v1901, %v2547
        %v2572 = vadd.f32 %v1902, %v2548
        %v2573 = vadd.f32 %v1903, %v2549
        %v2574 = vadd.f32 %v1904, %v2550
        %v2575 = vadd.f32 %v1905, %v2551
        %v2576 = vadd.f32 %v1906, %v2552
        %v2577 = vadd.f32 %v1907, %v2553
        %v2578 = vadd.f32 %v1908, %v2554
        %v2579 = vadd.f32 %v1909, %v2555
        %v2580 = vadd.f32 %v1910, %v2556
        %v2581 = vadd.f32 %v1911, %v2557
        %v2582 = vadd.f32 %v1912, %v2558
        %v2583 = vadd.f32 %v1913, %v2559
        %v2584 = vadd.f32 %v1914, %v2560
        %v2585 = vadd.f32 %v1915, %v2561
        %v2586 = vadd.f32 %v1916, %v2562
        %v2587 = vadd.f32 %v1917, %v2563
        %v2588 = vadd.f32 %v1918, %v2564
        %v2589 = vadd.f32 %v1919, %v2565
        %v2590 = vadd.f32 %v1920, %v2566
        %v2591 = vadd.f32 %v1921, %v2567
        %v2592 = vadd.f32 %v1922, %v2568
        %s2593 = sadd.s32 %s1267, 2
        %s2594 = smul.u32 %s2593, 6
        %s2595 = smul.addr %s2594, 8
        %s2596 = scalar_lea.vmem [#allocation4], %s2595
        %v2597 = vld [vmem:[%s2596] sm:$0x80]
        %v2598 = vld [vmem:[%s2596 + $0x8] sm:$0x80]
        %v2599 = vld [vmem:[%s2596 + $0x10] sm:$0x7f]
        %v2600 = vld [vmem:[%s2596 + $0x18] sm:$0x7f]
        %v2601 = vld [vmem:[%s2596 + $0x30] sm:$0x80]
        %v2602 = vld [vmem:[%s2596 + $0x38] sm:$0x80]
        %v2603 = vld [vmem:[%s2596 + $0x40] sm:$0x7f]
        %v2604 = vld [vmem:[%s2596 + $0x48] sm:$0x7f]
        %v2605 = vld [vmem:[%s2596 + $0x60] sm:$0x80]
        %v2606 = vld [vmem:[%s2596 + $0x68] sm:$0x80]
        %v2607 = vld [vmem:[%s2596 + $0x70] sm:$0x7f]
        %v2608 = vld [vmem:[%s2596 + $0x78] sm:$0x7f]
        %v2609 = vld [vmem:[%s2596 + $0x90] sm:$0x80]
        %v2610 = vld [vmem:[%s2596 + $0x98] sm:$0x80]
        %v2611 = vld [vmem:[%s2596 + $0xa0] sm:$0x7f]
        %v2612 = vld [vmem:[%s2596 + $0xa8] sm:$0x7f]
        %v2613 = vld [vmem:[%s3 + $0x8] sm:$0x22]
        %v2615 = vunpack.c.l.b16 %v2613
        %v2616 = vunpack.c.h.b16 %v2613
        %v2617 = vpack.c.b16 %v2615, %v2615
        %v2618 = vpack.c.b16 %v2616, %v2616
        %v2620 = vpack.i.b16 %v2617, %v2617
        %v2622 = vlaneseq
        %v2623 = vshrl.u32 %v2622, 7
        %v2624 = vsub.s32 1, %v2623
        %v2625 = vrot.slane %v2620, %v2624
        %v2627 = vpack.i.b16 %v2618, %v2618
        %v2629 = vlaneseq
        %v2630 = vshrl.u32 %v2629, 7
        %v2631 = vsub.s32 1, %v2630
        %v2632 = vrot.slane %v2627, %v2631
        %v2633 = vmul.bf16 %v2597, %v2625
        %v2634 = vmul.bf16 %v2598, %v2632
        %v2635 = vmul.bf16 %v2599, %v2625
        %v2636 = vmul.bf16 %v2600, %v2632
        %v2637 = vmul.bf16 %v2601, %v2625
        %v2638 = vmul.bf16 %v2602, %v2632
        %v2639 = vmul.bf16 %v2603, %v2625
        %v2640 = vmul.bf16 %v2604, %v2632
        %v2641 = vmul.bf16 %v2605, %v2625
        %v2642 = vmul.bf16 %v2606, %v2632
        %v2643 = vmul.bf16 %v2607, %v2625
        %v2644 = vmul.bf16 %v2608, %v2632
        %v2645 = vmul.bf16 %v2609, %v2625
        %v2646 = vmul.bf16 %v2610, %v2632
        %v2647 = vmul.bf16 %v2611, %v2625
        %v2648 = vmul.bf16 %v2612, %v2632
        %v2649 = vld [vmem:[%s2596 + $0x10] sm:$0xff]
        %v2650 = vld [vmem:[%s2596 + $0x18] sm:$0xff]
        %v2651 = vld [vmem:[%s2596 + $0x40] sm:$0xff]
        %v2652 = vld [vmem:[%s2596 + $0x48] sm:$0xff]
        %v2653 = vld [vmem:[%s2596 + $0x70] sm:$0xff]
        %v2654 = vld [vmem:[%s2596 + $0x78] sm:$0xff]
        %v2655 = vld [vmem:[%s2596 + $0xa0] sm:$0xff]
        %v2656 = vld [vmem:[%s2596 + $0xa8] sm:$0xff]
        %v2657 = vshrl.u32 %v2617, 16
        %v2658 = vpack.i.b16 %v2657, %v2657
        %v2660 = vlaneseq
        %v2661 = vshrl.u32 %v2660, 7
        %v2662 = vsub.s32 1, %v2661
        %v2663 = vrot.slane %v2658, %v2662
        %v2664 = vshrl.u32 %v2618, 16
        %v2665 = vpack.i.b16 %v2664, %v2664
        %v2667 = vlaneseq
        %v2668 = vshrl.u32 %v2667, 7
        %v2669 = vsub.s32 1, %v2668
        %v2670 = vrot.slane %v2665, %v2669
        %v2671 = vmul.bf16 %v2597, %v2663
        %v2672 = vmul.bf16 %v2598, %v2670
        %v2673 = vmul.bf16 %v2649, %v2663
        %v2674 = vmul.bf16 %v2650, %v2670
        %v2675 = vmul.bf16 %v2601, %v2663
        %v2676 = vmul.bf16 %v2602, %v2670
        %v2677 = vmul.bf16 %v2651, %v2663
        %v2678 = vmul.bf16 %v2652, %v2670
        %v2679 = vmul.bf16 %v2605, %v2663
        %v2680 = vmul.bf16 %v2606, %v2670
        %v2681 = vmul.bf16 %v2653, %v2663
        %v2682 = vmul.bf16 %v2654, %v2670
        %v2683 = vmul.bf16 %v2609, %v2663
        %v2684 = vmul.bf16 %v2610, %v2670
        %v2685 = vmul.bf16 %v2655, %v2663
        %v2686 = vmul.bf16 %v2656, %v2670
        %v2688 = vshrl.u32 %v2671, 16
        %v2691 = vshll.u32 %v2673, 16
        %v2693 = vrot.slane %v2691, 1
        %v2694 = vsel %vm1361, %v2688, %v2693
        %v2696 = vshrl.u32 %v2672, 16
        %v2699 = vshll.u32 %v2674, 16
        %v2701 = vrot.slane %v2699, 1
        %v2702 = vsel %vm1361, %v2696, %v2701
        %v2703 = vshrl.u32 %v2673, 16
        %v2705 = vor.u32 %v2703, %v2693
        %v2706 = vshrl.u32 %v2674, 16
        %v2708 = vor.u32 %v2706, %v2701
        %v2710 = vshrl.u32 %v2675, 16
        %v2713 = vshll.u32 %v2677, 16
        %v2715 = vrot.slane %v2713, 1
        %v2716 = vsel %vm1361, %v2710, %v2715
        %v2718 = vshrl.u32 %v2676, 16
        %v2721 = vshll.u32 %v2678, 16
        %v2723 = vrot.slane %v2721, 1
        %v2724 = vsel %vm1361, %v2718, %v2723
        %v2725 = vshrl.u32 %v2677, 16
        %v2727 = vor.u32 %v2725, %v2715
        %v2728 = vshrl.u32 %v2678, 16
        %v2730 = vor.u32 %v2728, %v2723
        %v2732 = vshrl.u32 %v2679, 16
        %v2735 = vshll.u32 %v2681, 16
        %v2737 = vrot.slane %v2735, 1
        %v2738 = vsel %vm1361, %v2732, %v2737
        %v2740 = vshrl.u32 %v2680, 16
        %v2743 = vshll.u32 %v2682, 16
        %v2745 = vrot.slane %v2743, 1
        %v2746 = vsel %vm1361, %v2740, %v2745
        %v2747 = vshrl.u32 %v2681, 16
        %v2749 = vor.u32 %v2747, %v2737
        %v2750 = vshrl.u32 %v2682, 16
        %v2752 = vor.u32 %v2750, %v2745
        %v2754 = vshrl.u32 %v2683, 16
        %v2757 = vshll.u32 %v2685, 16
        %v2759 = vrot.slane %v2757, 1
        %v2760 = vsel %vm1361, %v2754, %v2759
        %v2762 = vshrl.u32 %v2684, 16
        %v2765 = vshll.u32 %v2686, 16
        %v2767 = vrot.slane %v2765, 1
        %v2768 = vsel %vm1361, %v2762, %v2767
        %v2769 = vshrl.u32 %v2685, 16
        %v2771 = vor.u32 %v2769, %v2759
        %v2772 = vshrl.u32 %v2686, 16
        %v2774 = vor.u32 %v2772, %v2767
        %v2791 = vadd.bf16 %v2633, %v2694
        %v2792 = vadd.bf16 %v2634, %v2702
        %v2793 = vadd.bf16 %v2635, %v2705
        %v2794 = vadd.bf16 %v2636, %v2708
        %v2795 = vadd.bf16 %v2637, %v2716
        %v2796 = vadd.bf16 %v2638, %v2724
        %v2797 = vadd.bf16 %v2639, %v2727
        %v2798 = vadd.bf16 %v2640, %v2730
        %v2799 = vadd.bf16 %v2641, %v2738
        %v2800 = vadd.bf16 %v2642, %v2746
        %v2801 = vadd.bf16 %v2643, %v2749
        %v2802 = vadd.bf16 %v2644, %v2752
        %v2803 = vadd.bf16 %v2645, %v2760
        %v2804 = vadd.bf16 %v2646, %v2768
        %v2805 = vadd.bf16 %v2647, %v2771
        %v2806 = vadd.bf16 %v2648, %v2774
        %v2807 = vld [vmem:[%s3 + $0x8] sm:$0x44]
        %v2809 = vunpack.c.l.b16 %v2807
        %v2810 = vunpack.c.h.b16 %v2807
        %v2811 = vpack.c.b16 %v2809, %v2809
        %v2812 = vpack.c.b16 %v2810, %v2810
        %v2814 = vpack.i.b16 %v2811, %v2811
        %v2816 = vlaneseq
        %v2817 = vshrl.u32 %v2816, 7
        %v2818 = vsub.s32 2, %v2817
        %v2819 = vrot.slane %v2814, %v2818
        %v2821 = vpack.i.b16 %v2812, %v2812
        %v2823 = vlaneseq
        %v2824 = vshrl.u32 %v2823, 7
        %v2825 = vsub.s32 2, %v2824
        %v2826 = vrot.slane %v2821, %v2825
        %v2827 = vmul.bf16 %v2649, %v2819
        %v2828 = vmul.bf16 %v2650, %v2826
        %v2829 = vmul.bf16 %v2651, %v2819
        %v2830 = vmul.bf16 %v2652, %v2826
        %v2831 = vmul.bf16 %v2653, %v2819
        %v2832 = vmul.bf16 %v2654, %v2826
        %v2833 = vmul.bf16 %v2655, %v2819
        %v2834 = vmul.bf16 %v2656, %v2826
        %v2843 = vrot.slane %v2827, 1
        %v2844 = vrot.slane %v2828, 1
        %v2845 = vrot.slane %v2829, 1
        %v2846 = vrot.slane %v2830, 1
        %v2847 = vrot.slane %v2831, 1
        %v2848 = vrot.slane %v2832, 1
        %v2849 = vrot.slane %v2833, 1
        %v2850 = vrot.slane %v2834, 1
        %v2859 = vadd.bf16 %v2791, %v2843
        %v2860 = vadd.bf16 %v2792, %v2844
        %v2861 = vadd.bf16 %v2793, %v2843
        %v2862 = vadd.bf16 %v2794, %v2844
        %v2863 = vadd.bf16 %v2795, %v2845
        %v2864 = vadd.bf16 %v2796, %v2846
        %v2865 = vadd.bf16 %v2797, %v2845
        %v2866 = vadd.bf16 %v2798, %v2846
        %v2867 = vadd.bf16 %v2799, %v2847
        %v2868 = vadd.bf16 %v2800, %v2848
        %v2869 = vadd.bf16 %v2801, %v2847
        %v2870 = vadd.bf16 %v2802, %v2848
        %v2871 = vadd.bf16 %v2803, %v2849
        %v2872 = vadd.bf16 %v2804, %v2850
        %v2873 = vadd.bf16 %v2805, %v2849
        %v2874 = vadd.bf16 %v2806, %v2850
        %v2875 = vld [vmem:[%s2596 + $0x20] sm:$0x1]
        %v2876 = vld [vmem:[%s2596 + $0x28] sm:$0x1]
        %v2877 = vld [vmem:[%s2596 + $0x50] sm:$0x1]
        %v2878 = vld [vmem:[%s2596 + $0x58] sm:$0x1]
        %v2879 = vld [vmem:[%s2596 + $0x80] sm:$0x1]
        %v2880 = vld [vmem:[%s2596 + $0x88] sm:$0x1]
        %v2881 = vld [vmem:[%s2596 + $0xb0] sm:$0x1]
        %v2882 = vld [vmem:[%s2596 + $0xb8] sm:$0x1]
        %v2883 = vshrl.u32 %v2811, 16
        %v2884 = vpack.i.b16 %v2883, %v2883
        %v2886 = vlaneseq
        %v2887 = vshrl.u32 %v2886, 7
        %v2888 = vsub.s32 2, %v2887
        %v2889 = vrot.slane %v2884, %v2888
        %v2890 = vshrl.u32 %v2812, 16
        %v2891 = vpack.i.b16 %v2890, %v2890
        %v2893 = vlaneseq
        %v2894 = vshrl.u32 %v2893, 7
        %v2895 = vsub.s32 2, %v2894
        %v2896 = vrot.slane %v2891, %v2895
        %v2897 = vmul.bf16 %v2649, %v2889
        %v2898 = vmul.bf16 %v2650, %v2896
        %v2899 = vmul.bf16 %v2875, %v2889
        %v2900 = vmul.bf16 %v2876, %v2896
        %v2901 = vmul.bf16 %v2651, %v2889
        %v2902 = vmul.bf16 %v2652, %v2896
        %v2903 = vmul.bf16 %v2877, %v2889
        %v2904 = vmul.bf16 %v2878, %v2896
        %v2905 = vmul.bf16 %v2653, %v2889
        %v2906 = vmul.bf16 %v2654, %v2896
        %v2907 = vmul.bf16 %v2879, %v2889
        %v2908 = vmul.bf16 %v2880, %v2896
        %v2909 = vmul.bf16 %v2655, %v2889
        %v2910 = vmul.bf16 %v2656, %v2896
        %v2911 = vmul.bf16 %v2881, %v2889
        %v2912 = vmul.bf16 %v2882, %v2896
        %v2914 = vshrl.u32 %v2897, 16
        %v2916 = vrot.slane %v2914, 1
        %v2917 = vshll.u32 %v2897, 16
        %v2919 = vrot.slane %v2917, 2
        %v2920 = vor.u32 %v2916, %v2919
        %v2922 = vshrl.u32 %v2898, 16
        %v2924 = vrot.slane %v2922, 1
        %v2925 = vshll.u32 %v2898, 16
        %v2927 = vrot.slane %v2925, 2
        %v2928 = vor.u32 %v2924, %v2927
        %v2930 = vshll.u32 %v2899, 16
        %v2932 = vrot.slane %v2930, 2
        %v2933 = vsel %vm1588, %v2920, %v2932
        %v2935 = vshll.u32 %v2900, 16
        %v2937 = vrot.slane %v2935, 2
        %v2938 = vsel %vm1588, %v2928, %v2937
        %v2940 = vshrl.u32 %v2901, 16
        %v2942 = vrot.slane %v2940, 1
        %v2943 = vshll.u32 %v2901, 16
        %v2945 = vrot.slane %v2943, 2
        %v2946 = vor.u32 %v2942, %v2945
        %v2948 = vshrl.u32 %v2902, 16
        %v2950 = vrot.slane %v2948, 1
        %v2951 = vshll.u32 %v2902, 16
        %v2953 = vrot.slane %v2951, 2
        %v2954 = vor.u32 %v2950, %v2953
        %v2956 = vshll.u32 %v2903, 16
        %v2958 = vrot.slane %v2956, 2
        %v2959 = vsel %vm1588, %v2946, %v2958
        %v2961 = vshll.u32 %v2904, 16
        %v2963 = vrot.slane %v2961, 2
        %v2964 = vsel %vm1588, %v2954, %v2963
        %v2966 = vshrl.u32 %v2905, 16
        %v2968 = vrot.slane %v2966, 1
        %v2969 = vshll.u32 %v2905, 16
        %v2971 = vrot.slane %v2969, 2
        %v2972 = vor.u32 %v2968, %v2971
        %v2974 = vshrl.u32 %v2906, 16
        %v2976 = vrot.slane %v2974, 1
        %v2977 = vshll.u32 %v2906, 16
        %v2979 = vrot.slane %v2977, 2
        %v2980 = vor.u32 %v2976, %v2979
        %v2982 = vshll.u32 %v2907, 16
        %v2984 = vrot.slane %v2982, 2
        %v2985 = vsel %vm1588, %v2972, %v2984
        %v2987 = vshll.u32 %v2908, 16
        %v2989 = vrot.slane %v2987, 2
        %v2990 = vsel %vm1588, %v2980, %v2989
        %v2992 = vshrl.u32 %v2909, 16
        %v2994 = vrot.slane %v2992, 1
        %v2995 = vshll.u32 %v2909, 16
        %v2997 = vrot.slane %v2995, 2
        %v2998 = vor.u32 %v2994, %v2997
        %v3000 = vshrl.u32 %v2910, 16
        %v3002 = vrot.slane %v3000, 1
        %v3003 = vshll.u32 %v2910, 16
        %v3005 = vrot.slane %v3003, 2
        %v3006 = vor.u32 %v3002, %v3005
        %v3008 = vshll.u32 %v2911, 16
        %v3010 = vrot.slane %v3008, 2
        %v3011 = vsel %vm1588, %v2998, %v3010
        %v3013 = vshll.u32 %v2912, 16
        %v3015 = vrot.slane %v3013, 2
        %v3016 = vsel %vm1588, %v3006, %v3015
        %v3033 = vadd.bf16 %v2859, %v2920
        %v3034 = vadd.bf16 %v2860, %v2928
        %v3035 = vadd.bf16 %v2861, %v2933
        %v3036 = vadd.bf16 %v2862, %v2938
        %v3037 = vadd.bf16 %v2863, %v2946
        %v3038 = vadd.bf16 %v2864, %v2954
        %v3039 = vadd.bf16 %v2865, %v2959
        %v3040 = vadd.bf16 %v2866, %v2964
        %v3041 = vadd.bf16 %v2867, %v2972
        %v3042 = vadd.bf16 %v2868, %v2980
        %v3043 = vadd.bf16 %v2869, %v2985
        %v3044 = vadd.bf16 %v2870, %v2990
        %v3045 = vadd.bf16 %v2871, %v2998
        %v3046 = vadd.bf16 %v2872, %v3006
        %v3047 = vadd.bf16 %v2873, %v3011
        %v3048 = vadd.bf16 %v2874, %v3016
        %v3049 = vld [vmem:[%s2596 + $0x10] sm:$0xfe]
        %v3050 = vld [vmem:[%s2596 + $0x18] sm:$0xfe]
        %v3051 = vld [vmem:[%s2596 + $0x40] sm:$0xfe]
        %v3052 = vld [vmem:[%s2596 + $0x48] sm:$0xfe]
        %v3053 = vld [vmem:[%s2596 + $0x70] sm:$0xfe]
        %v3054 = vld [vmem:[%s2596 + $0x78] sm:$0xfe]
        %v3055 = vld [vmem:[%s2596 + $0xa0] sm:$0xfe]
        %v3056 = vld [vmem:[%s2596 + $0xa8] sm:$0xfe]
        %v3057 = vld [vmem:[%s3 + $0x8] sm:$0x88]
        %v3059 = vunpack.c.l.b16 %v3057
        %v3060 = vunpack.c.h.b16 %v3057
        %v3061 = vpack.c.b16 %v3059, %v3059
        %v3062 = vpack.c.b16 %v3060, %v3060
        %v3064 = vpack.i.b16 %v3061, %v3061
        %v3066 = vlaneseq
        %v3067 = vshrl.u32 %v3066, 7
        %v3068 = vsub.s32 3, %v3067
        %v3069 = vrot.slane %v3064, %v3068
        %v3071 = vpack.i.b16 %v3062, %v3062
        %v3073 = vlaneseq
        %v3074 = vshrl.u32 %v3073, 7
        %v3075 = vsub.s32 3, %v3074
        %v3076 = vrot.slane %v3071, %v3075
        %v3077 = vmul.bf16 %v3049, %v3069
        %v3078 = vmul.bf16 %v3050, %v3076
        %v3079 = vmul.bf16 %v2875, %v3069
        %v3080 = vmul.bf16 %v2876, %v3076
        %v3081 = vmul.bf16 %v3051, %v3069
        %v3082 = vmul.bf16 %v3052, %v3076
        %v3083 = vmul.bf16 %v2877, %v3069
        %v3084 = vmul.bf16 %v2878, %v3076
        %v3085 = vmul.bf16 %v3053, %v3069
        %v3086 = vmul.bf16 %v3054, %v3076
        %v3087 = vmul.bf16 %v2879, %v3069
        %v3088 = vmul.bf16 %v2880, %v3076
        %v3089 = vmul.bf16 %v3055, %v3069
        %v3090 = vmul.bf16 %v3056, %v3076
        %v3091 = vmul.bf16 %v2881, %v3069
        %v3092 = vmul.bf16 %v2882, %v3076
        %v3109 = vrot.slane %v3077, 2
        %v3110 = vrot.slane %v3078, 2
        %v3111 = vrot.slane %v3079, 2
        %v3112 = vsel %vm1785, %v3109, %v3111
        %v3113 = vrot.slane %v3080, 2
        %v3114 = vsel %vm1785, %v3110, %v3113
        %v3115 = vrot.slane %v3081, 2
        %v3116 = vrot.slane %v3082, 2
        %v3117 = vrot.slane %v3083, 2
        %v3118 = vsel %vm1785, %v3115, %v3117
        %v3119 = vrot.slane %v3084, 2
        %v3120 = vsel %vm1785, %v3116, %v3119
        %v3121 = vrot.slane %v3085, 2
        %v3122 = vrot.slane %v3086, 2
        %v3123 = vrot.slane %v3087, 2
        %v3124 = vsel %vm1785, %v3121, %v3123
        %v3125 = vrot.slane %v3088, 2
        %v3126 = vsel %vm1785, %v3122, %v3125
        %v3127 = vrot.slane %v3089, 2
        %v3128 = vrot.slane %v3090, 2
        %v3129 = vrot.slane %v3091, 2
        %v3130 = vsel %vm1785, %v3127, %v3129
        %v3131 = vrot.slane %v3092, 2
        %v3132 = vsel %vm1785, %v3128, %v3131
        %v3149 = vadd.bf16 %v3033, %v3109
        %v3150 = vadd.bf16 %v3034, %v3110
        %v3151 = vadd.bf16 %v3035, %v3112
        %v3152 = vadd.bf16 %v3036, %v3114
        %v3153 = vadd.bf16 %v3037, %v3115
        %v3154 = vadd.bf16 %v3038, %v3116
        %v3155 = vadd.bf16 %v3039, %v3118
        %v3156 = vadd.bf16 %v3040, %v3120
        %v3157 = vadd.bf16 %v3041, %v3121
        %v3158 = vadd.bf16 %v3042, %v3122
        %v3159 = vadd.bf16 %v3043, %v3124
        %v3160 = vadd.bf16 %v3044, %v3126
        %v3161 = vadd.bf16 %v3045, %v3127
        %v3162 = vadd.bf16 %v3046, %v3128
        %v3163 = vadd.bf16 %v3047, %v3130
        %v3164 = vadd.bf16 %v3048, %v3132
        %v3181 = vrot.slane %v3149, 4
        %v3182 = vrot.slane %v3151, 4
        %v3183 = vsel %vm1858, %v3181, %v3182
        %v3184 = vrot.slane %v3150, 4
        %v3185 = vrot.slane %v3152, 4
        %v3186 = vsel %vm1858, %v3184, %v3185
        %v3187 = vrot.slane %v3153, 4
        %v3188 = vrot.slane %v3155, 4
        %v3189 = vsel %vm1858, %v3187, %v3188
        %v3190 = vrot.slane %v3154, 4
        %v3191 = vrot.slane %v3156, 4
        %v3192 = vsel %vm1858, %v3190, %v3191
        %v3193 = vrot.slane %v3157, 4
        %v3194 = vrot.slane %v3159, 4
        %v3195 = vsel %vm1858, %v3193, %v3194
        %v3196 = vrot.slane %v3158, 4
        %v3197 = vrot.slane %v3160, 4
        %v3198 = vsel %vm1858, %v3196, %v3197
        %v3199 = vrot.slane %v3161, 4
        %v3200 = vrot.slane %v3163, 4
        %v3201 = vsel %vm1858, %v3199, %v3200
        %v3202 = vrot.slane %v3162, 4
        %v3203 = vrot.slane %v3164, 4
        %v3204 = vsel %vm1858, %v3202, %v3203
        %v3221 = vunpack.c.l.bf16 %v3183
        %v3222 = vunpack.c.l.bf16 %v3186
        %v3223 = vunpack.c.h.bf16 %v3183
        %v3224 = vunpack.c.h.bf16 %v3186
        %v3225 = vunpack.c.l.bf16 %v3182
        %v3226 = vunpack.c.l.bf16 %v3185
        %v3227 = vunpack.c.l.bf16 %v3189
        %v3228 = vunpack.c.l.bf16 %v3192
        %v3229 = vunpack.c.h.bf16 %v3189
        %v3230 = vunpack.c.h.bf16 %v3192
        %v3231 = vunpack.c.l.bf16 %v3188
        %v3232 = vunpack.c.l.bf16 %v3191
        %v3233 = vunpack.c.l.bf16 %v3195
        %v3234 = vunpack.c.l.bf16 %v3198
        %v3235 = vunpack.c.h.bf16 %v3195
        %v3236 = vunpack.c.h.bf16 %v3198
        %v3237 = vunpack.c.l.bf16 %v3194
        %v3238 = vunpack.c.l.bf16 %v3197
        %v3239 = vunpack.c.l.bf16 %v3201
        %v3240 = vunpack.c.l.bf16 %v3204
        %v3241 = vunpack.c.h.bf16 %v3201
        %v3242 = vunpack.c.h.bf16 %v3204
        %v3243 = vunpack.c.l.bf16 %v3200
        %v3244 = vunpack.c.l.bf16 %v3203
        %v3245 = vadd.f32 %v2569, %v3221
        %v3246 = vadd.f32 %v2570, %v3222
        %v3247 = vadd.f32 %v2571, %v3223
        %v3248 = vadd.f32 %v2572, %v3224
        %v3249 = vadd.f32 %v2573, %v3225
        %v3250 = vadd.f32 %v2574, %v3226
        %v3251 = vadd.f32 %v2575, %v3227
        %v3252 = vadd.f32 %v2576, %v3228
        %v3253 = vadd.f32 %v2577, %v3229
        %v3254 = vadd.f32 %v2578, %v3230
        %v3255 = vadd.f32 %v2579, %v3231
        %v3256 = vadd.f32 %v2580, %v3232
        %v3257 = vadd.f32 %v2581, %v3233
        %v3258 = vadd.f32 %v2582, %v3234
        %v3259 = vadd.f32 %v2583, %v3235
        %v3260 = vadd.f32 %v2584, %v3236
        %v3261 = vadd.f32 %v2585, %v3237
        %v3262 = vadd.f32 %v2586, %v3238
        %v3263 = vadd.f32 %v2587, %v3239
        %v3264 = vadd.f32 %v2588, %v3240
        %v3265 = vadd.f32 %v2589, %v3241
        %v3266 = vadd.f32 %v2590, %v3242
        %v3267 = vadd.f32 %v2591, %v3243
        %v3268 = vadd.f32 %v2592, %v3244
        %s3269 = sadd.s32 %s1267, 3
        %s3270 = smul.u32 %s3269, 6
        %s3271 = smul.addr %s3270, 8
        %s3272 = scalar_lea.vmem [#allocation4], %s3271
        %v3273 = vld [vmem:[%s3272] sm:$0x80]
        %v3274 = vld [vmem:[%s3272 + $0x8] sm:$0x80]
        %v3275 = vld [vmem:[%s3272 + $0x10] sm:$0x7f]
        %v3276 = vld [vmem:[%s3272 + $0x18] sm:$0x7f]
        %v3277 = vld [vmem:[%s3272 + $0x30] sm:$0x80]
        %v3278 = vld [vmem:[%s3272 + $0x38] sm:$0x80]
        %v3279 = vld [vmem:[%s3272 + $0x40] sm:$0x7f]
        %v3280 = vld [vmem:[%s3272 + $0x48] sm:$0x7f]
        %v3281 = vld [vmem:[%s3272 + $0x60] sm:$0x80]
        %v3282 = vld [vmem:[%s3272 + $0x68] sm:$0x80]
        %v3283 = vld [vmem:[%s3272 + $0x70] sm:$0x7f]
        %v3284 = vld [vmem:[%s3272 + $0x78] sm:$0x7f]
        %v3285 = vld [vmem:[%s3272 + $0x90] sm:$0x80]
        %v3286 = vld [vmem:[%s3272 + $0x98] sm:$0x80]
        %v3287 = vld [vmem:[%s3272 + $0xa0] sm:$0x7f]
        %v3288 = vld [vmem:[%s3272 + $0xa8] sm:$0x7f]
        %v3289 = vshrl.u32 %v3061, 16
        %v3290 = vpack.i.b16 %v3289, %v3289
        %v3292 = vlaneseq
        %v3293 = vshrl.u32 %v3292, 7
        %v3294 = vsub.s32 3, %v3293
        %v3295 = vrot.slane %v3290, %v3294
        %v3296 = vshrl.u32 %v3062, 16
        %v3297 = vpack.i.b16 %v3296, %v3296
        %v3299 = vlaneseq
        %v3300 = vshrl.u32 %v3299, 7
        %v3301 = vsub.s32 3, %v3300
        %v3302 = vrot.slane %v3297, %v3301
        %v3303 = vmul.bf16 %v3273, %v3295
        %v3304 = vmul.bf16 %v3274, %v3302
        %v3305 = vmul.bf16 %v3275, %v3295
        %v3306 = vmul.bf16 %v3276, %v3302
        %v3307 = vmul.bf16 %v3277, %v3295
        %v3308 = vmul.bf16 %v3278, %v3302
        %v3309 = vmul.bf16 %v3279, %v3295
        %v3310 = vmul.bf16 %v3280, %v3302
        %v3311 = vmul.bf16 %v3281, %v3295
        %v3312 = vmul.bf16 %v3282, %v3302
        %v3313 = vmul.bf16 %v3283, %v3295
        %v3314 = vmul.bf16 %v3284, %v3302
        %v3315 = vmul.bf16 %v3285, %v3295
        %v3316 = vmul.bf16 %v3286, %v3302
        %v3317 = vmul.bf16 %v3287, %v3295
        %v3318 = vmul.bf16 %v3288, %v3302
        %v3319 = vld [vmem:[%s3272 + $0x10] sm:$0xff]
        %v3320 = vld [vmem:[%s3272 + $0x18] sm:$0xff]
        %v3321 = vld [vmem:[%s3272 + $0x40] sm:$0xff]
        %v3322 = vld [vmem:[%s3272 + $0x48] sm:$0xff]
        %v3323 = vld [vmem:[%s3272 + $0x70] sm:$0xff]
        %v3324 = vld [vmem:[%s3272 + $0x78] sm:$0xff]
        %v3325 = vld [vmem:[%s3272 + $0xa0] sm:$0xff]
        %v3326 = vld [vmem:[%s3272 + $0xa8] sm:$0xff]
        %v3327 = vld [vmem:[%s3 + $0x10] sm:$0x11]
        %v3329 = vunpack.c.l.b16 %v3327
        %v3330 = vunpack.c.h.b16 %v3327
        %v3331 = vpack.c.b16 %v3329, %v3329
        %v3332 = vpack.c.b16 %v3330, %v3330
        %v3334 = vpack.i.b16 %v3331, %v3331
        %v3336 = vlaneseq
        %v3337 = vshrl.u32 %v3336, 7
        %v3338 = vsub.s32 0, %v3337
        %v3339 = vrot.slane %v3334, %v3338
        %v3341 = vpack.i.b16 %v3332, %v3332
        %v3343 = vlaneseq
        %v3344 = vshrl.u32 %v3343, 7
        %v3345 = vsub.s32 0, %v3344
        %v3346 = vrot.slane %v3341, %v3345
        %v3347 = vmul.bf16 %v3273, %v3339
        %v3348 = vmul.bf16 %v3274, %v3346
        %v3349 = vmul.bf16 %v3319, %v3339
        %v3350 = vmul.bf16 %v3320, %v3346
        %v3351 = vmul.bf16 %v3277, %v3339
        %v3352 = vmul.bf16 %v3278, %v3346
        %v3353 = vmul.bf16 %v3321, %v3339
        %v3354 = vmul.bf16 %v3322, %v3346
        %v3355 = vmul.bf16 %v3281, %v3339
        %v3356 = vmul.bf16 %v3282, %v3346
        %v3357 = vmul.bf16 %v3323, %v3339
        %v3358 = vmul.bf16 %v3324, %v3346
        %v3359 = vmul.bf16 %v3285, %v3339
        %v3360 = vmul.bf16 %v3286, %v3346
        %v3361 = vmul.bf16 %v3325, %v3339
        %v3362 = vmul.bf16 %v3326, %v3346
        %v3364 = vshrl.u32 %v3347, 16
        %v3367 = vshll.u32 %v3349, 16
        %v3369 = vrot.slane %v3367, 1
        %v3370 = vsel %vm1361, %v3364, %v3369
        %v3372 = vshrl.u32 %v3348, 16
        %v3375 = vshll.u32 %v3350, 16
        %v3377 = vrot.slane %v3375, 1
        %v3378 = vsel %vm1361, %v3372, %v3377
        %v3379 = vshrl.u32 %v3349, 16
        %v3381 = vor.u32 %v3379, %v3369
        %v3382 = vshrl.u32 %v3350, 16
        %v3384 = vor.u32 %v3382, %v3377
        %v3386 = vshrl.u32 %v3351, 16
        %v3389 = vshll.u32 %v3353, 16
        %v3391 = vrot.slane %v3389, 1
        %v3392 = vsel %vm1361, %v3386, %v3391
        %v3394 = vshrl.u32 %v3352, 16
        %v3397 = vshll.u32 %v3354, 16
        %v3399 = vrot.slane %v3397, 1
        %v3400 = vsel %vm1361, %v3394, %v3399
        %v3401 = vshrl.u32 %v3353, 16
        %v3403 = vor.u32 %v3401, %v3391
        %v3404 = vshrl.u32 %v3354, 16
        %v3406 = vor.u32 %v3404, %v3399
        %v3408 = vshrl.u32 %v3355, 16
        %v3411 = vshll.u32 %v3357, 16
        %v3413 = vrot.slane %v3411, 1
        %v3414 = vsel %vm1361, %v3408, %v3413
        %v3416 = vshrl.u32 %v3356, 16
        %v3419 = vshll.u32 %v3358, 16
        %v3421 = vrot.slane %v3419, 1
        %v3422 = vsel %vm1361, %v3416, %v3421
        %v3423 = vshrl.u32 %v3357, 16
        %v3425 = vor.u32 %v3423, %v3413
        %v3426 = vshrl.u32 %v3358, 16
        %v3428 = vor.u32 %v3426, %v3421
        %v3430 = vshrl.u32 %v3359, 16
        %v3433 = vshll.u32 %v3361, 16
        %v3435 = vrot.slane %v3433, 1
        %v3436 = vsel %vm1361, %v3430, %v3435
        %v3438 = vshrl.u32 %v3360, 16
        %v3441 = vshll.u32 %v3362, 16
        %v3443 = vrot.slane %v3441, 1
        %v3444 = vsel %vm1361, %v3438, %v3443
        %v3445 = vshrl.u32 %v3361, 16
        %v3447 = vor.u32 %v3445, %v3435
        %v3448 = vshrl.u32 %v3362, 16
        %v3450 = vor.u32 %v3448, %v3443
        %v3467 = vadd.bf16 %v3303, %v3370
        %v3468 = vadd.bf16 %v3304, %v3378
        %v3469 = vadd.bf16 %v3305, %v3381
        %v3470 = vadd.bf16 %v3306, %v3384
        %v3471 = vadd.bf16 %v3307, %v3392
        %v3472 = vadd.bf16 %v3308, %v3400
        %v3473 = vadd.bf16 %v3309, %v3403
        %v3474 = vadd.bf16 %v3310, %v3406
        %v3475 = vadd.bf16 %v3311, %v3414
        %v3476 = vadd.bf16 %v3312, %v3422
        %v3477 = vadd.bf16 %v3313, %v3425
        %v3478 = vadd.bf16 %v3314, %v3428
        %v3479 = vadd.bf16 %v3315, %v3436
        %v3480 = vadd.bf16 %v3316, %v3444
        %v3481 = vadd.bf16 %v3317, %v3447
        %v3482 = vadd.bf16 %v3318, %v3450
        %v3483 = vshrl.u32 %v3331, 16
        %v3484 = vpack.i.b16 %v3483, %v3483
        %v3486 = vlaneseq
        %v3487 = vshrl.u32 %v3486, 7
        %v3488 = vsub.s32 0, %v3487
        %v3489 = vrot.slane %v3484, %v3488
        %v3490 = vshrl.u32 %v3332, 16
        %v3491 = vpack.i.b16 %v3490, %v3490
        %v3493 = vlaneseq
        %v3494 = vshrl.u32 %v3493, 7
        %v3495 = vsub.s32 0, %v3494
        %v3496 = vrot.slane %v3491, %v3495
        %v3497 = vmul.bf16 %v3319, %v3489
        %v3498 = vmul.bf16 %v3320, %v3496
        %v3499 = vmul.bf16 %v3321, %v3489
        %v3500 = vmul.bf16 %v3322, %v3496
        %v3501 = vmul.bf16 %v3323, %v3489
        %v3502 = vmul.bf16 %v3324, %v3496
        %v3503 = vmul.bf16 %v3325, %v3489
        %v3504 = vmul.bf16 %v3326, %v3496
        %v3513 = vrot.slane %v3497, 1
        %v3514 = vrot.slane %v3498, 1
        %v3515 = vrot.slane %v3499, 1
        %v3516 = vrot.slane %v3500, 1
        %v3517 = vrot.slane %v3501, 1
        %v3518 = vrot.slane %v3502, 1
        %v3519 = vrot.slane %v3503, 1
        %v3520 = vrot.slane %v3504, 1
        %v3529 = vadd.bf16 %v3467, %v3513
        %v3530 = vadd.bf16 %v3468, %v3514
        %v3531 = vadd.bf16 %v3469, %v3513
        %v3532 = vadd.bf16 %v3470, %v3514
        %v3533 = vadd.bf16 %v3471, %v3515
        %v3534 = vadd.bf16 %v3472, %v3516
        %v3535 = vadd.bf16 %v3473, %v3515
        %v3536 = vadd.bf16 %v3474, %v3516
        %v3537 = vadd.bf16 %v3475, %v3517
        %v3538 = vadd.bf16 %v3476, %v3518
        %v3539 = vadd.bf16 %v3477, %v3517
        %v3540 = vadd.bf16 %v3478, %v3518
        %v3541 = vadd.bf16 %v3479, %v3519
        %v3542 = vadd.bf16 %v3480, %v3520
        %v3543 = vadd.bf16 %v3481, %v3519
        %v3544 = vadd.bf16 %v3482, %v3520
        %v3545 = vld [vmem:[%s3272 + $0x20] sm:$0x1]
        %v3546 = vld [vmem:[%s3272 + $0x28] sm:$0x1]
        %v3547 = vld [vmem:[%s3272 + $0x50] sm:$0x1]
        %v3548 = vld [vmem:[%s3272 + $0x58] sm:$0x1]
        %v3549 = vld [vmem:[%s3272 + $0x80] sm:$0x1]
        %v3550 = vld [vmem:[%s3272 + $0x88] sm:$0x1]
        %v3551 = vld [vmem:[%s3272 + $0xb0] sm:$0x1]
        %v3552 = vld [vmem:[%s3272 + $0xb8] sm:$0x1]
        %v3553 = vld [vmem:[%s3 + $0x10] sm:$0x22]
        %v3555 = vunpack.c.l.b16 %v3553
        %v3556 = vunpack.c.h.b16 %v3553
        %v3557 = vpack.c.b16 %v3555, %v3555
        %v3558 = vpack.c.b16 %v3556, %v3556
        %v3560 = vpack.i.b16 %v3557, %v3557
        %v3562 = vlaneseq
        %v3563 = vshrl.u32 %v3562, 7
        %v3564 = vsub.s32 1, %v3563
        %v3565 = vrot.slane %v3560, %v3564
        %v3567 = vpack.i.b16 %v3558, %v3558
        %v3569 = vlaneseq
        %v3570 = vshrl.u32 %v3569, 7
        %v3571 = vsub.s32 1, %v3570
        %v3572 = vrot.slane %v3567, %v3571
        %v3573 = vmul.bf16 %v3319, %v3565
        %v3574 = vmul.bf16 %v3320, %v3572
        %v3575 = vmul.bf16 %v3545, %v3565
        %v3576 = vmul.bf16 %v3546, %v3572
        %v3577 = vmul.bf16 %v3321, %v3565
        %v3578 = vmul.bf16 %v3322, %v3572
        %v3579 = vmul.bf16 %v3547, %v3565
        %v3580 = vmul.bf16 %v3548, %v3572
        %v3581 = vmul.bf16 %v3323, %v3565
        %v3582 = vmul.bf16 %v3324, %v3572
        %v3583 = vmul.bf16 %v3549, %v3565
        %v3584 = vmul.bf16 %v3550, %v3572
        %v3585 = vmul.bf16 %v3325, %v3565
        %v3586 = vmul.bf16 %v3326, %v3572
        %v3587 = vmul.bf16 %v3551, %v3565
        %v3588 = vmul.bf16 %v3552, %v3572
        %v3590 = vshrl.u32 %v3573, 16
        %v3592 = vrot.slane %v3590, 1
        %v3593 = vshll.u32 %v3573, 16
        %v3595 = vrot.slane %v3593, 2
        %v3596 = vor.u32 %v3592, %v3595
        %v3598 = vshrl.u32 %v3574, 16
        %v3600 = vrot.slane %v3598, 1
        %v3601 = vshll.u32 %v3574, 16
        %v3603 = vrot.slane %v3601, 2
        %v3604 = vor.u32 %v3600, %v3603
        %v3606 = vshll.u32 %v3575, 16
        %v3608 = vrot.slane %v3606, 2
        %v3609 = vsel %vm1588, %v3596, %v3608
        %v3611 = vshll.u32 %v3576, 16
        %v3613 = vrot.slane %v3611, 2
        %v3614 = vsel %vm1588, %v3604, %v3613
        %v3616 = vshrl.u32 %v3577, 16
        %v3618 = vrot.slane %v3616, 1
        %v3619 = vshll.u32 %v3577, 16
        %v3621 = vrot.slane %v3619, 2
        %v3622 = vor.u32 %v3618, %v3621
        %v3624 = vshrl.u32 %v3578, 16
        %v3626 = vrot.slane %v3624, 1
        %v3627 = vshll.u32 %v3578, 16
        %v3629 = vrot.slane %v3627, 2
        %v3630 = vor.u32 %v3626, %v3629
        %v3632 = vshll.u32 %v3579, 16
        %v3634 = vrot.slane %v3632, 2
        %v3635 = vsel %vm1588, %v3622, %v3634
        %v3637 = vshll.u32 %v3580, 16
        %v3639 = vrot.slane %v3637, 2
        %v3640 = vsel %vm1588, %v3630, %v3639
        %v3642 = vshrl.u32 %v3581, 16
        %v3644 = vrot.slane %v3642, 1
        %v3645 = vshll.u32 %v3581, 16
        %v3647 = vrot.slane %v3645, 2
        %v3648 = vor.u32 %v3644, %v3647
        %v3650 = vshrl.u32 %v3582, 16
        %v3652 = vrot.slane %v3650, 1
        %v3653 = vshll.u32 %v3582, 16
        %v3655 = vrot.slane %v3653, 2
        %v3656 = vor.u32 %v3652, %v3655
        %v3658 = vshll.u32 %v3583, 16
        %v3660 = vrot.slane %v3658, 2
        %v3661 = vsel %vm1588, %v3648, %v3660
        %v3663 = vshll.u32 %v3584, 16
        %v3665 = vrot.slane %v3663, 2
        %v3666 = vsel %vm1588, %v3656, %v3665
        %v3668 = vshrl.u32 %v3585, 16
        %v3670 = vrot.slane %v3668, 1
        %v3671 = vshll.u32 %v3585, 16
        %v3673 = vrot.slane %v3671, 2
        %v3674 = vor.u32 %v3670, %v3673
        %v3676 = vshrl.u32 %v3586, 16
        %v3678 = vrot.slane %v3676, 1
        %v3679 = vshll.u32 %v3586, 16
        %v3681 = vrot.slane %v3679, 2
        %v3682 = vor.u32 %v3678, %v3681
        %v3684 = vshll.u32 %v3587, 16
        %v3686 = vrot.slane %v3684, 2
        %v3687 = vsel %vm1588, %v3674, %v3686
        %v3689 = vshll.u32 %v3588, 16
        %v3691 = vrot.slane %v3689, 2
        %v3692 = vsel %vm1588, %v3682, %v3691
        %v3709 = vadd.bf16 %v3529, %v3596
        %v3710 = vadd.bf16 %v3530, %v3604
        %v3711 = vadd.bf16 %v3531, %v3609
        %v3712 = vadd.bf16 %v3532, %v3614
        %v3713 = vadd.bf16 %v3533, %v3622
        %v3714 = vadd.bf16 %v3534, %v3630
        %v3715 = vadd.bf16 %v3535, %v3635
        %v3716 = vadd.bf16 %v3536, %v3640
        %v3717 = vadd.bf16 %v3537, %v3648
        %v3718 = vadd.bf16 %v3538, %v3656
        %v3719 = vadd.bf16 %v3539, %v3661
        %v3720 = vadd.bf16 %v3540, %v3666
        %v3721 = vadd.bf16 %v3541, %v3674
        %v3722 = vadd.bf16 %v3542, %v3682
        %v3723 = vadd.bf16 %v3543, %v3687
        %v3724 = vadd.bf16 %v3544, %v3692
        %v3725 = vld [vmem:[%s3272 + $0x10] sm:$0xfe]
        %v3726 = vld [vmem:[%s3272 + $0x18] sm:$0xfe]
        %v3727 = vld [vmem:[%s3272 + $0x40] sm:$0xfe]
        %v3728 = vld [vmem:[%s3272 + $0x48] sm:$0xfe]
        %v3729 = vld [vmem:[%s3272 + $0x70] sm:$0xfe]
        %v3730 = vld [vmem:[%s3272 + $0x78] sm:$0xfe]
        %v3731 = vld [vmem:[%s3272 + $0xa0] sm:$0xfe]
        %v3732 = vld [vmem:[%s3272 + $0xa8] sm:$0xfe]
        %v3733 = vshrl.u32 %v3557, 16
        %v3734 = vpack.i.b16 %v3733, %v3733
        %v3736 = vlaneseq
        %v3737 = vshrl.u32 %v3736, 7
        %v3738 = vsub.s32 1, %v3737
        %v3739 = vrot.slane %v3734, %v3738
        %v3740 = vshrl.u32 %v3558, 16
        %v3741 = vpack.i.b16 %v3740, %v3740
        %v3743 = vlaneseq
        %v3744 = vshrl.u32 %v3743, 7
        %v3745 = vsub.s32 1, %v3744
        %v3746 = vrot.slane %v3741, %v3745
        %v3747 = vmul.bf16 %v3725, %v3739
        %v3748 = vmul.bf16 %v3726, %v3746
        %v3749 = vmul.bf16 %v3545, %v3739
        %v3750 = vmul.bf16 %v3546, %v3746
        %v3751 = vmul.bf16 %v3727, %v3739
        %v3752 = vmul.bf16 %v3728, %v3746
        %v3753 = vmul.bf16 %v3547, %v3739
        %v3754 = vmul.bf16 %v3548, %v3746
        %v3755 = vmul.bf16 %v3729, %v3739
        %v3756 = vmul.bf16 %v3730, %v3746
        %v3757 = vmul.bf16 %v3549, %v3739
        %v3758 = vmul.bf16 %v3550, %v3746
        %v3759 = vmul.bf16 %v3731, %v3739
        %v3760 = vmul.bf16 %v3732, %v3746
        %v3761 = vmul.bf16 %v3551, %v3739
        %v3762 = vmul.bf16 %v3552, %v3746
        %v3779 = vrot.slane %v3747, 2
        %v3780 = vrot.slane %v3748, 2
        %v3781 = vrot.slane %v3749, 2
        %v3782 = vsel %vm1785, %v3779, %v3781
        %v3783 = vrot.slane %v3750, 2
        %v3784 = vsel %vm1785, %v3780, %v3783
        %v3785 = vrot.slane %v3751, 2
        %v3786 = vrot.slane %v3752, 2
        %v3787 = vrot.slane %v3753, 2
        %v3788 = vsel %vm1785, %v3785, %v3787
        %v3789 = vrot.slane %v3754, 2
        %v3790 = vsel %vm1785, %v3786, %v3789
        %v3791 = vrot.slane %v3755, 2
        %v3792 = vrot.slane %v3756, 2
        %v3793 = vrot.slane %v3757, 2
        %v3794 = vsel %vm1785, %v3791, %v3793
        %v3795 = vrot.slane %v3758, 2
        %v3796 = vsel %vm1785, %v3792, %v3795
        %v3797 = vrot.slane %v3759, 2
        %v3798 = vrot.slane %v3760, 2
        %v3799 = vrot.slane %v3761, 2
        %v3800 = vsel %vm1785, %v3797, %v3799
        %v3801 = vrot.slane %v3762, 2
        %v3802 = vsel %vm1785, %v3798, %v3801
        %v3819 = vadd.bf16 %v3709, %v3779
        %v3820 = vadd.bf16 %v3710, %v3780
        %v3821 = vadd.bf16 %v3711, %v3782
        %v3822 = vadd.bf16 %v3712, %v3784
        %v3823 = vadd.bf16 %v3713, %v3785
        %v3824 = vadd.bf16 %v3714, %v3786
        %v3825 = vadd.bf16 %v3715, %v3788
        %v3826 = vadd.bf16 %v3716, %v3790
        %v3827 = vadd.bf16 %v3717, %v3791
        %v3828 = vadd.bf16 %v3718, %v3792
        %v3829 = vadd.bf16 %v3719, %v3794
        %v3830 = vadd.bf16 %v3720, %v3796
        %v3831 = vadd.bf16 %v3721, %v3797
        %v3832 = vadd.bf16 %v3722, %v3798
        %v3833 = vadd.bf16 %v3723, %v3800
        %v3834 = vadd.bf16 %v3724, %v3802
        %v3851 = vrot.slane %v3819, 4
        %v3852 = vrot.slane %v3821, 4
        %v3853 = vsel %vm1858, %v3851, %v3852
        %v3854 = vrot.slane %v3820, 4
        %v3855 = vrot.slane %v3822, 4
        %v3856 = vsel %vm1858, %v3854, %v3855
        %v3857 = vrot.slane %v3823, 4
        %v3858 = vrot.slane %v3825, 4
        %v3859 = vsel %vm1858, %v3857, %v3858
        %v3860 = vrot.slane %v3824, 4
        %v3861 = vrot.slane %v3826, 4
        %v3862 = vsel %vm1858, %v3860, %v3861
        %v3863 = vrot.slane %v3827, 4
        %v3864 = vrot.slane %v3829, 4
        %v3865 = vsel %vm1858, %v3863, %v3864
        %v3866 = vrot.slane %v3828, 4
        %v3867 = vrot.slane %v3830, 4
        %v3868 = vsel %vm1858, %v3866, %v3867
        %v3869 = vrot.slane %v3831, 4
        %v3870 = vrot.slane %v3833, 4
        %v3871 = vsel %vm1858, %v3869, %v3870
        %v3872 = vrot.slane %v3832, 4
        %v3873 = vrot.slane %v3834, 4
        %v3874 = vsel %vm1858, %v3872, %v3873
        %v3891 = vunpack.c.l.bf16 %v3853
        %v3892 = vunpack.c.l.bf16 %v3856
        %v3893 = vunpack.c.h.bf16 %v3853
        %v3894 = vunpack.c.h.bf16 %v3856
        %v3895 = vunpack.c.l.bf16 %v3852
        %v3896 = vunpack.c.l.bf16 %v3855
        %v3897 = vunpack.c.l.bf16 %v3859
        %v3898 = vunpack.c.l.bf16 %v3862
        %v3899 = vunpack.c.h.bf16 %v3859
        %v3900 = vunpack.c.h.bf16 %v3862
        %v3901 = vunpack.c.l.bf16 %v3858
        %v3902 = vunpack.c.l.bf16 %v3861
        %v3903 = vunpack.c.l.bf16 %v3865
        %v3904 = vunpack.c.l.bf16 %v3868
        %v3905 = vunpack.c.h.bf16 %v3865
        %v3906 = vunpack.c.h.bf16 %v3868
        %v3907 = vunpack.c.l.bf16 %v3864
        %v3908 = vunpack.c.l.bf16 %v3867
        %v3909 = vunpack.c.l.bf16 %v3871
        %v3910 = vunpack.c.l.bf16 %v3874
        %v3911 = vunpack.c.h.bf16 %v3871
        %v3912 = vunpack.c.h.bf16 %v3874
        %v3913 = vunpack.c.l.bf16 %v3870
        %v3914 = vunpack.c.l.bf16 %v3873
        %v3915 = vadd.f32 %v3245, %v3891
        %v3916 = vadd.f32 %v3246, %v3892
        %v3917 = vadd.f32 %v3247, %v3893
        %v3918 = vadd.f32 %v3248, %v3894
        %v3919 = vadd.f32 %v3249, %v3895
        %v3920 = vadd.f32 %v3250, %v3896
        %v3921 = vadd.f32 %v3251, %v3897
        %v3922 = vadd.f32 %v3252, %v3898
        %v3923 = vadd.f32 %v3253, %v3899
        %v3924 = vadd.f32 %v3254, %v3900
        %v3925 = vadd.f32 %v3255, %v3901
        %v3926 = vadd.f32 %v3256, %v3902
        %v3927 = vadd.f32 %v3257, %v3903
        %v3928 = vadd.f32 %v3258, %v3904
        %v3929 = vadd.f32 %v3259, %v3905
        %v3930 = vadd.f32 %v3260, %v3906
        %v3931 = vadd.f32 %v3261, %v3907
        %v3932 = vadd.f32 %v3262, %v3908
        %v3933 = vadd.f32 %v3263, %v3909
        %v3934 = vadd.f32 %v3264, %v3910
        %v3935 = vadd.f32 %v3265, %v3911
        %v3936 = vadd.f32 %v3266, %v3912
        %v3937 = vadd.f32 %v3267, %v3913
        %v3938 = vadd.f32 %v3268, %v3914
        %s3939 = sadd.s32 %s1267, 4
        %s3940 = smul.u32 %s3939, 6
        %s3941 = smul.addr %s3940, 8
        %s3942 = scalar_lea.vmem [#allocation4], %s3941
        %v3943 = vld [vmem:[%s3942] sm:$0x80]
        %v3944 = vld [vmem:[%s3942 + $0x8] sm:$0x80]
        %v3945 = vld [vmem:[%s3942 + $0x10] sm:$0x7f]
        %v3946 = vld [vmem:[%s3942 + $0x18] sm:$0x7f]
        %v3947 = vld [vmem:[%s3942 + $0x30] sm:$0x80]
        %v3948 = vld [vmem:[%s3942 + $0x38] sm:$0x80]
        %v3949 = vld [vmem:[%s3942 + $0x40] sm:$0x7f]
        %v3950 = vld [vmem:[%s3942 + $0x48] sm:$0x7f]
        %v3951 = vld [vmem:[%s3942 + $0x60] sm:$0x80]
        %v3952 = vld [vmem:[%s3942 + $0x68] sm:$0x80]
        %v3953 = vld [vmem:[%s3942 + $0x70] sm:$0x7f]
        %v3954 = vld [vmem:[%s3942 + $0x78] sm:$0x7f]
        %v3955 = vld [vmem:[%s3942 + $0x90] sm:$0x80]
        %v3956 = vld [vmem:[%s3942 + $0x98] sm:$0x80]
        %v3957 = vld [vmem:[%s3942 + $0xa0] sm:$0x7f]
        %v3958 = vld [vmem:[%s3942 + $0xa8] sm:$0x7f]
        %v3959 = vld [vmem:[%s3 + $0x10] sm:$0x44]
        %v3961 = vunpack.c.l.b16 %v3959
        %v3962 = vunpack.c.h.b16 %v3959
        %v3963 = vpack.c.b16 %v3961, %v3961
        %v3964 = vpack.c.b16 %v3962, %v3962
        %v3966 = vpack.i.b16 %v3963, %v3963
        %v3968 = vlaneseq
        %v3969 = vshrl.u32 %v3968, 7
        %v3970 = vsub.s32 2, %v3969
        %v3971 = vrot.slane %v3966, %v3970
        %v3973 = vpack.i.b16 %v3964, %v3964
        %v3975 = vlaneseq
        %v3976 = vshrl.u32 %v3975, 7
        %v3977 = vsub.s32 2, %v3976
        %v3978 = vrot.slane %v3973, %v3977
        %v3979 = vmul.bf16 %v3943, %v3971
        %v3980 = vmul.bf16 %v3944, %v3978
        %v3981 = vmul.bf16 %v3945, %v3971
        %v3982 = vmul.bf16 %v3946, %v3978
        %v3983 = vmul.bf16 %v3947, %v3971
        %v3984 = vmul.bf16 %v3948, %v3978
        %v3985 = vmul.bf16 %v3949, %v3971
        %v3986 = vmul.bf16 %v3950, %v3978
        %v3987 = vmul.bf16 %v3951, %v3971
        %v3988 = vmul.bf16 %v3952, %v3978
        %v3989 = vmul.bf16 %v3953, %v3971
        %v3990 = vmul.bf16 %v3954, %v3978
        %v3991 = vmul.bf16 %v3955, %v3971
        %v3992 = vmul.bf16 %v3956, %v3978
        %v3993 = vmul.bf16 %v3957, %v3971
        %v3994 = vmul.bf16 %v3958, %v3978
        %v3995 = vld [vmem:[%s3942 + $0x10] sm:$0xff]
        %v3996 = vld [vmem:[%s3942 + $0x18] sm:$0xff]
        %v3997 = vld [vmem:[%s3942 + $0x40] sm:$0xff]
        %v3998 = vld [vmem:[%s3942 + $0x48] sm:$0xff]
        %v3999 = vld [vmem:[%s3942 + $0x70] sm:$0xff]
        %v4000 = vld [vmem:[%s3942 + $0x78] sm:$0xff]
        %v4001 = vld [vmem:[%s3942 + $0xa0] sm:$0xff]
        %v4002 = vld [vmem:[%s3942 + $0xa8] sm:$0xff]
        %v4003 = vshrl.u32 %v3963, 16
        %v4004 = vpack.i.b16 %v4003, %v4003
        %v4006 = vlaneseq
        %v4007 = vshrl.u32 %v4006, 7
        %v4008 = vsub.s32 2, %v4007
        %v4009 = vrot.slane %v4004, %v4008
        %v4010 = vshrl.u32 %v3964, 16
        %v4011 = vpack.i.b16 %v4010, %v4010
        %v4013 = vlaneseq
        %v4014 = vshrl.u32 %v4013, 7
        %v4015 = vsub.s32 2, %v4014
        %v4016 = vrot.slane %v4011, %v4015
        %v4017 = vmul.bf16 %v3943, %v4009
        %v4018 = vmul.bf16 %v3944, %v4016
        %v4019 = vmul.bf16 %v3995, %v4009
        %v4020 = vmul.bf16 %v3996, %v4016
        %v4021 = vmul.bf16 %v3947, %v4009
        %v4022 = vmul.bf16 %v3948, %v4016
        %v4023 = vmul.bf16 %v3997, %v4009
        %v4024 = vmul.bf16 %v3998, %v4016
        %v4025 = vmul.bf16 %v3951, %v4009
        %v4026 = vmul.bf16 %v3952, %v4016
        %v4027 = vmul.bf16 %v3999, %v4009
        %v4028 = vmul.bf16 %v4000, %v4016
        %v4029 = vmul.bf16 %v3955, %v4009
        %v4030 = vmul.bf16 %v3956, %v4016
        %v4031 = vmul.bf16 %v4001, %v4009
        %v4032 = vmul.bf16 %v4002, %v4016
        %v4034 = vshrl.u32 %v4017, 16
        %v4037 = vshll.u32 %v4019, 16
        %v4039 = vrot.slane %v4037, 1
        %v4040 = vsel %vm1361, %v4034, %v4039
        %v4042 = vshrl.u32 %v4018, 16
        %v4045 = vshll.u32 %v4020, 16
        %v4047 = vrot.slane %v4045, 1
        %v4048 = vsel %vm1361, %v4042, %v4047
        %v4049 = vshrl.u32 %v4019, 16
        %v4051 = vor.u32 %v4049, %v4039
        %v4052 = vshrl.u32 %v4020, 16
        %v4054 = vor.u32 %v4052, %v4047
        %v4056 = vshrl.u32 %v4021, 16
        %v4059 = vshll.u32 %v4023, 16
        %v4061 = vrot.slane %v4059, 1
        %v4062 = vsel %vm1361, %v4056, %v4061
        %v4064 = vshrl.u32 %v4022, 16
        %v4067 = vshll.u32 %v4024, 16
        %v4069 = vrot.slane %v4067, 1
        %v4070 = vsel %vm1361, %v4064, %v4069
        %v4071 = vshrl.u32 %v4023, 16
        %v4073 = vor.u32 %v4071, %v4061
        %v4074 = vshrl.u32 %v4024, 16
        %v4076 = vor.u32 %v4074, %v4069
        %v4078 = vshrl.u32 %v4025, 16
        %v4081 = vshll.u32 %v4027, 16
        %v4083 = vrot.slane %v4081, 1
        %v4084 = vsel %vm1361, %v4078, %v4083
        %v4086 = vshrl.u32 %v4026, 16
        %v4089 = vshll.u32 %v4028, 16
        %v4091 = vrot.slane %v4089, 1
        %v4092 = vsel %vm1361, %v4086, %v4091
        %v4093 = vshrl.u32 %v4027, 16
        %v4095 = vor.u32 %v4093, %v4083
        %v4096 = vshrl.u32 %v4028, 16
        %v4098 = vor.u32 %v4096, %v4091
        %v4100 = vshrl.u32 %v4029, 16
        %v4103 = vshll.u32 %v4031, 16
        %v4105 = vrot.slane %v4103, 1
        %v4106 = vsel %vm1361, %v4100, %v4105
        %v4108 = vshrl.u32 %v4030, 16
        %v4111 = vshll.u32 %v4032, 16
        %v4113 = vrot.slane %v4111, 1
        %v4114 = vsel %vm1361, %v4108, %v4113
        %v4115 = vshrl.u32 %v4031, 16
        %v4117 = vor.u32 %v4115, %v4105
        %v4118 = vshrl.u32 %v4032, 16
        %v4120 = vor.u32 %v4118, %v4113
        %v4137 = vadd.bf16 %v3979, %v4040
        %v4138 = vadd.bf16 %v3980, %v4048
        %v4139 = vadd.bf16 %v3981, %v4051
        %v4140 = vadd.bf16 %v3982, %v4054
        %v4141 = vadd.bf16 %v3983, %v4062
        %v4142 = vadd.bf16 %v3984, %v4070
        %v4143 = vadd.bf16 %v3985, %v4073
        %v4144 = vadd.bf16 %v3986, %v4076
        %v4145 = vadd.bf16 %v3987, %v4084
        %v4146 = vadd.bf16 %v3988, %v4092
        %v4147 = vadd.bf16 %v3989, %v4095
        %v4148 = vadd.bf16 %v3990, %v4098
        %v4149 = vadd.bf16 %v3991, %v4106
        %v4150 = vadd.bf16 %v3992, %v4114
        %v4151 = vadd.bf16 %v3993, %v4117
        %v4152 = vadd.bf16 %v3994, %v4120
        %v4153 = vld [vmem:[%s3 + $0x10] sm:$0x88]
        %v4155 = vunpack.c.l.b16 %v4153
        %v4156 = vunpack.c.h.b16 %v4153
        %v4157 = vpack.c.b16 %v4155, %v4155
        %v4158 = vpack.c.b16 %v4156, %v4156
        %v4160 = vpack.i.b16 %v4157, %v4157
        %v4162 = vlaneseq
        %v4163 = vshrl.u32 %v4162, 7
        %v4164 = vsub.s32 3, %v4163
        %v4165 = vrot.slane %v4160, %v4164
        %v4167 = vpack.i.b16 %v4158, %v4158
        %v4169 = vlaneseq
        %v4170 = vshrl.u32 %v4169, 7
        %v4171 = vsub.s32 3, %v4170
        %v4172 = vrot.slane %v4167, %v4171
        %v4173 = vmul.bf16 %v3995, %v4165
        %v4174 = vmul.bf16 %v3996, %v4172
        %v4175 = vmul.bf16 %v3997, %v4165
        %v4176 = vmul.bf16 %v3998, %v4172
        %v4177 = vmul.bf16 %v3999, %v4165
        %v4178 = vmul.bf16 %v4000, %v4172
        %v4179 = vmul.bf16 %v4001, %v4165
        %v4180 = vmul.bf16 %v4002, %v4172
        %v4189 = vrot.slane %v4173, 1
        %v4190 = vrot.slane %v4174, 1
        %v4191 = vrot.slane %v4175, 1
        %v4192 = vrot.slane %v4176, 1
        %v4193 = vrot.slane %v4177, 1
        %v4194 = vrot.slane %v4178, 1
        %v4195 = vrot.slane %v4179, 1
        %v4196 = vrot.slane %v4180, 1
        %v4205 = vadd.bf16 %v4137, %v4189
        %v4206 = vadd.bf16 %v4138, %v4190
        %v4207 = vadd.bf16 %v4139, %v4189
        %v4208 = vadd.bf16 %v4140, %v4190
        %v4209 = vadd.bf16 %v4141, %v4191
        %v4210 = vadd.bf16 %v4142, %v4192
        %v4211 = vadd.bf16 %v4143, %v4191
        %v4212 = vadd.bf16 %v4144, %v4192
        %v4213 = vadd.bf16 %v4145, %v4193
        %v4214 = vadd.bf16 %v4146, %v4194
        %v4215 = vadd.bf16 %v4147, %v4193
        %v4216 = vadd.bf16 %v4148, %v4194
        %v4217 = vadd.bf16 %v4149, %v4195
        %v4218 = vadd.bf16 %v4150, %v4196
        %v4219 = vadd.bf16 %v4151, %v4195
        %v4220 = vadd.bf16 %v4152, %v4196
        %v4221 = vld [vmem:[%s3942 + $0x20] sm:$0x1]
        %v4222 = vld [vmem:[%s3942 + $0x28] sm:$0x1]
        %v4223 = vld [vmem:[%s3942 + $0x50] sm:$0x1]
        %v4224 = vld [vmem:[%s3942 + $0x58] sm:$0x1]
        %v4225 = vld [vmem:[%s3942 + $0x80] sm:$0x1]
        %v4226 = vld [vmem:[%s3942 + $0x88] sm:$0x1]
        %v4227 = vld [vmem:[%s3942 + $0xb0] sm:$0x1]
        %v4228 = vld [vmem:[%s3942 + $0xb8] sm:$0x1]
        %v4229 = vshrl.u32 %v4157, 16
        %v4230 = vpack.i.b16 %v4229, %v4229
        %v4232 = vlaneseq
        %v4233 = vshrl.u32 %v4232, 7
        %v4234 = vsub.s32 3, %v4233
        %v4235 = vrot.slane %v4230, %v4234
        %v4236 = vshrl.u32 %v4158, 16
        %v4237 = vpack.i.b16 %v4236, %v4236
        %v4239 = vlaneseq
        %v4240 = vshrl.u32 %v4239, 7
        %v4241 = vsub.s32 3, %v4240
        %v4242 = vrot.slane %v4237, %v4241
        %v4243 = vmul.bf16 %v3995, %v4235
        %v4244 = vmul.bf16 %v3996, %v4242
        %v4245 = vmul.bf16 %v4221, %v4235
        %v4246 = vmul.bf16 %v4222, %v4242
        %v4247 = vmul.bf16 %v3997, %v4235
        %v4248 = vmul.bf16 %v3998, %v4242
        %v4249 = vmul.bf16 %v4223, %v4235
        %v4250 = vmul.bf16 %v4224, %v4242
        %v4251 = vmul.bf16 %v3999, %v4235
        %v4252 = vmul.bf16 %v4000, %v4242
        %v4253 = vmul.bf16 %v4225, %v4235
        %v4254 = vmul.bf16 %v4226, %v4242
        %v4255 = vmul.bf16 %v4001, %v4235
        %v4256 = vmul.bf16 %v4002, %v4242
        %v4257 = vmul.bf16 %v4227, %v4235
        %v4258 = vmul.bf16 %v4228, %v4242
        %v4260 = vshrl.u32 %v4243, 16
        %v4262 = vrot.slane %v4260, 1
        %v4263 = vshll.u32 %v4243, 16
        %v4265 = vrot.slane %v4263, 2
        %v4266 = vor.u32 %v4262, %v4265
        %v4268 = vshrl.u32 %v4244, 16
        %v4270 = vrot.slane %v4268, 1
        %v4271 = vshll.u32 %v4244, 16
        %v4273 = vrot.slane %v4271, 2
        %v4274 = vor.u32 %v4270, %v4273
        %v4276 = vshll.u32 %v4245, 16
        %v4278 = vrot.slane %v4276, 2
        %v4279 = vsel %vm1588, %v4266, %v4278
        %v4281 = vshll.u32 %v4246, 16
        %v4283 = vrot.slane %v4281, 2
        %v4284 = vsel %vm1588, %v4274, %v4283
        %v4286 = vshrl.u32 %v4247, 16
        %v4288 = vrot.slane %v4286, 1
        %v4289 = vshll.u32 %v4247, 16
        %v4291 = vrot.slane %v4289, 2
        %v4292 = vor.u32 %v4288, %v4291
        %v4294 = vshrl.u32 %v4248, 16
        %v4296 = vrot.slane %v4294, 1
        %v4297 = vshll.u32 %v4248, 16
        %v4299 = vrot.slane %v4297, 2
        %v4300 = vor.u32 %v4296, %v4299
        %v4302 = vshll.u32 %v4249, 16
        %v4304 = vrot.slane %v4302, 2
        %v4305 = vsel %vm1588, %v4292, %v4304
        %v4307 = vshll.u32 %v4250, 16
        %v4309 = vrot.slane %v4307, 2
        %v4310 = vsel %vm1588, %v4300, %v4309
        %v4312 = vshrl.u32 %v4251, 16
        %v4314 = vrot.slane %v4312, 1
        %v4315 = vshll.u32 %v4251, 16
        %v4317 = vrot.slane %v4315, 2
        %v4318 = vor.u32 %v4314, %v4317
        %v4320 = vshrl.u32 %v4252, 16
        %v4322 = vrot.slane %v4320, 1
        %v4323 = vshll.u32 %v4252, 16
        %v4325 = vrot.slane %v4323, 2
        %v4326 = vor.u32 %v4322, %v4325
        %v4328 = vshll.u32 %v4253, 16
        %v4330 = vrot.slane %v4328, 2
        %v4331 = vsel %vm1588, %v4318, %v4330
        %v4333 = vshll.u32 %v4254, 16
        %v4335 = vrot.slane %v4333, 2
        %v4336 = vsel %vm1588, %v4326, %v4335
        %v4338 = vshrl.u32 %v4255, 16
        %v4340 = vrot.slane %v4338, 1
        %v4341 = vshll.u32 %v4255, 16
        %v4343 = vrot.slane %v4341, 2
        %v4344 = vor.u32 %v4340, %v4343
        %v4346 = vshrl.u32 %v4256, 16
        %v4348 = vrot.slane %v4346, 1
        %v4349 = vshll.u32 %v4256, 16
        %v4351 = vrot.slane %v4349, 2
        %v4352 = vor.u32 %v4348, %v4351
        %v4354 = vshll.u32 %v4257, 16
        %v4356 = vrot.slane %v4354, 2
        %v4357 = vsel %vm1588, %v4344, %v4356
        %v4359 = vshll.u32 %v4258, 16
        %v4361 = vrot.slane %v4359, 2
        %v4362 = vsel %vm1588, %v4352, %v4361
        %v4379 = vadd.bf16 %v4205, %v4266
        %v4380 = vadd.bf16 %v4206, %v4274
        %v4381 = vadd.bf16 %v4207, %v4279
        %v4382 = vadd.bf16 %v4208, %v4284
        %v4383 = vadd.bf16 %v4209, %v4292
        %v4384 = vadd.bf16 %v4210, %v4300
        %v4385 = vadd.bf16 %v4211, %v4305
        %v4386 = vadd.bf16 %v4212, %v4310
        %v4387 = vadd.bf16 %v4213, %v4318
        %v4388 = vadd.bf16 %v4214, %v4326
        %v4389 = vadd.bf16 %v4215, %v4331
        %v4390 = vadd.bf16 %v4216, %v4336
        %v4391 = vadd.bf16 %v4217, %v4344
        %v4392 = vadd.bf16 %v4218, %v4352
        %v4393 = vadd.bf16 %v4219, %v4357
        %v4394 = vadd.bf16 %v4220, %v4362
        %v4395 = vld [vmem:[%s3942 + $0x10] sm:$0xfe]
        %v4396 = vld [vmem:[%s3942 + $0x18] sm:$0xfe]
        %v4397 = vld [vmem:[%s3942 + $0x40] sm:$0xfe]
        %v4398 = vld [vmem:[%s3942 + $0x48] sm:$0xfe]
        %v4399 = vld [vmem:[%s3942 + $0x70] sm:$0xfe]
        %v4400 = vld [vmem:[%s3942 + $0x78] sm:$0xfe]
        %v4401 = vld [vmem:[%s3942 + $0xa0] sm:$0xfe]
        %v4402 = vld [vmem:[%s3942 + $0xa8] sm:$0xfe]
        %v4403 = vld [vmem:[%s3 + $0x18] sm:$0x11]
        %v4405 = vunpack.c.l.b16 %v4403
        %v4406 = vunpack.c.h.b16 %v4403
        %v4407 = vpack.c.b16 %v4405, %v4405
        %v4408 = vpack.c.b16 %v4406, %v4406
        %v4410 = vpack.i.b16 %v4407, %v4407
        %v4412 = vlaneseq
        %v4413 = vshrl.u32 %v4412, 7
        %v4414 = vsub.s32 0, %v4413
        %v4415 = vrot.slane %v4410, %v4414
        %v4417 = vpack.i.b16 %v4408, %v4408
        %v4419 = vlaneseq
        %v4420 = vshrl.u32 %v4419, 7
        %v4421 = vsub.s32 0, %v4420
        %v4422 = vrot.slane %v4417, %v4421
        %v4423 = vmul.bf16 %v4395, %v4415
        %v4424 = vmul.bf16 %v4396, %v4422
        %v4425 = vmul.bf16 %v4221, %v4415
        %v4426 = vmul.bf16 %v4222, %v4422
        %v4427 = vmul.bf16 %v4397, %v4415
        %v4428 = vmul.bf16 %v4398, %v4422
        %v4429 = vmul.bf16 %v4223, %v4415
        %v4430 = vmul.bf16 %v4224, %v4422
        %v4431 = vmul.bf16 %v4399, %v4415
        %v4432 = vmul.bf16 %v4400, %v4422
        %v4433 = vmul.bf16 %v4225, %v4415
        %v4434 = vmul.bf16 %v4226, %v4422
        %v4435 = vmul.bf16 %v4401, %v4415
        %v4436 = vmul.bf16 %v4402, %v4422
        %v4437 = vmul.bf16 %v4227, %v4415
        %v4438 = vmul.bf16 %v4228, %v4422
        %v4455 = vrot.slane %v4423, 2
        %v4456 = vrot.slane %v4424, 2
        %v4457 = vrot.slane %v4425, 2
        %v4458 = vsel %vm1785, %v4455, %v4457
        %v4459 = vrot.slane %v4426, 2
        %v4460 = vsel %vm1785, %v4456, %v4459
        %v4461 = vrot.slane %v4427, 2
        %v4462 = vrot.slane %v4428, 2
        %v4463 = vrot.slane %v4429, 2
        %v4464 = vsel %vm1785, %v4461, %v4463
        %v4465 = vrot.slane %v4430, 2
        %v4466 = vsel %vm1785, %v4462, %v4465
        %v4467 = vrot.slane %v4431, 2
        %v4468 = vrot.slane %v4432, 2
        %v4469 = vrot.slane %v4433, 2
        %v4470 = vsel %vm1785, %v4467, %v4469
        %v4471 = vrot.slane %v4434, 2
        %v4472 = vsel %vm1785, %v4468, %v4471
        %v4473 = vrot.slane %v4435, 2
        %v4474 = vrot.slane %v4436, 2
        %v4475 = vrot.slane %v4437, 2
        %v4476 = vsel %vm1785, %v4473, %v4475
        %v4477 = vrot.slane %v4438, 2
        %v4478 = vsel %vm1785, %v4474, %v4477
        %v4495 = vadd.bf16 %v4379, %v4455
        %v4496 = vadd.bf16 %v4380, %v4456
        %v4497 = vadd.bf16 %v4381, %v4458
        %v4498 = vadd.bf16 %v4382, %v4460
        %v4499 = vadd.bf16 %v4383, %v4461
        %v4500 = vadd.bf16 %v4384, %v4462
        %v4501 = vadd.bf16 %v4385, %v4464
        %v4502 = vadd.bf16 %v4386, %v4466
        %v4503 = vadd.bf16 %v4387, %v4467
        %v4504 = vadd.bf16 %v4388, %v4468
        %v4505 = vadd.bf16 %v4389, %v4470
        %v4506 = vadd.bf16 %v4390, %v4472
        %v4507 = vadd.bf16 %v4391, %v4473
        %v4508 = vadd.bf16 %v4392, %v4474
        %v4509 = vadd.bf16 %v4393, %v4476
        %v4510 = vadd.bf16 %v4394, %v4478
        %v4527 = vrot.slane %v4495, 4
        %v4528 = vrot.slane %v4497, 4
        %v4529 = vsel %vm1858, %v4527, %v4528
        %v4530 = vrot.slane %v4496, 4
        %v4531 = vrot.slane %v4498, 4
        %v4532 = vsel %vm1858, %v4530, %v4531
        %v4533 = vrot.slane %v4499, 4
        %v4534 = vrot.slane %v4501, 4
        %v4535 = vsel %vm1858, %v4533, %v4534
        %v4536 = vrot.slane %v4500, 4
        %v4537 = vrot.slane %v4502, 4
        %v4538 = vsel %vm1858, %v4536, %v4537
        %v4539 = vrot.slane %v4503, 4
        %v4540 = vrot.slane %v4505, 4
        %v4541 = vsel %vm1858, %v4539, %v4540
        %v4542 = vrot.slane %v4504, 4
        %v4543 = vrot.slane %v4506, 4
        %v4544 = vsel %vm1858, %v4542, %v4543
        %v4545 = vrot.slane %v4507, 4
        %v4546 = vrot.slane %v4509, 4
        %v4547 = vsel %vm1858, %v4545, %v4546
        %v4548 = vrot.slane %v4508, 4
        %v4549 = vrot.slane %v4510, 4
        %v4550 = vsel %vm1858, %v4548, %v4549
        %v4567 = vunpack.c.l.bf16 %v4529
        %v4568 = vunpack.c.l.bf16 %v4532
        %v4569 = vunpack.c.h.bf16 %v4529
        %v4570 = vunpack.c.h.bf16 %v4532
        %v4571 = vunpack.c.l.bf16 %v4528
        %v4572 = vunpack.c.l.bf16 %v4531
        %v4573 = vunpack.c.l.bf16 %v4535
        %v4574 = vunpack.c.l.bf16 %v4538
        %v4575 = vunpack.c.h.bf16 %v4535
        %v4576 = vunpack.c.h.bf16 %v4538
        %v4577 = vunpack.c.l.bf16 %v4534
        %v4578 = vunpack.c.l.bf16 %v4537
        %v4579 = vunpack.c.l.bf16 %v4541
        %v4580 = vunpack.c.l.bf16 %v4544
        %v4581 = vunpack.c.h.bf16 %v4541
        %v4582 = vunpack.c.h.bf16 %v4544
        %v4583 = vunpack.c.l.bf16 %v4540
        %v4584 = vunpack.c.l.bf16 %v4543
        %v4585 = vunpack.c.l.bf16 %v4547
        %v4586 = vunpack.c.l.bf16 %v4550
        %v4587 = vunpack.c.h.bf16 %v4547
        %v4588 = vunpack.c.h.bf16 %v4550
        %v4589 = vunpack.c.l.bf16 %v4546
        %v4590 = vunpack.c.l.bf16 %v4549
        %v4591 = vadd.f32 %v3915, %v4567
        %v4592 = vadd.f32 %v3916, %v4568
        %v4593 = vadd.f32 %v3917, %v4569
        %v4594 = vadd.f32 %v3918, %v4570
        %v4595 = vadd.f32 %v3919, %v4571
        %v4596 = vadd.f32 %v3920, %v4572
        %v4597 = vadd.f32 %v3921, %v4573
        %v4598 = vadd.f32 %v3922, %v4574
        %v4599 = vadd.f32 %v3923, %v4575
        %v4600 = vadd.f32 %v3924, %v4576
        %v4601 = vadd.f32 %v3925, %v4577
        %v4602 = vadd.f32 %v3926, %v4578
        %v4603 = vadd.f32 %v3927, %v4579
        %v4604 = vadd.f32 %v3928, %v4580
        %v4605 = vadd.f32 %v3929, %v4581
        %v4606 = vadd.f32 %v3930, %v4582
        %v4607 = vadd.f32 %v3931, %v4583
        %v4608 = vadd.f32 %v3932, %v4584
        %v4609 = vadd.f32 %v3933, %v4585
        %v4610 = vadd.f32 %v3934, %v4586
        %v4611 = vadd.f32 %v3935, %v4587
        %v4612 = vadd.f32 %v3936, %v4588
        %v4613 = vadd.f32 %v3937, %v4589
        %v4614 = vadd.f32 %v3938, %v4590
        %vm4639 = vcmask 1041408
        %v4640 = vrot.slane %v4591, 6
        %v4641 = vrot.slane %v4593, 6
        %v4642 = vsel %vm4639, %v4640, %v4641
        %v4643 = vrot.slane %v4592, 6
        %v4644 = vrot.slane %v4594, 6
        %v4645 = vsel %vm4639, %v4643, %v4644
        %v4646 = vrot.slane %v4595, 6
        %v4647 = vsel %vm4639, %v4641, %v4646
        %v4648 = vrot.slane %v4596, 6
        %v4649 = vsel %vm4639, %v4644, %v4648
        %v4650 = vrot.slane %v4597, 6
        %v4651 = vrot.slane %v4599, 6
        %v4652 = vsel %vm4639, %v4650, %v4651
        %v4653 = vrot.slane %v4598, 6
        %v4654 = vrot.slane %v4600, 6
        %v4655 = vsel %vm4639, %v4653, %v4654
        %v4656 = vrot.slane %v4601, 6
        %v4657 = vsel %vm4639, %v4651, %v4656
        %v4658 = vrot.slane %v4602, 6
        %v4659 = vsel %vm4639, %v4654, %v4658
        %v4660 = vrot.slane %v4603, 6
        %v4661 = vrot.slane %v4605, 6
        %v4662 = vsel %vm4639, %v4660, %v4661
        %v4663 = vrot.slane %v4604, 6
        %v4664 = vrot.slane %v4606, 6
        %v4665 = vsel %vm4639, %v4663, %v4664
        %v4666 = vrot.slane %v4607, 6
        %v4667 = vsel %vm4639, %v4661, %v4666
        %v4668 = vrot.slane %v4608, 6
        %v4669 = vsel %vm4639, %v4664, %v4668
        %v4670 = vrot.slane %v4609, 6
        %v4671 = vrot.slane %v4611, 6
        %v4672 = vsel %vm4639, %v4670, %v4671
        %v4673 = vrot.slane %v4610, 6
        %v4674 = vrot.slane %v4612, 6
        %v4675 = vsel %vm4639, %v4673, %v4674
        %v4676 = vrot.slane %v4613, 6
        %v4677 = vsel %vm4639, %v4671, %v4676
        %v4678 = vrot.slane %v4614, 6
        %v4679 = vsel %vm4639, %v4674, %v4678
        %v4697 = vlaneseq
        %v4698 = vshrl.u32 %v4697, 7
        %v4699 = vsub.s32 0, %v4698
        %v4700 = vrot.slane %v1258, %v4699
        %v4701 = vlaneseq
        %v4702 = vshrl.u32 %v4701, 7
        %v4703 = vsub.s32 1, %v4702
        %v4704 = vrot.slane %v1258, %v4703
        %v4707 = vadd.f32 %v4642, %v4700
        %v4708 = vadd.f32 %v4645, %v4704
        %v4709 = vadd.f32 %v4647, %v4700
        %v4710 = vadd.f32 %v4649, %v4704
        %v4711 = vadd.f32 %v4652, %v4700
        %v4712 = vadd.f32 %v4655, %v4704
        %v4713 = vadd.f32 %v4657, %v4700
        %v4714 = vadd.f32 %v4659, %v4704
        %v4715 = vadd.f32 %v4662, %v4700
        %v4716 = vadd.f32 %v4665, %v4704
        %v4717 = vadd.f32 %v4667, %v4700
        %v4718 = vadd.f32 %v4669, %v4704
        %v4719 = vadd.f32 %v4672, %v4700
        %v4720 = vadd.f32 %v4675, %v4704
        %v4721 = vadd.f32 %v4677, %v4700
        %v4722 = vadd.f32 %v4679, %v4704
        %v4723 = vxor.u32 %v4707, 2147483648
        %v4724 = vxor.u32 %v4708, 2147483648
        %v4725 = vxor.u32 %v4709, 2147483648
        %v4726 = vxor.u32 %v4710, 2147483648
        %v4727 = vxor.u32 %v4711, 2147483648
        %v4728 = vxor.u32 %v4712, 2147483648
        %v4729 = vxor.u32 %v4713, 2147483648
        %v4730 = vxor.u32 %v4714, 2147483648
        %v4731 = vxor.u32 %v4715, 2147483648
        %v4732 = vxor.u32 %v4716, 2147483648
        %v4733 = vxor.u32 %v4717, 2147483648
        %v4734 = vxor.u32 %v4718, 2147483648
        %v4735 = vxor.u32 %v4719, 2147483648
        %v4736 = vxor.u32 %v4720, 2147483648
        %v4737 = vxor.u32 %v4721, 2147483648
        %v4738 = vxor.u32 %v4722, 2147483648
        %v4739 = vmul.f32 %v4723, 1.442695
        %v4740 = vpow.pop %v4739
        %v4741 = vmul.f32 %v4724, 1.442695
        %v4742 = vpow.pop %v4741
        %v4743 = vmul.f32 %v4725, 1.442695
        %v4744 = vpow.pop %v4743
        %v4745 = vmul.f32 %v4726, 1.442695
        %v4746 = vpow.pop %v4745
        %v4747 = vmul.f32 %v4727, 1.442695
        %v4748 = vpow.pop %v4747
        %v4749 = vmul.f32 %v4728, 1.442695
        %v4750 = vpow.pop %v4749
        %v4751 = vmul.f32 %v4729, 1.442695
        %v4752 = vpow.pop %v4751
        %v4753 = vmul.f32 %v4730, 1.442695
        %v4754 = vpow.pop %v4753
        %v4755 = vmul.f32 %v4731, 1.442695
        %v4756 = vpow.pop %v4755
        %v4757 = vmul.f32 %v4732, 1.442695
        %v4758 = vpow.pop %v4757
        %v4759 = vmul.f32 %v4733, 1.442695
        %v4760 = vpow.pop %v4759
        %v4761 = vmul.f32 %v4734, 1.442695
        %v4762 = vpow.pop %v4761
        %v4763 = vmul.f32 %v4735, 1.442695
        %v4764 = vpow.pop %v4763
        %v4765 = vmul.f32 %v4736, 1.442695
        %v4766 = vpow.pop %v4765
        %v4767 = vmul.f32 %v4737, 1.442695
        %v4768 = vpow.pop %v4767
        %v4769 = vmul.f32 %v4738, 1.442695
        %v4770 = vpow.pop %v4769
        %v4771 = vadd.f32 %v4740, 1.0
        %v4772 = vadd.f32 %v4742, 1.0
        %v4773 = vadd.f32 %v4744, 1.0
        %v4774 = vadd.f32 %v4746, 1.0
        %v4775 = vadd.f32 %v4748, 1.0
        %v4776 = vadd.f32 %v4750, 1.0
        %v4777 = vadd.f32 %v4752, 1.0
        %v4778 = vadd.f32 %v4754, 1.0
        %v4779 = vadd.f32 %v4756, 1.0
        %v4780 = vadd.f32 %v4758, 1.0
        %v4781 = vadd.f32 %v4760, 1.0
        %v4782 = vadd.f32 %v4762, 1.0
        %v4783 = vadd.f32 %v4764, 1.0
        %v4784 = vadd.f32 %v4766, 1.0
        %v4785 = vadd.f32 %v4768, 1.0
        %v4786 = vadd.f32 %v4770, 1.0
        %v4787 = vrcp.pop %v4771
        %v4788 = vmul.f32 1.0, %v4787
        %v4789 = vrcp.pop %v4772
        %v4790 = vmul.f32 1.0, %v4789
        %v4791 = vrcp.pop %v4773
        %v4792 = vmul.f32 1.0, %v4791
        %v4793 = vrcp.pop %v4774
        %v4794 = vmul.f32 1.0, %v4793
        %v4795 = vrcp.pop %v4775
        %v4796 = vmul.f32 1.0, %v4795
        %v4797 = vrcp.pop %v4776
        %v4798 = vmul.f32 1.0, %v4797
        %v4799 = vrcp.pop %v4777
        %v4800 = vmul.f32 1.0, %v4799
        %v4801 = vrcp.pop %v4778
        %v4802 = vmul.f32 1.0, %v4801
        %v4803 = vrcp.pop %v4779
        %v4804 = vmul.f32 1.0, %v4803
        %v4805 = vrcp.pop %v4780
        %v4806 = vmul.f32 1.0, %v4805
        %v4807 = vrcp.pop %v4781
        %v4808 = vmul.f32 1.0, %v4807
        %v4809 = vrcp.pop %v4782
        %v4810 = vmul.f32 1.0, %v4809
        %v4811 = vrcp.pop %v4783
        %v4812 = vmul.f32 1.0, %v4811
        %v4813 = vrcp.pop %v4784
        %v4814 = vmul.f32 1.0, %v4813
        %v4815 = vrcp.pop %v4785
        %v4816 = vmul.f32 1.0, %v4815
        %v4817 = vrcp.pop %v4786
        %v4818 = vmul.f32 1.0, %v4817
        %v4819 = vmul.f32 %v4707, %v4788
        %v4820 = vmul.f32 %v4708, %v4790
        %v4821 = vmul.f32 %v4709, %v4792
        %v4822 = vmul.f32 %v4710, %v4794
        %v4823 = vmul.f32 %v4711, %v4796
        %v4824 = vmul.f32 %v4712, %v4798
        %v4825 = vmul.f32 %v4713, %v4800
        %v4826 = vmul.f32 %v4714, %v4802
        %v4827 = vmul.f32 %v4715, %v4804
        %v4828 = vmul.f32 %v4716, %v4806
        %v4829 = vmul.f32 %v4717, %v4808
        %v4830 = vmul.f32 %v4718, %v4810
        %v4831 = vmul.f32 %v4719, %v4812
        %v4832 = vmul.f32 %v4720, %v4814
        %v4833 = vmul.f32 %v4721, %v4816
        %v4834 = vmul.f32 %v4722, %v4818
        %s4835 = smul.u32 %s1260, 64
        %v4836 = vpack.c.bf16 %v4821, %v4819
        %v4837 = vpack.c.bf16 %v4822, %v4820
        %v4838 = vpack.c.bf16 %v4825, %v4823
        %v4839 = vpack.c.bf16 %v4826, %v4824
        %v4840 = vpack.c.bf16 %v4829, %v4827
        %v4841 = vpack.c.bf16 %v4830, %v4828
        %v4842 = vpack.c.bf16 %v4833, %v4831
        %v4843 = vpack.c.bf16 %v4834, %v4832
        %s4844 = sshra.s32 %s4835, 4
        %s4845 = sand.u32 %s4835, 15
        %s4846 = smul.u32 %s4844, 2
        %s4847 = smul.addr %s4846, 8
        %s4848 = scalar_lea.vmem [#allocation3], %s4847
        %4849 = vst [vmem:[%s4848] sm:$0xff] %v4836
        %4850 = vst.msk [vmem:[%s4848 + $0x8] sm:$0xff] %vm686, %v4837
        %4851 = vst [vmem:[%s4848 + $0x10] sm:$0xff] %v4838
        %4852 = vst.msk [vmem:[%s4848 + $0x18] sm:$0xff] %vm686, %v4839
        %4853 = vst [vmem:[%s4848 + $0x20] sm:$0xff] %v4840
        %4854 = vst.msk [vmem:[%s4848 + $0x28] sm:$0xff] %vm686, %v4841
        %4855 = vst [vmem:[%s4848 + $0x30] sm:$0xff] %v4842
        %4856 = vst.msk [vmem:[%s4848 + $0x38] sm:$0xff] %vm686, %v4843
        %v4857 = vadd.f32 %v4819, %v4821
        %v4858 = vadd.f32 %v4857, %v4823
        %v4859 = vadd.f32 %v4858, %v4825
        %v4860 = vadd.f32 %v4859, %v4827
        %v4861 = vadd.f32 %v4860, %v4829
        %v4862 = vadd.f32 %v4861, %v4831
        %v4863 = vadd.f32 %v4862, %v4833
        %v4864 = vrot.slane %v4863, 4
        %v4865 = vadd.f32 %v4863, %v4864
        %v4866 = vrot.slane %v4865, 2
        %v4867 = vadd.f32 %v4865, %v4866
        %v4868 = vrot.slane %v4867, 1
        %v4869 = vadd.f32 %v4867, %v4868
        %v4870 = vsel %vm686, %v4820, 0.0
        %v4871 = vsel %vm686, %v4822, 0.0
        %v4872 = vadd.f32 %v4870, %v4871
        %v4873 = vsel %vm686, %v4824, 0.0
        %v4874 = vadd.f32 %v4872, %v4873
        %v4875 = vsel %vm686, %v4826, 0.0
        %v4876 = vadd.f32 %v4874, %v4875
        %v4877 = vsel %vm686, %v4828, 0.0
        %v4878 = vadd.f32 %v4876, %v4877
        %v4879 = vsel %vm686, %v4830, 0.0
        %v4880 = vadd.f32 %v4878, %v4879
        %v4881 = vsel %vm686, %v4832, 0.0
        %v4882 = vadd.f32 %v4880, %v4881
        %v4883 = vsel %vm686, %v4834, 0.0
        %v4884 = vadd.f32 %v4882, %v4883
        %v4885 = vrot.slane %v4884, 4
        %v4886 = vadd.f32 %v4884, %v4885
        %v4887 = vrot.slane %v4886, 2
        %v4888 = vadd.f32 %v4886, %v4887
        %v4889 = vrot.slane %v4888, 1
        %v4890 = vadd.f32 %v4888, %v4889
        %v4891 = vadd.f32 %v1265, %v4869
        %v4892 = vadd.f32 %v1266, %v4890
      $region120: #{tpu_custom_call.1} parent=107 // loop_footer
        %s1264 = sadd.s32 1, %s1260
      $region121: #{tpu_custom_call.1} parent=107 // loop_footer_branch
        %1259 = sbr.rel target = $region117
      $region122: #{tpu_custom_call.1} parent=107 // loop_exit
        _
      %v4893 = vld [vmem:[%s5] sm:$0xf]
      %v4894 = vld [vmem:[%s5 + $0x4] sm:$0xf]
      %v4895 = vld [vmem:[%s5 + $0x8] sm:$0xf]
      %v4896 = vld [vmem:[%s5 + $0xc] sm:$0xf]
      %v4897 = vld [vmem:[%s5 + $0x10] sm:$0xf]
      %v4898 = vld [vmem:[%s5 + $0x14] sm:$0xf]
      %v4899 = vld [vmem:[%s5 + $0x18] sm:$0xf]
      %v4900 = vld [vmem:[%s5 + $0x1c] sm:$0xf]
      %v4901 = vld [vmem:[%s5 + $0x20] sm:$0xf]
      %v4902 = vld [vmem:[%s5 + $0x24] sm:$0xf]
      %v4903 = vld [vmem:[%s5 + $0x28] sm:$0xf]
      %v4904 = vld [vmem:[%s5 + $0x2c] sm:$0xf]
      %v4905 = vld [vmem:[%s5 + $0x30] sm:$0xf]
      %v4906 = vld [vmem:[%s5 + $0x34] sm:$0xf]
      %v4907 = vld [vmem:[%s5 + $0x38] sm:$0xf]
      %v4908 = vld [vmem:[%s5 + $0x3c] sm:$0xf]
      %v4909 = vld [vmem:[%s5 + $0x40] sm:$0xf]
      %v4910 = vld [vmem:[%s5 + $0x44] sm:$0xf]
      %v4911 = vld [vmem:[%s5 + $0x48] sm:$0xf]
      %v4912 = vld [vmem:[%s5 + $0x4c] sm:$0xf]
      %v4913 = vld [vmem:[%s5 + $0x50] sm:$0xf]
      %v4914 = vld [vmem:[%s5 + $0x54] sm:$0xf]
      %v4915 = vld [vmem:[%s5 + $0x58] sm:$0xf]
      %v4916 = vld [vmem:[%s5 + $0x5c] sm:$0xf]
      %v4917 = vld [vmem:[%s6] sm:$0x1]
      %v4918 = vmul.f32 %v1265, 0.00390625
      %v4919 = vmul.f32 %v1266, 0.00390625
      %v4920 = vpack.c.bf16 %v4918, %v4918
      %v4921 = vpack.c.bf16 %v4919, %v4919
      %v4946 = vunpack.c.l.b16 %v4893
      %v4947 = vunpack.c.l.b16 %v4894
      %v4948 = vunpack.c.l.b16 %v4895
      %v4949 = vunpack.c.l.b16 %v4896
      %v4950 = vunpack.c.l.b16 %v4897
      %v4951 = vunpack.c.l.b16 %v4898
      %v4952 = vunpack.c.l.b16 %v4899
      %v4953 = vunpack.c.l.b16 %v4900
      %v4954 = vunpack.c.l.b16 %v4901
      %v4955 = vunpack.c.l.b16 %v4902
      %v4956 = vunpack.c.l.b16 %v4903
      %v4957 = vunpack.c.l.b16 %v4904
      %v4958 = vunpack.c.l.b16 %v4905
      %v4959 = vunpack.c.l.b16 %v4906
      %v4960 = vunpack.c.l.b16 %v4907
      %v4961 = vunpack.c.l.b16 %v4908
      %v4962 = vunpack.c.l.b16 %v4909
      %v4963 = vunpack.c.l.b16 %v4910
      %v4964 = vunpack.c.l.b16 %v4911
      %v4965 = vunpack.c.l.b16 %v4912
      %v4966 = vunpack.c.l.b16 %v4913
      %v4967 = vunpack.c.l.b16 %v4914
      %v4968 = vunpack.c.l.b16 %v4915
      %v4969 = vunpack.c.l.b16 %v4916
      %v4970 = vpack.c.b16 %v4947, %v4946
      %v4971 = vpack.c.b16 %v4949, %v4948
      %v4972 = vpack.c.b16 %v4951, %v4950
      %v4973 = vpack.c.b16 %v4953, %v4952
      %v4974 = vpack.c.b16 %v4955, %v4954
      %v4975 = vpack.c.b16 %v4957, %v4956
      %v4976 = vpack.c.b16 %v4959, %v4958
      %v4977 = vpack.c.b16 %v4961, %v4960
      %v4978 = vpack.c.b16 %v4963, %v4962
      %v4979 = vpack.c.b16 %v4965, %v4964
      %v4980 = vpack.c.b16 %v4967, %v4966
      %v4981 = vpack.c.b16 %v4969, %v4968
      %v4995 = vsel %vm686, %v4921, 0
      %4997 = vmatprep.subr.bf16.mxu0 0
      %4998 = vmatpush1.bf16.msra.mxu0 %v4970
      %4999 = vmatprep.subr.bf16.mxu0 0
      %5000 = vmatpush1.bf16.msra.mxu0 %v4971
      %5001 = vmatprep.subr.bf16.mxu0 0
      %5002 = vmatpush1.bf16.msra.mxu0 %v4972
      %5003 = vmatprep.subr.bf16.mxu0 0
      %5004 = vmatpush1.bf16.msra.mxu0 %v4973
      %5005 = vmatprep.subr.bf16.mxu0 0
      %5006 = vmatpush1.bf16.msra.mxu0 %v4974
      %5007 = vmatprep.subr.bf16.mxu0 0
      %5008 = vmatpush1.bf16.msra.mxu0 %v4975
      %5009 = vmatprep.subr.bf16.mxu0 0
      %5010 = vmatpush1.bf16.msra.mxu0 %v4976
      %5011 = vmatprep.subr.bf16.mxu0 0
      %5012 = vmatpush1.bf16.msra.mxu0 %v4977
      %5013 = vmatprep.subr.bf16.mxu0 0
      %5014 = vmatpush1.bf16.msra.mxu0 %v4978
      %5015 = vmatprep.subr.bf16.mxu0 0
      %5016 = vmatpush1.bf16.msra.mxu0 %v4979
      %5017 = vmatprep.subr.bf16.mxu0 0
      %5018 = vmatpush1.bf16.msra.mxu0 %v4980
      %5019 = vmatprep.subr.bf16.mxu0 0
      %5020 = vmatpush1.bf16.msra.mxu0 %v4981
      %5021 = vmatprep.subr.bf16.mxu0 0
      %5022 = vmatpush1.bf16.msra.mxu0 0
      %5023 = vmatprep.subr.bf16.mxu0 0
      %5024 = vmatpush1.bf16.msra.mxu0 0
      %5025 = vmatprep.subr.bf16.mxu0 0
      %5026 = vmatpush1.bf16.msra.mxu0 0
      %5027 = vmatprep.subr.bf16.mxu0 0
      %5028 = vmatpush1.bf16.msra.mxu0 0
      %5029 = vmatprep.mubr.bf16.mxu0 %v4995
      %5030 = vmatmul.mubr.bf16.gmra.mrb[0].mxu0 %v4920
      %v5031 = vpop.f32.mrb[0].mxu0
      %v5032 = vadd.f32 %v4917, %v5031
      %v5033 = vpop.f32.mrb[0].mxu0
      %v5034 = vpop.f32.mrb[0].mxu0
      %v5035 = vpop.f32.mrb[0].mxu0
      %5036 = vdwg.mxu0
      %v5037 = vld [vmem:[%s7] sm:$0xff]
      %v5038 = vld [vmem:[%s7 + $0x8] sm:$0xff]
      %v5039 = vld [vmem:[%s7 + $0x10] sm:$0xff]
      %v5040 = vld [vmem:[%s7 + $0x18] sm:$0xff]
      %v5041 = vld [vmem:[%s8] sm:$0x1]
      %vm5042 = vcmask 261120
      %v5044 = vsel %vm5042, %v5032, 0
      %5046 = vmatprep.subr.mxu0 0.0
      %5047 = vmatpush1.msra.mxu0 %v5037
      %5048 = vmatprep.subr.mxu0 0.0
      %5049 = vmatpush1.msra.mxu0 %v5038
      %5050 = vmatprep.subr.mxu0 0.0
      %5051 = vmatpush1.msra.mxu0 %v5039
      %5052 = vmatprep.subr.mxu0 0.0
      %5053 = vmatpush1.msra.mxu0 %v5040
      %5054 = vmatprep.subr.mxu0 0.0
      %5055 = vmatpush1.msra.mxu0 0.0
      %5056 = vmatprep.subr.mxu0 0.0
      %5057 = vmatpush1.msra.mxu0 0.0
      %5058 = vmatprep.subr.mxu0 0.0
      %5059 = vmatpush1.msra.mxu0 0.0
      %5060 = vmatprep.subr.mxu0 0.0
      %5061 = vmatpush1.msra.mxu0 0.0
      %5062 = vmatprep.subr.mxu0 0.0
      %5063 = vmatpush1.msra.mxu0 0.0
      %5064 = vmatprep.subr.mxu0 0.0
      %5065 = vmatpush1.msra.mxu0 0.0
      %5066 = vmatprep.subr.mxu0 0.0
      %5067 = vmatpush1.msra.mxu0 0.0
      %5068 = vmatprep.subr.mxu0 0.0
      %5069 = vmatpush1.msra.mxu0 0.0
      %5070 = vmatprep.subr.mxu0 0.0
      %5071 = vmatpush1.msra.mxu0 0.0
      %5072 = vmatprep.subr.mxu0 0.0
      %5073 = vmatpush1.msra.mxu0 0.0
      %5074 = vmatprep.subr.mxu0 0.0
      %5075 = vmatpush1.msra.mxu0 0.0
      %5076 = vmatprep.subr.mxu0 0.0
      %5077 = vmatpush1.msra.mxu0 0.0
      %5078 = vmatprep.subr.mxu0 0.0
      %5079 = vmatpush1.msra.mxu0 0.0
      %5080 = vmatprep.subr.mxu0 0.0
      %5081 = vmatpush1.msra.mxu0 0.0
      %5082 = vmatprep.subr.mxu0 0.0
      %5083 = vmatpush1.msra.mxu0 0.0
      %5084 = vmatprep.subr.mxu0 0.0
      %5085 = vmatpush1.msra.mxu0 0.0
      %5086 = vmatprep.subr.mxu0 0.0
      %5087 = vmatpush1.msra.mxu0 0.0
      %5088 = vmatprep.subr.mxu0 0.0
      %5089 = vmatpush1.msra.mxu0 0.0
      %5090 = vmatprep.subr.mxu0 0.0
      %5091 = vmatpush1.msra.mxu0 0.0
      %5092 = vmatprep.subr.mxu0 0.0
      %5093 = vmatpush1.msra.mxu0 0.0
      %5094 = vmatprep.subr.mxu0 0.0
      %5095 = vmatpush1.msra.mxu0 0.0
      %5096 = vmatprep.subr.mxu0 0.0
      %5097 = vmatpush1.msra.mxu0 0.0
      %5098 = vmatprep.subr.mxu0 0.0
      %5099 = vmatpush1.msra.mxu0 0.0
      %5100 = vmatprep.subr.mxu0 0.0
      %5101 = vmatpush1.msra.mxu0 0.0
      %5102 = vmatprep.subr.mxu0 0.0
      %5103 = vmatpush1.msra.mxu0 0.0
      %5104 = vmatprep.subr.mxu0 0.0
      %5105 = vmatpush1.msra.mxu0 0.0
      %5106 = vmatprep.subr.mxu0 0.0
      %5107 = vmatpush1.msra.mxu0 0.0
      %5108 = vmatprep.subr.mxu0 0.0
      %5109 = vmatpush1.msra.mxu0 0.0
      %5110 = vmatprep.mubr.f32.mxu0 0.0
      %5111 = vmatmul.mubr.f32.gmra.mrb[0].mxu0 %v5044
      %v5112 = vpop.f32.mrb[0].mxu0
      %v5113 = vadd.f32 %v5041, %v5112
      %v5114 = vpop.f32.mrb[0].mxu0
      %5115 = vdwg.mxu0
      %v5116 = vmax.f32 %v5113, 0.0
      %v5117 = vld [vmem:[%s9] sm:$0xf]
      %v5118 = vld [vmem:[%s10] sm:$0x1]
      %vm5119 = vcmask 31744
      %v5121 = vsel %vm5119, %v5116, 0
      %vm5123 = vcmask 1043456
      %v5125 = vsel %vm5123, %v5117, 0
      %5127 = vmatprep.subr.mxu0 0.0
      %5128 = vmatpush1.msra.mxu0 %v5125
      %5129 = vmatprep.subr.mxu0 0.0
      %5130 = vmatpush1.msra.mxu0 0.0
      %5131 = vmatprep.subr.mxu0 0.0
      %5132 = vmatpush1.msra.mxu0 0.0
      %5133 = vmatprep.subr.mxu0 0.0
      %5134 = vmatpush1.msra.mxu0 0.0
      %5135 = vmatprep.subr.mxu0 0.0
      %5136 = vmatpush1.msra.mxu0 0.0
      %5137 = vmatprep.subr.mxu0 0.0
      %5138 = vmatpush1.msra.mxu0 0.0
      %5139 = vmatprep.subr.mxu0 0.0
      %5140 = vmatpush1.msra.mxu0 0.0
      %5141 = vmatprep.subr.mxu0 0.0
      %5142 = vmatpush1.msra.mxu0 0.0
      %5143 = vmatprep.subr.mxu0 0.0
      %5144 = vmatpush1.msra.mxu0 0.0
      %5145 = vmatprep.subr.mxu0 0.0
      %5146 = vmatpush1.msra.mxu0 0.0
      %5147 = vmatprep.subr.mxu0 0.0
      %5148 = vmatpush1.msra.mxu0 0.0
      %5149 = vmatprep.subr.mxu0 0.0
      %5150 = vmatpush1.msra.mxu0 0.0
      %5151 = vmatprep.subr.mxu0 0.0
      %5152 = vmatpush1.msra.mxu0 0.0
      %5153 = vmatprep.subr.mxu0 0.0
      %5154 = vmatpush1.msra.mxu0 0.0
      %5155 = vmatprep.subr.mxu0 0.0
      %5156 = vmatpush1.msra.mxu0 0.0
      %5157 = vmatprep.subr.mxu0 0.0
      %5158 = vmatpush1.msra.mxu0 0.0
      %5159 = vmatprep.subr.mxu0 0.0
      %5160 = vmatpush1.msra.mxu0 0.0
      %5161 = vmatprep.subr.mxu0 0.0
      %5162 = vmatpush1.msra.mxu0 0.0
      %5163 = vmatprep.subr.mxu0 0.0
      %5164 = vmatpush1.msra.mxu0 0.0
      %5165 = vmatprep.subr.mxu0 0.0
      %5166 = vmatpush1.msra.mxu0 0.0
      %5167 = vmatprep.subr.mxu0 0.0
      %5168 = vmatpush1.msra.mxu0 0.0
      %5169 = vmatprep.subr.mxu0 0.0
      %5170 = vmatpush1.msra.mxu0 0.0
      %5171 = vmatprep.subr.mxu0 0.0
      %5172 = vmatpush1.msra.mxu0 0.0
      %5173 = vmatprep.subr.mxu0 0.0
      %5174 = vmatpush1.msra.mxu0 0.0
      %5175 = vmatprep.subr.mxu0 0.0
      %5176 = vmatpush1.msra.mxu0 0.0
      %5177 = vmatprep.subr.mxu0 0.0
      %5178 = vmatpush1.msra.mxu0 0.0
      %5179 = vmatprep.subr.mxu0 0.0
      %5180 = vmatpush1.msra.mxu0 0.0
      %5181 = vmatprep.subr.mxu0 0.0
      %5182 = vmatpush1.msra.mxu0 0.0
      %5183 = vmatprep.subr.mxu0 0.0
      %5184 = vmatpush1.msra.mxu0 0.0
      %5185 = vmatprep.subr.mxu0 0.0
      %5186 = vmatpush1.msra.mxu0 0.0
      %5187 = vmatprep.subr.mxu0 0.0
      %5188 = vmatpush1.msra.mxu0 0.0
      %5189 = vmatprep.subr.mxu0 0.0
      %5190 = vmatpush1.msra.mxu0 0.0
      %5191 = vmatprep.mubr.f32.mxu0 0.0
      %5192 = vmatmul.mubr.f32.gmra.mrb[0].mxu0 %v5121
      %v5193 = vpop.f32.mrb[0].mxu0
      %v5194 = vadd.f32 %v5118, %v5193
      %v5195 = vpop.f32.mrb[0].mxu0
      %5196 = vdwg.mxu0
      %v5197 = vxor.u32 %v5194, 2147483648
      %v5198 = vmul.f32 %v5197, 1.442695
      %v5199 = vpow.pop %v5198
      %v5200 = vadd.f32 %v5199, 1.0
      %v5201 = vrcp.pop %v5200
      %v5202 = vmul.f32 1.0, %v5201
      %v5203 = vmul.f32 %v5202, 0.1
      loop: start=0, step=1, limit=2
      $region123: #{tpu_custom_call.1} parent=107 // loop_pre_header
        _
      $region124: #{tpu_custom_call.1} parent=107 // loop_header
        %s5205 = sphi 0, %s5209
        %p5206 = scmp.ge.s32.totalorder %s5205, 2
      $region125: #{tpu_custom_call.1} parent=107 // loop_header_branch
        %5208 = sbr.rel (%p5206) target = $region129
      $region126: #{tpu_custom_call.1} parent=107 // loop_body
        %s5210 = smul.u32 %s5205, 128
        %s5211 = sshra.s32 %s5210, 4
        %s5212 = sand.u32 %s5210, 15
        %s5213 = smul.u32 %s5211, 2
        %s5214 = smul.addr %s5213, 8
        %s5215 = scalar_lea.vmem [#allocation3], %s5214
        %v5216 = vld [vmem:[%s5215] sm:$0xff]
        %v5217 = vld [vmem:[%s5215 + $0x8] sm:$0xff]
        %v5218 = vld [vmem:[%s5215 + $0x10] sm:$0xff]
        %v5219 = vld [vmem:[%s5215 + $0x18] sm:$0xff]
        %v5220 = vld [vmem:[%s5215 + $0x20] sm:$0xff]
        %v5221 = vld [vmem:[%s5215 + $0x28] sm:$0xff]
        %v5222 = vld [vmem:[%s5215 + $0x30] sm:$0xff]
        %v5223 = vld [vmem:[%s5215 + $0x38] sm:$0xff]
        %v5224 = vld [vmem:[%s5215 + $0x40] sm:$0xff]
        %v5225 = vld [vmem:[%s5215 + $0x48] sm:$0xff]
        %v5226 = vld [vmem:[%s5215 + $0x50] sm:$0xff]
        %v5227 = vld [vmem:[%s5215 + $0x58] sm:$0xff]
        %v5228 = vld [vmem:[%s5215 + $0x60] sm:$0xff]
        %v5229 = vld [vmem:[%s5215 + $0x68] sm:$0xff]
        %v5230 = vld [vmem:[%s5215 + $0x70] sm:$0xff]
        %v5231 = vld [vmem:[%s5215 + $0x78] sm:$0xff]
        %v5233 = vlaneseq
        %v5234 = vshrl.u32 %v5233, 7
        %v5235 = vsub.s32 0, %v5234
        %v5236 = vrot.slane %v4917, %v5235
        %v5239 = vsel %vm686, %v5217, 0
        %v5242 = vsel %vm686, %v5219, 0
        %v5245 = vsel %vm686, %v5221, 0
        %v5248 = vsel %vm686, %v5223, 0
        %v5251 = vsel %vm686, %v5225, 0
        %v5254 = vsel %vm686, %v5227, 0
        %v5257 = vsel %vm686, %v5229, 0
        %v5260 = vsel %vm686, %v5231, 0
        %5262 = vmatprep.subr.bf16.mxu0 0
        %5263 = vmatpush1.bf16.msra.mxu0 %v4970
        %5264 = vmatprep.subr.bf16.mxu0 0
        %5265 = vmatpush1.bf16.msra.mxu0 %v4971
        %5266 = vmatprep.subr.bf16.mxu0 0
        %5267 = vmatpush1.bf16.msra.mxu0 %v4972
        %5268 = vmatprep.subr.bf16.mxu0 0
        %5269 = vmatpush1.bf16.msra.mxu0 %v4973
        %5270 = vmatprep.subr.bf16.mxu0 0
        %5271 = vmatpush1.bf16.msra.mxu0 %v4974
        %5272 = vmatprep.subr.bf16.mxu0 0
        %5273 = vmatpush1.bf16.msra.mxu0 %v4975
        %5274 = vmatprep.subr.bf16.mxu0 0
        %5275 = vmatpush1.bf16.msra.mxu0 %v4976
        %5276 = vmatprep.subr.bf16.mxu0 0
        %5277 = vmatpush1.bf16.msra.mxu0 %v4977
        %5278 = vmatprep.subr.bf16.mxu0 0
        %5279 = vmatpush1.bf16.msra.mxu0 %v4978
        %5280 = vmatprep.subr.bf16.mxu0 0
        %5281 = vmatpush1.bf16.msra.mxu0 %v4979
        %5282 = vmatprep.subr.bf16.mxu0 0
        %5283 = vmatpush1.bf16.msra.mxu0 %v4980
        %5284 = vmatprep.subr.bf16.mxu0 0
        %5285 = vmatpush1.bf16.msra.mxu0 %v4981
        %5286 = vmatprep.subr.bf16.mxu0 0
        %5287 = vmatpush1.bf16.msra.mxu0 0
        %5288 = vmatprep.subr.bf16.mxu0 0
        %5289 = vmatpush1.bf16.msra.mxu0 0
        %5290 = vmatprep.subr.bf16.mxu0 0
        %5291 = vmatpush1.bf16.msra.mxu0 0
        %5292 = vmatprep.subr.bf16.mxu0 0
        %5293 = vmatpush1.bf16.msra.mxu0 0
        %5294 = vmatprep.mubr.bf16.mxu0 %v5239
        %5295 = vmatmul.mubr.bf16.gmra.mrb[0].mxu0 %v5216
        %v5296 = vpop.f32.mrb[0].mxu0
        %v5297 = vadd.f32 %v5236, %v5296
        %v5298 = vpop.f32.mrb[0].mxu0
        %v5299 = vpop.f32.mrb[0].mxu0
        %v5300 = vadd.f32 %v5236, %v5299
        %v5301 = vpop.f32.mrb[0].mxu0
        %5302 = vmatprep.mubr.bf16.mxu0 %v5242
        %5303 = vmatmul.mubr.bf16.gmra.mrb[0].mxu0 %v5218
        %v5304 = vpop.f32.mrb[0].mxu0
        %v5305 = vadd.f32 %v5236, %v5304
        %v5306 = vpop.f32.mrb[0].mxu0
        %v5307 = vpop.f32.mrb[0].mxu0
        %v5308 = vadd.f32 %v5236, %v5307
        %v5309 = vpop.f32.mrb[0].mxu0
        %5310 = vmatprep.mubr.bf16.mxu0 %v5245
        %5311 = vmatmul.mubr.bf16.gmra.mrb[0].mxu0 %v5220
        %v5312 = vpop.f32.mrb[0].mxu0
        %v5313 = vadd.f32 %v5236, %v5312
        %v5314 = vpop.f32.mrb[0].mxu0
        %v5315 = vpop.f32.mrb[0].mxu0
        %v5316 = vadd.f32 %v5236, %v5315
        %v5317 = vpop.f32.mrb[0].mxu0
        %5318 = vmatprep.mubr.bf16.mxu0 %v5248
        %5319 = vmatmul.mubr.bf16.gmra.mrb[0].mxu0 %v5222
        %v5320 = vpop.f32.mrb[0].mxu0
        %v5321 = vadd.f32 %v5236, %v5320
        %v5322 = vpop.f32.mrb[0].mxu0
        %v5323 = vpop.f32.mrb[0].mxu0
        %v5324 = vadd.f32 %v5236, %v5323
        %v5325 = vpop.f32.mrb[0].mxu0
        %5326 = vmatprep.mubr.bf16.mxu0 %v5251
        %5327 = vmatmul.mubr.bf16.gmra.mrb[0].mxu0 %v5224
        %v5328 = vpop.f32.mrb[0].mxu0
        %v5329 = vadd.f32 %v5236, %v5328
        %v5330 = vpop.f32.mrb[0].mxu0
        %v5331 = vpop.f32.mrb[0].mxu0
        %v5332 = vadd.f32 %v5236, %v5331
        %v5333 = vpop.f32.mrb[0].mxu0
        %5334 = vmatprep.mubr.bf16.mxu0 %v5254
        %5335 = vmatmul.mubr.bf16.gmra.mrb[0].mxu0 %v5226
        %v5336 = vpop.f32.mrb[0].mxu0
        %v5337 = vadd.f32 %v5236, %v5336
        %v5338 = vpop.f32.mrb[0].mxu0
        %v5339 = vpop.f32.mrb[0].mxu0
        %v5340 = vadd.f32 %v5236, %v5339
        %v5341 = vpop.f32.mrb[0].mxu0
        %5342 = vmatprep.mubr.bf16.mxu0 %v5257
        %5343 = vmatmul.mubr.bf16.gmra.mrb[0].mxu0 %v5228
        %v5344 = vpop.f32.mrb[0].mxu0
        %v5345 = vadd.f32 %v5236, %v5344
        %v5346 = vpop.f32.mrb[0].mxu0
        %v5347 = vpop.f32.mrb[0].mxu0
        %v5348 = vadd.f32 %v5236, %v5347
        %v5349 = vpop.f32.mrb[0].mxu0
        %5350 = vmatprep.mubr.bf16.mxu0 %v5260
        %5351 = vmatmul.mubr.bf16.gmra.mrb[0].mxu0 %v5230
        %v5352 = vpop.f32.mrb[0].mxu0
        %v5353 = vadd.f32 %v5236, %v5352
        %v5354 = vpop.f32.mrb[0].mxu0
        %v5355 = vpop.f32.mrb[0].mxu0
        %v5356 = vadd.f32 %v5236, %v5355
        %v5357 = vpop.f32.mrb[0].mxu0
        %5358 = vdwg.mxu0
        %s5359 = scalar_lea.vmem %s678, %s5210
        %v5360 = vld [vmem:[%s5359] sm:$0xff]
        %v5361 = vld [vmem:[%s5359 + $0x8] sm:$0xff]
        %v5362 = vld [vmem:[%s5359 + $0x10] sm:$0xff]
        %v5363 = vld [vmem:[%s5359 + $0x18] sm:$0xff]
        %v5364 = vld [vmem:[%s5359 + $0x20] sm:$0xff]
        %v5365 = vld [vmem:[%s5359 + $0x28] sm:$0xff]
        %v5366 = vld [vmem:[%s5359 + $0x30] sm:$0xff]
        %v5367 = vld [vmem:[%s5359 + $0x38] sm:$0xff]
        %v5368 = vld [vmem:[%s5359 + $0x40] sm:$0xff]
        %v5369 = vld [vmem:[%s5359 + $0x48] sm:$0xff]
        %v5370 = vld [vmem:[%s5359 + $0x50] sm:$0xff]
        %v5371 = vld [vmem:[%s5359 + $0x58] sm:$0xff]
        %v5372 = vld [vmem:[%s5359 + $0x60] sm:$0xff]
        %v5373 = vld [vmem:[%s5359 + $0x68] sm:$0xff]
        %v5374 = vld [vmem:[%s5359 + $0x70] sm:$0xff]
        %v5375 = vld [vmem:[%s5359 + $0x78] sm:$0xff]
        %v5376 = vlaneseq
        %v5377 = vshrl.u32 %v5376, 7
        %v5378 = vsub.s32 0, %v5377
        %v5379 = vrot.slane %v5203, %v5378
        %v5380 = vmul.f32 %v5379, %v5297
        %v5381 = vmul.f32 %v5379, %v5300
        %v5382 = vmul.f32 %v5379, %v5305
        %v5383 = vmul.f32 %v5379, %v5308
        %v5384 = vmul.f32 %v5379, %v5313
        %v5385 = vmul.f32 %v5379, %v5316
        %v5386 = vmul.f32 %v5379, %v5321
        %v5387 = vmul.f32 %v5379, %v5324
        %v5388 = vmul.f32 %v5379, %v5329
        %v5389 = vmul.f32 %v5379, %v5332
        %v5390 = vmul.f32 %v5379, %v5337
        %v5391 = vmul.f32 %v5379, %v5340
        %v5392 = vmul.f32 %v5379, %v5345
        %v5393 = vmul.f32 %v5379, %v5348
        %v5394 = vmul.f32 %v5379, %v5353
        %v5395 = vmul.f32 %v5379, %v5356
        %v5396 = vadd.f32 %v5360, %v5380
        %v5397 = vadd.f32 %v5361, %v5381
        %v5398 = vadd.f32 %v5362, %v5382
        %v5399 = vadd.f32 %v5363, %v5383
        %v5400 = vadd.f32 %v5364, %v5384
        %v5401 = vadd.f32 %v5365, %v5385
        %v5402 = vadd.f32 %v5366, %v5386
        %v5403 = vadd.f32 %v5367, %v5387
        %v5404 = vadd.f32 %v5368, %v5388
        %v5405 = vadd.f32 %v5369, %v5389
        %v5406 = vadd.f32 %v5370, %v5390
        %v5407 = vadd.f32 %v5371, %v5391
        %v5408 = vadd.f32 %v5372, %v5392
        %v5409 = vadd.f32 %v5373, %v5393
        %v5410 = vadd.f32 %v5374, %v5394
        %v5411 = vadd.f32 %v5375, %v5395
        %s5412 = scalar_lea.vmem [#allocation2], %s5210
        %5413 = vst.msk [vmem:[%s5412] sm:$0xff] %vm5042, %v5396
        %5414 = vst.msk [vmem:[%s5412 + $0x8] sm:$0xff] %vm5042, %v5397
        %5415 = vst.msk [vmem:[%s5412 + $0x10] sm:$0xff] %vm5042, %v5398
        %5416 = vst.msk [vmem:[%s5412 + $0x18] sm:$0xff] %vm5042, %v5399
        %5417 = vst.msk [vmem:[%s5412 + $0x20] sm:$0xff] %vm5042, %v5400
        %5418 = vst.msk [vmem:[%s5412 + $0x28] sm:$0xff] %vm5042, %v5401
        %5419 = vst.msk [vmem:[%s5412 + $0x30] sm:$0xff] %vm5042, %v5402
        %5420 = vst.msk [vmem:[%s5412 + $0x38] sm:$0xff] %vm5042, %v5403
        %5421 = vst.msk [vmem:[%s5412 + $0x40] sm:$0xff] %vm5042, %v5404
        %5422 = vst.msk [vmem:[%s5412 + $0x48] sm:$0xff] %vm5042, %v5405
        %5423 = vst.msk [vmem:[%s5412 + $0x50] sm:$0xff] %vm5042, %v5406
        %5424 = vst.msk [vmem:[%s5412 + $0x58] sm:$0xff] %vm5042, %v5407
        %5425 = vst.msk [vmem:[%s5412 + $0x60] sm:$0xff] %vm5042, %v5408
        %5426 = vst.msk [vmem:[%s5412 + $0x68] sm:$0xff] %vm5042, %v5409
        %5427 = vst.msk [vmem:[%s5412 + $0x70] sm:$0xff] %vm5042, %v5410
        %5428 = vst.msk [vmem:[%s5412 + $0x78] sm:$0xff] %vm5042, %v5411
      $region127: #{tpu_custom_call.1} parent=107 // loop_footer
        %s5209 = sadd.s32 1, %s5205
      $region128: #{tpu_custom_call.1} parent=107 // loop_footer_branch
        %5204 = sbr.rel target = $region124
      $region129: #{tpu_custom_call.1} parent=107 // loop_exit
        _
      %v5429 = vld [vmem:[%s11] sm:$0xff]
      %v5430 = vld [vmem:[%s11 + $0x8] sm:$0xff]
      %v5431 = vld [vmem:[%s11 + $0x10] sm:$0xff]
      %v5432 = vld [vmem:[%s11 + $0x18] sm:$0xff]
      %v5433 = vld [vmem:[%s12] sm:$0x3]
      loop: start=0, step=1, limit=2
      $region130: #{tpu_custom_call.1} parent=107 // loop_pre_header
        _
      $region131: #{tpu_custom_call.1} parent=107 // loop_header
        %s5435 = sphi 0, %s5439
        %p5436 = scmp.ge.s32.totalorder %s5435, 2
      $region132: #{tpu_custom_call.1} parent=107 // loop_header_branch
        %5438 = sbr.rel (%p5436) target = $region136
      $region133: #{tpu_custom_call.1} parent=107 // loop_body
        %s5440 = smul.u32 %s5435, 128
        %s5441 = scalar_lea.vmem [#allocation2], %s5440
        %v5442 = vld [vmem:[%s5441] sm:$0xff]
        %v5443 = vld [vmem:[%s5441 + $0x8] sm:$0xff]
        %v5444 = vld [vmem:[%s5441 + $0x10] sm:$0xff]
        %v5445 = vld [vmem:[%s5441 + $0x18] sm:$0xff]
        %v5446 = vld [vmem:[%s5441 + $0x20] sm:$0xff]
        %v5447 = vld [vmem:[%s5441 + $0x28] sm:$0xff]
        %v5448 = vld [vmem:[%s5441 + $0x30] sm:$0xff]
        %v5449 = vld [vmem:[%s5441 + $0x38] sm:$0xff]
        %v5450 = vld [vmem:[%s5441 + $0x40] sm:$0xff]
        %v5451 = vld [vmem:[%s5441 + $0x48] sm:$0xff]
        %v5452 = vld [vmem:[%s5441 + $0x50] sm:$0xff]
        %v5453 = vld [vmem:[%s5441 + $0x58] sm:$0xff]
        %v5454 = vld [vmem:[%s5441 + $0x60] sm:$0xff]
        %v5455 = vld [vmem:[%s5441 + $0x68] sm:$0xff]
        %v5456 = vld [vmem:[%s5441 + $0x70] sm:$0xff]
        %v5457 = vld [vmem:[%s5441 + $0x78] sm:$0xff]
        %v5458 = vpack.c.bf16 %v5443, %v5442
        %v5459 = vpack.c.bf16 %v5445, %v5444
        %v5460 = vpack.c.bf16 %v5447, %v5446
        %v5461 = vpack.c.bf16 %v5449, %v5448
        %v5462 = vpack.c.bf16 %v5451, %v5450
        %v5463 = vpack.c.bf16 %v5453, %v5452
        %v5464 = vpack.c.bf16 %v5455, %v5454
        %v5465 = vpack.c.bf16 %v5457, %v5456
        %v5467 = vlaneseq
        %v5468 = vshrl.u32 %v5467, 7
        %v5469 = vsub.s32 0, %v5468
        %v5470 = vrot.slane %v5433, %v5469
        %v5471 = vlaneseq
        %v5472 = vshrl.u32 %v5471, 7
        %v5473 = vsub.s32 1, %v5472
        %v5474 = vrot.slane %v5433, %v5473
        %v5481 = vunpack.c.l.b16 %v5429
        %v5482 = vunpack.c.h.b16 %v5429
        %v5483 = vunpack.c.l.b16 %v5430
        %v5484 = vunpack.c.h.b16 %v5430
        %v5485 = vunpack.c.l.b16 %v5431
        %v5486 = vunpack.c.h.b16 %v5431
        %v5487 = vunpack.c.l.b16 %v5432
        %v5488 = vunpack.c.h.b16 %v5432
        %v5489 = vpack.c.b16 %v5483, %v5481
        %v5490 = vpack.c.b16 %v5484, %v5482
        %v5491 = vpack.c.b16 %v5487, %v5485
        %v5492 = vpack.c.b16 %v5488, %v5486
        %v5498 = vsel %vm5042, %v5458, 0
        %v5501 = vsel %vm5042, %v5459, 0
        %v5504 = vsel %vm5042, %v5460, 0
        %v5507 = vsel %vm5042, %v5461, 0
        %v5510 = vsel %vm5042, %v5462, 0
        %v5513 = vsel %vm5042, %v5463, 0
        %v5516 = vsel %vm5042, %v5464, 0
        %v5519 = vsel %vm5042, %v5465, 0
        %5521 = vmatprep.subr.bf16.mxu0 %v5490
        %5522 = vmatpush1.bf16.msra.mxu0 %v5489
        %5523 = vmatprep.subr.bf16.mxu0 %v5492
        %5524 = vmatpush1.bf16.msra.mxu0 %v5491
        %5525 = vmatprep.subr.bf16.mxu0 0
        %5526 = vmatpush1.bf16.msra.mxu0 0
        %5527 = vmatprep.subr.bf16.mxu0 0
        %5528 = vmatpush1.bf16.msra.mxu0 0
        %5529 = vmatprep.subr.bf16.mxu0 0
        %5530 = vmatpush1.bf16.msra.mxu0 0
        %5531 = vmatprep.subr.bf16.mxu0 0
        %5532 = vmatpush1.bf16.msra.mxu0 0
        %5533 = vmatprep.subr.bf16.mxu0 0
        %5534 = vmatpush1.bf16.msra.mxu0 0
        %5535 = vmatprep.subr.bf16.mxu0 0
        %5536 = vmatpush1.bf16.msra.mxu0 0
        %5537 = vmatprep.subr.bf16.mxu0 0
        %5538 = vmatpush1.bf16.msra.mxu0 0
        %5539 = vmatprep.subr.bf16.mxu0 0
        %5540 = vmatpush1.bf16.msra.mxu0 0
        %5541 = vmatprep.subr.bf16.mxu0 0
        %5542 = vmatpush1.bf16.msra.mxu0 0
        %5543 = vmatprep.subr.bf16.mxu0 0
        %5544 = vmatpush1.bf16.msra.mxu0 0
        %5545 = vmatprep.subr.bf16.mxu0 0
        %5546 = vmatpush1.bf16.msra.mxu0 0
        %5547 = vmatprep.subr.bf16.mxu0 0
        %5548 = vmatpush1.bf16.msra.mxu0 0
        %5549 = vmatprep.subr.bf16.mxu0 0
        %5550 = vmatpush1.bf16.msra.mxu0 0
        %5551 = vmatprep.subr.bf16.mxu0 0
        %5552 = vmatpush1.bf16.msra.mxu0 0
        %5553 = vmatprep.mubr.bf16.mxu0 0
        %5554 = vmatmul.mubr.bf16.gmra.mrb[0].mxu0 %v5498
        %v5555 = vpop.f32.mrb[0].mxu0
        %v5556 = vadd.f32 %v5470, %v5555
        %v5557 = vpop.f32.mrb[0].mxu0
        %v5558 = vadd.f32 %v5474, %v5557
        %v5559 = vpop.f32.mrb[0].mxu0
        %v5560 = vadd.f32 %v5470, %v5559
        %v5561 = vpop.f32.mrb[0].mxu0
        %v5562 = vadd.f32 %v5474, %v5561
        %5563 = vmatprep.mubr.bf16.mxu0 0
        %5564 = vmatmul.mubr.bf16.gmra.mrb[0].mxu0 %v5501
        %v5565 = vpop.f32.mrb[0].mxu0
        %v5566 = vadd.f32 %v5470, %v5565
        %v5567 = vpop.f32.mrb[0].mxu0
        %v5568 = vadd.f32 %v5474, %v5567
        %v5569 = vpop.f32.mrb[0].mxu0
        %v5570 = vadd.f32 %v5470, %v5569
        %v5571 = vpop.f32.mrb[0].mxu0
        %v5572 = vadd.f32 %v5474, %v5571
        %5573 = vmatprep.mubr.bf16.mxu0 0
        %5574 = vmatmul.mubr.bf16.gmra.mrb[0].mxu0 %v5504
        %v5575 = vpop.f32.mrb[0].mxu0
        %v5576 = vadd.f32 %v5470, %v5575
        %v5577 = vpop.f32.mrb[0].mxu0
        %v5578 = vadd.f32 %v5474, %v5577
        %v5579 = vpop.f32.mrb[0].mxu0
        %v5580 = vadd.f32 %v5470, %v5579
        %v5581 = vpop.f32.mrb[0].mxu0
        %v5582 = vadd.f32 %v5474, %v5581
        %5583 = vmatprep.mubr.bf16.mxu0 0
        %5584 = vmatmul.mubr.bf16.gmra.mrb[0].mxu0 %v5507
        %v5585 = vpop.f32.mrb[0].mxu0
        %v5586 = vadd.f32 %v5470, %v5585
        %v5587 = vpop.f32.mrb[0].mxu0
        %v5588 = vadd.f32 %v5474, %v5587
        %v5589 = vpop.f32.mrb[0].mxu0
        %v5590 = vadd.f32 %v5470, %v5589
        %v5591 = vpop.f32.mrb[0].mxu0
        %v5592 = vadd.f32 %v5474, %v5591
        %5593 = vmatprep.mubr.bf16.mxu0 0
        %5594 = vmatmul.mubr.bf16.gmra.mrb[0].mxu0 %v5510
        %v5595 = vpop.f32.mrb[0].mxu0
        %v5596 = vadd.f32 %v5470, %v5595
        %v5597 = vpop.f32.mrb[0].mxu0
        %v5598 = vadd.f32 %v5474, %v5597
        %v5599 = vpop.f32.mrb[0].mxu0
        %v5600 = vadd.f32 %v5470, %v5599
        %v5601 = vpop.f32.mrb[0].mxu0
        %v5602 = vadd.f32 %v5474, %v5601
        %5603 = vmatprep.mubr.bf16.mxu0 0
        %5604 = vmatmul.mubr.bf16.gmra.mrb[0].mxu0 %v5513
        %v5605 = vpop.f32.mrb[0].mxu0
        %v5606 = vadd.f32 %v5470, %v5605
        %v5607 = vpop.f32.mrb[0].mxu0
        %v5608 = vadd.f32 %v5474, %v5607
        %v5609 = vpop.f32.mrb[0].mxu0
        %v5610 = vadd.f32 %v5470, %v5609
        %v5611 = vpop.f32.mrb[0].mxu0
        %v5612 = vadd.f32 %v5474, %v5611
        %5613 = vmatprep.mubr.bf16.mxu0 0
        %5614 = vmatmul.mubr.bf16.gmra.mrb[0].mxu0 %v5516
        %v5615 = vpop.f32.mrb[0].mxu0
        %v5616 = vadd.f32 %v5470, %v5615
        %v5617 = vpop.f32.mrb[0].mxu0
        %v5618 = vadd.f32 %v5474, %v5617
        %v5619 = vpop.f32.mrb[0].mxu0
        %v5620 = vadd.f32 %v5470, %v5619
        %v5621 = vpop.f32.mrb[0].mxu0
        %v5622 = vadd.f32 %v5474, %v5621
        %5623 = vmatprep.mubr.bf16.mxu0 0
        %5624 = vmatmul.mubr.bf16.gmra.mrb[0].mxu0 %v5519
        %v5625 = vpop.f32.mrb[0].mxu0
        %v5626 = vadd.f32 %v5470, %v5625
        %v5627 = vpop.f32.mrb[0].mxu0
        %v5628 = vadd.f32 %v5474, %v5627
        %v5629 = vpop.f32.mrb[0].mxu0
        %v5630 = vadd.f32 %v5470, %v5629
        %v5631 = vpop.f32.mrb[0].mxu0
        %v5632 = vadd.f32 %v5474, %v5631
        %5633 = vdwg.mxu0
        %v5634 = vxor.u32 %v5556, 2147483648
        %v5635 = vxor.u32 %v5558, 2147483648
        %v5636 = vxor.u32 %v5560, 2147483648
        %v5637 = vxor.u32 %v5562, 2147483648
        %v5638 = vxor.u32 %v5566, 2147483648
        %v5639 = vxor.u32 %v5568, 2147483648
        %v5640 = vxor.u32 %v5570, 2147483648
        %v5641 = vxor.u32 %v5572, 2147483648
        %v5642 = vxor.u32 %v5576, 2147483648
        %v5643 = vxor.u32 %v5578, 2147483648
        %v5644 = vxor.u32 %v5580, 2147483648
        %v5645 = vxor.u32 %v5582, 2147483648
        %v5646 = vxor.u32 %v5586, 2147483648
        %v5647 = vxor.u32 %v5588, 2147483648
        %v5648 = vxor.u32 %v5590, 2147483648
        %v5649 = vxor.u32 %v5592, 2147483648
        %v5650 = vxor.u32 %v5596, 2147483648
        %v5651 = vxor.u32 %v5598, 2147483648
        %v5652 = vxor.u32 %v5600, 2147483648
        %v5653 = vxor.u32 %v5602, 2147483648
        %v5654 = vxor.u32 %v5606, 2147483648
        %v5655 = vxor.u32 %v5608, 2147483648
        %v5656 = vxor.u32 %v5610, 2147483648
        %v5657 = vxor.u32 %v5612, 2147483648
        %v5658 = vxor.u32 %v5616, 2147483648
        %v5659 = vxor.u32 %v5618, 2147483648
        %v5660 = vxor.u32 %v5620, 2147483648
        %v5661 = vxor.u32 %v5622, 2147483648
        %v5662 = vxor.u32 %v5626, 2147483648
        %v5663 = vxor.u32 %v5628, 2147483648
        %v5664 = vxor.u32 %v5630, 2147483648
        %v5665 = vxor.u32 %v5632, 2147483648
        %v5666 = vmul.f32 %v5634, 1.442695
        %v5667 = vpow.pop %v5666
        %v5668 = vmul.f32 %v5635, 1.442695
        %v5669 = vpow.pop %v5668
        %v5670 = vmul.f32 %v5636, 1.442695
        %v5671 = vpow.pop %v5670
        %v5672 = vmul.f32 %v5637, 1.442695
        %v5673 = vpow.pop %v5672
        %v5674 = vmul.f32 %v5638, 1.442695
        %v5675 = vpow.pop %v5674
        %v5676 = vmul.f32 %v5639, 1.442695
        %v5677 = vpow.pop %v5676
        %v5678 = vmul.f32 %v5640, 1.442695
        %v5679 = vpow.pop %v5678
        %v5680 = vmul.f32 %v5641, 1.442695
        %v5681 = vpow.pop %v5680
        %v5682 = vmul.f32 %v5642, 1.442695
        %v5683 = vpow.pop %v5682
        %v5684 = vmul.f32 %v5643, 1.442695
        %v5685 = vpow.pop %v5684
        %v5686 = vmul.f32 %v5644, 1.442695
        %v5687 = vpow.pop %v5686
        %v5688 = vmul.f32 %v5645, 1.442695
        %v5689 = vpow.pop %v5688
        %v5690 = vmul.f32 %v5646, 1.442695
        %v5691 = vpow.pop %v5690
        %v5692 = vmul.f32 %v5647, 1.442695
        %v5693 = vpow.pop %v5692
        %v5694 = vmul.f32 %v5648, 1.442695
        %v5695 = vpow.pop %v5694
        %v5696 = vmul.f32 %v5649, 1.442695
        %v5697 = vpow.pop %v5696
        %v5698 = vmul.f32 %v5650, 1.442695
        %v5699 = vpow.pop %v5698
        %v5700 = vmul.f32 %v5651, 1.442695
        %v5701 = vpow.pop %v5700
        %v5702 = vmul.f32 %v5652, 1.442695
        %v5703 = vpow.pop %v5702
        %v5704 = vmul.f32 %v5653, 1.442695
        %v5705 = vpow.pop %v5704
        %v5706 = vmul.f32 %v5654, 1.442695
        %v5707 = vpow.pop %v5706
        %v5708 = vmul.f32 %v5655, 1.442695
        %v5709 = vpow.pop %v5708
        %v5710 = vmul.f32 %v5656, 1.442695
        %v5711 = vpow.pop %v5710
        %v5712 = vmul.f32 %v5657, 1.442695
        %v5713 = vpow.pop %v5712
        %v5714 = vmul.f32 %v5658, 1.442695
        %v5715 = vpow.pop %v5714
        %v5716 = vmul.f32 %v5659, 1.442695
        %v5717 = vpow.pop %v5716
        %v5718 = vmul.f32 %v5660, 1.442695
        %v5719 = vpow.pop %v5718
        %v5720 = vmul.f32 %v5661, 1.442695
        %v5721 = vpow.pop %v5720
        %v5722 = vmul.f32 %v5662, 1.442695
        %v5723 = vpow.pop %v5722
        %v5724 = vmul.f32 %v5663, 1.442695
        %v5725 = vpow.pop %v5724
        %v5726 = vmul.f32 %v5664, 1.442695
        %v5727 = vpow.pop %v5726
        %v5728 = vmul.f32 %v5665, 1.442695
        %v5729 = vpow.pop %v5728
        %v5730 = vadd.f32 %v5667, 1.0
        %v5731 = vadd.f32 %v5669, 1.0
        %v5732 = vadd.f32 %v5671, 1.0
        %v5733 = vadd.f32 %v5673, 1.0
        %v5734 = vadd.f32 %v5675, 1.0
        %v5735 = vadd.f32 %v5677, 1.0
        %v5736 = vadd.f32 %v5679, 1.0
        %v5737 = vadd.f32 %v5681, 1.0
        %v5738 = vadd.f32 %v5683, 1.0
        %v5739 = vadd.f32 %v5685, 1.0
        %v5740 = vadd.f32 %v5687, 1.0
        %v5741 = vadd.f32 %v5689, 1.0
        %v5742 = vadd.f32 %v5691, 1.0
        %v5743 = vadd.f32 %v5693, 1.0
        %v5744 = vadd.f32 %v5695, 1.0
        %v5745 = vadd.f32 %v5697, 1.0
        %v5746 = vadd.f32 %v5699, 1.0
        %v5747 = vadd.f32 %v5701, 1.0
        %v5748 = vadd.f32 %v5703, 1.0
        %v5749 = vadd.f32 %v5705, 1.0
        %v5750 = vadd.f32 %v5707, 1.0
        %v5751 = vadd.f32 %v5709, 1.0
        %v5752 = vadd.f32 %v5711, 1.0
        %v5753 = vadd.f32 %v5713, 1.0
        %v5754 = vadd.f32 %v5715, 1.0
        %v5755 = vadd.f32 %v5717, 1.0
        %v5756 = vadd.f32 %v5719, 1.0
        %v5757 = vadd.f32 %v5721, 1.0
        %v5758 = vadd.f32 %v5723, 1.0
        %v5759 = vadd.f32 %v5725, 1.0
        %v5760 = vadd.f32 %v5727, 1.0
        %v5761 = vadd.f32 %v5729, 1.0
        %v5762 = vrcp.pop %v5730
        %v5763 = vmul.f32 1.0, %v5762
        %v5764 = vrcp.pop %v5731
        %v5765 = vmul.f32 1.0, %v5764
        %v5766 = vrcp.pop %v5732
        %v5767 = vmul.f32 1.0, %v5766
        %v5768 = vrcp.pop %v5733
        %v5769 = vmul.f32 1.0, %v5768
        %v5770 = vrcp.pop %v5734
        %v5771 = vmul.f32 1.0, %v5770
        %v5772 = vrcp.pop %v5735
        %v5773 = vmul.f32 1.0, %v5772
        %v5774 = vrcp.pop %v5736
        %v5775 = vmul.f32 1.0, %v5774
        %v5776 = vrcp.pop %v5737
        %v5777 = vmul.f32 1.0, %v5776
        %v5778 = vrcp.pop %v5738
        %v5779 = vmul.f32 1.0, %v5778
        %v5780 = vrcp.pop %v5739
        %v5781 = vmul.f32 1.0, %v5780
        %v5782 = vrcp.pop %v5740
        %v5783 = vmul.f32 1.0, %v5782
        %v5784 = vrcp.pop %v5741
        %v5785 = vmul.f32 1.0, %v5784
        %v5786 = vrcp.pop %v5742
        %v5787 = vmul.f32 1.0, %v5786
        %v5788 = vrcp.pop %v5743
        %v5789 = vmul.f32 1.0, %v5788
        %v5790 = vrcp.pop %v5744
        %v5791 = vmul.f32 1.0, %v5790
        %v5792 = vrcp.pop %v5745
        %v5793 = vmul.f32 1.0, %v5792
        %v5794 = vrcp.pop %v5746
        %v5795 = vmul.f32 1.0, %v5794
        %v5796 = vrcp.pop %v5747
        %v5797 = vmul.f32 1.0, %v5796
        %v5798 = vrcp.pop %v5748
        %v5799 = vmul.f32 1.0, %v5798
        %v5800 = vrcp.pop %v5749
        %v5801 = vmul.f32 1.0, %v5800
        %v5802 = vrcp.pop %v5750
        %v5803 = vmul.f32 1.0, %v5802
        %v5804 = vrcp.pop %v5751
        %v5805 = vmul.f32 1.0, %v5804
        %v5806 = vrcp.pop %v5752
        %v5807 = vmul.f32 1.0, %v5806
        %v5808 = vrcp.pop %v5753
        %v5809 = vmul.f32 1.0, %v5808
        %v5810 = vrcp.pop %v5754
        %v5811 = vmul.f32 1.0, %v5810
        %v5812 = vrcp.pop %v5755
        %v5813 = vmul.f32 1.0, %v5812
        %v5814 = vrcp.pop %v5756
        %v5815 = vmul.f32 1.0, %v5814
        %v5816 = vrcp.pop %v5757
        %v5817 = vmul.f32 1.0, %v5816
        %v5818 = vrcp.pop %v5758
        %v5819 = vmul.f32 1.0, %v5818
        %v5820 = vrcp.pop %v5759
        %v5821 = vmul.f32 1.0, %v5820
        %v5822 = vrcp.pop %v5760
        %v5823 = vmul.f32 1.0, %v5822
        %v5824 = vrcp.pop %v5761
        %v5825 = vmul.f32 1.0, %v5824
        %v5826 = vmul.f32 %v5556, %v5763
        %v5827 = vmul.f32 %v5558, %v5765
        %v5828 = vmul.f32 %v5560, %v5767
        %v5829 = vmul.f32 %v5562, %v5769
        %v5830 = vmul.f32 %v5566, %v5771
        %v5831 = vmul.f32 %v5568, %v5773
        %v5832 = vmul.f32 %v5570, %v5775
        %v5833 = vmul.f32 %v5572, %v5777
        %v5834 = vmul.f32 %v5576, %v5779
        %v5835 = vmul.f32 %v5578, %v5781
        %v5836 = vmul.f32 %v5580, %v5783
        %v5837 = vmul.f32 %v5582, %v5785
        %v5838 = vmul.f32 %v5586, %v5787
        %v5839 = vmul.f32 %v5588, %v5789
        %v5840 = vmul.f32 %v5590, %v5791
        %v5841 = vmul.f32 %v5592, %v5793
        %v5842 = vmul.f32 %v5596, %v5795
        %v5843 = vmul.f32 %v5598, %v5797
        %v5844 = vmul.f32 %v5600, %v5799
        %v5845 = vmul.f32 %v5602, %v5801
        %v5846 = vmul.f32 %v5606, %v5803
        %v5847 = vmul.f32 %v5608, %v5805
        %v5848 = vmul.f32 %v5610, %v5807
        %v5849 = vmul.f32 %v5612, %v5809
        %v5850 = vmul.f32 %v5616, %v5811
        %v5851 = vmul.f32 %v5618, %v5813
        %v5852 = vmul.f32 %v5620, %v5815
        %v5853 = vmul.f32 %v5622, %v5817
        %v5854 = vmul.f32 %v5626, %v5819
        %v5855 = vmul.f32 %v5628, %v5821
        %v5856 = vmul.f32 %v5630, %v5823
        %v5857 = vmul.f32 %v5632, %v5825
        %v5858 = vpack.c.bf16 %v5828, %v5826
        %v5859 = vpack.c.bf16 %v5829, %v5827
        %v5860 = vpack.c.bf16 %v5832, %v5830
        %v5861 = vpack.c.bf16 %v5833, %v5831
        %v5862 = vpack.c.bf16 %v5836, %v5834
        %v5863 = vpack.c.bf16 %v5837, %v5835
        %v5864 = vpack.c.bf16 %v5840, %v5838
        %v5865 = vpack.c.bf16 %v5841, %v5839
        %v5866 = vpack.c.bf16 %v5844, %v5842
        %v5867 = vpack.c.bf16 %v5845, %v5843
        %v5868 = vpack.c.bf16 %v5848, %v5846
        %v5869 = vpack.c.bf16 %v5849, %v5847
        %v5870 = vpack.c.bf16 %v5852, %v5850
        %v5871 = vpack.c.bf16 %v5853, %v5851
        %v5872 = vpack.c.bf16 %v5856, %v5854
        %v5873 = vpack.c.bf16 %v5857, %v5855
        %s5874 = smul.u32 %s5435, 8
        %s5875 = sadd.s32 %s5874, 2
        %s5876 = smul.u32 %s5875, 6
        %s5877 = smul.addr %s5876, 8
        %s5878 = scalar_lea.vmem [#allocation4], %s5877
        %5879 = vst [vmem:[%s5878 + $0x10] sm:$0xff] %v5858
        %5880 = vst.msk [vmem:[%s5878 + $0x18] sm:$0xff] %vm686, %v5859
        %5881 = vst [vmem:[%s5878 + $0x40] sm:$0xff] %v5860
        %5882 = vst.msk [vmem:[%s5878 + $0x48] sm:$0xff] %vm686, %v5861
        %5883 = vst [vmem:[%s5878 + $0x70] sm:$0xff] %v5862
        %5884 = vst.msk [vmem:[%s5878 + $0x78] sm:$0xff] %vm686, %v5863
        %5885 = vst [vmem:[%s5878 + $0xa0] sm:$0xff] %v5864
        %5886 = vst.msk [vmem:[%s5878 + $0xa8] sm:$0xff] %vm686, %v5865
        %5887 = vst [vmem:[%s5878 + $0xd0] sm:$0xff] %v5866
        %5888 = vst.msk [vmem:[%s5878 + $0xd8] sm:$0xff] %vm686, %v5867
        %5889 = vst [vmem:[%s5878 + $0x100] sm:$0xff] %v5868
        %5890 = vst.msk [vmem:[%s5878 + $0x108] sm:$0xff] %vm686, %v5869
        %5891 = vst [vmem:[%s5878 + $0x130] sm:$0xff] %v5870
        %5892 = vst.msk [vmem:[%s5878 + $0x138] sm:$0xff] %vm686, %v5871
        %5893 = vst [vmem:[%s5878 + $0x160] sm:$0xff] %v5872
        %5894 = vst.msk [vmem:[%s5878 + $0x168] sm:$0xff] %vm686, %v5873
      $region134: #{tpu_custom_call.1} parent=107 // loop_footer
        %s5439 = sadd.s32 1, %s5435
      $region135: #{tpu_custom_call.1} parent=107 // loop_footer_branch
        %5434 = sbr.rel target = $region131
      $region136: #{tpu_custom_call.1} parent=107 // loop_exit
        _
      %v5895 = vld [vmem:[%s14] sm:$0x3]
      loop: start=0, step=1, limit=4
      $region137: #{tpu_custom_call.1} parent=107 // loop_pre_header
        _
      $region138: #{tpu_custom_call.1} parent=107 // loop_header
        %s5897 = sphi 0, %s5901
        %p5898 = scmp.ge.s32.totalorder %s5897, 4
        %v5902 = vphi 0.0, %v9528
        %v5903 = vphi 0.0, %v9529
      $region139: #{tpu_custom_call.1} parent=107 // loop_header_branch
        %5900 = sbr.rel (%p5898) target = $region143
      $region140: #{tpu_custom_call.1} parent=107 // loop_body
        %s5904 = smul.u32 %s5897, 4
        %s5905 = smul.u32 %s5904, 6
        %s5906 = smul.addr %s5905, 8
        %s5907 = scalar_lea.vmem [#allocation4], %s5906
        %v5908 = vld [vmem:[%s5907] sm:$0x80]
        %v5909 = vld [vmem:[%s5907 + $0x8] sm:$0x80]
        %v5910 = vld [vmem:[%s5907 + $0x10] sm:$0x7f]
        %v5911 = vld [vmem:[%s5907 + $0x18] sm:$0x7f]
        %v5912 = vld [vmem:[%s5907 + $0x30] sm:$0x80]
        %v5913 = vld [vmem:[%s5907 + $0x38] sm:$0x80]
        %v5914 = vld [vmem:[%s5907 + $0x40] sm:$0x7f]
        %v5915 = vld [vmem:[%s5907 + $0x48] sm:$0x7f]
        %v5916 = vld [vmem:[%s5907 + $0x60] sm:$0x80]
        %v5917 = vld [vmem:[%s5907 + $0x68] sm:$0x80]
        %v5918 = vld [vmem:[%s5907 + $0x70] sm:$0x7f]
        %v5919 = vld [vmem:[%s5907 + $0x78] sm:$0x7f]
        %v5920 = vld [vmem:[%s5907 + $0x90] sm:$0x80]
        %v5921 = vld [vmem:[%s5907 + $0x98] sm:$0x80]
        %v5922 = vld [vmem:[%s5907 + $0xa0] sm:$0x7f]
        %v5923 = vld [vmem:[%s5907 + $0xa8] sm:$0x7f]
        %v5924 = vld [vmem:[%s13] sm:$0x11]
        %v5926 = vunpack.c.l.b16 %v5924
        %v5927 = vunpack.c.h.b16 %v5924
        %v5928 = vpack.c.b16 %v5926, %v5926
        %v5929 = vpack.c.b16 %v5927, %v5927
        %v5931 = vpack.i.b16 %v5928, %v5928
        %v5933 = vlaneseq
        %v5934 = vshrl.u32 %v5933, 7
        %v5935 = vsub.s32 0, %v5934
        %v5936 = vrot.slane %v5931, %v5935
        %v5938 = vpack.i.b16 %v5929, %v5929
        %v5940 = vlaneseq
        %v5941 = vshrl.u32 %v5940, 7
        %v5942 = vsub.s32 0, %v5941
        %v5943 = vrot.slane %v5938, %v5942
        %v5944 = vmul.bf16 %v5908, %v5936
        %v5945 = vmul.bf16 %v5909, %v5943
        %v5946 = vmul.bf16 %v5910, %v5936
        %v5947 = vmul.bf16 %v5911, %v5943
        %v5948 = vmul.bf16 %v5912, %v5936
        %v5949 = vmul.bf16 %v5913, %v5943
        %v5950 = vmul.bf16 %v5914, %v5936
        %v5951 = vmul.bf16 %v5915, %v5943
        %v5952 = vmul.bf16 %v5916, %v5936
        %v5953 = vmul.bf16 %v5917, %v5943
        %v5954 = vmul.bf16 %v5918, %v5936
        %v5955 = vmul.bf16 %v5919, %v5943
        %v5956 = vmul.bf16 %v5920, %v5936
        %v5957 = vmul.bf16 %v5921, %v5943
        %v5958 = vmul.bf16 %v5922, %v5936
        %v5959 = vmul.bf16 %v5923, %v5943
        %v5960 = vld [vmem:[%s5907 + $0x10] sm:$0xff]
        %v5961 = vld [vmem:[%s5907 + $0x18] sm:$0xff]
        %v5962 = vld [vmem:[%s5907 + $0x40] sm:$0xff]
        %v5963 = vld [vmem:[%s5907 + $0x48] sm:$0xff]
        %v5964 = vld [vmem:[%s5907 + $0x70] sm:$0xff]
        %v5965 = vld [vmem:[%s5907 + $0x78] sm:$0xff]
        %v5966 = vld [vmem:[%s5907 + $0xa0] sm:$0xff]
        %v5967 = vld [vmem:[%s5907 + $0xa8] sm:$0xff]
        %v5968 = vshrl.u32 %v5928, 16
        %v5969 = vpack.i.b16 %v5968, %v5968
        %v5971 = vlaneseq
        %v5972 = vshrl.u32 %v5971, 7
        %v5973 = vsub.s32 0, %v5972
        %v5974 = vrot.slane %v5969, %v5973
        %v5975 = vshrl.u32 %v5929, 16
        %v5976 = vpack.i.b16 %v5975, %v5975
        %v5978 = vlaneseq
        %v5979 = vshrl.u32 %v5978, 7
        %v5980 = vsub.s32 0, %v5979
        %v5981 = vrot.slane %v5976, %v5980
        %v5982 = vmul.bf16 %v5908, %v5974
        %v5983 = vmul.bf16 %v5909, %v5981
        %v5984 = vmul.bf16 %v5960, %v5974
        %v5985 = vmul.bf16 %v5961, %v5981
        %v5986 = vmul.bf16 %v5912, %v5974
        %v5987 = vmul.bf16 %v5913, %v5981
        %v5988 = vmul.bf16 %v5962, %v5974
        %v5989 = vmul.bf16 %v5963, %v5981
        %v5990 = vmul.bf16 %v5916, %v5974
        %v5991 = vmul.bf16 %v5917, %v5981
        %v5992 = vmul.bf16 %v5964, %v5974
        %v5993 = vmul.bf16 %v5965, %v5981
        %v5994 = vmul.bf16 %v5920, %v5974
        %v5995 = vmul.bf16 %v5921, %v5981
        %v5996 = vmul.bf16 %v5966, %v5974
        %v5997 = vmul.bf16 %v5967, %v5981
        %vm5998 = vsmask.f32 7424
        %v6000 = vshrl.u32 %v5982, 16
        %v6003 = vshll.u32 %v5984, 16
        %v6005 = vrot.slane %v6003, 1
        %v6006 = vsel %vm5998, %v6000, %v6005
        %v6008 = vshrl.u32 %v5983, 16
        %v6011 = vshll.u32 %v5985, 16
        %v6013 = vrot.slane %v6011, 1
        %v6014 = vsel %vm5998, %v6008, %v6013
        %v6015 = vshrl.u32 %v5984, 16
        %v6017 = vor.u32 %v6015, %v6005
        %v6018 = vshrl.u32 %v5985, 16
        %v6020 = vor.u32 %v6018, %v6013
        %v6022 = vshrl.u32 %v5986, 16
        %v6025 = vshll.u32 %v5988, 16
        %v6027 = vrot.slane %v6025, 1
        %v6028 = vsel %vm5998, %v6022, %v6027
        %v6030 = vshrl.u32 %v5987, 16
        %v6033 = vshll.u32 %v5989, 16
        %v6035 = vrot.slane %v6033, 1
        %v6036 = vsel %vm5998, %v6030, %v6035
        %v6037 = vshrl.u32 %v5988, 16
        %v6039 = vor.u32 %v6037, %v6027
        %v6040 = vshrl.u32 %v5989, 16
        %v6042 = vor.u32 %v6040, %v6035
        %v6044 = vshrl.u32 %v5990, 16
        %v6047 = vshll.u32 %v5992, 16
        %v6049 = vrot.slane %v6047, 1
        %v6050 = vsel %vm5998, %v6044, %v6049
        %v6052 = vshrl.u32 %v5991, 16
        %v6055 = vshll.u32 %v5993, 16
        %v6057 = vrot.slane %v6055, 1
        %v6058 = vsel %vm5998, %v6052, %v6057
        %v6059 = vshrl.u32 %v5992, 16
        %v6061 = vor.u32 %v6059, %v6049
        %v6062 = vshrl.u32 %v5993, 16
        %v6064 = vor.u32 %v6062, %v6057
        %v6066 = vshrl.u32 %v5994, 16
        %v6069 = vshll.u32 %v5996, 16
        %v6071 = vrot.slane %v6069, 1
        %v6072 = vsel %vm5998, %v6066, %v6071
        %v6074 = vshrl.u32 %v5995, 16
        %v6077 = vshll.u32 %v5997, 16
        %v6079 = vrot.slane %v6077, 1
        %v6080 = vsel %vm5998, %v6074, %v6079
        %v6081 = vshrl.u32 %v5996, 16
        %v6083 = vor.u32 %v6081, %v6071
        %v6084 = vshrl.u32 %v5997, 16
        %v6086 = vor.u32 %v6084, %v6079
        %v6103 = vadd.bf16 %v5944, %v6006
        %v6104 = vadd.bf16 %v5945, %v6014
        %v6105 = vadd.bf16 %v5946, %v6017
        %v6106 = vadd.bf16 %v5947, %v6020
        %v6107 = vadd.bf16 %v5948, %v6028
        %v6108 = vadd.bf16 %v5949, %v6036
        %v6109 = vadd.bf16 %v5950, %v6039
        %v6110 = vadd.bf16 %v5951, %v6042
        %v6111 = vadd.bf16 %v5952, %v6050
        %v6112 = vadd.bf16 %v5953, %v6058
        %v6113 = vadd.bf16 %v5954, %v6061
        %v6114 = vadd.bf16 %v5955, %v6064
        %v6115 = vadd.bf16 %v5956, %v6072
        %v6116 = vadd.bf16 %v5957, %v6080
        %v6117 = vadd.bf16 %v5958, %v6083
        %v6118 = vadd.bf16 %v5959, %v6086
        %v6119 = vld [vmem:[%s13] sm:$0x22]
        %v6121 = vunpack.c.l.b16 %v6119
        %v6122 = vunpack.c.h.b16 %v6119
        %v6123 = vpack.c.b16 %v6121, %v6121
        %v6124 = vpack.c.b16 %v6122, %v6122
        %v6126 = vpack.i.b16 %v6123, %v6123
        %v6128 = vlaneseq
        %v6129 = vshrl.u32 %v6128, 7
        %v6130 = vsub.s32 1, %v6129
        %v6131 = vrot.slane %v6126, %v6130
        %v6133 = vpack.i.b16 %v6124, %v6124
        %v6135 = vlaneseq
        %v6136 = vshrl.u32 %v6135, 7
        %v6137 = vsub.s32 1, %v6136
        %v6138 = vrot.slane %v6133, %v6137
        %v6139 = vmul.bf16 %v5960, %v6131
        %v6140 = vmul.bf16 %v5961, %v6138
        %v6141 = vmul.bf16 %v5962, %v6131
        %v6142 = vmul.bf16 %v5963, %v6138
        %v6143 = vmul.bf16 %v5964, %v6131
        %v6144 = vmul.bf16 %v5965, %v6138
        %v6145 = vmul.bf16 %v5966, %v6131
        %v6146 = vmul.bf16 %v5967, %v6138
        %v6155 = vrot.slane %v6139, 1
        %v6156 = vrot.slane %v6140, 1
        %v6157 = vrot.slane %v6141, 1
        %v6158 = vrot.slane %v6142, 1
        %v6159 = vrot.slane %v6143, 1
        %v6160 = vrot.slane %v6144, 1
        %v6161 = vrot.slane %v6145, 1
        %v6162 = vrot.slane %v6146, 1
        %v6171 = vadd.bf16 %v6103, %v6155
        %v6172 = vadd.bf16 %v6104, %v6156
        %v6173 = vadd.bf16 %v6105, %v6155
        %v6174 = vadd.bf16 %v6106, %v6156
        %v6175 = vadd.bf16 %v6107, %v6157
        %v6176 = vadd.bf16 %v6108, %v6158
        %v6177 = vadd.bf16 %v6109, %v6157
        %v6178 = vadd.bf16 %v6110, %v6158
        %v6179 = vadd.bf16 %v6111, %v6159
        %v6180 = vadd.bf16 %v6112, %v6160
        %v6181 = vadd.bf16 %v6113, %v6159
        %v6182 = vadd.bf16 %v6114, %v6160
        %v6183 = vadd.bf16 %v6115, %v6161
        %v6184 = vadd.bf16 %v6116, %v6162
        %v6185 = vadd.bf16 %v6117, %v6161
        %v6186 = vadd.bf16 %v6118, %v6162
        %v6187 = vld [vmem:[%s5907 + $0x20] sm:$0x1]
        %v6188 = vld [vmem:[%s5907 + $0x28] sm:$0x1]
        %v6189 = vld [vmem:[%s5907 + $0x50] sm:$0x1]
        %v6190 = vld [vmem:[%s5907 + $0x58] sm:$0x1]
        %v6191 = vld [vmem:[%s5907 + $0x80] sm:$0x1]
        %v6192 = vld [vmem:[%s5907 + $0x88] sm:$0x1]
        %v6193 = vld [vmem:[%s5907 + $0xb0] sm:$0x1]
        %v6194 = vld [vmem:[%s5907 + $0xb8] sm:$0x1]
        %v6195 = vshrl.u32 %v6123, 16
        %v6196 = vpack.i.b16 %v6195, %v6195
        %v6198 = vlaneseq
        %v6199 = vshrl.u32 %v6198, 7
        %v6200 = vsub.s32 1, %v6199
        %v6201 = vrot.slane %v6196, %v6200
        %v6202 = vshrl.u32 %v6124, 16
        %v6203 = vpack.i.b16 %v6202, %v6202
        %v6205 = vlaneseq
        %v6206 = vshrl.u32 %v6205, 7
        %v6207 = vsub.s32 1, %v6206
        %v6208 = vrot.slane %v6203, %v6207
        %v6209 = vmul.bf16 %v5960, %v6201
        %v6210 = vmul.bf16 %v5961, %v6208
        %v6211 = vmul.bf16 %v6187, %v6201
        %v6212 = vmul.bf16 %v6188, %v6208
        %v6213 = vmul.bf16 %v5962, %v6201
        %v6214 = vmul.bf16 %v5963, %v6208
        %v6215 = vmul.bf16 %v6189, %v6201
        %v6216 = vmul.bf16 %v6190, %v6208
        %v6217 = vmul.bf16 %v5964, %v6201
        %v6218 = vmul.bf16 %v5965, %v6208
        %v6219 = vmul.bf16 %v6191, %v6201
        %v6220 = vmul.bf16 %v6192, %v6208
        %v6221 = vmul.bf16 %v5966, %v6201
        %v6222 = vmul.bf16 %v5967, %v6208
        %v6223 = vmul.bf16 %v6193, %v6201
        %v6224 = vmul.bf16 %v6194, %v6208
        %vm6225 = vsmask.f32 6400
        %v6227 = vshrl.u32 %v6209, 16
        %v6229 = vrot.slane %v6227, 1
        %v6230 = vshll.u32 %v6209, 16
        %v6232 = vrot.slane %v6230, 2
        %v6233 = vor.u32 %v6229, %v6232
        %v6235 = vshrl.u32 %v6210, 16
        %v6237 = vrot.slane %v6235, 1
        %v6238 = vshll.u32 %v6210, 16
        %v6240 = vrot.slane %v6238, 2
        %v6241 = vor.u32 %v6237, %v6240
        %v6243 = vshll.u32 %v6211, 16
        %v6245 = vrot.slane %v6243, 2
        %v6246 = vsel %vm6225, %v6233, %v6245
        %v6248 = vshll.u32 %v6212, 16
        %v6250 = vrot.slane %v6248, 2
        %v6251 = vsel %vm6225, %v6241, %v6250
        %v6253 = vshrl.u32 %v6213, 16
        %v6255 = vrot.slane %v6253, 1
        %v6256 = vshll.u32 %v6213, 16
        %v6258 = vrot.slane %v6256, 2
        %v6259 = vor.u32 %v6255, %v6258
        %v6261 = vshrl.u32 %v6214, 16
        %v6263 = vrot.slane %v6261, 1
        %v6264 = vshll.u32 %v6214, 16
        %v6266 = vrot.slane %v6264, 2
        %v6267 = vor.u32 %v6263, %v6266
        %v6269 = vshll.u32 %v6215, 16
        %v6271 = vrot.slane %v6269, 2
        %v6272 = vsel %vm6225, %v6259, %v6271
        %v6274 = vshll.u32 %v6216, 16
        %v6276 = vrot.slane %v6274, 2
        %v6277 = vsel %vm6225, %v6267, %v6276
        %v6279 = vshrl.u32 %v6217, 16
        %v6281 = vrot.slane %v6279, 1
        %v6282 = vshll.u32 %v6217, 16
        %v6284 = vrot.slane %v6282, 2
        %v6285 = vor.u32 %v6281, %v6284
        %v6287 = vshrl.u32 %v6218, 16
        %v6289 = vrot.slane %v6287, 1
        %v6290 = vshll.u32 %v6218, 16
        %v6292 = vrot.slane %v6290, 2
        %v6293 = vor.u32 %v6289, %v6292
        %v6295 = vshll.u32 %v6219, 16
        %v6297 = vrot.slane %v6295, 2
        %v6298 = vsel %vm6225, %v6285, %v6297
        %v6300 = vshll.u32 %v6220, 16
        %v6302 = vrot.slane %v6300, 2
        %v6303 = vsel %vm6225, %v6293, %v6302
        %v6305 = vshrl.u32 %v6221, 16
        %v6307 = vrot.slane %v6305, 1
        %v6308 = vshll.u32 %v6221, 16
        %v6310 = vrot.slane %v6308, 2
        %v6311 = vor.u32 %v6307, %v6310
        %v6313 = vshrl.u32 %v6222, 16
        %v6315 = vrot.slane %v6313, 1
        %v6316 = vshll.u32 %v6222, 16
        %v6318 = vrot.slane %v6316, 2
        %v6319 = vor.u32 %v6315, %v6318
        %v6321 = vshll.u32 %v6223, 16
        %v6323 = vrot.slane %v6321, 2
        %v6324 = vsel %vm6225, %v6311, %v6323
        %v6326 = vshll.u32 %v6224, 16
        %v6328 = vrot.slane %v6326, 2
        %v6329 = vsel %vm6225, %v6319, %v6328
        %v6346 = vadd.bf16 %v6171, %v6233
        %v6347 = vadd.bf16 %v6172, %v6241
        %v6348 = vadd.bf16 %v6173, %v6246
        %v6349 = vadd.bf16 %v6174, %v6251
        %v6350 = vadd.bf16 %v6175, %v6259
        %v6351 = vadd.bf16 %v6176, %v6267
        %v6352 = vadd.bf16 %v6177, %v6272
        %v6353 = vadd.bf16 %v6178, %v6277
        %v6354 = vadd.bf16 %v6179, %v6285
        %v6355 = vadd.bf16 %v6180, %v6293
        %v6356 = vadd.bf16 %v6181, %v6298
        %v6357 = vadd.bf16 %v6182, %v6303
        %v6358 = vadd.bf16 %v6183, %v6311
        %v6359 = vadd.bf16 %v6184, %v6319
        %v6360 = vadd.bf16 %v6185, %v6324
        %v6361 = vadd.bf16 %v6186, %v6329
        %v6362 = vld [vmem:[%s5907 + $0x10] sm:$0xfe]
        %v6363 = vld [vmem:[%s5907 + $0x18] sm:$0xfe]
        %v6364 = vld [vmem:[%s5907 + $0x40] sm:$0xfe]
        %v6365 = vld [vmem:[%s5907 + $0x48] sm:$0xfe]
        %v6366 = vld [vmem:[%s5907 + $0x70] sm:$0xfe]
        %v6367 = vld [vmem:[%s5907 + $0x78] sm:$0xfe]
        %v6368 = vld [vmem:[%s5907 + $0xa0] sm:$0xfe]
        %v6369 = vld [vmem:[%s5907 + $0xa8] sm:$0xfe]
        %v6370 = vld [vmem:[%s13] sm:$0x44]
        %v6372 = vunpack.c.l.b16 %v6370
        %v6373 = vunpack.c.h.b16 %v6370
        %v6374 = vpack.c.b16 %v6372, %v6372
        %v6375 = vpack.c.b16 %v6373, %v6373
        %v6377 = vpack.i.b16 %v6374, %v6374
        %v6379 = vlaneseq
        %v6380 = vshrl.u32 %v6379, 7
        %v6381 = vsub.s32 2, %v6380
        %v6382 = vrot.slane %v6377, %v6381
        %v6384 = vpack.i.b16 %v6375, %v6375
        %v6386 = vlaneseq
        %v6387 = vshrl.u32 %v6386, 7
        %v6388 = vsub.s32 2, %v6387
        %v6389 = vrot.slane %v6384, %v6388
        %v6390 = vmul.bf16 %v6362, %v6382
        %v6391 = vmul.bf16 %v6363, %v6389
        %v6392 = vmul.bf16 %v6187, %v6382
        %v6393 = vmul.bf16 %v6188, %v6389
        %v6394 = vmul.bf16 %v6364, %v6382
        %v6395 = vmul.bf16 %v6365, %v6389
        %v6396 = vmul.bf16 %v6189, %v6382
        %v6397 = vmul.bf16 %v6190, %v6389
        %v6398 = vmul.bf16 %v6366, %v6382
        %v6399 = vmul.bf16 %v6367, %v6389
        %v6400 = vmul.bf16 %v6191, %v6382
        %v6401 = vmul.bf16 %v6192, %v6389
        %v6402 = vmul.bf16 %v6368, %v6382
        %v6403 = vmul.bf16 %v6369, %v6389
        %v6404 = vmul.bf16 %v6193, %v6382
        %v6405 = vmul.bf16 %v6194, %v6389
        %vm6422 = vcmask 1045504
        %v6423 = vrot.slane %v6390, 2
        %v6424 = vrot.slane %v6391, 2
        %v6425 = vrot.slane %v6392, 2
        %v6426 = vsel %vm6422, %v6423, %v6425
        %v6427 = vrot.slane %v6393, 2
        %v6428 = vsel %vm6422, %v6424, %v6427
        %v6429 = vrot.slane %v6394, 2
        %v6430 = vrot.slane %v6395, 2
        %v6431 = vrot.slane %v6396, 2
        %v6432 = vsel %vm6422, %v6429, %v6431
        %v6433 = vrot.slane %v6397, 2
        %v6434 = vsel %vm6422, %v6430, %v6433
        %v6435 = vrot.slane %v6398, 2
        %v6436 = vrot.slane %v6399, 2
        %v6437 = vrot.slane %v6400, 2
        %v6438 = vsel %vm6422, %v6435, %v6437
        %v6439 = vrot.slane %v6401, 2
        %v6440 = vsel %vm6422, %v6436, %v6439
        %v6441 = vrot.slane %v6402, 2
        %v6442 = vrot.slane %v6403, 2
        %v6443 = vrot.slane %v6404, 2
        %v6444 = vsel %vm6422, %v6441, %v6443
        %v6445 = vrot.slane %v6405, 2
        %v6446 = vsel %vm6422, %v6442, %v6445
        %v6463 = vadd.bf16 %v6346, %v6423
        %v6464 = vadd.bf16 %v6347, %v6424
        %v6465 = vadd.bf16 %v6348, %v6426
        %v6466 = vadd.bf16 %v6349, %v6428
        %v6467 = vadd.bf16 %v6350, %v6429
        %v6468 = vadd.bf16 %v6351, %v6430
        %v6469 = vadd.bf16 %v6352, %v6432
        %v6470 = vadd.bf16 %v6353, %v6434
        %v6471 = vadd.bf16 %v6354, %v6435
        %v6472 = vadd.bf16 %v6355, %v6436
        %v6473 = vadd.bf16 %v6356, %v6438
        %v6474 = vadd.bf16 %v6357, %v6440
        %v6475 = vadd.bf16 %v6358, %v6441
        %v6476 = vadd.bf16 %v6359, %v6442
        %v6477 = vadd.bf16 %v6360, %v6444
        %v6478 = vadd.bf16 %v6361, %v6446
        %vm6495 = vcmask 1043456
        %v6496 = vrot.slane %v6463, 4
        %v6497 = vrot.slane %v6465, 4
        %v6498 = vsel %vm6495, %v6496, %v6497
        %v6499 = vrot.slane %v6464, 4
        %v6500 = vrot.slane %v6466, 4
        %v6501 = vsel %vm6495, %v6499, %v6500
        %v6502 = vrot.slane %v6467, 4
        %v6503 = vrot.slane %v6469, 4
        %v6504 = vsel %vm6495, %v6502, %v6503
        %v6505 = vrot.slane %v6468, 4
        %v6506 = vrot.slane %v6470, 4
        %v6507 = vsel %vm6495, %v6505, %v6506
        %v6508 = vrot.slane %v6471, 4
        %v6509 = vrot.slane %v6473, 4
        %v6510 = vsel %vm6495, %v6508, %v6509
        %v6511 = vrot.slane %v6472, 4
        %v6512 = vrot.slane %v6474, 4
        %v6513 = vsel %vm6495, %v6511, %v6512
        %v6514 = vrot.slane %v6475, 4
        %v6515 = vrot.slane %v6477, 4
        %v6516 = vsel %vm6495, %v6514, %v6515
        %v6517 = vrot.slane %v6476, 4
        %v6518 = vrot.slane %v6478, 4
        %v6519 = vsel %vm6495, %v6517, %v6518
        %v6536 = vunpack.c.l.bf16 %v6498
        %v6537 = vunpack.c.l.bf16 %v6501
        %v6538 = vunpack.c.h.bf16 %v6498
        %v6539 = vunpack.c.h.bf16 %v6501
        %v6540 = vunpack.c.l.bf16 %v6497
        %v6541 = vunpack.c.l.bf16 %v6500
        %v6542 = vunpack.c.l.bf16 %v6504
        %v6543 = vunpack.c.l.bf16 %v6507
        %v6544 = vunpack.c.h.bf16 %v6504
        %v6545 = vunpack.c.h.bf16 %v6507
        %v6546 = vunpack.c.l.bf16 %v6503
        %v6547 = vunpack.c.l.bf16 %v6506
        %v6548 = vunpack.c.l.bf16 %v6510
        %v6549 = vunpack.c.l.bf16 %v6513
        %v6550 = vunpack.c.h.bf16 %v6510
        %v6551 = vunpack.c.h.bf16 %v6513
        %v6552 = vunpack.c.l.bf16 %v6509
        %v6553 = vunpack.c.l.bf16 %v6512
        %v6554 = vunpack.c.l.bf16 %v6516
        %v6555 = vunpack.c.l.bf16 %v6519
        %v6556 = vunpack.c.h.bf16 %v6516
        %v6557 = vunpack.c.h.bf16 %v6519
        %v6558 = vunpack.c.l.bf16 %v6515
        %v6559 = vunpack.c.l.bf16 %v6518
        %s6560 = sadd.s32 %s5904, 1
        %s6561 = smul.u32 %s6560, 6
        %s6562 = smul.addr %s6561, 8
        %s6563 = scalar_lea.vmem [#allocation4], %s6562
        %v6564 = vld [vmem:[%s6563] sm:$0x80]
        %v6565 = vld [vmem:[%s6563 + $0x8] sm:$0x80]
        %v6566 = vld [vmem:[%s6563 + $0x10] sm:$0x7f]
        %v6567 = vld [vmem:[%s6563 + $0x18] sm:$0x7f]
        %v6568 = vld [vmem:[%s6563 + $0x30] sm:$0x80]
        %v6569 = vld [vmem:[%s6563 + $0x38] sm:$0x80]
        %v6570 = vld [vmem:[%s6563 + $0x40] sm:$0x7f]
        %v6571 = vld [vmem:[%s6563 + $0x48] sm:$0x7f]
        %v6572 = vld [vmem:[%s6563 + $0x60] sm:$0x80]
        %v6573 = vld [vmem:[%s6563 + $0x68] sm:$0x80]
        %v6574 = vld [vmem:[%s6563 + $0x70] sm:$0x7f]
        %v6575 = vld [vmem:[%s6563 + $0x78] sm:$0x7f]
        %v6576 = vld [vmem:[%s6563 + $0x90] sm:$0x80]
        %v6577 = vld [vmem:[%s6563 + $0x98] sm:$0x80]
        %v6578 = vld [vmem:[%s6563 + $0xa0] sm:$0x7f]
        %v6579 = vld [vmem:[%s6563 + $0xa8] sm:$0x7f]
        %v6580 = vshrl.u32 %v6374, 16
        %v6581 = vpack.i.b16 %v6580, %v6580
        %v6583 = vlaneseq
        %v6584 = vshrl.u32 %v6583, 7
        %v6585 = vsub.s32 2, %v6584
        %v6586 = vrot.slane %v6581, %v6585
        %v6587 = vshrl.u32 %v6375, 16
        %v6588 = vpack.i.b16 %v6587, %v6587
        %v6590 = vlaneseq
        %v6591 = vshrl.u32 %v6590, 7
        %v6592 = vsub.s32 2, %v6591
        %v6593 = vrot.slane %v6588, %v6592
        %v6594 = vmul.bf16 %v6564, %v6586
        %v6595 = vmul.bf16 %v6565, %v6593
        %v6596 = vmul.bf16 %v6566, %v6586
        %v6597 = vmul.bf16 %v6567, %v6593
        %v6598 = vmul.bf16 %v6568, %v6586
        %v6599 = vmul.bf16 %v6569, %v6593
        %v6600 = vmul.bf16 %v6570, %v6586
        %v6601 = vmul.bf16 %v6571, %v6593
        %v6602 = vmul.bf16 %v6572, %v6586
        %v6603 = vmul.bf16 %v6573, %v6593
        %v6604 = vmul.bf16 %v6574, %v6586
        %v6605 = vmul.bf16 %v6575, %v6593
        %v6606 = vmul.bf16 %v6576, %v6586
        %v6607 = vmul.bf16 %v6577, %v6593
        %v6608 = vmul.bf16 %v6578, %v6586
        %v6609 = vmul.bf16 %v6579, %v6593
        %v6610 = vld [vmem:[%s6563 + $0x10] sm:$0xff]
        %v6611 = vld [vmem:[%s6563 + $0x18] sm:$0xff]
        %v6612 = vld [vmem:[%s6563 + $0x40] sm:$0xff]
        %v6613 = vld [vmem:[%s6563 + $0x48] sm:$0xff]
        %v6614 = vld [vmem:[%s6563 + $0x70] sm:$0xff]
        %v6615 = vld [vmem:[%s6563 + $0x78] sm:$0xff]
        %v6616 = vld [vmem:[%s6563 + $0xa0] sm:$0xff]
        %v6617 = vld [vmem:[%s6563 + $0xa8] sm:$0xff]
        %v6618 = vld [vmem:[%s13] sm:$0x88]
        %v6620 = vunpack.c.l.b16 %v6618
        %v6621 = vunpack.c.h.b16 %v6618
        %v6622 = vpack.c.b16 %v6620, %v6620
        %v6623 = vpack.c.b16 %v6621, %v6621
        %v6625 = vpack.i.b16 %v6622, %v6622
        %v6627 = vlaneseq
        %v6628 = vshrl.u32 %v6627, 7
        %v6629 = vsub.s32 3, %v6628
        %v6630 = vrot.slane %v6625, %v6629
        %v6632 = vpack.i.b16 %v6623, %v6623
        %v6634 = vlaneseq
        %v6635 = vshrl.u32 %v6634, 7
        %v6636 = vsub.s32 3, %v6635
        %v6637 = vrot.slane %v6632, %v6636
        %v6638 = vmul.bf16 %v6564, %v6630
        %v6639 = vmul.bf16 %v6565, %v6637
        %v6640 = vmul.bf16 %v6610, %v6630
        %v6641 = vmul.bf16 %v6611, %v6637
        %v6642 = vmul.bf16 %v6568, %v6630
        %v6643 = vmul.bf16 %v6569, %v6637
        %v6644 = vmul.bf16 %v6612, %v6630
        %v6645 = vmul.bf16 %v6613, %v6637
        %v6646 = vmul.bf16 %v6572, %v6630
        %v6647 = vmul.bf16 %v6573, %v6637
        %v6648 = vmul.bf16 %v6614, %v6630
        %v6649 = vmul.bf16 %v6615, %v6637
        %v6650 = vmul.bf16 %v6576, %v6630
        %v6651 = vmul.bf16 %v6577, %v6637
        %v6652 = vmul.bf16 %v6616, %v6630
        %v6653 = vmul.bf16 %v6617, %v6637
        %v6655 = vshrl.u32 %v6638, 16
        %v6658 = vshll.u32 %v6640, 16
        %v6660 = vrot.slane %v6658, 1
        %v6661 = vsel %vm5998, %v6655, %v6660
        %v6663 = vshrl.u32 %v6639, 16
        %v6666 = vshll.u32 %v6641, 16
        %v6668 = vrot.slane %v6666, 1
        %v6669 = vsel %vm5998, %v6663, %v6668
        %v6670 = vshrl.u32 %v6640, 16
        %v6672 = vor.u32 %v6670, %v6660
        %v6673 = vshrl.u32 %v6641, 16
        %v6675 = vor.u32 %v6673, %v6668
        %v6677 = vshrl.u32 %v6642, 16
        %v6680 = vshll.u32 %v6644, 16
        %v6682 = vrot.slane %v6680, 1
        %v6683 = vsel %vm5998, %v6677, %v6682
        %v6685 = vshrl.u32 %v6643, 16
        %v6688 = vshll.u32 %v6645, 16
        %v6690 = vrot.slane %v6688, 1
        %v6691 = vsel %vm5998, %v6685, %v6690
        %v6692 = vshrl.u32 %v6644, 16
        %v6694 = vor.u32 %v6692, %v6682
        %v6695 = vshrl.u32 %v6645, 16
        %v6697 = vor.u32 %v6695, %v6690
        %v6699 = vshrl.u32 %v6646, 16
        %v6702 = vshll.u32 %v6648, 16
        %v6704 = vrot.slane %v6702, 1
        %v6705 = vsel %vm5998, %v6699, %v6704
        %v6707 = vshrl.u32 %v6647, 16
        %v6710 = vshll.u32 %v6649, 16
        %v6712 = vrot.slane %v6710, 1
        %v6713 = vsel %vm5998, %v6707, %v6712
        %v6714 = vshrl.u32 %v6648, 16
        %v6716 = vor.u32 %v6714, %v6704
        %v6717 = vshrl.u32 %v6649, 16
        %v6719 = vor.u32 %v6717, %v6712
        %v6721 = vshrl.u32 %v6650, 16
        %v6724 = vshll.u32 %v6652, 16
        %v6726 = vrot.slane %v6724, 1
        %v6727 = vsel %vm5998, %v6721, %v6726
        %v6729 = vshrl.u32 %v6651, 16
        %v6732 = vshll.u32 %v6653, 16
        %v6734 = vrot.slane %v6732, 1
        %v6735 = vsel %vm5998, %v6729, %v6734
        %v6736 = vshrl.u32 %v6652, 16
        %v6738 = vor.u32 %v6736, %v6726
        %v6739 = vshrl.u32 %v6653, 16
        %v6741 = vor.u32 %v6739, %v6734
        %v6758 = vadd.bf16 %v6594, %v6661
        %v6759 = vadd.bf16 %v6595, %v6669
        %v6760 = vadd.bf16 %v6596, %v6672
        %v6761 = vadd.bf16 %v6597, %v6675
        %v6762 = vadd.bf16 %v6598, %v6683
        %v6763 = vadd.bf16 %v6599, %v6691
        %v6764 = vadd.bf16 %v6600, %v6694
        %v6765 = vadd.bf16 %v6601, %v6697
        %v6766 = vadd.bf16 %v6602, %v6705
        %v6767 = vadd.bf16 %v6603, %v6713
        %v6768 = vadd.bf16 %v6604, %v6716
        %v6769 = vadd.bf16 %v6605, %v6719
        %v6770 = vadd.bf16 %v6606, %v6727
        %v6771 = vadd.bf16 %v6607, %v6735
        %v6772 = vadd.bf16 %v6608, %v6738
        %v6773 = vadd.bf16 %v6609, %v6741
        %v6774 = vshrl.u32 %v6622, 16
        %v6775 = vpack.i.b16 %v6774, %v6774
        %v6777 = vlaneseq
        %v6778 = vshrl.u32 %v6777, 7
        %v6779 = vsub.s32 3, %v6778
        %v6780 = vrot.slane %v6775, %v6779
        %v6781 = vshrl.u32 %v6623, 16
        %v6782 = vpack.i.b16 %v6781, %v6781
        %v6784 = vlaneseq
        %v6785 = vshrl.u32 %v6784, 7
        %v6786 = vsub.s32 3, %v6785
        %v6787 = vrot.slane %v6782, %v6786
        %v6788 = vmul.bf16 %v6610, %v6780
        %v6789 = vmul.bf16 %v6611, %v6787
        %v6790 = vmul.bf16 %v6612, %v6780
        %v6791 = vmul.bf16 %v6613, %v6787
        %v6792 = vmul.bf16 %v6614, %v6780
        %v6793 = vmul.bf16 %v6615, %v6787
        %v6794 = vmul.bf16 %v6616, %v6780
        %v6795 = vmul.bf16 %v6617, %v6787
        %v6804 = vrot.slane %v6788, 1
        %v6805 = vrot.slane %v6789, 1
        %v6806 = vrot.slane %v6790, 1
        %v6807 = vrot.slane %v6791, 1
        %v6808 = vrot.slane %v6792, 1
        %v6809 = vrot.slane %v6793, 1
        %v6810 = vrot.slane %v6794, 1
        %v6811 = vrot.slane %v6795, 1
        %v6820 = vadd.bf16 %v6758, %v6804
        %v6821 = vadd.bf16 %v6759, %v6805
        %v6822 = vadd.bf16 %v6760, %v6804
        %v6823 = vadd.bf16 %v6761, %v6805
        %v6824 = vadd.bf16 %v6762, %v6806
        %v6825 = vadd.bf16 %v6763, %v6807
        %v6826 = vadd.bf16 %v6764, %v6806
        %v6827 = vadd.bf16 %v6765, %v6807
        %v6828 = vadd.bf16 %v6766, %v6808
        %v6829 = vadd.bf16 %v6767, %v6809
        %v6830 = vadd.bf16 %v6768, %v6808
        %v6831 = vadd.bf16 %v6769, %v6809
        %v6832 = vadd.bf16 %v6770, %v6810
        %v6833 = vadd.bf16 %v6771, %v6811
        %v6834 = vadd.bf16 %v6772, %v6810
        %v6835 = vadd.bf16 %v6773, %v6811
        %v6836 = vld [vmem:[%s6563 + $0x20] sm:$0x1]
        %v6837 = vld [vmem:[%s6563 + $0x28] sm:$0x1]
        %v6838 = vld [vmem:[%s6563 + $0x50] sm:$0x1]
        %v6839 = vld [vmem:[%s6563 + $0x58] sm:$0x1]
        %v6840 = vld [vmem:[%s6563 + $0x80] sm:$0x1]
        %v6841 = vld [vmem:[%s6563 + $0x88] sm:$0x1]
        %v6842 = vld [vmem:[%s6563 + $0xb0] sm:$0x1]
        %v6843 = vld [vmem:[%s6563 + $0xb8] sm:$0x1]
        %v6844 = vld [vmem:[%s13 + $0x8] sm:$0x11]
        %v6846 = vunpack.c.l.b16 %v6844
        %v6847 = vunpack.c.h.b16 %v6844
        %v6848 = vpack.c.b16 %v6846, %v6846
        %v6849 = vpack.c.b16 %v6847, %v6847
        %v6851 = vpack.i.b16 %v6848, %v6848
        %v6853 = vlaneseq
        %v6854 = vshrl.u32 %v6853, 7
        %v6855 = vsub.s32 0, %v6854
        %v6856 = vrot.slane %v6851, %v6855
        %v6858 = vpack.i.b16 %v6849, %v6849
        %v6860 = vlaneseq
        %v6861 = vshrl.u32 %v6860, 7
        %v6862 = vsub.s32 0, %v6861
        %v6863 = vrot.slane %v6858, %v6862
        %v6864 = vmul.bf16 %v6610, %v6856
        %v6865 = vmul.bf16 %v6611, %v6863
        %v6866 = vmul.bf16 %v6836, %v6856
        %v6867 = vmul.bf16 %v6837, %v6863
        %v6868 = vmul.bf16 %v6612, %v6856
        %v6869 = vmul.bf16 %v6613, %v6863
        %v6870 = vmul.bf16 %v6838, %v6856
        %v6871 = vmul.bf16 %v6839, %v6863
        %v6872 = vmul.bf16 %v6614, %v6856
        %v6873 = vmul.bf16 %v6615, %v6863
        %v6874 = vmul.bf16 %v6840, %v6856
        %v6875 = vmul.bf16 %v6841, %v6863
        %v6876 = vmul.bf16 %v6616, %v6856
        %v6877 = vmul.bf16 %v6617, %v6863
        %v6878 = vmul.bf16 %v6842, %v6856
        %v6879 = vmul.bf16 %v6843, %v6863
        %v6881 = vshrl.u32 %v6864, 16
        %v6883 = vrot.slane %v6881, 1
        %v6884 = vshll.u32 %v6864, 16
        %v6886 = vrot.slane %v6884, 2
        %v6887 = vor.u32 %v6883, %v6886
        %v6889 = vshrl.u32 %v6865, 16
        %v6891 = vrot.slane %v6889, 1
        %v6892 = vshll.u32 %v6865, 16
        %v6894 = vrot.slane %v6892, 2
        %v6895 = vor.u32 %v6891, %v6894
        %v6897 = vshll.u32 %v6866, 16
        %v6899 = vrot.slane %v6897, 2
        %v6900 = vsel %vm6225, %v6887, %v6899
        %v6902 = vshll.u32 %v6867, 16
        %v6904 = vrot.slane %v6902, 2
        %v6905 = vsel %vm6225, %v6895, %v6904
        %v6907 = vshrl.u32 %v6868, 16
        %v6909 = vrot.slane %v6907, 1
        %v6910 = vshll.u32 %v6868, 16
        %v6912 = vrot.slane %v6910, 2
        %v6913 = vor.u32 %v6909, %v6912
        %v6915 = vshrl.u32 %v6869, 16
        %v6917 = vrot.slane %v6915, 1
        %v6918 = vshll.u32 %v6869, 16
        %v6920 = vrot.slane %v6918, 2
        %v6921 = vor.u32 %v6917, %v6920
        %v6923 = vshll.u32 %v6870, 16
        %v6925 = vrot.slane %v6923, 2
        %v6926 = vsel %vm6225, %v6913, %v6925
        %v6928 = vshll.u32 %v6871, 16
        %v6930 = vrot.slane %v6928, 2
        %v6931 = vsel %vm6225, %v6921, %v6930
        %v6933 = vshrl.u32 %v6872, 16
        %v6935 = vrot.slane %v6933, 1
        %v6936 = vshll.u32 %v6872, 16
        %v6938 = vrot.slane %v6936, 2
        %v6939 = vor.u32 %v6935, %v6938
        %v6941 = vshrl.u32 %v6873, 16
        %v6943 = vrot.slane %v6941, 1
        %v6944 = vshll.u32 %v6873, 16
        %v6946 = vrot.slane %v6944, 2
        %v6947 = vor.u32 %v6943, %v6946
        %v6949 = vshll.u32 %v6874, 16
        %v6951 = vrot.slane %v6949, 2
        %v6952 = vsel %vm6225, %v6939, %v6951
        %v6954 = vshll.u32 %v6875, 16
        %v6956 = vrot.slane %v6954, 2
        %v6957 = vsel %vm6225, %v6947, %v6956
        %v6959 = vshrl.u32 %v6876, 16
        %v6961 = vrot.slane %v6959, 1
        %v6962 = vshll.u32 %v6876, 16
        %v6964 = vrot.slane %v6962, 2
        %v6965 = vor.u32 %v6961, %v6964
        %v6967 = vshrl.u32 %v6877, 16
        %v6969 = vrot.slane %v6967, 1
        %v6970 = vshll.u32 %v6877, 16
        %v6972 = vrot.slane %v6970, 2
        %v6973 = vor.u32 %v6969, %v6972
        %v6975 = vshll.u32 %v6878, 16
        %v6977 = vrot.slane %v6975, 2
        %v6978 = vsel %vm6225, %v6965, %v6977
        %v6980 = vshll.u32 %v6879, 16
        %v6982 = vrot.slane %v6980, 2
        %v6983 = vsel %vm6225, %v6973, %v6982
        %v7000 = vadd.bf16 %v6820, %v6887
        %v7001 = vadd.bf16 %v6821, %v6895
        %v7002 = vadd.bf16 %v6822, %v6900
        %v7003 = vadd.bf16 %v6823, %v6905
        %v7004 = vadd.bf16 %v6824, %v6913
        %v7005 = vadd.bf16 %v6825, %v6921
        %v7006 = vadd.bf16 %v6826, %v6926
        %v7007 = vadd.bf16 %v6827, %v6931
        %v7008 = vadd.bf16 %v6828, %v6939
        %v7009 = vadd.bf16 %v6829, %v6947
        %v7010 = vadd.bf16 %v6830, %v6952
        %v7011 = vadd.bf16 %v6831, %v6957
        %v7012 = vadd.bf16 %v6832, %v6965
        %v7013 = vadd.bf16 %v6833, %v6973
        %v7014 = vadd.bf16 %v6834, %v6978
        %v7015 = vadd.bf16 %v6835, %v6983
        %v7016 = vld [vmem:[%s6563 + $0x10] sm:$0xfe]
        %v7017 = vld [vmem:[%s6563 + $0x18] sm:$0xfe]
        %v7018 = vld [vmem:[%s6563 + $0x40] sm:$0xfe]
        %v7019 = vld [vmem:[%s6563 + $0x48] sm:$0xfe]
        %v7020 = vld [vmem:[%s6563 + $0x70] sm:$0xfe]
        %v7021 = vld [vmem:[%s6563 + $0x78] sm:$0xfe]
        %v7022 = vld [vmem:[%s6563 + $0xa0] sm:$0xfe]
        %v7023 = vld [vmem:[%s6563 + $0xa8] sm:$0xfe]
        %v7024 = vshrl.u32 %v6848, 16
        %v7025 = vpack.i.b16 %v7024, %v7024
        %v7027 = vlaneseq
        %v7028 = vshrl.u32 %v7027, 7
        %v7029 = vsub.s32 0, %v7028
        %v7030 = vrot.slane %v7025, %v7029
        %v7031 = vshrl.u32 %v6849, 16
        %v7032 = vpack.i.b16 %v7031, %v7031
        %v7034 = vlaneseq
        %v7035 = vshrl.u32 %v7034, 7
        %v7036 = vsub.s32 0, %v7035
        %v7037 = vrot.slane %v7032, %v7036
        %v7038 = vmul.bf16 %v7016, %v7030
        %v7039 = vmul.bf16 %v7017, %v7037
        %v7040 = vmul.bf16 %v6836, %v7030
        %v7041 = vmul.bf16 %v6837, %v7037
        %v7042 = vmul.bf16 %v7018, %v7030
        %v7043 = vmul.bf16 %v7019, %v7037
        %v7044 = vmul.bf16 %v6838, %v7030
        %v7045 = vmul.bf16 %v6839, %v7037
        %v7046 = vmul.bf16 %v7020, %v7030
        %v7047 = vmul.bf16 %v7021, %v7037
        %v7048 = vmul.bf16 %v6840, %v7030
        %v7049 = vmul.bf16 %v6841, %v7037
        %v7050 = vmul.bf16 %v7022, %v7030
        %v7051 = vmul.bf16 %v7023, %v7037
        %v7052 = vmul.bf16 %v6842, %v7030
        %v7053 = vmul.bf16 %v6843, %v7037
        %v7070 = vrot.slane %v7038, 2
        %v7071 = vrot.slane %v7039, 2
        %v7072 = vrot.slane %v7040, 2
        %v7073 = vsel %vm6422, %v7070, %v7072
        %v7074 = vrot.slane %v7041, 2
        %v7075 = vsel %vm6422, %v7071, %v7074
        %v7076 = vrot.slane %v7042, 2
        %v7077 = vrot.slane %v7043, 2
        %v7078 = vrot.slane %v7044, 2
        %v7079 = vsel %vm6422, %v7076, %v7078
        %v7080 = vrot.slane %v7045, 2
        %v7081 = vsel %vm6422, %v7077, %v7080
        %v7082 = vrot.slane %v7046, 2
        %v7083 = vrot.slane %v7047, 2
        %v7084 = vrot.slane %v7048, 2
        %v7085 = vsel %vm6422, %v7082, %v7084
        %v7086 = vrot.slane %v7049, 2
        %v7087 = vsel %vm6422, %v7083, %v7086
        %v7088 = vrot.slane %v7050, 2
        %v7089 = vrot.slane %v7051, 2
        %v7090 = vrot.slane %v7052, 2
        %v7091 = vsel %vm6422, %v7088, %v7090
        %v7092 = vrot.slane %v7053, 2
        %v7093 = vsel %vm6422, %v7089, %v7092
        %v7110 = vadd.bf16 %v7000, %v7070
        %v7111 = vadd.bf16 %v7001, %v7071
        %v7112 = vadd.bf16 %v7002, %v7073
        %v7113 = vadd.bf16 %v7003, %v7075
        %v7114 = vadd.bf16 %v7004, %v7076
        %v7115 = vadd.bf16 %v7005, %v7077
        %v7116 = vadd.bf16 %v7006, %v7079
        %v7117 = vadd.bf16 %v7007, %v7081
        %v7118 = vadd.bf16 %v7008, %v7082
        %v7119 = vadd.bf16 %v7009, %v7083
        %v7120 = vadd.bf16 %v7010, %v7085
        %v7121 = vadd.bf16 %v7011, %v7087
        %v7122 = vadd.bf16 %v7012, %v7088
        %v7123 = vadd.bf16 %v7013, %v7089
        %v7124 = vadd.bf16 %v7014, %v7091
        %v7125 = vadd.bf16 %v7015, %v7093
        %v7142 = vrot.slane %v7110, 4
        %v7143 = vrot.slane %v7112, 4
        %v7144 = vsel %vm6495, %v7142, %v7143
        %v7145 = vrot.slane %v7111, 4
        %v7146 = vrot.slane %v7113, 4
        %v7147 = vsel %vm6495, %v7145, %v7146
        %v7148 = vrot.slane %v7114, 4
        %v7149 = vrot.slane %v7116, 4
        %v7150 = vsel %vm6495, %v7148, %v7149
        %v7151 = vrot.slane %v7115, 4
        %v7152 = vrot.slane %v7117, 4
        %v7153 = vsel %vm6495, %v7151, %v7152
        %v7154 = vrot.slane %v7118, 4
        %v7155 = vrot.slane %v7120, 4
        %v7156 = vsel %vm6495, %v7154, %v7155
        %v7157 = vrot.slane %v7119, 4
        %v7158 = vrot.slane %v7121, 4
        %v7159 = vsel %vm6495, %v7157, %v7158
        %v7160 = vrot.slane %v7122, 4
        %v7161 = vrot.slane %v7124, 4
        %v7162 = vsel %vm6495, %v7160, %v7161
        %v7163 = vrot.slane %v7123, 4
        %v7164 = vrot.slane %v7125, 4
        %v7165 = vsel %vm6495, %v7163, %v7164
        %v7182 = vunpack.c.l.bf16 %v7144
        %v7183 = vunpack.c.l.bf16 %v7147
        %v7184 = vunpack.c.h.bf16 %v7144
        %v7185 = vunpack.c.h.bf16 %v7147
        %v7186 = vunpack.c.l.bf16 %v7143
        %v7187 = vunpack.c.l.bf16 %v7146
        %v7188 = vunpack.c.l.bf16 %v7150
        %v7189 = vunpack.c.l.bf16 %v7153
        %v7190 = vunpack.c.h.bf16 %v7150
        %v7191 = vunpack.c.h.bf16 %v7153
        %v7192 = vunpack.c.l.bf16 %v7149
        %v7193 = vunpack.c.l.bf16 %v7152
        %v7194 = vunpack.c.l.bf16 %v7156
        %v7195 = vunpack.c.l.bf16 %v7159
        %v7196 = vunpack.c.h.bf16 %v7156
        %v7197 = vunpack.c.h.bf16 %v7159
        %v7198 = vunpack.c.l.bf16 %v7155
        %v7199 = vunpack.c.l.bf16 %v7158
        %v7200 = vunpack.c.l.bf16 %v7162
        %v7201 = vunpack.c.l.bf16 %v7165
        %v7202 = vunpack.c.h.bf16 %v7162
        %v7203 = vunpack.c.h.bf16 %v7165
        %v7204 = vunpack.c.l.bf16 %v7161
        %v7205 = vunpack.c.l.bf16 %v7164
        %v7206 = vadd.f32 %v6536, %v7182
        %v7207 = vadd.f32 %v6537, %v7183
        %v7208 = vadd.f32 %v6538, %v7184
        %v7209 = vadd.f32 %v6539, %v7185
        %v7210 = vadd.f32 %v6540, %v7186
        %v7211 = vadd.f32 %v6541, %v7187
        %v7212 = vadd.f32 %v6542, %v7188
        %v7213 = vadd.f32 %v6543, %v7189
        %v7214 = vadd.f32 %v6544, %v7190
        %v7215 = vadd.f32 %v6545, %v7191
        %v7216 = vadd.f32 %v6546, %v7192
        %v7217 = vadd.f32 %v6547, %v7193
        %v7218 = vadd.f32 %v6548, %v7194
        %v7219 = vadd.f32 %v6549, %v7195
        %v7220 = vadd.f32 %v6550, %v7196
        %v7221 = vadd.f32 %v6551, %v7197
        %v7222 = vadd.f32 %v6552, %v7198
        %v7223 = vadd.f32 %v6553, %v7199
        %v7224 = vadd.f32 %v6554, %v7200
        %v7225 = vadd.f32 %v6555, %v7201
        %v7226 = vadd.f32 %v6556, %v7202
        %v7227 = vadd.f32 %v6557, %v7203
        %v7228 = vadd.f32 %v6558, %v7204
        %v7229 = vadd.f32 %v6559, %v7205
        %s7230 = sadd.s32 %s5904, 2
        %s7231 = smul.u32 %s7230, 6
        %s7232 = smul.addr %s7231, 8
        %s7233 = scalar_lea.vmem [#allocation4], %s7232
        %v7234 = vld [vmem:[%s7233] sm:$0x80]
        %v7235 = vld [vmem:[%s7233 + $0x8] sm:$0x80]
        %v7236 = vld [vmem:[%s7233 + $0x10] sm:$0x7f]
        %v7237 = vld [vmem:[%s7233 + $0x18] sm:$0x7f]
        %v7238 = vld [vmem:[%s7233 + $0x30] sm:$0x80]
        %v7239 = vld [vmem:[%s7233 + $0x38] sm:$0x80]
        %v7240 = vld [vmem:[%s7233 + $0x40] sm:$0x7f]
        %v7241 = vld [vmem:[%s7233 + $0x48] sm:$0x7f]
        %v7242 = vld [vmem:[%s7233 + $0x60] sm:$0x80]
        %v7243 = vld [vmem:[%s7233 + $0x68] sm:$0x80]
        %v7244 = vld [vmem:[%s7233 + $0x70] sm:$0x7f]
        %v7245 = vld [vmem:[%s7233 + $0x78] sm:$0x7f]
        %v7246 = vld [vmem:[%s7233 + $0x90] sm:$0x80]
        %v7247 = vld [vmem:[%s7233 + $0x98] sm:$0x80]
        %v7248 = vld [vmem:[%s7233 + $0xa0] sm:$0x7f]
        %v7249 = vld [vmem:[%s7233 + $0xa8] sm:$0x7f]
        %v7250 = vld [vmem:[%s13 + $0x8] sm:$0x22]
        %v7252 = vunpack.c.l.b16 %v7250
        %v7253 = vunpack.c.h.b16 %v7250
        %v7254 = vpack.c.b16 %v7252, %v7252
        %v7255 = vpack.c.b16 %v7253, %v7253
        %v7257 = vpack.i.b16 %v7254, %v7254
        %v7259 = vlaneseq
        %v7260 = vshrl.u32 %v7259, 7
        %v7261 = vsub.s32 1, %v7260
        %v7262 = vrot.slane %v7257, %v7261
        %v7264 = vpack.i.b16 %v7255, %v7255
        %v7266 = vlaneseq
        %v7267 = vshrl.u32 %v7266, 7
        %v7268 = vsub.s32 1, %v7267
        %v7269 = vrot.slane %v7264, %v7268
        %v7270 = vmul.bf16 %v7234, %v7262
        %v7271 = vmul.bf16 %v7235, %v7269
        %v7272 = vmul.bf16 %v7236, %v7262
        %v7273 = vmul.bf16 %v7237, %v7269
        %v7274 = vmul.bf16 %v7238, %v7262
        %v7275 = vmul.bf16 %v7239, %v7269
        %v7276 = vmul.bf16 %v7240, %v7262
        %v7277 = vmul.bf16 %v7241, %v7269
        %v7278 = vmul.bf16 %v7242, %v7262
        %v7279 = vmul.bf16 %v7243, %v7269
        %v7280 = vmul.bf16 %v7244, %v7262
        %v7281 = vmul.bf16 %v7245, %v7269
        %v7282 = vmul.bf16 %v7246, %v7262
        %v7283 = vmul.bf16 %v7247, %v7269
        %v7284 = vmul.bf16 %v7248, %v7262
        %v7285 = vmul.bf16 %v7249, %v7269
        %v7286 = vld [vmem:[%s7233 + $0x10] sm:$0xff]
        %v7287 = vld [vmem:[%s7233 + $0x18] sm:$0xff]
        %v7288 = vld [vmem:[%s7233 + $0x40] sm:$0xff]
        %v7289 = vld [vmem:[%s7233 + $0x48] sm:$0xff]
        %v7290 = vld [vmem:[%s7233 + $0x70] sm:$0xff]
        %v7291 = vld [vmem:[%s7233 + $0x78] sm:$0xff]
        %v7292 = vld [vmem:[%s7233 + $0xa0] sm:$0xff]
        %v7293 = vld [vmem:[%s7233 + $0xa8] sm:$0xff]
        %v7294 = vshrl.u32 %v7254, 16
        %v7295 = vpack.i.b16 %v7294, %v7294
        %v7297 = vlaneseq
        %v7298 = vshrl.u32 %v7297, 7
        %v7299 = vsub.s32 1, %v7298
        %v7300 = vrot.slane %v7295, %v7299
        %v7301 = vshrl.u32 %v7255, 16
        %v7302 = vpack.i.b16 %v7301, %v7301
        %v7304 = vlaneseq
        %v7305 = vshrl.u32 %v7304, 7
        %v7306 = vsub.s32 1, %v7305
        %v7307 = vrot.slane %v7302, %v7306
        %v7308 = vmul.bf16 %v7234, %v7300
        %v7309 = vmul.bf16 %v7235, %v7307
        %v7310 = vmul.bf16 %v7286, %v7300
        %v7311 = vmul.bf16 %v7287, %v7307
        %v7312 = vmul.bf16 %v7238, %v7300
        %v7313 = vmul.bf16 %v7239, %v7307
        %v7314 = vmul.bf16 %v7288, %v7300
        %v7315 = vmul.bf16 %v7289, %v7307
        %v7316 = vmul.bf16 %v7242, %v7300
        %v7317 = vmul.bf16 %v7243, %v7307
        %v7318 = vmul.bf16 %v7290, %v7300
        %v7319 = vmul.bf16 %v7291, %v7307
        %v7320 = vmul.bf16 %v7246, %v7300
        %v7321 = vmul.bf16 %v7247, %v7307
        %v7322 = vmul.bf16 %v7292, %v7300
        %v7323 = vmul.bf16 %v7293, %v7307
        %v7325 = vshrl.u32 %v7308, 16
        %v7328 = vshll.u32 %v7310, 16
        %v7330 = vrot.slane %v7328, 1
        %v7331 = vsel %vm5998, %v7325, %v7330
        %v7333 = vshrl.u32 %v7309, 16
        %v7336 = vshll.u32 %v7311, 16
        %v7338 = vrot.slane %v7336, 1
        %v7339 = vsel %vm5998, %v7333, %v7338
        %v7340 = vshrl.u32 %v7310, 16
        %v7342 = vor.u32 %v7340, %v7330
        %v7343 = vshrl.u32 %v7311, 16
        %v7345 = vor.u32 %v7343, %v7338
        %v7347 = vshrl.u32 %v7312, 16
        %v7350 = vshll.u32 %v7314, 16
        %v7352 = vrot.slane %v7350, 1
        %v7353 = vsel %vm5998, %v7347, %v7352
        %v7355 = vshrl.u32 %v7313, 16
        %v7358 = vshll.u32 %v7315, 16
        %v7360 = vrot.slane %v7358, 1
        %v7361 = vsel %vm5998, %v7355, %v7360
        %v7362 = vshrl.u32 %v7314, 16
        %v7364 = vor.u32 %v7362, %v7352
        %v7365 = vshrl.u32 %v7315, 16
        %v7367 = vor.u32 %v7365, %v7360
        %v7369 = vshrl.u32 %v7316, 16
        %v7372 = vshll.u32 %v7318, 16
        %v7374 = vrot.slane %v7372, 1
        %v7375 = vsel %vm5998, %v7369, %v7374
        %v7377 = vshrl.u32 %v7317, 16
        %v7380 = vshll.u32 %v7319, 16
        %v7382 = vrot.slane %v7380, 1
        %v7383 = vsel %vm5998, %v7377, %v7382
        %v7384 = vshrl.u32 %v7318, 16
        %v7386 = vor.u32 %v7384, %v7374
        %v7387 = vshrl.u32 %v7319, 16
        %v7389 = vor.u32 %v7387, %v7382
        %v7391 = vshrl.u32 %v7320, 16
        %v7394 = vshll.u32 %v7322, 16
        %v7396 = vrot.slane %v7394, 1
        %v7397 = vsel %vm5998, %v7391, %v7396
        %v7399 = vshrl.u32 %v7321, 16
        %v7402 = vshll.u32 %v7323, 16
        %v7404 = vrot.slane %v7402, 1
        %v7405 = vsel %vm5998, %v7399, %v7404
        %v7406 = vshrl.u32 %v7322, 16
        %v7408 = vor.u32 %v7406, %v7396
        %v7409 = vshrl.u32 %v7323, 16
        %v7411 = vor.u32 %v7409, %v7404
        %v7428 = vadd.bf16 %v7270, %v7331
        %v7429 = vadd.bf16 %v7271, %v7339
        %v7430 = vadd.bf16 %v7272, %v7342
        %v7431 = vadd.bf16 %v7273, %v7345
        %v7432 = vadd.bf16 %v7274, %v7353
        %v7433 = vadd.bf16 %v7275, %v7361
        %v7434 = vadd.bf16 %v7276, %v7364
        %v7435 = vadd.bf16 %v7277, %v7367
        %v7436 = vadd.bf16 %v7278, %v7375
        %v7437 = vadd.bf16 %v7279, %v7383
        %v7438 = vadd.bf16 %v7280, %v7386
        %v7439 = vadd.bf16 %v7281, %v7389
        %v7440 = vadd.bf16 %v7282, %v7397
        %v7441 = vadd.bf16 %v7283, %v7405
        %v7442 = vadd.bf16 %v7284, %v7408
        %v7443 = vadd.bf16 %v7285, %v7411
        %v7444 = vld [vmem:[%s13 + $0x8] sm:$0x44]
        %v7446 = vunpack.c.l.b16 %v7444
        %v7447 = vunpack.c.h.b16 %v7444
        %v7448 = vpack.c.b16 %v7446, %v7446
        %v7449 = vpack.c.b16 %v7447, %v7447
        %v7451 = vpack.i.b16 %v7448, %v7448
        %v7453 = vlaneseq
        %v7454 = vshrl.u32 %v7453, 7
        %v7455 = vsub.s32 2, %v7454
        %v7456 = vrot.slane %v7451, %v7455
        %v7458 = vpack.i.b16 %v7449, %v7449
        %v7460 = vlaneseq
        %v7461 = vshrl.u32 %v7460, 7
        %v7462 = vsub.s32 2, %v7461
        %v7463 = vrot.slane %v7458, %v7462
        %v7464 = vmul.bf16 %v7286, %v7456
        %v7465 = vmul.bf16 %v7287, %v7463
        %v7466 = vmul.bf16 %v7288, %v7456
        %v7467 = vmul.bf16 %v7289, %v7463
        %v7468 = vmul.bf16 %v7290, %v7456
        %v7469 = vmul.bf16 %v7291, %v7463
        %v7470 = vmul.bf16 %v7292, %v7456
        %v7471 = vmul.bf16 %v7293, %v7463
        %v7480 = vrot.slane %v7464, 1
        %v7481 = vrot.slane %v7465, 1
        %v7482 = vrot.slane %v7466, 1
        %v7483 = vrot.slane %v7467, 1
        %v7484 = vrot.slane %v7468, 1
        %v7485 = vrot.slane %v7469, 1
        %v7486 = vrot.slane %v7470, 1
        %v7487 = vrot.slane %v7471, 1
        %v7496 = vadd.bf16 %v7428, %v7480
        %v7497 = vadd.bf16 %v7429, %v7481
        %v7498 = vadd.bf16 %v7430, %v7480
        %v7499 = vadd.bf16 %v7431, %v7481
        %v7500 = vadd.bf16 %v7432, %v7482
        %v7501 = vadd.bf16 %v7433, %v7483
        %v7502 = vadd.bf16 %v7434, %v7482
        %v7503 = vadd.bf16 %v7435, %v7483
        %v7504 = vadd.bf16 %v7436, %v7484
        %v7505 = vadd.bf16 %v7437, %v7485
        %v7506 = vadd.bf16 %v7438, %v7484
        %v7507 = vadd.bf16 %v7439, %v7485
        %v7508 = vadd.bf16 %v7440, %v7486
        %v7509 = vadd.bf16 %v7441, %v7487
        %v7510 = vadd.bf16 %v7442, %v7486
        %v7511 = vadd.bf16 %v7443, %v7487
        %v7512 = vld [vmem:[%s7233 + $0x20] sm:$0x1]
        %v7513 = vld [vmem:[%s7233 + $0x28] sm:$0x1]
        %v7514 = vld [vmem:[%s7233 + $0x50] sm:$0x1]
        %v7515 = vld [vmem:[%s7233 + $0x58] sm:$0x1]
        %v7516 = vld [vmem:[%s7233 + $0x80] sm:$0x1]
        %v7517 = vld [vmem:[%s7233 + $0x88] sm:$0x1]
        %v7518 = vld [vmem:[%s7233 + $0xb0] sm:$0x1]
        %v7519 = vld [vmem:[%s7233 + $0xb8] sm:$0x1]
        %v7520 = vshrl.u32 %v7448, 16
        %v7521 = vpack.i.b16 %v7520, %v7520
        %v7523 = vlaneseq
        %v7524 = vshrl.u32 %v7523, 7
        %v7525 = vsub.s32 2, %v7524
        %v7526 = vrot.slane %v7521, %v7525
        %v7527 = vshrl.u32 %v7449, 16
        %v7528 = vpack.i.b16 %v7527, %v7527
        %v7530 = vlaneseq
        %v7531 = vshrl.u32 %v7530, 7
        %v7532 = vsub.s32 2, %v7531
        %v7533 = vrot.slane %v7528, %v7532
        %v7534 = vmul.bf16 %v7286, %v7526
        %v7535 = vmul.bf16 %v7287, %v7533
        %v7536 = vmul.bf16 %v7512, %v7526
        %v7537 = vmul.bf16 %v7513, %v7533
        %v7538 = vmul.bf16 %v7288, %v7526
        %v7539 = vmul.bf16 %v7289, %v7533
        %v7540 = vmul.bf16 %v7514, %v7526
        %v7541 = vmul.bf16 %v7515, %v7533
        %v7542 = vmul.bf16 %v7290, %v7526
        %v7543 = vmul.bf16 %v7291, %v7533
        %v7544 = vmul.bf16 %v7516, %v7526
        %v7545 = vmul.bf16 %v7517, %v7533
        %v7546 = vmul.bf16 %v7292, %v7526
        %v7547 = vmul.bf16 %v7293, %v7533
        %v7548 = vmul.bf16 %v7518, %v7526
        %v7549 = vmul.bf16 %v7519, %v7533
        %v7551 = vshrl.u32 %v7534, 16
        %v7553 = vrot.slane %v7551, 1
        %v7554 = vshll.u32 %v7534, 16
        %v7556 = vrot.slane %v7554, 2
        %v7557 = vor.u32 %v7553, %v7556
        %v7559 = vshrl.u32 %v7535, 16
        %v7561 = vrot.slane %v7559, 1
        %v7562 = vshll.u32 %v7535, 16
        %v7564 = vrot.slane %v7562, 2
        %v7565 = vor.u32 %v7561, %v7564
        %v7567 = vshll.u32 %v7536, 16
        %v7569 = vrot.slane %v7567, 2
        %v7570 = vsel %vm6225, %v7557, %v7569
        %v7572 = vshll.u32 %v7537, 16
        %v7574 = vrot.slane %v7572, 2
        %v7575 = vsel %vm6225, %v7565, %v7574
        %v7577 = vshrl.u32 %v7538, 16
        %v7579 = vrot.slane %v7577, 1
        %v7580 = vshll.u32 %v7538, 16
        %v7582 = vrot.slane %v7580, 2
        %v7583 = vor.u32 %v7579, %v7582
        %v7585 = vshrl.u32 %v7539, 16
        %v7587 = vrot.slane %v7585, 1
        %v7588 = vshll.u32 %v7539, 16
        %v7590 = vrot.slane %v7588, 2
        %v7591 = vor.u32 %v7587, %v7590
        %v7593 = vshll.u32 %v7540, 16
        %v7595 = vrot.slane %v7593, 2
        %v7596 = vsel %vm6225, %v7583, %v7595
        %v7598 = vshll.u32 %v7541, 16
        %v7600 = vrot.slane %v7598, 2
        %v7601 = vsel %vm6225, %v7591, %v7600
        %v7603 = vshrl.u32 %v7542, 16
        %v7605 = vrot.slane %v7603, 1
        %v7606 = vshll.u32 %v7542, 16
        %v7608 = vrot.slane %v7606, 2
        %v7609 = vor.u32 %v7605, %v7608
        %v7611 = vshrl.u32 %v7543, 16
        %v7613 = vrot.slane %v7611, 1
        %v7614 = vshll.u32 %v7543, 16
        %v7616 = vrot.slane %v7614, 2
        %v7617 = vor.u32 %v7613, %v7616
        %v7619 = vshll.u32 %v7544, 16
        %v7621 = vrot.slane %v7619, 2
        %v7622 = vsel %vm6225, %v7609, %v7621
        %v7624 = vshll.u32 %v7545, 16
        %v7626 = vrot.slane %v7624, 2
        %v7627 = vsel %vm6225, %v7617, %v7626
        %v7629 = vshrl.u32 %v7546, 16
        %v7631 = vrot.slane %v7629, 1
        %v7632 = vshll.u32 %v7546, 16
        %v7634 = vrot.slane %v7632, 2
        %v7635 = vor.u32 %v7631, %v7634
        %v7637 = vshrl.u32 %v7547, 16
        %v7639 = vrot.slane %v7637, 1
        %v7640 = vshll.u32 %v7547, 16
        %v7642 = vrot.slane %v7640, 2
        %v7643 = vor.u32 %v7639, %v7642
        %v7645 = vshll.u32 %v7548, 16
        %v7647 = vrot.slane %v7645, 2
        %v7648 = vsel %vm6225, %v7635, %v7647
        %v7650 = vshll.u32 %v7549, 16
        %v7652 = vrot.slane %v7650, 2
        %v7653 = vsel %vm6225, %v7643, %v7652
        %v7670 = vadd.bf16 %v7496, %v7557
        %v7671 = vadd.bf16 %v7497, %v7565
        %v7672 = vadd.bf16 %v7498, %v7570
        %v7673 = vadd.bf16 %v7499, %v7575
        %v7674 = vadd.bf16 %v7500, %v7583
        %v7675 = vadd.bf16 %v7501, %v7591
        %v7676 = vadd.bf16 %v7502, %v7596
        %v7677 = vadd.bf16 %v7503, %v7601
        %v7678 = vadd.bf16 %v7504, %v7609
        %v7679 = vadd.bf16 %v7505, %v7617
        %v7680 = vadd.bf16 %v7506, %v7622
        %v7681 = vadd.bf16 %v7507, %v7627
        %v7682 = vadd.bf16 %v7508, %v7635
        %v7683 = vadd.bf16 %v7509, %v7643
        %v7684 = vadd.bf16 %v7510, %v7648
        %v7685 = vadd.bf16 %v7511, %v7653
        %v7686 = vld [vmem:[%s7233 + $0x10] sm:$0xfe]
        %v7687 = vld [vmem:[%s7233 + $0x18] sm:$0xfe]
        %v7688 = vld [vmem:[%s7233 + $0x40] sm:$0xfe]
        %v7689 = vld [vmem:[%s7233 + $0x48] sm:$0xfe]
        %v7690 = vld [vmem:[%s7233 + $0x70] sm:$0xfe]
        %v7691 = vld [vmem:[%s7233 + $0x78] sm:$0xfe]
        %v7692 = vld [vmem:[%s7233 + $0xa0] sm:$0xfe]
        %v7693 = vld [vmem:[%s7233 + $0xa8] sm:$0xfe]
        %v7694 = vld [vmem:[%s13 + $0x8] sm:$0x88]
        %v7696 = vunpack.c.l.b16 %v7694
        %v7697 = vunpack.c.h.b16 %v7694
        %v7698 = vpack.c.b16 %v7696, %v7696
        %v7699 = vpack.c.b16 %v7697, %v7697
        %v7701 = vpack.i.b16 %v7698, %v7698
        %v7703 = vlaneseq
        %v7704 = vshrl.u32 %v7703, 7
        %v7705 = vsub.s32 3, %v7704
        %v7706 = vrot.slane %v7701, %v7705
        %v7708 = vpack.i.b16 %v7699, %v7699
        %v7710 = vlaneseq
        %v7711 = vshrl.u32 %v7710, 7
        %v7712 = vsub.s32 3, %v7711
        %v7713 = vrot.slane %v7708, %v7712
        %v7714 = vmul.bf16 %v7686, %v7706
        %v7715 = vmul.bf16 %v7687, %v7713
        %v7716 = vmul.bf16 %v7512, %v7706
        %v7717 = vmul.bf16 %v7513, %v7713
        %v7718 = vmul.bf16 %v7688, %v7706
        %v7719 = vmul.bf16 %v7689, %v7713
        %v7720 = vmul.bf16 %v7514, %v7706
        %v7721 = vmul.bf16 %v7515, %v7713
        %v7722 = vmul.bf16 %v7690, %v7706
        %v7723 = vmul.bf16 %v7691, %v7713
        %v7724 = vmul.bf16 %v7516, %v7706
        %v7725 = vmul.bf16 %v7517, %v7713
        %v7726 = vmul.bf16 %v7692, %v7706
        %v7727 = vmul.bf16 %v7693, %v7713
        %v7728 = vmul.bf16 %v7518, %v7706
        %v7729 = vmul.bf16 %v7519, %v7713
        %v7746 = vrot.slane %v7714, 2
        %v7747 = vrot.slane %v7715, 2
        %v7748 = vrot.slane %v7716, 2
        %v7749 = vsel %vm6422, %v7746, %v7748
        %v7750 = vrot.slane %v7717, 2
        %v7751 = vsel %vm6422, %v7747, %v7750
        %v7752 = vrot.slane %v7718, 2
        %v7753 = vrot.slane %v7719, 2
        %v7754 = vrot.slane %v7720, 2
        %v7755 = vsel %vm6422, %v7752, %v7754
        %v7756 = vrot.slane %v7721, 2
        %v7757 = vsel %vm6422, %v7753, %v7756
        %v7758 = vrot.slane %v7722, 2
        %v7759 = vrot.slane %v7723, 2
        %v7760 = vrot.slane %v7724, 2
        %v7761 = vsel %vm6422, %v7758, %v7760
        %v7762 = vrot.slane %v7725, 2
        %v7763 = vsel %vm6422, %v7759, %v7762
        %v7764 = vrot.slane %v7726, 2
        %v7765 = vrot.slane %v7727, 2
        %v7766 = vrot.slane %v7728, 2
        %v7767 = vsel %vm6422, %v7764, %v7766
        %v7768 = vrot.slane %v7729, 2
        %v7769 = vsel %vm6422, %v7765, %v7768
        %v7786 = vadd.bf16 %v7670, %v7746
        %v7787 = vadd.bf16 %v7671, %v7747
        %v7788 = vadd.bf16 %v7672, %v7749
        %v7789 = vadd.bf16 %v7673, %v7751
        %v7790 = vadd.bf16 %v7674, %v7752
        %v7791 = vadd.bf16 %v7675, %v7753
        %v7792 = vadd.bf16 %v7676, %v7755
        %v7793 = vadd.bf16 %v7677, %v7757
        %v7794 = vadd.bf16 %v7678, %v7758
        %v7795 = vadd.bf16 %v7679, %v7759
        %v7796 = vadd.bf16 %v7680, %v7761
        %v7797 = vadd.bf16 %v7681, %v7763
        %v7798 = vadd.bf16 %v7682, %v7764
        %v7799 = vadd.bf16 %v7683, %v7765
        %v7800 = vadd.bf16 %v7684, %v7767
        %v7801 = vadd.bf16 %v7685, %v7769
        %v7818 = vrot.slane %v7786, 4
        %v7819 = vrot.slane %v7788, 4
        %v7820 = vsel %vm6495, %v7818, %v7819
        %v7821 = vrot.slane %v7787, 4
        %v7822 = vrot.slane %v7789, 4
        %v7823 = vsel %vm6495, %v7821, %v7822
        %v7824 = vrot.slane %v7790, 4
        %v7825 = vrot.slane %v7792, 4
        %v7826 = vsel %vm6495, %v7824, %v7825
        %v7827 = vrot.slane %v7791, 4
        %v7828 = vrot.slane %v7793, 4
        %v7829 = vsel %vm6495, %v7827, %v7828
        %v7830 = vrot.slane %v7794, 4
        %v7831 = vrot.slane %v7796, 4
        %v7832 = vsel %vm6495, %v7830, %v7831
        %v7833 = vrot.slane %v7795, 4
        %v7834 = vrot.slane %v7797, 4
        %v7835 = vsel %vm6495, %v7833, %v7834
        %v7836 = vrot.slane %v7798, 4
        %v7837 = vrot.slane %v7800, 4
        %v7838 = vsel %vm6495, %v7836, %v7837
        %v7839 = vrot.slane %v7799, 4
        %v7840 = vrot.slane %v7801, 4
        %v7841 = vsel %vm6495, %v7839, %v7840
        %v7858 = vunpack.c.l.bf16 %v7820
        %v7859 = vunpack.c.l.bf16 %v7823
        %v7860 = vunpack.c.h.bf16 %v7820
        %v7861 = vunpack.c.h.bf16 %v7823
        %v7862 = vunpack.c.l.bf16 %v7819
        %v7863 = vunpack.c.l.bf16 %v7822
        %v7864 = vunpack.c.l.bf16 %v7826
        %v7865 = vunpack.c.l.bf16 %v7829
        %v7866 = vunpack.c.h.bf16 %v7826
        %v7867 = vunpack.c.h.bf16 %v7829
        %v7868 = vunpack.c.l.bf16 %v7825
        %v7869 = vunpack.c.l.bf16 %v7828
        %v7870 = vunpack.c.l.bf16 %v7832
        %v7871 = vunpack.c.l.bf16 %v7835
        %v7872 = vunpack.c.h.bf16 %v7832
        %v7873 = vunpack.c.h.bf16 %v7835
        %v7874 = vunpack.c.l.bf16 %v7831
        %v7875 = vunpack.c.l.bf16 %v7834
        %v7876 = vunpack.c.l.bf16 %v7838
        %v7877 = vunpack.c.l.bf16 %v7841
        %v7878 = vunpack.c.h.bf16 %v7838
        %v7879 = vunpack.c.h.bf16 %v7841
        %v7880 = vunpack.c.l.bf16 %v7837
        %v7881 = vunpack.c.l.bf16 %v7840
        %v7882 = vadd.f32 %v7206, %v7858
        %v7883 = vadd.f32 %v7207, %v7859
        %v7884 = vadd.f32 %v7208, %v7860
        %v7885 = vadd.f32 %v7209, %v7861
        %v7886 = vadd.f32 %v7210, %v7862
        %v7887 = vadd.f32 %v7211, %v7863
        %v7888 = vadd.f32 %v7212, %v7864
        %v7889 = vadd.f32 %v7213, %v7865
        %v7890 = vadd.f32 %v7214, %v7866
        %v7891 = vadd.f32 %v7215, %v7867
        %v7892 = vadd.f32 %v7216, %v7868
        %v7893 = vadd.f32 %v7217, %v7869
        %v7894 = vadd.f32 %v7218, %v7870
        %v7895 = vadd.f32 %v7219, %v7871
        %v7896 = vadd.f32 %v7220, %v7872
        %v7897 = vadd.f32 %v7221, %v7873
        %v7898 = vadd.f32 %v7222, %v7874
        %v7899 = vadd.f32 %v7223, %v7875
        %v7900 = vadd.f32 %v7224, %v7876
        %v7901 = vadd.f32 %v7225, %v7877
        %v7902 = vadd.f32 %v7226, %v7878
        %v7903 = vadd.f32 %v7227, %v7879
        %v7904 = vadd.f32 %v7228, %v7880
        %v7905 = vadd.f32 %v7229, %v7881
        %s7906 = sadd.s32 %s5904, 3
        %s7907 = smul.u32 %s7906, 6
        %s7908 = smul.addr %s7907, 8
        %s7909 = scalar_lea.vmem [#allocation4], %s7908
        %v7910 = vld [vmem:[%s7909] sm:$0x80]
        %v7911 = vld [vmem:[%s7909 + $0x8] sm:$0x80]
        %v7912 = vld [vmem:[%s7909 + $0x10] sm:$0x7f]
        %v7913 = vld [vmem:[%s7909 + $0x18] sm:$0x7f]
        %v7914 = vld [vmem:[%s7909 + $0x30] sm:$0x80]
        %v7915 = vld [vmem:[%s7909 + $0x38] sm:$0x80]
        %v7916 = vld [vmem:[%s7909 + $0x40] sm:$0x7f]
        %v7917 = vld [vmem:[%s7909 + $0x48] sm:$0x7f]
        %v7918 = vld [vmem:[%s7909 + $0x60] sm:$0x80]
        %v7919 = vld [vmem:[%s7909 + $0x68] sm:$0x80]
        %v7920 = vld [vmem:[%s7909 + $0x70] sm:$0x7f]
        %v7921 = vld [vmem:[%s7909 + $0x78] sm:$0x7f]
        %v7922 = vld [vmem:[%s7909 + $0x90] sm:$0x80]
        %v7923 = vld [vmem:[%s7909 + $0x98] sm:$0x80]
        %v7924 = vld [vmem:[%s7909 + $0xa0] sm:$0x7f]
        %v7925 = vld [vmem:[%s7909 + $0xa8] sm:$0x7f]
        %v7926 = vshrl.u32 %v7698, 16
        %v7927 = vpack.i.b16 %v7926, %v7926
        %v7929 = vlaneseq
        %v7930 = vshrl.u32 %v7929, 7
        %v7931 = vsub.s32 3, %v7930
        %v7932 = vrot.slane %v7927, %v7931
        %v7933 = vshrl.u32 %v7699, 16
        %v7934 = vpack.i.b16 %v7933, %v7933
        %v7936 = vlaneseq
        %v7937 = vshrl.u32 %v7936, 7
        %v7938 = vsub.s32 3, %v7937
        %v7939 = vrot.slane %v7934, %v7938
        %v7940 = vmul.bf16 %v7910, %v7932
        %v7941 = vmul.bf16 %v7911, %v7939
        %v7942 = vmul.bf16 %v7912, %v7932
        %v7943 = vmul.bf16 %v7913, %v7939
        %v7944 = vmul.bf16 %v7914, %v7932
        %v7945 = vmul.bf16 %v7915, %v7939
        %v7946 = vmul.bf16 %v7916, %v7932
        %v7947 = vmul.bf16 %v7917, %v7939
        %v7948 = vmul.bf16 %v7918, %v7932
        %v7949 = vmul.bf16 %v7919, %v7939
        %v7950 = vmul.bf16 %v7920, %v7932
        %v7951 = vmul.bf16 %v7921, %v7939
        %v7952 = vmul.bf16 %v7922, %v7932
        %v7953 = vmul.bf16 %v7923, %v7939
        %v7954 = vmul.bf16 %v7924, %v7932
        %v7955 = vmul.bf16 %v7925, %v7939
        %v7956 = vld [vmem:[%s7909 + $0x10] sm:$0xff]
        %v7957 = vld [vmem:[%s7909 + $0x18] sm:$0xff]
        %v7958 = vld [vmem:[%s7909 + $0x40] sm:$0xff]
        %v7959 = vld [vmem:[%s7909 + $0x48] sm:$0xff]
        %v7960 = vld [vmem:[%s7909 + $0x70] sm:$0xff]
        %v7961 = vld [vmem:[%s7909 + $0x78] sm:$0xff]
        %v7962 = vld [vmem:[%s7909 + $0xa0] sm:$0xff]
        %v7963 = vld [vmem:[%s7909 + $0xa8] sm:$0xff]
        %v7964 = vld [vmem:[%s13 + $0x10] sm:$0x11]
        %v7966 = vunpack.c.l.b16 %v7964
        %v7967 = vunpack.c.h.b16 %v7964
        %v7968 = vpack.c.b16 %v7966, %v7966
        %v7969 = vpack.c.b16 %v7967, %v7967
        %v7971 = vpack.i.b16 %v7968, %v7968
        %v7973 = vlaneseq
        %v7974 = vshrl.u32 %v7973, 7
        %v7975 = vsub.s32 0, %v7974
        %v7976 = vrot.slane %v7971, %v7975
        %v7978 = vpack.i.b16 %v7969, %v7969
        %v7980 = vlaneseq
        %v7981 = vshrl.u32 %v7980, 7
        %v7982 = vsub.s32 0, %v7981
        %v7983 = vrot.slane %v7978, %v7982
        %v7984 = vmul.bf16 %v7910, %v7976
        %v7985 = vmul.bf16 %v7911, %v7983
        %v7986 = vmul.bf16 %v7956, %v7976
        %v7987 = vmul.bf16 %v7957, %v7983
        %v7988 = vmul.bf16 %v7914, %v7976
        %v7989 = vmul.bf16 %v7915, %v7983
        %v7990 = vmul.bf16 %v7958, %v7976
        %v7991 = vmul.bf16 %v7959, %v7983
        %v7992 = vmul.bf16 %v7918, %v7976
        %v7993 = vmul.bf16 %v7919, %v7983
        %v7994 = vmul.bf16 %v7960, %v7976
        %v7995 = vmul.bf16 %v7961, %v7983
        %v7996 = vmul.bf16 %v7922, %v7976
        %v7997 = vmul.bf16 %v7923, %v7983
        %v7998 = vmul.bf16 %v7962, %v7976
        %v7999 = vmul.bf16 %v7963, %v7983
        %v8001 = vshrl.u32 %v7984, 16
        %v8004 = vshll.u32 %v7986, 16
        %v8006 = vrot.slane %v8004, 1
        %v8007 = vsel %vm5998, %v8001, %v8006
        %v8009 = vshrl.u32 %v7985, 16
        %v8012 = vshll.u32 %v7987, 16
        %v8014 = vrot.slane %v8012, 1
        %v8015 = vsel %vm5998, %v8009, %v8014
        %v8016 = vshrl.u32 %v7986, 16
        %v8018 = vor.u32 %v8016, %v8006
        %v8019 = vshrl.u32 %v7987, 16
        %v8021 = vor.u32 %v8019, %v8014
        %v8023 = vshrl.u32 %v7988, 16
        %v8026 = vshll.u32 %v7990, 16
        %v8028 = vrot.slane %v8026, 1
        %v8029 = vsel %vm5998, %v8023, %v8028
        %v8031 = vshrl.u32 %v7989, 16
        %v8034 = vshll.u32 %v7991, 16
        %v8036 = vrot.slane %v8034, 1
        %v8037 = vsel %vm5998, %v8031, %v8036
        %v8038 = vshrl.u32 %v7990, 16
        %v8040 = vor.u32 %v8038, %v8028
        %v8041 = vshrl.u32 %v7991, 16
        %v8043 = vor.u32 %v8041, %v8036
        %v8045 = vshrl.u32 %v7992, 16
        %v8048 = vshll.u32 %v7994, 16
        %v8050 = vrot.slane %v8048, 1
        %v8051 = vsel %vm5998, %v8045, %v8050
        %v8053 = vshrl.u32 %v7993, 16
        %v8056 = vshll.u32 %v7995, 16
        %v8058 = vrot.slane %v8056, 1
        %v8059 = vsel %vm5998, %v8053, %v8058
        %v8060 = vshrl.u32 %v7994, 16
        %v8062 = vor.u32 %v8060, %v8050
        %v8063 = vshrl.u32 %v7995, 16
        %v8065 = vor.u32 %v8063, %v8058
        %v8067 = vshrl.u32 %v7996, 16
        %v8070 = vshll.u32 %v7998, 16
        %v8072 = vrot.slane %v8070, 1
        %v8073 = vsel %vm5998, %v8067, %v8072
        %v8075 = vshrl.u32 %v7997, 16
        %v8078 = vshll.u32 %v7999, 16
        %v8080 = vrot.slane %v8078, 1
        %v8081 = vsel %vm5998, %v8075, %v8080
        %v8082 = vshrl.u32 %v7998, 16
        %v8084 = vor.u32 %v8082, %v8072
        %v8085 = vshrl.u32 %v7999, 16
        %v8087 = vor.u32 %v8085, %v8080
        %v8104 = vadd.bf16 %v7940, %v8007
        %v8105 = vadd.bf16 %v7941, %v8015
        %v8106 = vadd.bf16 %v7942, %v8018
        %v8107 = vadd.bf16 %v7943, %v8021
        %v8108 = vadd.bf16 %v7944, %v8029
        %v8109 = vadd.bf16 %v7945, %v8037
        %v8110 = vadd.bf16 %v7946, %v8040
        %v8111 = vadd.bf16 %v7947, %v8043
        %v8112 = vadd.bf16 %v7948, %v8051
        %v8113 = vadd.bf16 %v7949, %v8059
        %v8114 = vadd.bf16 %v7950, %v8062
        %v8115 = vadd.bf16 %v7951, %v8065
        %v8116 = vadd.bf16 %v7952, %v8073
        %v8117 = vadd.bf16 %v7953, %v8081
        %v8118 = vadd.bf16 %v7954, %v8084
        %v8119 = vadd.bf16 %v7955, %v8087
        %v8120 = vshrl.u32 %v7968, 16
        %v8121 = vpack.i.b16 %v8120, %v8120
        %v8123 = vlaneseq
        %v8124 = vshrl.u32 %v8123, 7
        %v8125 = vsub.s32 0, %v8124
        %v8126 = vrot.slane %v8121, %v8125
        %v8127 = vshrl.u32 %v7969, 16
        %v8128 = vpack.i.b16 %v8127, %v8127
        %v8130 = vlaneseq
        %v8131 = vshrl.u32 %v8130, 7
        %v8132 = vsub.s32 0, %v8131
        %v8133 = vrot.slane %v8128, %v8132
        %v8134 = vmul.bf16 %v7956, %v8126
        %v8135 = vmul.bf16 %v7957, %v8133
        %v8136 = vmul.bf16 %v7958, %v8126
        %v8137 = vmul.bf16 %v7959, %v8133
        %v8138 = vmul.bf16 %v7960, %v8126
        %v8139 = vmul.bf16 %v7961, %v8133
        %v8140 = vmul.bf16 %v7962, %v8126
        %v8141 = vmul.bf16 %v7963, %v8133
        %v8150 = vrot.slane %v8134, 1
        %v8151 = vrot.slane %v8135, 1
        %v8152 = vrot.slane %v8136, 1
        %v8153 = vrot.slane %v8137, 1
        %v8154 = vrot.slane %v8138, 1
        %v8155 = vrot.slane %v8139, 1
        %v8156 = vrot.slane %v8140, 1
        %v8157 = vrot.slane %v8141, 1
        %v8166 = vadd.bf16 %v8104, %v8150
        %v8167 = vadd.bf16 %v8105, %v8151
        %v8168 = vadd.bf16 %v8106, %v8150
        %v8169 = vadd.bf16 %v8107, %v8151
        %v8170 = vadd.bf16 %v8108, %v8152
        %v8171 = vadd.bf16 %v8109, %v8153
        %v8172 = vadd.bf16 %v8110, %v8152
        %v8173 = vadd.bf16 %v8111, %v8153
        %v8174 = vadd.bf16 %v8112, %v8154
        %v8175 = vadd.bf16 %v8113, %v8155
        %v8176 = vadd.bf16 %v8114, %v8154
        %v8177 = vadd.bf16 %v8115, %v8155
        %v8178 = vadd.bf16 %v8116, %v8156
        %v8179 = vadd.bf16 %v8117, %v8157
        %v8180 = vadd.bf16 %v8118, %v8156
        %v8181 = vadd.bf16 %v8119, %v8157
        %v8182 = vld [vmem:[%s7909 + $0x20] sm:$0x1]
        %v8183 = vld [vmem:[%s7909 + $0x28] sm:$0x1]
        %v8184 = vld [vmem:[%s7909 + $0x50] sm:$0x1]
        %v8185 = vld [vmem:[%s7909 + $0x58] sm:$0x1]
        %v8186 = vld [vmem:[%s7909 + $0x80] sm:$0x1]
        %v8187 = vld [vmem:[%s7909 + $0x88] sm:$0x1]
        %v8188 = vld [vmem:[%s7909 + $0xb0] sm:$0x1]
        %v8189 = vld [vmem:[%s7909 + $0xb8] sm:$0x1]
        %v8190 = vld [vmem:[%s13 + $0x10] sm:$0x22]
        %v8192 = vunpack.c.l.b16 %v8190
        %v8193 = vunpack.c.h.b16 %v8190
        %v8194 = vpack.c.b16 %v8192, %v8192
        %v8195 = vpack.c.b16 %v8193, %v8193
        %v8197 = vpack.i.b16 %v8194, %v8194
        %v8199 = vlaneseq
        %v8200 = vshrl.u32 %v8199, 7
        %v8201 = vsub.s32 1, %v8200
        %v8202 = vrot.slane %v8197, %v8201
        %v8204 = vpack.i.b16 %v8195, %v8195
        %v8206 = vlaneseq
        %v8207 = vshrl.u32 %v8206, 7
        %v8208 = vsub.s32 1, %v8207
        %v8209 = vrot.slane %v8204, %v8208
        %v8210 = vmul.bf16 %v7956, %v8202
        %v8211 = vmul.bf16 %v7957, %v8209
        %v8212 = vmul.bf16 %v8182, %v8202
        %v8213 = vmul.bf16 %v8183, %v8209
        %v8214 = vmul.bf16 %v7958, %v8202
        %v8215 = vmul.bf16 %v7959, %v8209
        %v8216 = vmul.bf16 %v8184, %v8202
        %v8217 = vmul.bf16 %v8185, %v8209
        %v8218 = vmul.bf16 %v7960, %v8202
        %v8219 = vmul.bf16 %v7961, %v8209
        %v8220 = vmul.bf16 %v8186, %v8202
        %v8221 = vmul.bf16 %v8187, %v8209
        %v8222 = vmul.bf16 %v7962, %v8202
        %v8223 = vmul.bf16 %v7963, %v8209
        %v8224 = vmul.bf16 %v8188, %v8202
        %v8225 = vmul.bf16 %v8189, %v8209
        %v8227 = vshrl.u32 %v8210, 16
        %v8229 = vrot.slane %v8227, 1
        %v8230 = vshll.u32 %v8210, 16
        %v8232 = vrot.slane %v8230, 2
        %v8233 = vor.u32 %v8229, %v8232
        %v8235 = vshrl.u32 %v8211, 16
        %v8237 = vrot.slane %v8235, 1
        %v8238 = vshll.u32 %v8211, 16
        %v8240 = vrot.slane %v8238, 2
        %v8241 = vor.u32 %v8237, %v8240
        %v8243 = vshll.u32 %v8212, 16
        %v8245 = vrot.slane %v8243, 2
        %v8246 = vsel %vm6225, %v8233, %v8245
        %v8248 = vshll.u32 %v8213, 16
        %v8250 = vrot.slane %v8248, 2
        %v8251 = vsel %vm6225, %v8241, %v8250
        %v8253 = vshrl.u32 %v8214, 16
        %v8255 = vrot.slane %v8253, 1
        %v8256 = vshll.u32 %v8214, 16
        %v8258 = vrot.slane %v8256, 2
        %v8259 = vor.u32 %v8255, %v8258
        %v8261 = vshrl.u32 %v8215, 16
        %v8263 = vrot.slane %v8261, 1
        %v8264 = vshll.u32 %v8215, 16
        %v8266 = vrot.slane %v8264, 2
        %v8267 = vor.u32 %v8263, %v8266
        %v8269 = vshll.u32 %v8216, 16
        %v8271 = vrot.slane %v8269, 2
        %v8272 = vsel %vm6225, %v8259, %v8271
        %v8274 = vshll.u32 %v8217, 16
        %v8276 = vrot.slane %v8274, 2
        %v8277 = vsel %vm6225, %v8267, %v8276
        %v8279 = vshrl.u32 %v8218, 16
        %v8281 = vrot.slane %v8279, 1
        %v8282 = vshll.u32 %v8218, 16
        %v8284 = vrot.slane %v8282, 2
        %v8285 = vor.u32 %v8281, %v8284
        %v8287 = vshrl.u32 %v8219, 16
        %v8289 = vrot.slane %v8287, 1
        %v8290 = vshll.u32 %v8219, 16
        %v8292 = vrot.slane %v8290, 2
        %v8293 = vor.u32 %v8289, %v8292
        %v8295 = vshll.u32 %v8220, 16
        %v8297 = vrot.slane %v8295, 2
        %v8298 = vsel %vm6225, %v8285, %v8297
        %v8300 = vshll.u32 %v8221, 16
        %v8302 = vrot.slane %v8300, 2
        %v8303 = vsel %vm6225, %v8293, %v8302
        %v8305 = vshrl.u32 %v8222, 16
        %v8307 = vrot.slane %v8305, 1
        %v8308 = vshll.u32 %v8222, 16
        %v8310 = vrot.slane %v8308, 2
        %v8311 = vor.u32 %v8307, %v8310
        %v8313 = vshrl.u32 %v8223, 16
        %v8315 = vrot.slane %v8313, 1
        %v8316 = vshll.u32 %v8223, 16
        %v8318 = vrot.slane %v8316, 2
        %v8319 = vor.u32 %v8315, %v8318
        %v8321 = vshll.u32 %v8224, 16
        %v8323 = vrot.slane %v8321, 2
        %v8324 = vsel %vm6225, %v8311, %v8323
        %v8326 = vshll.u32 %v8225, 16
        %v8328 = vrot.slane %v8326, 2
        %v8329 = vsel %vm6225, %v8319, %v8328
        %v8346 = vadd.bf16 %v8166, %v8233
        %v8347 = vadd.bf16 %v8167, %v8241
        %v8348 = vadd.bf16 %v8168, %v8246
        %v8349 = vadd.bf16 %v8169, %v8251
        %v8350 = vadd.bf16 %v8170, %v8259
        %v8351 = vadd.bf16 %v8171, %v8267
        %v8352 = vadd.bf16 %v8172, %v8272
        %v8353 = vadd.bf16 %v8173, %v8277
        %v8354 = vadd.bf16 %v8174, %v8285
        %v8355 = vadd.bf16 %v8175, %v8293
        %v8356 = vadd.bf16 %v8176, %v8298
        %v8357 = vadd.bf16 %v8177, %v8303
        %v8358 = vadd.bf16 %v8178, %v8311
        %v8359 = vadd.bf16 %v8179, %v8319
        %v8360 = vadd.bf16 %v8180, %v8324
        %v8361 = vadd.bf16 %v8181, %v8329
        %v8362 = vld [vmem:[%s7909 + $0x10] sm:$0xfe]
        %v8363 = vld [vmem:[%s7909 + $0x18] sm:$0xfe]
        %v8364 = vld [vmem:[%s7909 + $0x40] sm:$0xfe]
        %v8365 = vld [vmem:[%s7909 + $0x48] sm:$0xfe]
        %v8366 = vld [vmem:[%s7909 + $0x70] sm:$0xfe]
        %v8367 = vld [vmem:[%s7909 + $0x78] sm:$0xfe]
        %v8368 = vld [vmem:[%s7909 + $0xa0] sm:$0xfe]
        %v8369 = vld [vmem:[%s7909 + $0xa8] sm:$0xfe]
        %v8370 = vshrl.u32 %v8194, 16
        %v8371 = vpack.i.b16 %v8370, %v8370
        %v8373 = vlaneseq
        %v8374 = vshrl.u32 %v8373, 7
        %v8375 = vsub.s32 1, %v8374
        %v8376 = vrot.slane %v8371, %v8375
        %v8377 = vshrl.u32 %v8195, 16
        %v8378 = vpack.i.b16 %v8377, %v8377
        %v8380 = vlaneseq
        %v8381 = vshrl.u32 %v8380, 7
        %v8382 = vsub.s32 1, %v8381
        %v8383 = vrot.slane %v8378, %v8382
        %v8384 = vmul.bf16 %v8362, %v8376
        %v8385 = vmul.bf16 %v8363, %v8383
        %v8386 = vmul.bf16 %v8182, %v8376
        %v8387 = vmul.bf16 %v8183, %v8383
        %v8388 = vmul.bf16 %v8364, %v8376
        %v8389 = vmul.bf16 %v8365, %v8383
        %v8390 = vmul.bf16 %v8184, %v8376
        %v8391 = vmul.bf16 %v8185, %v8383
        %v8392 = vmul.bf16 %v8366, %v8376
        %v8393 = vmul.bf16 %v8367, %v8383
        %v8394 = vmul.bf16 %v8186, %v8376
        %v8395 = vmul.bf16 %v8187, %v8383
        %v8396 = vmul.bf16 %v8368, %v8376
        %v8397 = vmul.bf16 %v8369, %v8383
        %v8398 = vmul.bf16 %v8188, %v8376
        %v8399 = vmul.bf16 %v8189, %v8383
        %v8416 = vrot.slane %v8384, 2
        %v8417 = vrot.slane %v8385, 2
        %v8418 = vrot.slane %v8386, 2
        %v8419 = vsel %vm6422, %v8416, %v8418
        %v8420 = vrot.slane %v8387, 2
        %v8421 = vsel %vm6422, %v8417, %v8420
        %v8422 = vrot.slane %v8388, 2
        %v8423 = vrot.slane %v8389, 2
        %v8424 = vrot.slane %v8390, 2
        %v8425 = vsel %vm6422, %v8422, %v8424
        %v8426 = vrot.slane %v8391, 2
        %v8427 = vsel %vm6422, %v8423, %v8426
        %v8428 = vrot.slane %v8392, 2
        %v8429 = vrot.slane %v8393, 2
        %v8430 = vrot.slane %v8394, 2
        %v8431 = vsel %vm6422, %v8428, %v8430
        %v8432 = vrot.slane %v8395, 2
        %v8433 = vsel %vm6422, %v8429, %v8432
        %v8434 = vrot.slane %v8396, 2
        %v8435 = vrot.slane %v8397, 2
        %v8436 = vrot.slane %v8398, 2
        %v8437 = vsel %vm6422, %v8434, %v8436
        %v8438 = vrot.slane %v8399, 2
        %v8439 = vsel %vm6422, %v8435, %v8438
        %v8456 = vadd.bf16 %v8346, %v8416
        %v8457 = vadd.bf16 %v8347, %v8417
        %v8458 = vadd.bf16 %v8348, %v8419
        %v8459 = vadd.bf16 %v8349, %v8421
        %v8460 = vadd.bf16 %v8350, %v8422
        %v8461 = vadd.bf16 %v8351, %v8423
        %v8462 = vadd.bf16 %v8352, %v8425
        %v8463 = vadd.bf16 %v8353, %v8427
        %v8464 = vadd.bf16 %v8354, %v8428
        %v8465 = vadd.bf16 %v8355, %v8429
        %v8466 = vadd.bf16 %v8356, %v8431
        %v8467 = vadd.bf16 %v8357, %v8433
        %v8468 = vadd.bf16 %v8358, %v8434
        %v8469 = vadd.bf16 %v8359, %v8435
        %v8470 = vadd.bf16 %v8360, %v8437
        %v8471 = vadd.bf16 %v8361, %v8439
        %v8488 = vrot.slane %v8456, 4
        %v8489 = vrot.slane %v8458, 4
        %v8490 = vsel %vm6495, %v8488, %v8489
        %v8491 = vrot.slane %v8457, 4
        %v8492 = vrot.slane %v8459, 4
        %v8493 = vsel %vm6495, %v8491, %v8492
        %v8494 = vrot.slane %v8460, 4
        %v8495 = vrot.slane %v8462, 4
        %v8496 = vsel %vm6495, %v8494, %v8495
        %v8497 = vrot.slane %v8461, 4
        %v8498 = vrot.slane %v8463, 4
        %v8499 = vsel %vm6495, %v8497, %v8498
        %v8500 = vrot.slane %v8464, 4
        %v8501 = vrot.slane %v8466, 4
        %v8502 = vsel %vm6495, %v8500, %v8501
        %v8503 = vrot.slane %v8465, 4
        %v8504 = vrot.slane %v8467, 4
        %v8505 = vsel %vm6495, %v8503, %v8504
        %v8506 = vrot.slane %v8468, 4
        %v8507 = vrot.slane %v8470, 4
        %v8508 = vsel %vm6495, %v8506, %v8507
        %v8509 = vrot.slane %v8469, 4
        %v8510 = vrot.slane %v8471, 4
        %v8511 = vsel %vm6495, %v8509, %v8510
        %v8528 = vunpack.c.l.bf16 %v8490
        %v8529 = vunpack.c.l.bf16 %v8493
        %v8530 = vunpack.c.h.bf16 %v8490
        %v8531 = vunpack.c.h.bf16 %v8493
        %v8532 = vunpack.c.l.bf16 %v8489
        %v8533 = vunpack.c.l.bf16 %v8492
        %v8534 = vunpack.c.l.bf16 %v8496
        %v8535 = vunpack.c.l.bf16 %v8499
        %v8536 = vunpack.c.h.bf16 %v8496
        %v8537 = vunpack.c.h.bf16 %v8499
        %v8538 = vunpack.c.l.bf16 %v8495
        %v8539 = vunpack.c.l.bf16 %v8498
        %v8540 = vunpack.c.l.bf16 %v8502
        %v8541 = vunpack.c.l.bf16 %v8505
        %v8542 = vunpack.c.h.bf16 %v8502
        %v8543 = vunpack.c.h.bf16 %v8505
        %v8544 = vunpack.c.l.bf16 %v8501
        %v8545 = vunpack.c.l.bf16 %v8504
        %v8546 = vunpack.c.l.bf16 %v8508
        %v8547 = vunpack.c.l.bf16 %v8511
        %v8548 = vunpack.c.h.bf16 %v8508
        %v8549 = vunpack.c.h.bf16 %v8511
        %v8550 = vunpack.c.l.bf16 %v8507
        %v8551 = vunpack.c.l.bf16 %v8510
        %v8552 = vadd.f32 %v7882, %v8528
        %v8553 = vadd.f32 %v7883, %v8529
        %v8554 = vadd.f32 %v7884, %v8530
        %v8555 = vadd.f32 %v7885, %v8531
        %v8556 = vadd.f32 %v7886, %v8532
        %v8557 = vadd.f32 %v7887, %v8533
        %v8558 = vadd.f32 %v7888, %v8534
        %v8559 = vadd.f32 %v7889, %v8535
        %v8560 = vadd.f32 %v7890, %v8536
        %v8561 = vadd.f32 %v7891, %v8537
        %v8562 = vadd.f32 %v7892, %v8538
        %v8563 = vadd.f32 %v7893, %v8539
        %v8564 = vadd.f32 %v7894, %v8540
        %v8565 = vadd.f32 %v7895, %v8541
        %v8566 = vadd.f32 %v7896, %v8542
        %v8567 = vadd.f32 %v7897, %v8543
        %v8568 = vadd.f32 %v7898, %v8544
        %v8569 = vadd.f32 %v7899, %v8545
        %v8570 = vadd.f32 %v7900, %v8546
        %v8571 = vadd.f32 %v7901, %v8547
        %v8572 = vadd.f32 %v7902, %v8548
        %v8573 = vadd.f32 %v7903, %v8549
        %v8574 = vadd.f32 %v7904, %v8550
        %v8575 = vadd.f32 %v7905, %v8551
        %s8576 = sadd.s32 %s5904, 4
        %s8577 = smul.u32 %s8576, 6
        %s8578 = smul.addr %s8577, 8
        %s8579 = scalar_lea.vmem [#allocation4], %s8578
        %v8580 = vld [vmem:[%s8579] sm:$0x80]
        %v8581 = vld [vmem:[%s8579 + $0x8] sm:$0x80]
        %v8582 = vld [vmem:[%s8579 + $0x10] sm:$0x7f]
        %v8583 = vld [vmem:[%s8579 + $0x18] sm:$0x7f]
        %v8584 = vld [vmem:[%s8579 + $0x30] sm:$0x80]
        %v8585 = vld [vmem:[%s8579 + $0x38] sm:$0x80]
        %v8586 = vld [vmem:[%s8579 + $0x40] sm:$0x7f]
        %v8587 = vld [vmem:[%s8579 + $0x48] sm:$0x7f]
        %v8588 = vld [vmem:[%s8579 + $0x60] sm:$0x80]
        %v8589 = vld [vmem:[%s8579 + $0x68] sm:$0x80]
        %v8590 = vld [vmem:[%s8579 + $0x70] sm:$0x7f]
        %v8591 = vld [vmem:[%s8579 + $0x78] sm:$0x7f]
        %v8592 = vld [vmem:[%s8579 + $0x90] sm:$0x80]
        %v8593 = vld [vmem:[%s8579 + $0x98] sm:$0x80]
        %v8594 = vld [vmem:[%s8579 + $0xa0] sm:$0x7f]
        %v8595 = vld [vmem:[%s8579 + $0xa8] sm:$0x7f]
        %v8596 = vld [vmem:[%s13 + $0x10] sm:$0x44]
        %v8598 = vunpack.c.l.b16 %v8596
        %v8599 = vunpack.c.h.b16 %v8596
        %v8600 = vpack.c.b16 %v8598, %v8598
        %v8601 = vpack.c.b16 %v8599, %v8599
        %v8603 = vpack.i.b16 %v8600, %v8600
        %v8605 = vlaneseq
        %v8606 = vshrl.u32 %v8605, 7
        %v8607 = vsub.s32 2, %v8606
        %v8608 = vrot.slane %v8603, %v8607
        %v8610 = vpack.i.b16 %v8601, %v8601
        %v8612 = vlaneseq
        %v8613 = vshrl.u32 %v8612, 7
        %v8614 = vsub.s32 2, %v8613
        %v8615 = vrot.slane %v8610, %v8614
        %v8616 = vmul.bf16 %v8580, %v8608
        %v8617 = vmul.bf16 %v8581, %v8615
        %v8618 = vmul.bf16 %v8582, %v8608
        %v8619 = vmul.bf16 %v8583, %v8615
        %v8620 = vmul.bf16 %v8584, %v8608
        %v8621 = vmul.bf16 %v8585, %v8615
        %v8622 = vmul.bf16 %v8586, %v8608
        %v8623 = vmul.bf16 %v8587, %v8615
        %v8624 = vmul.bf16 %v8588, %v8608
        %v8625 = vmul.bf16 %v8589, %v8615
        %v8626 = vmul.bf16 %v8590, %v8608
        %v8627 = vmul.bf16 %v8591, %v8615
        %v8628 = vmul.bf16 %v8592, %v8608
        %v8629 = vmul.bf16 %v8593, %v8615
        %v8630 = vmul.bf16 %v8594, %v8608
        %v8631 = vmul.bf16 %v8595, %v8615
        %v8632 = vld [vmem:[%s8579 + $0x10] sm:$0xff]
        %v8633 = vld [vmem:[%s8579 + $0x18] sm:$0xff]
        %v8634 = vld [vmem:[%s8579 + $0x40] sm:$0xff]
        %v8635 = vld [vmem:[%s8579 + $0x48] sm:$0xff]
        %v8636 = vld [vmem:[%s8579 + $0x70] sm:$0xff]
        %v8637 = vld [vmem:[%s8579 + $0x78] sm:$0xff]
        %v8638 = vld [vmem:[%s8579 + $0xa0] sm:$0xff]
        %v8639 = vld [vmem:[%s8579 + $0xa8] sm:$0xff]
        %v8640 = vshrl.u32 %v8600, 16
        %v8641 = vpack.i.b16 %v8640, %v8640
        %v8643 = vlaneseq
        %v8644 = vshrl.u32 %v8643, 7
        %v8645 = vsub.s32 2, %v8644
        %v8646 = vrot.slane %v8641, %v8645
        %v8647 = vshrl.u32 %v8601, 16
        %v8648 = vpack.i.b16 %v8647, %v8647
        %v8650 = vlaneseq
        %v8651 = vshrl.u32 %v8650, 7
        %v8652 = vsub.s32 2, %v8651
        %v8653 = vrot.slane %v8648, %v8652
        %v8654 = vmul.bf16 %v8580, %v8646
        %v8655 = vmul.bf16 %v8581, %v8653
        %v8656 = vmul.bf16 %v8632, %v8646
        %v8657 = vmul.bf16 %v8633, %v8653
        %v8658 = vmul.bf16 %v8584, %v8646
        %v8659 = vmul.bf16 %v8585, %v8653
        %v8660 = vmul.bf16 %v8634, %v8646
        %v8661 = vmul.bf16 %v8635, %v8653
        %v8662 = vmul.bf16 %v8588, %v8646
        %v8663 = vmul.bf16 %v8589, %v8653
        %v8664 = vmul.bf16 %v8636, %v8646
        %v8665 = vmul.bf16 %v8637, %v8653
        %v8666 = vmul.bf16 %v8592, %v8646
        %v8667 = vmul.bf16 %v8593, %v8653
        %v8668 = vmul.bf16 %v8638, %v8646
        %v8669 = vmul.bf16 %v8639, %v8653
        %v8671 = vshrl.u32 %v8654, 16
        %v8674 = vshll.u32 %v8656, 16
        %v8676 = vrot.slane %v8674, 1
        %v8677 = vsel %vm5998, %v8671, %v8676
        %v8679 = vshrl.u32 %v8655, 16
        %v8682 = vshll.u32 %v8657, 16
        %v8684 = vrot.slane %v8682, 1
        %v8685 = vsel %vm5998, %v8679, %v8684
        %v8686 = vshrl.u32 %v8656, 16
        %v8688 = vor.u32 %v8686, %v8676
        %v8689 = vshrl.u32 %v8657, 16
        %v8691 = vor.u32 %v8689, %v8684
        %v8693 = vshrl.u32 %v8658, 16
        %v8696 = vshll.u32 %v8660, 16
        %v8698 = vrot.slane %v8696, 1
        %v8699 = vsel %vm5998, %v8693, %v8698
        %v8701 = vshrl.u32 %v8659, 16
        %v8704 = vshll.u32 %v8661, 16
        %v8706 = vrot.slane %v8704, 1
        %v8707 = vsel %vm5998, %v8701, %v8706
        %v8708 = vshrl.u32 %v8660, 16
        %v8710 = vor.u32 %v8708, %v8698
        %v8711 = vshrl.u32 %v8661, 16
        %v8713 = vor.u32 %v8711, %v8706
        %v8715 = vshrl.u32 %v8662, 16
        %v8718 = vshll.u32 %v8664, 16
        %v8720 = vrot.slane %v8718, 1
        %v8721 = vsel %vm5998, %v8715, %v8720
        %v8723 = vshrl.u32 %v8663, 16
        %v8726 = vshll.u32 %v8665, 16
        %v8728 = vrot.slane %v8726, 1
        %v8729 = vsel %vm5998, %v8723, %v8728
        %v8730 = vshrl.u32 %v8664, 16
        %v8732 = vor.u32 %v8730, %v8720
        %v8733 = vshrl.u32 %v8665, 16
        %v8735 = vor.u32 %v8733, %v8728
        %v8737 = vshrl.u32 %v8666, 16
        %v8740 = vshll.u32 %v8668, 16
        %v8742 = vrot.slane %v8740, 1
        %v8743 = vsel %vm5998, %v8737, %v8742
        %v8745 = vshrl.u32 %v8667, 16
        %v8748 = vshll.u32 %v8669, 16
        %v8750 = vrot.slane %v8748, 1
        %v8751 = vsel %vm5998, %v8745, %v8750
        %v8752 = vshrl.u32 %v8668, 16
        %v8754 = vor.u32 %v8752, %v8742
        %v8755 = vshrl.u32 %v8669, 16
        %v8757 = vor.u32 %v8755, %v8750
        %v8774 = vadd.bf16 %v8616, %v8677
        %v8775 = vadd.bf16 %v8617, %v8685
        %v8776 = vadd.bf16 %v8618, %v8688
        %v8777 = vadd.bf16 %v8619, %v8691
        %v8778 = vadd.bf16 %v8620, %v8699
        %v8779 = vadd.bf16 %v8621, %v8707
        %v8780 = vadd.bf16 %v8622, %v8710
        %v8781 = vadd.bf16 %v8623, %v8713
        %v8782 = vadd.bf16 %v8624, %v8721
        %v8783 = vadd.bf16 %v8625, %v8729
        %v8784 = vadd.bf16 %v8626, %v8732
        %v8785 = vadd.bf16 %v8627, %v8735
        %v8786 = vadd.bf16 %v8628, %v8743
        %v8787 = vadd.bf16 %v8629, %v8751
        %v8788 = vadd.bf16 %v8630, %v8754
        %v8789 = vadd.bf16 %v8631, %v8757
        %v8790 = vld [vmem:[%s13 + $0x10] sm:$0x88]
        %v8792 = vunpack.c.l.b16 %v8790
        %v8793 = vunpack.c.h.b16 %v8790
        %v8794 = vpack.c.b16 %v8792, %v8792
        %v8795 = vpack.c.b16 %v8793, %v8793
        %v8797 = vpack.i.b16 %v8794, %v8794
        %v8799 = vlaneseq
        %v8800 = vshrl.u32 %v8799, 7
        %v8801 = vsub.s32 3, %v8800
        %v8802 = vrot.slane %v8797, %v8801
        %v8804 = vpack.i.b16 %v8795, %v8795
        %v8806 = vlaneseq
        %v8807 = vshrl.u32 %v8806, 7
        %v8808 = vsub.s32 3, %v8807
        %v8809 = vrot.slane %v8804, %v8808
        %v8810 = vmul.bf16 %v8632, %v8802
        %v8811 = vmul.bf16 %v8633, %v8809
        %v8812 = vmul.bf16 %v8634, %v8802
        %v8813 = vmul.bf16 %v8635, %v8809
        %v8814 = vmul.bf16 %v8636, %v8802
        %v8815 = vmul.bf16 %v8637, %v8809
        %v8816 = vmul.bf16 %v8638, %v8802
        %v8817 = vmul.bf16 %v8639, %v8809
        %v8826 = vrot.slane %v8810, 1
        %v8827 = vrot.slane %v8811, 1
        %v8828 = vrot.slane %v8812, 1
        %v8829 = vrot.slane %v8813, 1
        %v8830 = vrot.slane %v8814, 1
        %v8831 = vrot.slane %v8815, 1
        %v8832 = vrot.slane %v8816, 1
        %v8833 = vrot.slane %v8817, 1
        %v8842 = vadd.bf16 %v8774, %v8826
        %v8843 = vadd.bf16 %v8775, %v8827
        %v8844 = vadd.bf16 %v8776, %v8826
        %v8845 = vadd.bf16 %v8777, %v8827
        %v8846 = vadd.bf16 %v8778, %v8828
        %v8847 = vadd.bf16 %v8779, %v8829
        %v8848 = vadd.bf16 %v8780, %v8828
        %v8849 = vadd.bf16 %v8781, %v8829
        %v8850 = vadd.bf16 %v8782, %v8830
        %v8851 = vadd.bf16 %v8783, %v8831
        %v8852 = vadd.bf16 %v8784, %v8830
        %v8853 = vadd.bf16 %v8785, %v8831
        %v8854 = vadd.bf16 %v8786, %v8832
        %v8855 = vadd.bf16 %v8787, %v8833
        %v8856 = vadd.bf16 %v8788, %v8832
        %v8857 = vadd.bf16 %v8789, %v8833
        %v8858 = vld [vmem:[%s8579 + $0x20] sm:$0x1]
        %v8859 = vld [vmem:[%s8579 + $0x28] sm:$0x1]
        %v8860 = vld [vmem:[%s8579 + $0x50] sm:$0x1]
        %v8861 = vld [vmem:[%s8579 + $0x58] sm:$0x1]
        %v8862 = vld [vmem:[%s8579 + $0x80] sm:$0x1]
        %v8863 = vld [vmem:[%s8579 + $0x88] sm:$0x1]
        %v8864 = vld [vmem:[%s8579 + $0xb0] sm:$0x1]
        %v8865 = vld [vmem:[%s8579 + $0xb8] sm:$0x1]
        %v8866 = vshrl.u32 %v8794, 16
        %v8867 = vpack.i.b16 %v8866, %v8866
        %v8869 = vlaneseq
        %v8870 = vshrl.u32 %v8869, 7
        %v8871 = vsub.s32 3, %v8870
        %v8872 = vrot.slane %v8867, %v8871
        %v8873 = vshrl.u32 %v8795, 16
        %v8874 = vpack.i.b16 %v8873, %v8873
        %v8876 = vlaneseq
        %v8877 = vshrl.u32 %v8876, 7
        %v8878 = vsub.s32 3, %v8877
        %v8879 = vrot.slane %v8874, %v8878
        %v8880 = vmul.bf16 %v8632, %v8872
        %v8881 = vmul.bf16 %v8633, %v8879
        %v8882 = vmul.bf16 %v8858, %v8872
        %v8883 = vmul.bf16 %v8859, %v8879
        %v8884 = vmul.bf16 %v8634, %v8872
        %v8885 = vmul.bf16 %v8635, %v8879
        %v8886 = vmul.bf16 %v8860, %v8872
        %v8887 = vmul.bf16 %v8861, %v8879
        %v8888 = vmul.bf16 %v8636, %v8872
        %v8889 = vmul.bf16 %v8637, %v8879
        %v8890 = vmul.bf16 %v8862, %v8872
        %v8891 = vmul.bf16 %v8863, %v8879
        %v8892 = vmul.bf16 %v8638, %v8872
        %v8893 = vmul.bf16 %v8639, %v8879
        %v8894 = vmul.bf16 %v8864, %v8872
        %v8895 = vmul.bf16 %v8865, %v8879
        %v8897 = vshrl.u32 %v8880, 16
        %v8899 = vrot.slane %v8897, 1
        %v8900 = vshll.u32 %v8880, 16
        %v8902 = vrot.slane %v8900, 2
        %v8903 = vor.u32 %v8899, %v8902
        %v8905 = vshrl.u32 %v8881, 16
        %v8907 = vrot.slane %v8905, 1
        %v8908 = vshll.u32 %v8881, 16
        %v8910 = vrot.slane %v8908, 2
        %v8911 = vor.u32 %v8907, %v8910
        %v8913 = vshll.u32 %v8882, 16
        %v8915 = vrot.slane %v8913, 2
        %v8916 = vsel %vm6225, %v8903, %v8915
        %v8918 = vshll.u32 %v8883, 16
        %v8920 = vrot.slane %v8918, 2
        %v8921 = vsel %vm6225, %v8911, %v8920
        %v8923 = vshrl.u32 %v8884, 16
        %v8925 = vrot.slane %v8923, 1
        %v8926 = vshll.u32 %v8884, 16
        %v8928 = vrot.slane %v8926, 2
        %v8929 = vor.u32 %v8925, %v8928
        %v8931 = vshrl.u32 %v8885, 16
        %v8933 = vrot.slane %v8931, 1
        %v8934 = vshll.u32 %v8885, 16
        %v8936 = vrot.slane %v8934, 2
        %v8937 = vor.u32 %v8933, %v8936
        %v8939 = vshll.u32 %v8886, 16
        %v8941 = vrot.slane %v8939, 2
        %v8942 = vsel %vm6225, %v8929, %v8941
        %v8944 = vshll.u32 %v8887, 16
        %v8946 = vrot.slane %v8944, 2
        %v8947 = vsel %vm6225, %v8937, %v8946
        %v8949 = vshrl.u32 %v8888, 16
        %v8951 = vrot.slane %v8949, 1
        %v8952 = vshll.u32 %v8888, 16
        %v8954 = vrot.slane %v8952, 2
        %v8955 = vor.u32 %v8951, %v8954
        %v8957 = vshrl.u32 %v8889, 16
        %v8959 = vrot.slane %v8957, 1
        %v8960 = vshll.u32 %v8889, 16
        %v8962 = vrot.slane %v8960, 2
        %v8963 = vor.u32 %v8959, %v8962
        %v8965 = vshll.u32 %v8890, 16
        %v8967 = vrot.slane %v8965, 2
        %v8968 = vsel %vm6225, %v8955, %v8967
        %v8970 = vshll.u32 %v8891, 16
        %v8972 = vrot.slane %v8970, 2
        %v8973 = vsel %vm6225, %v8963, %v8972
        %v8975 = vshrl.u32 %v8892, 16
        %v8977 = vrot.slane %v8975, 1
        %v8978 = vshll.u32 %v8892, 16
        %v8980 = vrot.slane %v8978, 2
        %v8981 = vor.u32 %v8977, %v8980
        %v8983 = vshrl.u32 %v8893, 16
        %v8985 = vrot.slane %v8983, 1
        %v8986 = vshll.u32 %v8893, 16
        %v8988 = vrot.slane %v8986, 2
        %v8989 = vor.u32 %v8985, %v8988
        %v8991 = vshll.u32 %v8894, 16
        %v8993 = vrot.slane %v8991, 2
        %v8994 = vsel %vm6225, %v8981, %v8993
        %v8996 = vshll.u32 %v8895, 16
        %v8998 = vrot.slane %v8996, 2
        %v8999 = vsel %vm6225, %v8989, %v8998
        %v9016 = vadd.bf16 %v8842, %v8903
        %v9017 = vadd.bf16 %v8843, %v8911
        %v9018 = vadd.bf16 %v8844, %v8916
        %v9019 = vadd.bf16 %v8845, %v8921
        %v9020 = vadd.bf16 %v8846, %v8929
        %v9021 = vadd.bf16 %v8847, %v8937
        %v9022 = vadd.bf16 %v8848, %v8942
        %v9023 = vadd.bf16 %v8849, %v8947
        %v9024 = vadd.bf16 %v8850, %v8955
        %v9025 = vadd.bf16 %v8851, %v8963
        %v9026 = vadd.bf16 %v8852, %v8968
        %v9027 = vadd.bf16 %v8853, %v8973
        %v9028 = vadd.bf16 %v8854, %v8981
        %v9029 = vadd.bf16 %v8855, %v8989
        %v9030 = vadd.bf16 %v8856, %v8994
        %v9031 = vadd.bf16 %v8857, %v8999
        %v9032 = vld [vmem:[%s8579 + $0x10] sm:$0xfe]
        %v9033 = vld [vmem:[%s8579 + $0x18] sm:$0xfe]
        %v9034 = vld [vmem:[%s8579 + $0x40] sm:$0xfe]
        %v9035 = vld [vmem:[%s8579 + $0x48] sm:$0xfe]
        %v9036 = vld [vmem:[%s8579 + $0x70] sm:$0xfe]
        %v9037 = vld [vmem:[%s8579 + $0x78] sm:$0xfe]
        %v9038 = vld [vmem:[%s8579 + $0xa0] sm:$0xfe]
        %v9039 = vld [vmem:[%s8579 + $0xa8] sm:$0xfe]
        %v9040 = vld [vmem:[%s13 + $0x18] sm:$0x11]
        %v9042 = vunpack.c.l.b16 %v9040
        %v9043 = vunpack.c.h.b16 %v9040
        %v9044 = vpack.c.b16 %v9042, %v9042
        %v9045 = vpack.c.b16 %v9043, %v9043
        %v9047 = vpack.i.b16 %v9044, %v9044
        %v9049 = vlaneseq
        %v9050 = vshrl.u32 %v9049, 7
        %v9051 = vsub.s32 0, %v9050
        %v9052 = vrot.slane %v9047, %v9051
        %v9054 = vpack.i.b16 %v9045, %v9045
        %v9056 = vlaneseq
        %v9057 = vshrl.u32 %v9056, 7
        %v9058 = vsub.s32 0, %v9057
        %v9059 = vrot.slane %v9054, %v9058
        %v9060 = vmul.bf16 %v9032, %v9052
        %v9061 = vmul.bf16 %v9033, %v9059
        %v9062 = vmul.bf16 %v8858, %v9052
        %v9063 = vmul.bf16 %v8859, %v9059
        %v9064 = vmul.bf16 %v9034, %v9052
        %v9065 = vmul.bf16 %v9035, %v9059
        %v9066 = vmul.bf16 %v8860, %v9052
        %v9067 = vmul.bf16 %v8861, %v9059
        %v9068 = vmul.bf16 %v9036, %v9052
        %v9069 = vmul.bf16 %v9037, %v9059
        %v9070 = vmul.bf16 %v8862, %v9052
        %v9071 = vmul.bf16 %v8863, %v9059
        %v9072 = vmul.bf16 %v9038, %v9052
        %v9073 = vmul.bf16 %v9039, %v9059
        %v9074 = vmul.bf16 %v8864, %v9052
        %v9075 = vmul.bf16 %v8865, %v9059
        %v9092 = vrot.slane %v9060, 2
        %v9093 = vrot.slane %v9061, 2
        %v9094 = vrot.slane %v9062, 2
        %v9095 = vsel %vm6422, %v9092, %v9094
        %v9096 = vrot.slane %v9063, 2
        %v9097 = vsel %vm6422, %v9093, %v9096
        %v9098 = vrot.slane %v9064, 2
        %v9099 = vrot.slane %v9065, 2
        %v9100 = vrot.slane %v9066, 2
        %v9101 = vsel %vm6422, %v9098, %v9100
        %v9102 = vrot.slane %v9067, 2
        %v9103 = vsel %vm6422, %v9099, %v9102
        %v9104 = vrot.slane %v9068, 2
        %v9105 = vrot.slane %v9069, 2
        %v9106 = vrot.slane %v9070, 2
        %v9107 = vsel %vm6422, %v9104, %v9106
        %v9108 = vrot.slane %v9071, 2
        %v9109 = vsel %vm6422, %v9105, %v9108
        %v9110 = vrot.slane %v9072, 2
        %v9111 = vrot.slane %v9073, 2
        %v9112 = vrot.slane %v9074, 2
        %v9113 = vsel %vm6422, %v9110, %v9112
        %v9114 = vrot.slane %v9075, 2
        %v9115 = vsel %vm6422, %v9111, %v9114
        %v9132 = vadd.bf16 %v9016, %v9092
        %v9133 = vadd.bf16 %v9017, %v9093
        %v9134 = vadd.bf16 %v9018, %v9095
        %v9135 = vadd.bf16 %v9019, %v9097
        %v9136 = vadd.bf16 %v9020, %v9098
        %v9137 = vadd.bf16 %v9021, %v9099
        %v9138 = vadd.bf16 %v9022, %v9101
        %v9139 = vadd.bf16 %v9023, %v9103
        %v9140 = vadd.bf16 %v9024, %v9104
        %v9141 = vadd.bf16 %v9025, %v9105
        %v9142 = vadd.bf16 %v9026, %v9107
        %v9143 = vadd.bf16 %v9027, %v9109
        %v9144 = vadd.bf16 %v9028, %v9110
        %v9145 = vadd.bf16 %v9029, %v9111
        %v9146 = vadd.bf16 %v9030, %v9113
        %v9147 = vadd.bf16 %v9031, %v9115
        %v9164 = vrot.slane %v9132, 4
        %v9165 = vrot.slane %v9134, 4
        %v9166 = vsel %vm6495, %v9164, %v9165
        %v9167 = vrot.slane %v9133, 4
        %v9168 = vrot.slane %v9135, 4
        %v9169 = vsel %vm6495, %v9167, %v9168
        %v9170 = vrot.slane %v9136, 4
        %v9171 = vrot.slane %v9138, 4
        %v9172 = vsel %vm6495, %v9170, %v9171
        %v9173 = vrot.slane %v9137, 4
        %v9174 = vrot.slane %v9139, 4
        %v9175 = vsel %vm6495, %v9173, %v9174
        %v9176 = vrot.slane %v9140, 4
        %v9177 = vrot.slane %v9142, 4
        %v9178 = vsel %vm6495, %v9176, %v9177
        %v9179 = vrot.slane %v9141, 4
        %v9180 = vrot.slane %v9143, 4
        %v9181 = vsel %vm6495, %v9179, %v9180
        %v9182 = vrot.slane %v9144, 4
        %v9183 = vrot.slane %v9146, 4
        %v9184 = vsel %vm6495, %v9182, %v9183
        %v9185 = vrot.slane %v9145, 4
        %v9186 = vrot.slane %v9147, 4
        %v9187 = vsel %vm6495, %v9185, %v9186
        %v9204 = vunpack.c.l.bf16 %v9166
        %v9205 = vunpack.c.l.bf16 %v9169
        %v9206 = vunpack.c.h.bf16 %v9166
        %v9207 = vunpack.c.h.bf16 %v9169
        %v9208 = vunpack.c.l.bf16 %v9165
        %v9209 = vunpack.c.l.bf16 %v9168
        %v9210 = vunpack.c.l.bf16 %v9172
        %v9211 = vunpack.c.l.bf16 %v9175
        %v9212 = vunpack.c.h.bf16 %v9172
        %v9213 = vunpack.c.h.bf16 %v9175
        %v9214 = vunpack.c.l.bf16 %v9171
        %v9215 = vunpack.c.l.bf16 %v9174
        %v9216 = vunpack.c.l.bf16 %v9178
        %v9217 = vunpack.c.l.bf16 %v9181
        %v9218 = vunpack.c.h.bf16 %v9178
        %v9219 = vunpack.c.h.bf16 %v9181
        %v9220 = vunpack.c.l.bf16 %v9177
        %v9221 = vunpack.c.l.bf16 %v9180
        %v9222 = vunpack.c.l.bf16 %v9184
        %v9223 = vunpack.c.l.bf16 %v9187
        %v9224 = vunpack.c.h.bf16 %v9184
        %v9225 = vunpack.c.h.bf16 %v9187
        %v9226 = vunpack.c.l.bf16 %v9183
        %v9227 = vunpack.c.l.bf16 %v9186
        %v9228 = vadd.f32 %v8552, %v9204
        %v9229 = vadd.f32 %v8553, %v9205
        %v9230 = vadd.f32 %v8554, %v9206
        %v9231 = vadd.f32 %v8555, %v9207
        %v9232 = vadd.f32 %v8556, %v9208
        %v9233 = vadd.f32 %v8557, %v9209
        %v9234 = vadd.f32 %v8558, %v9210
        %v9235 = vadd.f32 %v8559, %v9211
        %v9236 = vadd.f32 %v8560, %v9212
        %v9237 = vadd.f32 %v8561, %v9213
        %v9238 = vadd.f32 %v8562, %v9214
        %v9239 = vadd.f32 %v8563, %v9215
        %v9240 = vadd.f32 %v8564, %v9216
        %v9241 = vadd.f32 %v8565, %v9217
        %v9242 = vadd.f32 %v8566, %v9218
        %v9243 = vadd.f32 %v8567, %v9219
        %v9244 = vadd.f32 %v8568, %v9220
        %v9245 = vadd.f32 %v8569, %v9221
        %v9246 = vadd.f32 %v8570, %v9222
        %v9247 = vadd.f32 %v8571, %v9223
        %v9248 = vadd.f32 %v8572, %v9224
        %v9249 = vadd.f32 %v8573, %v9225
        %v9250 = vadd.f32 %v8574, %v9226
        %v9251 = vadd.f32 %v8575, %v9227
        %vm9276 = vcmask 1041408
        %v9277 = vrot.slane %v9228, 6
        %v9278 = vrot.slane %v9230, 6
        %v9279 = vsel %vm9276, %v9277, %v9278
        %v9280 = vrot.slane %v9229, 6
        %v9281 = vrot.slane %v9231, 6
        %v9282 = vsel %vm9276, %v9280, %v9281
        %v9283 = vrot.slane %v9232, 6
        %v9284 = vsel %vm9276, %v9278, %v9283
        %v9285 = vrot.slane %v9233, 6
        %v9286 = vsel %vm9276, %v9281, %v9285
        %v9287 = vrot.slane %v9234, 6
        %v9288 = vrot.slane %v9236, 6
        %v9289 = vsel %vm9276, %v9287, %v9288
        %v9290 = vrot.slane %v9235, 6
        %v9291 = vrot.slane %v9237, 6
        %v9292 = vsel %vm9276, %v9290, %v9291
        %v9293 = vrot.slane %v9238, 6
        %v9294 = vsel %vm9276, %v9288, %v9293
        %v9295 = vrot.slane %v9239, 6
        %v9296 = vsel %vm9276, %v9291, %v9295
        %v9297 = vrot.slane %v9240, 6
        %v9298 = vrot.slane %v9242, 6
        %v9299 = vsel %vm9276, %v9297, %v9298
        %v9300 = vrot.slane %v9241, 6
        %v9301 = vrot.slane %v9243, 6
        %v9302 = vsel %vm9276, %v9300, %v9301
        %v9303 = vrot.slane %v9244, 6
        %v9304 = vsel %vm9276, %v9298, %v9303
        %v9305 = vrot.slane %v9245, 6
        %v9306 = vsel %vm9276, %v9301, %v9305
        %v9307 = vrot.slane %v9246, 6
        %v9308 = vrot.slane %v9248, 6
        %v9309 = vsel %vm9276, %v9307, %v9308
        %v9310 = vrot.slane %v9247, 6
        %v9311 = vrot.slane %v9249, 6
        %v9312 = vsel %vm9276, %v9310, %v9311
        %v9313 = vrot.slane %v9250, 6
        %v9314 = vsel %vm9276, %v9308, %v9313
        %v9315 = vrot.slane %v9251, 6
        %v9316 = vsel %vm9276, %v9311, %v9315
        %v9334 = vlaneseq
        %v9335 = vshrl.u32 %v9334, 7
        %v9336 = vsub.s32 0, %v9335
        %v9337 = vrot.slane %v5895, %v9336
        %v9338 = vlaneseq
        %v9339 = vshrl.u32 %v9338, 7
        %v9340 = vsub.s32 1, %v9339
        %v9341 = vrot.slane %v5895, %v9340
        %v9344 = vadd.f32 %v9279, %v9337
        %v9345 = vadd.f32 %v9282, %v9341
        %v9346 = vadd.f32 %v9284, %v9337
        %v9347 = vadd.f32 %v9286, %v9341
        %v9348 = vadd.f32 %v9289, %v9337
        %v9349 = vadd.f32 %v9292, %v9341
        %v9350 = vadd.f32 %v9294, %v9337
        %v9351 = vadd.f32 %v9296, %v9341
        %v9352 = vadd.f32 %v9299, %v9337
        %v9353 = vadd.f32 %v9302, %v9341
        %v9354 = vadd.f32 %v9304, %v9337
        %v9355 = vadd.f32 %v9306, %v9341
        %v9356 = vadd.f32 %v9309, %v9337
        %v9357 = vadd.f32 %v9312, %v9341
        %v9358 = vadd.f32 %v9314, %v9337
        %v9359 = vadd.f32 %v9316, %v9341
        %v9360 = vxor.u32 %v9344, 2147483648
        %v9361 = vxor.u32 %v9345, 2147483648
        %v9362 = vxor.u32 %v9346, 2147483648
        %v9363 = vxor.u32 %v9347, 2147483648
        %v9364 = vxor.u32 %v9348, 2147483648
        %v9365 = vxor.u32 %v9349, 2147483648
        %v9366 = vxor.u32 %v9350, 2147483648
        %v9367 = vxor.u32 %v9351, 2147483648
        %v9368 = vxor.u32 %v9352, 2147483648
        %v9369 = vxor.u32 %v9353, 2147483648
        %v9370 = vxor.u32 %v9354, 2147483648
        %v9371 = vxor.u32 %v9355, 2147483648
        %v9372 = vxor.u32 %v9356, 2147483648
        %v9373 = vxor.u32 %v9357, 2147483648
        %v9374 = vxor.u32 %v9358, 2147483648
        %v9375 = vxor.u32 %v9359, 2147483648
        %v9376 = vmul.f32 %v9360, 1.442695
        %v9377 = vpow.pop %v9376
        %v9378 = vmul.f32 %v9361, 1.442695
        %v9379 = vpow.pop %v9378
        %v9380 = vmul.f32 %v9362, 1.442695
        %v9381 = vpow.pop %v9380
        %v9382 = vmul.f32 %v9363, 1.442695
        %v9383 = vpow.pop %v9382
        %v9384 = vmul.f32 %v9364, 1.442695
        %v9385 = vpow.pop %v9384
        %v9386 = vmul.f32 %v9365, 1.442695
        %v9387 = vpow.pop %v9386
        %v9388 = vmul.f32 %v9366, 1.442695
        %v9389 = vpow.pop %v9388
        %v9390 = vmul.f32 %v9367, 1.442695
        %v9391 = vpow.pop %v9390
        %v9392 = vmul.f32 %v9368, 1.442695
        %v9393 = vpow.pop %v9392
        %v9394 = vmul.f32 %v9369, 1.442695
        %v9395 = vpow.pop %v9394
        %v9396 = vmul.f32 %v9370, 1.442695
        %v9397 = vpow.pop %v9396
        %v9398 = vmul.f32 %v9371, 1.442695
        %v9399 = vpow.pop %v9398
        %v9400 = vmul.f32 %v9372, 1.442695
        %v9401 = vpow.pop %v9400
        %v9402 = vmul.f32 %v9373, 1.442695
        %v9403 = vpow.pop %v9402
        %v9404 = vmul.f32 %v9374, 1.442695
        %v9405 = vpow.pop %v9404
        %v9406 = vmul.f32 %v9375, 1.442695
        %v9407 = vpow.pop %v9406
        %v9408 = vadd.f32 %v9377, 1.0
        %v9409 = vadd.f32 %v9379, 1.0
        %v9410 = vadd.f32 %v9381, 1.0
        %v9411 = vadd.f32 %v9383, 1.0
        %v9412 = vadd.f32 %v9385, 1.0
        %v9413 = vadd.f32 %v9387, 1.0
        %v9414 = vadd.f32 %v9389, 1.0
        %v9415 = vadd.f32 %v9391, 1.0
        %v9416 = vadd.f32 %v9393, 1.0
        %v9417 = vadd.f32 %v9395, 1.0
        %v9418 = vadd.f32 %v9397, 1.0
        %v9419 = vadd.f32 %v9399, 1.0
        %v9420 = vadd.f32 %v9401, 1.0
        %v9421 = vadd.f32 %v9403, 1.0
        %v9422 = vadd.f32 %v9405, 1.0
        %v9423 = vadd.f32 %v9407, 1.0
        %v9424 = vrcp.pop %v9408
        %v9425 = vmul.f32 1.0, %v9424
        %v9426 = vrcp.pop %v9409
        %v9427 = vmul.f32 1.0, %v9426
        %v9428 = vrcp.pop %v9410
        %v9429 = vmul.f32 1.0, %v9428
        %v9430 = vrcp.pop %v9411
        %v9431 = vmul.f32 1.0, %v9430
        %v9432 = vrcp.pop %v9412
        %v9433 = vmul.f32 1.0, %v9432
        %v9434 = vrcp.pop %v9413
        %v9435 = vmul.f32 1.0, %v9434
        %v9436 = vrcp.pop %v9414
        %v9437 = vmul.f32 1.0, %v9436
        %v9438 = vrcp.pop %v9415
        %v9439 = vmul.f32 1.0, %v9438
        %v9440 = vrcp.pop %v9416
        %v9441 = vmul.f32 1.0, %v9440
        %v9442 = vrcp.pop %v9417
        %v9443 = vmul.f32 1.0, %v9442
        %v9444 = vrcp.pop %v9418
        %v9445 = vmul.f32 1.0, %v9444
        %v9446 = vrcp.pop %v9419
        %v9447 = vmul.f32 1.0, %v9446
        %v9448 = vrcp.pop %v9420
        %v9449 = vmul.f32 1.0, %v9448
        %v9450 = vrcp.pop %v9421
        %v9451 = vmul.f32 1.0, %v9450
        %v9452 = vrcp.pop %v9422
        %v9453 = vmul.f32 1.0, %v9452
        %v9454 = vrcp.pop %v9423
        %v9455 = vmul.f32 1.0, %v9454
        %v9456 = vmul.f32 %v9344, %v9425
        %v9457 = vmul.f32 %v9345, %v9427
        %v9458 = vmul.f32 %v9346, %v9429
        %v9459 = vmul.f32 %v9347, %v9431
        %v9460 = vmul.f32 %v9348, %v9433
        %v9461 = vmul.f32 %v9349, %v9435
        %v9462 = vmul.f32 %v9350, %v9437
        %v9463 = vmul.f32 %v9351, %v9439
        %v9464 = vmul.f32 %v9352, %v9441
        %v9465 = vmul.f32 %v9353, %v9443
        %v9466 = vmul.f32 %v9354, %v9445
        %v9467 = vmul.f32 %v9355, %v9447
        %v9468 = vmul.f32 %v9356, %v9449
        %v9469 = vmul.f32 %v9357, %v9451
        %v9470 = vmul.f32 %v9358, %v9453
        %v9471 = vmul.f32 %v9359, %v9455
        %s9472 = smul.u32 %s5897, 64
        %v9473 = vpack.c.bf16 %v9458, %v9456
        %v9474 = vpack.c.bf16 %v9459, %v9457
        %v9475 = vpack.c.bf16 %v9462, %v9460
        %v9476 = vpack.c.bf16 %v9463, %v9461
        %v9477 = vpack.c.bf16 %v9466, %v9464
        %v9478 = vpack.c.bf16 %v9467, %v9465
        %v9479 = vpack.c.bf16 %v9470, %v9468
        %v9480 = vpack.c.bf16 %v9471, %v9469
        %s9481 = sshra.s32 %s9472, 4
        %s9482 = sand.u32 %s9472, 15
        %s9483 = smul.u32 %s9481, 2
        %s9484 = smul.addr %s9483, 8
        %s9485 = scalar_lea.vmem [#allocation3], %s9484
        %9486 = vst [vmem:[%s9485] sm:$0xff] %v9473
        %9487 = vst.msk [vmem:[%s9485 + $0x8] sm:$0xff] %vm686, %v9474
        %9488 = vst [vmem:[%s9485 + $0x10] sm:$0xff] %v9475
        %9489 = vst.msk [vmem:[%s9485 + $0x18] sm:$0xff] %vm686, %v9476
        %9490 = vst [vmem:[%s9485 + $0x20] sm:$0xff] %v9477
        %9491 = vst.msk [vmem:[%s9485 + $0x28] sm:$0xff] %vm686, %v9478
        %9492 = vst [vmem:[%s9485 + $0x30] sm:$0xff] %v9479
        %9493 = vst.msk [vmem:[%s9485 + $0x38] sm:$0xff] %vm686, %v9480
        %v9494 = vadd.f32 %v9456, %v9458
        %v9495 = vadd.f32 %v9494, %v9460
        %v9496 = vadd.f32 %v9495, %v9462
        %v9497 = vadd.f32 %v9496, %v9464
        %v9498 = vadd.f32 %v9497, %v9466
        %v9499 = vadd.f32 %v9498, %v9468
        %v9500 = vadd.f32 %v9499, %v9470
        %v9501 = vrot.slane %v9500, 4
        %v9502 = vadd.f32 %v9500, %v9501
        %v9503 = vrot.slane %v9502, 2
        %v9504 = vadd.f32 %v9502, %v9503
        %v9505 = vrot.slane %v9504, 1
        %v9506 = vadd.f32 %v9504, %v9505
        %v9507 = vsel %vm686, %v9457, 0.0
        %v9508 = vsel %vm686, %v9459, 0.0
        %v9509 = vadd.f32 %v9507, %v9508
        %v9510 = vsel %vm686, %v9461, 0.0
        %v9511 = vadd.f32 %v9509, %v9510
        %v9512 = vsel %vm686, %v9463, 0.0
        %v9513 = vadd.f32 %v9511, %v9512
        %v9514 = vsel %vm686, %v9465, 0.0
        %v9515 = vadd.f32 %v9513, %v9514
        %v9516 = vsel %vm686, %v9467, 0.0
        %v9517 = vadd.f32 %v9515, %v9516
        %v9518 = vsel %vm686, %v9469, 0.0
        %v9519 = vadd.f32 %v9517, %v9518
        %v9520 = vsel %vm686, %v9471, 0.0
        %v9521 = vadd.f32 %v9519, %v9520
        %v9522 = vrot.slane %v9521, 4
        %v9523 = vadd.f32 %v9521, %v9522
        %v9524 = vrot.slane %v9523, 2
        %v9525 = vadd.f32 %v9523, %v9524
        %v9526 = vrot.slane %v9525, 1
        %v9527 = vadd.f32 %v9525, %v9526
        %v9528 = vadd.f32 %v5902, %v9506
        %v9529 = vadd.f32 %v5903, %v9527
      $region141: #{tpu_custom_call.1} parent=107 // loop_footer
        %s5901 = sadd.s32 1, %s5897
      $region142: #{tpu_custom_call.1} parent=107 // loop_footer_branch
        %5896 = sbr.rel target = $region138
      $region143: #{tpu_custom_call.1} parent=107 // loop_exit
        _
      %v9530 = vld [vmem:[%s15] sm:$0xf]
      %v9531 = vld [vmem:[%s15 + $0x4] sm:$0xf]
      %v9532 = vld [vmem:[%s15 + $0x8] sm:$0xf]
      %v9533 = vld [vmem:[%s15 + $0xc] sm:$0xf]
      %v9534 = vld [vmem:[%s15 + $0x10] sm:$0xf]
      %v9535 = vld [vmem:[%s15 + $0x14] sm:$0xf]
      %v9536 = vld [vmem:[%s15 + $0x18] sm:$0xf]
      %v9537 = vld [vmem:[%s15 + $0x1c] sm:$0xf]
      %v9538 = vld [vmem:[%s15 + $0x20] sm:$0xf]
      %v9539 = vld [vmem:[%s15 + $0x24] sm:$0xf]
      %v9540 = vld [vmem:[%s15 + $0x28] sm:$0xf]
      %v9541 = vld [vmem:[%s15 + $0x2c] sm:$0xf]
      %v9542 = vld [vmem:[%s15 + $0x30] sm:$0xf]
      %v9543 = vld [vmem:[%s15 + $0x34] sm:$0xf]
      %v9544 = vld [vmem:[%s15 + $0x38] sm:$0xf]
      %v9545 = vld [vmem:[%s15 + $0x3c] sm:$0xf]
      %v9546 = vld [vmem:[%s15 + $0x40] sm:$0xf]
      %v9547 = vld [vmem:[%s15 + $0x44] sm:$0xf]
      %v9548 = vld [vmem:[%s15 + $0x48] sm:$0xf]
      %v9549 = vld [vmem:[%s15 + $0x4c] sm:$0xf]
      %v9550 = vld [vmem:[%s15 + $0x50] sm:$0xf]
      %v9551 = vld [vmem:[%s15 + $0x54] sm:$0xf]
      %v9552 = vld [vmem:[%s15 + $0x58] sm:$0xf]
      %v9553 = vld [vmem:[%s15 + $0x5c] sm:$0xf]
      %v9554 = vld [vmem:[%s16] sm:$0x1]
      %v9555 = vmul.f32 %v5902, 0.00390625
      %v9556 = vmul.f32 %v5903, 0.00390625
      %v9557 = vpack.c.bf16 %v9555, %v9555
      %v9558 = vpack.c.bf16 %v9556, %v9556
      %v9583 = vunpack.c.l.b16 %v9530
      %v9584 = vunpack.c.l.b16 %v9531
      %v9585 = vunpack.c.l.b16 %v9532
      %v9586 = vunpack.c.l.b16 %v9533
      %v9587 = vunpack.c.l.b16 %v9534
      %v9588 = vunpack.c.l.b16 %v9535
      %v9589 = vunpack.c.l.b16 %v9536
      %v9590 = vunpack.c.l.b16 %v9537
      %v9591 = vunpack.c.l.b16 %v9538
      %v9592 = vunpack.c.l.b16 %v9539
      %v9593 = vunpack.c.l.b16 %v9540
      %v9594 = vunpack.c.l.b16 %v9541
      %v9595 = vunpack.c.l.b16 %v9542
      %v9596 = vunpack.c.l.b16 %v9543
      %v9597 = vunpack.c.l.b16 %v9544
      %v9598 = vunpack.c.l.b16 %v9545
      %v9599 = vunpack.c.l.b16 %v9546
      %v9600 = vunpack.c.l.b16 %v9547
      %v9601 = vunpack.c.l.b16 %v9548
      %v9602 = vunpack.c.l.b16 %v9549
      %v9603 = vunpack.c.l.b16 %v9550
      %v9604 = vunpack.c.l.b16 %v9551
      %v9605 = vunpack.c.l.b16 %v9552
      %v9606 = vunpack.c.l.b16 %v9553
      %v9607 = vpack.c.b16 %v9584, %v9583
      %v9608 = vpack.c.b16 %v9586, %v9585
      %v9609 = vpack.c.b16 %v9588, %v9587
      %v9610 = vpack.c.b16 %v9590, %v9589
      %v9611 = vpack.c.b16 %v9592, %v9591
      %v9612 = vpack.c.b16 %v9594, %v9593
      %v9613 = vpack.c.b16 %v9596, %v9595
      %v9614 = vpack.c.b16 %v9598, %v9597
      %v9615 = vpack.c.b16 %v9600, %v9599
      %v9616 = vpack.c.b16 %v9602, %v9601
      %v9617 = vpack.c.b16 %v9604, %v9603
      %v9618 = vpack.c.b16 %v9606, %v9605
      %v9632 = vsel %vm686, %v9558, 0
      %9634 = vmatprep.subr.bf16.mxu0 0
      %9635 = vmatpush1.bf16.msra.mxu0 %v9607
      %9636 = vmatprep.subr.bf16.mxu0 0
      %9637 = vmatpush1.bf16.msra.mxu0 %v9608
      %9638 = vmatprep.subr.bf16.mxu0 0
      %9639 = vmatpush1.bf16.msra.mxu0 %v9609
      %9640 = vmatprep.subr.bf16.mxu0 0
      %9641 = vmatpush1.bf16.msra.mxu0 %v9610
      %9642 = vmatprep.subr.bf16.mxu0 0
      %9643 = vmatpush1.bf16.msra.mxu0 %v9611
      %9644 = vmatprep.subr.bf16.mxu0 0
      %9645 = vmatpush1.bf16.msra.mxu0 %v9612
      %9646 = vmatprep.subr.bf16.mxu0 0
      %9647 = vmatpush1.bf16.msra.mxu0 %v9613
      %9648 = vmatprep.subr.bf16.mxu0 0
      %9649 = vmatpush1.bf16.msra.mxu0 %v9614
      %9650 = vmatprep.subr.bf16.mxu0 0
      %9651 = vmatpush1.bf16.msra.mxu0 %v9615
      %9652 = vmatprep.subr.bf16.mxu0 0
      %9653 = vmatpush1.bf16.msra.mxu0 %v9616
      %9654 = vmatprep.subr.bf16.mxu0 0
      %9655 = vmatpush1.bf16.msra.mxu0 %v9617
      %9656 = vmatprep.subr.bf16.mxu0 0
      %9657 = vmatpush1.bf16.msra.mxu0 %v9618
      %9658 = vmatprep.subr.bf16.mxu0 0
      %9659 = vmatpush1.bf16.msra.mxu0 0
      %9660 = vmatprep.subr.bf16.mxu0 0
      %9661 = vmatpush1.bf16.msra.mxu0 0
      %9662 = vmatprep.subr.bf16.mxu0 0
      %9663 = vmatpush1.bf16.msra.mxu0 0
      %9664 = vmatprep.subr.bf16.mxu0 0
      %9665 = vmatpush1.bf16.msra.mxu0 0
      %9666 = vmatprep.mubr.bf16.mxu0 %v9632
      %9667 = vmatmul.mubr.bf16.gmra.mrb[0].mxu0 %v9557
      %v9668 = vpop.f32.mrb[0].mxu0
      %v9669 = vadd.f32 %v9554, %v9668
      %v9670 = vpop.f32.mrb[0].mxu0
      %v9671 = vpop.f32.mrb[0].mxu0
      %v9672 = vpop.f32.mrb[0].mxu0
      %9673 = vdwg.mxu0
      %v9674 = vld [vmem:[%s17] sm:$0xff]
      %v9675 = vld [vmem:[%s17 + $0x8] sm:$0xff]
      %v9676 = vld [vmem:[%s17 + $0x10] sm:$0xff]
      %v9677 = vld [vmem:[%s17 + $0x18] sm:$0xff]
      %v9678 = vld [vmem:[%s17 + $0x20] sm:$0xff]
      %v9679 = vld [vmem:[%s17 + $0x28] sm:$0xff]
      %v9680 = vld [vmem:[%s17 + $0x30] sm:$0xff]
      %v9681 = vld [vmem:[%s17 + $0x38] sm:$0xff]
      %v9682 = vld [vmem:[%s18] sm:$0x1]
      %v9684 = vsel %vm686, %v9669, 0
      %9686 = vmatprep.subr.mxu0 0.0
      %9687 = vmatpush1.msra.mxu0 %v9674
      %9688 = vmatprep.subr.mxu0 0.0
      %9689 = vmatpush1.msra.mxu0 %v9675
      %9690 = vmatprep.subr.mxu0 0.0
      %9691 = vmatpush1.msra.mxu0 %v9676
      %9692 = vmatprep.subr.mxu0 0.0
      %9693 = vmatpush1.msra.mxu0 %v9677
      %9694 = vmatprep.subr.mxu0 0.0
      %9695 = vmatpush1.msra.mxu0 %v9678
      %9696 = vmatprep.subr.mxu0 0.0
      %9697 = vmatpush1.msra.mxu0 %v9679
      %9698 = vmatprep.subr.mxu0 0.0
      %9699 = vmatpush1.msra.mxu0 %v9680
      %9700 = vmatprep.subr.mxu0 0.0
      %9701 = vmatpush1.msra.mxu0 %v9681
      %9702 = vmatprep.subr.mxu0 0.0
      %9703 = vmatpush1.msra.mxu0 0.0
      %9704 = vmatprep.subr.mxu0 0.0
      %9705 = vmatpush1.msra.mxu0 0.0
      %9706 = vmatprep.subr.mxu0 0.0
      %9707 = vmatpush1.msra.mxu0 0.0
      %9708 = vmatprep.subr.mxu0 0.0
      %9709 = vmatpush1.msra.mxu0 0.0
      %9710 = vmatprep.subr.mxu0 0.0
      %9711 = vmatpush1.msra.mxu0 0.0
      %9712 = vmatprep.subr.mxu0 0.0
      %9713 = vmatpush1.msra.mxu0 0.0
      %9714 = vmatprep.subr.mxu0 0.0
      %9715 = vmatpush1.msra.mxu0 0.0
      %9716 = vmatprep.subr.mxu0 0.0
      %9717 = vmatpush1.msra.mxu0 0.0
      %9718 = vmatprep.subr.mxu0 0.0
      %9719 = vmatpush1.msra.mxu0 0.0
      %9720 = vmatprep.subr.mxu0 0.0
      %9721 = vmatpush1.msra.mxu0 0.0
      %9722 = vmatprep.subr.mxu0 0.0
      %9723 = vmatpush1.msra.mxu0 0.0
      %9724 = vmatprep.subr.mxu0 0.0
      %9725 = vmatpush1.msra.mxu0 0.0
      %9726 = vmatprep.subr.mxu0 0.0
      %9727 = vmatpush1.msra.mxu0 0.0
      %9728 = vmatprep.subr.mxu0 0.0
      %9729 = vmatpush1.msra.mxu0 0.0
      %9730 = vmatprep.subr.mxu0 0.0
      %9731 = vmatpush1.msra.mxu0 0.0
      %9732 = vmatprep.subr.mxu0 0.0
      %9733 = vmatpush1.msra.mxu0 0.0
      %9734 = vmatprep.subr.mxu0 0.0
      %9735 = vmatpush1.msra.mxu0 0.0
      %9736 = vmatprep.subr.mxu0 0.0
      %9737 = vmatpush1.msra.mxu0 0.0
      %9738 = vmatprep.subr.mxu0 0.0
      %9739 = vmatpush1.msra.mxu0 0.0
      %9740 = vmatprep.subr.mxu0 0.0
      %9741 = vmatpush1.msra.mxu0 0.0
      %9742 = vmatprep.subr.mxu0 0.0
      %9743 = vmatpush1.msra.mxu0 0.0
      %9744 = vmatprep.subr.mxu0 0.0
      %9745 = vmatpush1.msra.mxu0 0.0
      %9746 = vmatprep.subr.mxu0 0.0
      %9747 = vmatpush1.msra.mxu0 0.0
      %9748 = vmatprep.subr.mxu0 0.0
      %9749 = vmatpush1.msra.mxu0 0.0
      %9750 = vmatprep.mubr.f32.mxu0 0.0
      %9751 = vmatmul.mubr.f32.gmra.mrb[0].mxu0 %v9684
      %v9752 = vpop.f32.mrb[0].mxu0
      %v9753 = vadd.f32 %v9682, %v9752
      %v9754 = vpop.f32.mrb[0].mxu0
      %9755 = vdwg.mxu0
      %v9756 = vmax.f32 %v9753, 0.0
      %v9757 = vld [vmem:[%s19] sm:$0xf]
      %v9758 = vld [vmem:[%s20] sm:$0x1]
      %v9760 = vsel %vm5119, %v9756, 0
      %v9763 = vsel %vm5123, %v9757, 0
      %9765 = vmatprep.subr.mxu0 0.0
      %9766 = vmatpush1.msra.mxu0 %v9763
      %9767 = vmatprep.subr.mxu0 0.0
      %9768 = vmatpush1.msra.mxu0 0.0
      %9769 = vmatprep.subr.mxu0 0.0
      %9770 = vmatpush1.msra.mxu0 0.0
      %9771 = vmatprep.subr.mxu0 0.0
      %9772 = vmatpush1.msra.mxu0 0.0
      %9773 = vmatprep.subr.mxu0 0.0
      %9774 = vmatpush1.msra.mxu0 0.0
      %9775 = vmatprep.subr.mxu0 0.0
      %9776 = vmatpush1.msra.mxu0 0.0
      %9777 = vmatprep.subr.mxu0 0.0
      %9778 = vmatpush1.msra.mxu0 0.0
      %9779 = vmatprep.subr.mxu0 0.0
      %9780 = vmatpush1.msra.mxu0 0.0
      %9781 = vmatprep.subr.mxu0 0.0
      %9782 = vmatpush1.msra.mxu0 0.0
      %9783 = vmatprep.subr.mxu0 0.0
      %9784 = vmatpush1.msra.mxu0 0.0
      %9785 = vmatprep.subr.mxu0 0.0
      %9786 = vmatpush1.msra.mxu0 0.0
      %9787 = vmatprep.subr.mxu0 0.0
      %9788 = vmatpush1.msra.mxu0 0.0
      %9789 = vmatprep.subr.mxu0 0.0
      %9790 = vmatpush1.msra.mxu0 0.0
      %9791 = vmatprep.subr.mxu0 0.0
      %9792 = vmatpush1.msra.mxu0 0.0
      %9793 = vmatprep.subr.mxu0 0.0
      %9794 = vmatpush1.msra.mxu0 0.0
      %9795 = vmatprep.subr.mxu0 0.0
      %9796 = vmatpush1.msra.mxu0 0.0
      %9797 = vmatprep.subr.mxu0 0.0
      %9798 = vmatpush1.msra.mxu0 0.0
      %9799 = vmatprep.subr.mxu0 0.0
      %9800 = vmatpush1.msra.mxu0 0.0
      %9801 = vmatprep.subr.mxu0 0.0
      %9802 = vmatpush1.msra.mxu0 0.0
      %9803 = vmatprep.subr.mxu0 0.0
      %9804 = vmatpush1.msra.mxu0 0.0
      %9805 = vmatprep.subr.mxu0 0.0
      %9806 = vmatpush1.msra.mxu0 0.0
      %9807 = vmatprep.subr.mxu0 0.0
      %9808 = vmatpush1.msra.mxu0 0.0
      %9809 = vmatprep.subr.mxu0 0.0
      %9810 = vmatpush1.msra.mxu0 0.0
      %9811 = vmatprep.subr.mxu0 0.0
      %9812 = vmatpush1.msra.mxu0 0.0
      %9813 = vmatprep.subr.mxu0 0.0
      %9814 = vmatpush1.msra.mxu0 0.0
      %9815 = vmatprep.subr.mxu0 0.0
      %9816 = vmatpush1.msra.mxu0 0.0
      %9817 = vmatprep.subr.mxu0 0.0
      %9818 = vmatpush1.msra.mxu0 0.0
      %9819 = vmatprep.subr.mxu0 0.0
      %9820 = vmatpush1.msra.mxu0 0.0
      %9821 = vmatprep.subr.mxu0 0.0
      %9822 = vmatpush1.msra.mxu0 0.0
      %9823 = vmatprep.subr.mxu0 0.0
      %9824 = vmatpush1.msra.mxu0 0.0
      %9825 = vmatprep.subr.mxu0 0.0
      %9826 = vmatpush1.msra.mxu0 0.0
      %9827 = vmatprep.subr.mxu0 0.0
      %9828 = vmatpush1.msra.mxu0 0.0
      %9829 = vmatprep.mubr.f32.mxu0 0.0
      %9830 = vmatmul.mubr.f32.gmra.mrb[0].mxu0 %v9760
      %v9831 = vpop.f32.mrb[0].mxu0
      %v9832 = vadd.f32 %v9758, %v9831
      %v9833 = vpop.f32.mrb[0].mxu0
      %9834 = vdwg.mxu0
      %v9835 = vxor.u32 %v9832, 2147483648
      %v9836 = vmul.f32 %v9835, 1.442695
      %v9837 = vpow.pop %v9836
      %v9838 = vadd.f32 %v9837, 1.0
      %v9839 = vrcp.pop %v9838
      %v9840 = vmul.f32 1.0, %v9839
      %v9841 = vmul.f32 %v9840, 0.1
      %v9842 = vld [vmem:[%s21] sm:$0xf]
      %v9843 = vld [vmem:[%s21 + $0x4] sm:$0xf]
      %v9844 = vld [vmem:[%s21 + $0x8] sm:$0xf]
      %v9845 = vld [vmem:[%s21 + $0xc] sm:$0xf]
      loop: start=0, step=1, limit=2
      $region144: #{tpu_custom_call.1} parent=107 // loop_pre_header
        _
      $region145: #{tpu_custom_call.1} parent=107 // loop_header
        %s9847 = sphi 0, %s9851
        %p9848 = scmp.ge.s32.totalorder %s9847, 2
      $region146: #{tpu_custom_call.1} parent=107 // loop_header_branch
        %9850 = sbr.rel (%p9848) target = $region150
      $region147: #{tpu_custom_call.1} parent=107 // loop_body
        %s9852 = smul.u32 %s9847, 128
        %s9853 = sshra.s32 %s9852, 4
        %s9854 = sand.u32 %s9852, 15
        %s9855 = smul.u32 %s9853, 2
        %s9856 = smul.addr %s9855, 8
        %s9857 = scalar_lea.vmem [#allocation3], %s9856
        %v9858 = vld [vmem:[%s9857] sm:$0xff]
        %v9859 = vld [vmem:[%s9857 + $0x8] sm:$0xff]
        %v9860 = vld [vmem:[%s9857 + $0x10] sm:$0xff]
        %v9861 = vld [vmem:[%s9857 + $0x18] sm:$0xff]
        %v9862 = vld [vmem:[%s9857 + $0x20] sm:$0xff]
        %v9863 = vld [vmem:[%s9857 + $0x28] sm:$0xff]
        %v9864 = vld [vmem:[%s9857 + $0x30] sm:$0xff]
        %v9865 = vld [vmem:[%s9857 + $0x38] sm:$0xff]
        %v9866 = vld [vmem:[%s9857 + $0x40] sm:$0xff]
        %v9867 = vld [vmem:[%s9857 + $0x48] sm:$0xff]
        %v9868 = vld [vmem:[%s9857 + $0x50] sm:$0xff]
        %v9869 = vld [vmem:[%s9857 + $0x58] sm:$0xff]
        %v9870 = vld [vmem:[%s9857 + $0x60] sm:$0xff]
        %v9871 = vld [vmem:[%s9857 + $0x68] sm:$0xff]
        %v9872 = vld [vmem:[%s9857 + $0x70] sm:$0xff]
        %v9873 = vld [vmem:[%s9857 + $0x78] sm:$0xff]
        %v9875 = vlaneseq
        %v9876 = vshrl.u32 %v9875, 7
        %v9877 = vsub.s32 0, %v9876
        %v9878 = vrot.slane %v9554, %v9877
        %v9881 = vsel %vm686, %v9859, 0
        %v9884 = vsel %vm686, %v9861, 0
        %v9887 = vsel %vm686, %v9863, 0
        %v9890 = vsel %vm686, %v9865, 0
        %v9893 = vsel %vm686, %v9867, 0
        %v9896 = vsel %vm686, %v9869, 0
        %v9899 = vsel %vm686, %v9871, 0
        %v9902 = vsel %vm686, %v9873, 0
        %9904 = vmatprep.subr.bf16.mxu0 0
        %9905 = vmatpush1.bf16.msra.mxu0 %v9607
        %9906 = vmatprep.subr.bf16.mxu0 0
        %9907 = vmatpush1.bf16.msra.mxu0 %v9608
        %9908 = vmatprep.subr.bf16.mxu0 0
        %9909 = vmatpush1.bf16.msra.mxu0 %v9609
        %9910 = vmatprep.subr.bf16.mxu0 0
        %9911 = vmatpush1.bf16.msra.mxu0 %v9610
        %9912 = vmatprep.subr.bf16.mxu0 0
        %9913 = vmatpush1.bf16.msra.mxu0 %v9611
        %9914 = vmatprep.subr.bf16.mxu0 0
        %9915 = vmatpush1.bf16.msra.mxu0 %v9612
        %9916 = vmatprep.subr.bf16.mxu0 0
        %9917 = vmatpush1.bf16.msra.mxu0 %v9613
        %9918 = vmatprep.subr.bf16.mxu0 0
        %9919 = vmatpush1.bf16.msra.mxu0 %v9614
        %9920 = vmatprep.subr.bf16.mxu0 0
        %9921 = vmatpush1.bf16.msra.mxu0 %v9615
        %9922 = vmatprep.subr.bf16.mxu0 0
        %9923 = vmatpush1.bf16.msra.mxu0 %v9616
        %9924 = vmatprep.subr.bf16.mxu0 0
        %9925 = vmatpush1.bf16.msra.mxu0 %v9617
        %9926 = vmatprep.subr.bf16.mxu0 0
        %9927 = vmatpush1.bf16.msra.mxu0 %v9618
        %9928 = vmatprep.subr.bf16.mxu0 0
        %9929 = vmatpush1.bf16.msra.mxu0 0
        %9930 = vmatprep.subr.bf16.mxu0 0
        %9931 = vmatpush1.bf16.msra.mxu0 0
        %9932 = vmatprep.subr.bf16.mxu0 0
        %9933 = vmatpush1.bf16.msra.mxu0 0
        %9934 = vmatprep.subr.bf16.mxu0 0
        %9935 = vmatpush1.bf16.msra.mxu0 0
        %9936 = vmatprep.mubr.bf16.mxu0 %v9881
        %9937 = vmatmul.mubr.bf16.gmra.mrb[0].mxu0 %v9858
        %v9938 = vpop.f32.mrb[0].mxu0
        %v9939 = vadd.f32 %v9878, %v9938
        %v9940 = vpop.f32.mrb[0].mxu0
        %v9941 = vpop.f32.mrb[0].mxu0
        %v9942 = vadd.f32 %v9878, %v9941
        %v9943 = vpop.f32.mrb[0].mxu0
        %9944 = vmatprep.mubr.bf16.mxu0 %v9884
        %9945 = vmatmul.mubr.bf16.gmra.mrb[0].mxu0 %v9860
        %v9946 = vpop.f32.mrb[0].mxu0
        %v9947 = vadd.f32 %v9878, %v9946
        %v9948 = vpop.f32.mrb[0].mxu0
        %v9949 = vpop.f32.mrb[0].mxu0
        %v9950 = vadd.f32 %v9878, %v9949
        %v9951 = vpop.f32.mrb[0].mxu0
        %9952 = vmatprep.mubr.bf16.mxu0 %v9887
        %9953 = vmatmul.mubr.bf16.gmra.mrb[0].mxu0 %v9862
        %v9954 = vpop.f32.mrb[0].mxu0
        %v9955 = vadd.f32 %v9878, %v9954
        %v9956 = vpop.f32.mrb[0].mxu0
        %v9957 = vpop.f32.mrb[0].mxu0
        %v9958 = vadd.f32 %v9878, %v9957
        %v9959 = vpop.f32.mrb[0].mxu0
        %9960 = vmatprep.mubr.bf16.mxu0 %v9890
        %9961 = vmatmul.mubr.bf16.gmra.mrb[0].mxu0 %v9864
        %v9962 = vpop.f32.mrb[0].mxu0
        %v9963 = vadd.f32 %v9878, %v9962
        %v9964 = vpop.f32.mrb[0].mxu0
        %v9965 = vpop.f32.mrb[0].mxu0
        %v9966 = vadd.f32 %v9878, %v9965
        %v9967 = vpop.f32.mrb[0].mxu0
        %9968 = vmatprep.mubr.bf16.mxu0 %v9893
        %9969 = vmatmul.mubr.bf16.gmra.mrb[0].mxu0 %v9866
        %v9970 = vpop.f32.mrb[0].mxu0
        %v9971 = vadd.f32 %v9878, %v9970
        %v9972 = vpop.f32.mrb[0].mxu0
        %v9973 = vpop.f32.mrb[0].mxu0
        %v9974 = vadd.f32 %v9878, %v9973
        %v9975 = vpop.f32.mrb[0].mxu0
        %9976 = vmatprep.mubr.bf16.mxu0 %v9896
        %9977 = vmatmul.mubr.bf16.gmra.mrb[0].mxu0 %v9868
        %v9978 = vpop.f32.mrb[0].mxu0
        %v9979 = vadd.f32 %v9878, %v9978
        %v9980 = vpop.f32.mrb[0].mxu0
        %v9981 = vpop.f32.mrb[0].mxu0
        %v9982 = vadd.f32 %v9878, %v9981
        %v9983 = vpop.f32.mrb[0].mxu0
        %9984 = vmatprep.mubr.bf16.mxu0 %v9899
        %9985 = vmatmul.mubr.bf16.gmra.mrb[0].mxu0 %v9870
        %v9986 = vpop.f32.mrb[0].mxu0
        %v9987 = vadd.f32 %v9878, %v9986
        %v9988 = vpop.f32.mrb[0].mxu0
        %v9989 = vpop.f32.mrb[0].mxu0
        %v9990 = vadd.f32 %v9878, %v9989
        %v9991 = vpop.f32.mrb[0].mxu0
        %9992 = vmatprep.mubr.bf16.mxu0 %v9902
        %9993 = vmatmul.mubr.bf16.gmra.mrb[0].mxu0 %v9872
        %v9994 = vpop.f32.mrb[0].mxu0
        %v9995 = vadd.f32 %v9878, %v9994
        %v9996 = vpop.f32.mrb[0].mxu0
        %v9997 = vpop.f32.mrb[0].mxu0
        %v9998 = vadd.f32 %v9878, %v9997
        %v9999 = vpop.f32.mrb[0].mxu0
        %10000 = vdwg.mxu0
        %s10001 = scalar_lea.vmem [#allocation2], %s9852
        %v10002 = vld [vmem:[%s10001] sm:$0xff]
        %v10003 = vld [vmem:[%s10001 + $0x8] sm:$0xff]
        %v10004 = vld [vmem:[%s10001 + $0x10] sm:$0xff]
        %v10005 = vld [vmem:[%s10001 + $0x18] sm:$0xff]
        %v10006 = vld [vmem:[%s10001 + $0x20] sm:$0xff]
        %v10007 = vld [vmem:[%s10001 + $0x28] sm:$0xff]
        %v10008 = vld [vmem:[%s10001 + $0x30] sm:$0xff]
        %v10009 = vld [vmem:[%s10001 + $0x38] sm:$0xff]
        %v10010 = vld [vmem:[%s10001 + $0x40] sm:$0xff]
        %v10011 = vld [vmem:[%s10001 + $0x48] sm:$0xff]
        %v10012 = vld [vmem:[%s10001 + $0x50] sm:$0xff]
        %v10013 = vld [vmem:[%s10001 + $0x58] sm:$0xff]
        %v10014 = vld [vmem:[%s10001 + $0x60] sm:$0xff]
        %v10015 = vld [vmem:[%s10001 + $0x68] sm:$0xff]
        %v10016 = vld [vmem:[%s10001 + $0x70] sm:$0xff]
        %v10017 = vld [vmem:[%s10001 + $0x78] sm:$0xff]
        %v10018 = vpack.c.bf16 %v10003, %v10002
        %v10019 = vpack.c.bf16 %v10005, %v10004
        %v10020 = vpack.c.bf16 %v10007, %v10006
        %v10021 = vpack.c.bf16 %v10009, %v10008
        %v10022 = vpack.c.bf16 %v10011, %v10010
        %v10023 = vpack.c.bf16 %v10013, %v10012
        %v10024 = vpack.c.bf16 %v10015, %v10014
        %v10025 = vpack.c.bf16 %v10017, %v10016
        %v10026 = vlaneseq
        %v10027 = vshrl.u32 %v10026, 7
        %v10028 = vsub.s32 0, %v10027
        %v10029 = vrot.slane %v9841, %v10028
        %v10030 = vmul.f32 %v10029, %v9939
        %v10031 = vmul.f32 %v10029, %v9942
        %v10032 = vmul.f32 %v10029, %v9947
        %v10033 = vmul.f32 %v10029, %v9950
        %v10034 = vmul.f32 %v10029, %v9955
        %v10035 = vmul.f32 %v10029, %v9958
        %v10036 = vmul.f32 %v10029, %v9963
        %v10037 = vmul.f32 %v10029, %v9966
        %v10038 = vmul.f32 %v10029, %v9971
        %v10039 = vmul.f32 %v10029, %v9974
        %v10040 = vmul.f32 %v10029, %v9979
        %v10041 = vmul.f32 %v10029, %v9982
        %v10042 = vmul.f32 %v10029, %v9987
        %v10043 = vmul.f32 %v10029, %v9990
        %v10044 = vmul.f32 %v10029, %v9995
        %v10045 = vmul.f32 %v10029, %v9998
        %v10050 = vunpack.c.l.b16 %v9842
        %v10051 = vunpack.c.l.b16 %v9843
        %v10052 = vunpack.c.l.b16 %v9844
        %v10053 = vunpack.c.l.b16 %v9845
        %v10054 = vpack.c.b16 %v10051, %v10050
        %v10055 = vpack.c.b16 %v10053, %v10052
        %v10059 = vsel %vm5042, %v10018, 0
        %v10062 = vsel %vm5042, %v10019, 0
        %v10065 = vsel %vm5042, %v10020, 0
        %v10068 = vsel %vm5042, %v10021, 0
        %v10071 = vsel %vm5042, %v10022, 0
        %v10074 = vsel %vm5042, %v10023, 0
        %v10077 = vsel %vm5042, %v10024, 0
        %v10080 = vsel %vm5042, %v10025, 0
        %10082 = vmatprep.subr.bf16.mxu0 0
        %10083 = vmatpush1.bf16.msra.mxu0 %v10054
        %10084 = vmatprep.subr.bf16.mxu0 0
        %10085 = vmatpush1.bf16.msra.mxu0 %v10055
        %10086 = vmatprep.subr.bf16.mxu0 0
        %10087 = vmatpush1.bf16.msra.mxu0 0
        %10088 = vmatprep.subr.bf16.mxu0 0
        %10089 = vmatpush1.bf16.msra.mxu0 0
        %10090 = vmatprep.subr.bf16.mxu0 0
        %10091 = vmatpush1.bf16.msra.mxu0 0
        %10092 = vmatprep.subr.bf16.mxu0 0
        %10093 = vmatpush1.bf16.msra.mxu0 0
        %10094 = vmatprep.subr.bf16.mxu0 0
        %10095 = vmatpush1.bf16.msra.mxu0 0
        %10096 = vmatprep.subr.bf16.mxu0 0
        %10097 = vmatpush1.bf16.msra.mxu0 0
        %10098 = vmatprep.subr.bf16.mxu0 0
        %10099 = vmatpush1.bf16.msra.mxu0 0
        %10100 = vmatprep.subr.bf16.mxu0 0
        %10101 = vmatpush1.bf16.msra.mxu0 0
        %10102 = vmatprep.subr.bf16.mxu0 0
        %10103 = vmatpush1.bf16.msra.mxu0 0
        %10104 = vmatprep.subr.bf16.mxu0 0
        %10105 = vmatpush1.bf16.msra.mxu0 0
        %10106 = vmatprep.subr.bf16.mxu0 0
        %10107 = vmatpush1.bf16.msra.mxu0 0
        %10108 = vmatprep.subr.bf16.mxu0 0
        %10109 = vmatpush1.bf16.msra.mxu0 0
        %10110 = vmatprep.subr.bf16.mxu0 0
        %10111 = vmatpush1.bf16.msra.mxu0 0
        %10112 = vmatprep.subr.bf16.mxu0 0
        %10113 = vmatpush1.bf16.msra.mxu0 0
        %10114 = vmatprep.mubr.bf16.mxu0 0
        %10115 = vmatmul.mubr.bf16.gmra.mrb[0].mxu0 %v10059
        %v10116 = vpop.f32.mrb[0].mxu0
        %v10117 = vadd.f32 %v10030, %v10116
        %v10118 = vpop.f32.mrb[0].mxu0
        %v10119 = vpop.f32.mrb[0].mxu0
        %v10120 = vadd.f32 %v10031, %v10119
        %v10121 = vpop.f32.mrb[0].mxu0
        %10122 = vmatprep.mubr.bf16.mxu0 0
        %10123 = vmatmul.mubr.bf16.gmra.mrb[0].mxu0 %v10062
        %v10124 = vpop.f32.mrb[0].mxu0
        %v10125 = vadd.f32 %v10032, %v10124
        %v10126 = vpop.f32.mrb[0].mxu0
        %v10127 = vpop.f32.mrb[0].mxu0
        %v10128 = vadd.f32 %v10033, %v10127
        %v10129 = vpop.f32.mrb[0].mxu0
        %10130 = vmatprep.mubr.bf16.mxu0 0
        %10131 = vmatmul.mubr.bf16.gmra.mrb[0].mxu0 %v10065
        %v10132 = vpop.f32.mrb[0].mxu0
        %v10133 = vadd.f32 %v10034, %v10132
        %v10134 = vpop.f32.mrb[0].mxu0
        %v10135 = vpop.f32.mrb[0].mxu0
        %v10136 = vadd.f32 %v10035, %v10135
        %v10137 = vpop.f32.mrb[0].mxu0
        %10138 = vmatprep.mubr.bf16.mxu0 0
        %10139 = vmatmul.mubr.bf16.gmra.mrb[0].mxu0 %v10068
        %v10140 = vpop.f32.mrb[0].mxu0
        %v10141 = vadd.f32 %v10036, %v10140
        %v10142 = vpop.f32.mrb[0].mxu0
        %v10143 = vpop.f32.mrb[0].mxu0
        %v10144 = vadd.f32 %v10037, %v10143
        %v10145 = vpop.f32.mrb[0].mxu0
        %10146 = vmatprep.mubr.bf16.mxu0 0
        %10147 = vmatmul.mubr.bf16.gmra.mrb[0].mxu0 %v10071
        %v10148 = vpop.f32.mrb[0].mxu0
        %v10149 = vadd.f32 %v10038, %v10148
        %v10150 = vpop.f32.mrb[0].mxu0
        %v10151 = vpop.f32.mrb[0].mxu0
        %v10152 = vadd.f32 %v10039, %v10151
        %v10153 = vpop.f32.mrb[0].mxu0
        %10154 = vmatprep.mubr.bf16.mxu0 0
        %10155 = vmatmul.mubr.bf16.gmra.mrb[0].mxu0 %v10074
        %v10156 = vpop.f32.mrb[0].mxu0
        %v10157 = vadd.f32 %v10040, %v10156
        %v10158 = vpop.f32.mrb[0].mxu0
        %v10159 = vpop.f32.mrb[0].mxu0
        %v10160 = vadd.f32 %v10041, %v10159
        %v10161 = vpop.f32.mrb[0].mxu0
        %10162 = vmatprep.mubr.bf16.mxu0 0
        %10163 = vmatmul.mubr.bf16.gmra.mrb[0].mxu0 %v10077
        %v10164 = vpop.f32.mrb[0].mxu0
        %v10165 = vadd.f32 %v10042, %v10164
        %v10166 = vpop.f32.mrb[0].mxu0
        %v10167 = vpop.f32.mrb[0].mxu0
        %v10168 = vadd.f32 %v10043, %v10167
        %v10169 = vpop.f32.mrb[0].mxu0
        %10170 = vmatprep.mubr.bf16.mxu0 0
        %10171 = vmatmul.mubr.bf16.gmra.mrb[0].mxu0 %v10080
        %v10172 = vpop.f32.mrb[0].mxu0
        %v10173 = vadd.f32 %v10044, %v10172
        %v10174 = vpop.f32.mrb[0].mxu0
        %v10175 = vpop.f32.mrb[0].mxu0
        %v10176 = vadd.f32 %v10045, %v10175
        %v10177 = vpop.f32.mrb[0].mxu0
        %10178 = vdwg.mxu0
        %s10179 = scalar_lea.vmem %s683, %s9852
        %10180 = vst.msk [vmem:[%s10179] sm:$0xff] %vm686, %v10117
        %10181 = vst.msk [vmem:[%s10179 + $0x8] sm:$0xff] %vm686, %v10120
        %10182 = vst.msk [vmem:[%s10179 + $0x10] sm:$0xff] %vm686, %v10125
        %10183 = vst.msk [vmem:[%s10179 + $0x18] sm:$0xff] %vm686, %v10128
        %10184 = vst.msk [vmem:[%s10179 + $0x20] sm:$0xff] %vm686, %v10133
        %10185 = vst.msk [vmem:[%s10179 + $0x28] sm:$0xff] %vm686, %v10136
        %10186 = vst.msk [vmem:[%s10179 + $0x30] sm:$0xff] %vm686, %v10141
        %10187 = vst.msk [vmem:[%s10179 + $0x38] sm:$0xff] %vm686, %v10144
        %10188 = vst.msk [vmem:[%s10179 + $0x40] sm:$0xff] %vm686, %v10149
        %10189 = vst.msk [vmem:[%s10179 + $0x48] sm:$0xff] %vm686, %v10152
        %10190 = vst.msk [vmem:[%s10179 + $0x50] sm:$0xff] %vm686, %v10157
        %10191 = vst.msk [vmem:[%s10179 + $0x58] sm:$0xff] %vm686, %v10160
        %10192 = vst.msk [vmem:[%s10179 + $0x60] sm:$0xff] %vm686, %v10165
        %10193 = vst.msk [vmem:[%s10179 + $0x68] sm:$0xff] %vm686, %v10168
        %10194 = vst.msk [vmem:[%s10179 + $0x70] sm:$0xff] %vm686, %v10173
        %10195 = vst.msk [vmem:[%s10179 + $0x78] sm:$0xff] %vm686, %v10176
      $region148: #{tpu_custom_call.1} parent=107 // loop_footer
        %s9851 = sadd.s32 1, %s9847
      $region149: #{tpu_custom_call.1} parent=107 // loop_footer_branch
        %9846 = sbr.rel target = $region145
      $region150: #{tpu_custom_call.1} parent=107 // loop_exit
        _
      %p10196 = scmp.lt.s32.totalorder %s33, 1
      %s10197 = scalar_select %p10196, %s33, 1
      %s10198 = smul.addr %s10197, 32
      %s10199 = smul.addr %s10198, 8
      %s10200 = scalar_lea.vmem %s22, %s10199
      // Predicated region
      $region151: #{tpu_custom_call.1} parent=107 // pred_check
        %p10201 = pneg %p518
      $region152: #{tpu_custom_call.1} parent=107 // pred_check_branch
        %10203 = sbr.rel (%p10201) target = $region154
      $region153: #{tpu_custom_call.1} parent=107 // pred_region
        _
      $region154: #{tpu_custom_call.1} parent=107 // pred_fallthru
        _
    $region108: #{tpu_custom_call.1} parent=5 // pred_fallthru
      _
    %p10204 = scmp.le.s32.totalorder 2, %s28
    // Predicated region
    $region155: #{tpu_custom_call.1} parent=5 // pred_check
      %p10205 = pneg %p10204
    $region156: #{tpu_custom_call.1} parent=5 // pred_check_branch
      %10207 = sbr.rel (%p10205) target = $region158
    $region157: #{tpu_custom_call.1} parent=5 // pred_region
      %s10208 = ssub.s32 %s28, 2
      // Predicated region
      $region159: #{tpu_custom_call.1} parent=157 // pred_check
        %p10209 = pneg %p524
      $region160: #{tpu_custom_call.1} parent=157 // pred_check_branch
        %10211 = sbr.rel (%p10209) target = $region162
      $region161: #{tpu_custom_call.1} parent=157 // pred_region
        %p10212 = scmp.lt.s32.totalorder %s34, 1
        %s10213 = scalar_select %p10212, %s34, 1
        %s10214 = smul.addr %s10213, 32
        %s10215 = smul.addr %s10214, 8
        %s10216 = scalar_lea.vmem %s22, %s10215
      $region162: #{tpu_custom_call.1} parent=157 // pred_fallthru
        _
    $region158: #{tpu_custom_call.1} parent=5 // pred_fallthru
      _
  $region6: #{tpu_custom_call.1} parent=0 // loop_footer
    %s32 = sadd.s32 1, %s28
  $region7: #{tpu_custom_call.1} parent=0 // loop_footer_branch
    %27 = sbr.rel target = $region3
  $region8: #{tpu_custom_call.1} parent=0 // loop_exit
    _

</llo_original>
